<compile_context>
chip_gen: v6e
topology: v6e:2x2x1
jax: 0.10.0
libtpu: 0.0.40
codegen_flags: <defaults>
</compile_context>

<pallas_src>
from functools import partial

import jax
import jax.numpy as jnp
from jax import lax
from jax.experimental import pallas as pl
from jax.experimental.pallas import tpu as pltpu

LANES = 128


# ---------------------------------------------------------------------------
# Pallas kernel: whole residual block for one batch element.
# ---------------------------------------------------------------------------
def _residual_block_kernel(x_ref, w1_ref, b1_ref, w2_ref, b2_ref, ws_ref,
                           out_ref, acc_ref, h1_ref, *, identity_shortcut):
    # x_ref  : (1, H+2, Wp, Cin_p)    bf16, zero-padded (halo + width/channel pad)
    # w1_ref : (3, 3*Cin_p, Cout_p)   bf16, BN1 scale folded, dx taps stacked on K
    # w2_ref : (3, 3*Cout_p, Cout_p)  bf16, BN2 scale folded, dx taps stacked on K
    # ws_ref : (Cin_p, Cout_p)        bf16 1x1 shortcut (unused dummy if identity)
    # b1_ref : (1, Cout_p)            f32 folded BN1 bias
    # b2_ref : (1, Cout_p)            f32 folded BN2 (+ shortcut BN) bias
    # out_ref: (1, H, W, Cout_p)      bf16
    # acc_ref: (H*W, Cout_p)          f32 VMEM scratch (reused for conv1 & conv2)
    # h1_ref : (H+2, Wp, Cout_p)      bf16 VMEM scratch (conv2 staging, 1-px halo)
    H, W, cout_p = out_ref.shape[1], out_ref.shape[2], out_ref.shape[3]
    cin_p = x_ref.shape[3]
    wp = x_ref.shape[2]

    # ---- conv1 (3x3, pad 1): 3 deep-K bf16 MXU matmuls, f32 accumulate -------
    acc_ref[...] = jnp.broadcast_to(b1_ref[...], (H * W, cout_p))  # seed with bias
    for dy in range(3):                       # 3 static taps, scratch-backed acc
        slab = x_ref[0, dy:dy + H, :, :]                          # (H, Wp, Cin_p)
        taps = jnp.concatenate([slab[:, dx:dx + W, :] for dx in range(3)],
                               axis=-1)                           # (H, W, 3*Cin_p)
        acc_ref[...] += jnp.dot(taps.reshape(H * W, 3 * cin_p), w1_ref[dy],
                                preferred_element_type=jnp.float32)

    # ---- stage h1 = ReLU(acc) into the padded bf16 scratch; zero only halo ----
    h1_ref[0:1, :, :] = jnp.zeros((1, wp, cout_p), h1_ref.dtype)
    h1_ref[H + 1:H + 2, :, :] = jnp.zeros((1, wp, cout_p), h1_ref.dtype)
    h1_ref[1:H + 1, 0:1, :] = jnp.zeros((H, 1, cout_p), h1_ref.dtype)
    h1_ref[1:H + 1, W + 1:wp, :] = jnp.zeros((H, wp - W - 1, cout_p), h1_ref.dtype)
    h1_ref[1:H + 1, 1:W + 1, :] = (
        jnp.maximum(acc_ref[...], 0.0).astype(h1_ref.dtype).reshape(H, W, cout_p))

    # ---- shortcut seeds the conv2 accumulator (residual add is free) ---------
    xc = x_ref[0, 1:H + 1, 1:W + 1, :].reshape(H * W, cin_p)
    if identity_shortcut:
        # direct add of the centre window; no eye-matrix matmul
        acc_ref[...] = xc.astype(jnp.float32) + b2_ref[...]
    else:
        acc_ref[...] = jnp.dot(xc, ws_ref[...],
                               preferred_element_type=jnp.float32) + b2_ref[...]

    # ---- conv2 (3x3, pad 1): 3 more deep-K matmuls on the bf16 staging -------
    for dy in range(3):
        slab = h1_ref[dy:dy + H, :, :]                            # (H, Wp, Cout_p)
        taps = jnp.concatenate([slab[:, dx:dx + W, :] for dx in range(3)],
                               axis=-1)                           # (H, W, 3*Cout_p)
        acc_ref[...] += jnp.dot(taps.reshape(H * W, 3 * cout_p), w2_ref[dy],
                                preferred_element_type=jnp.float32)

    # ---- final ReLU (f32) then lane-dense bf16 store --------------------------
    out_ref[...] = jnp.maximum(acc_ref[...], 0.0).reshape(
        1, H, W, cout_p).astype(out_ref.dtype)


# ---------------------------------------------------------------------------
# Wrapper / glue
# ---------------------------------------------------------------------------
def _fold_bn(gamma, beta, mean, var, eps=1e-5):
    scale = (gamma / jnp.sqrt(var + eps)).astype(jnp.float32)
    bias = (beta - mean * scale).astype(jnp.float32)
    return scale, bias


def _round_up(x, m):
    return (x + m - 1) // m * m


def _full_spec(shape):
    nd = len(shape)
    return pl.BlockSpec(shape, lambda n, nd=nd: (0,) * nd)


def residual_block_forward(x_nchw, params, eps=1e-5):
    """Forward pass of ResidualBlock (stride=1). Input/output are NCHW, like PyTorch."""
    N, cin, H, W = x_nchw.shape
    cout = params["w1"].shape[0]
    cin_p = _round_up(cin, LANES)
    cout_p = _round_up(cout, LANES)
    wp = _round_up(W + 2, 8)          # padded width incl. halo, sublane-aligned

    # Fold BatchNorm (inference form) into conv weights + per-channel biases.
    s1, b1 = _fold_bn(params["g1"], params["b1"], params["m1"], params["v1"], eps)
    s2, b2 = _fold_bn(params["g2"], params["b2"], params["m2"], params["v2"], eps)

    # OIHW -> HWIO, fold BN scale into output channels, pad to 128 lanes, then
    # stack the 3 dx taps along the contraction axis: weight tile (3, 3*C, Cout_p).
    w1 = jnp.transpose(params["w1"], (2, 3, 1, 0)).astype(jnp.float32) * s1
    w2 = jnp.transpose(params["w2"], (2, 3, 1, 0)).astype(jnp.float32) * s2
    w1_p = jnp.zeros((3, 3, cin_p, cout_p), jnp.float32).at[:, :, :cin, :cout].set(w1)
    w2_p = jnp.zeros((3, 3, cout_p, cout_p), jnp.float32).at[:, :, :cout, :cout].set(w2)
    w1_cat = w1_p.reshape(3, 3 * cin_p, cout_p).astype(jnp.bfloat16)
    w2_cat = w2_p.reshape(3, 3 * cout_p, cout_p).astype(jnp.bfloat16)

    identity_shortcut = params.get("ws") is None
    if identity_shortcut:
        assert cin == cout, "identity shortcut requires in_channels == out_channels"
        ws_p = jnp.zeros((16, LANES), jnp.bfloat16)       # unused dummy (no eye matmul)
        b2_total = b2
    else:
        ss, bs = _fold_bn(params["gs"], params["bs"], params["ms"], params["vs"], eps)
        ws = jnp.transpose(params["ws"][:, :, 0, 0], (1, 0)).astype(jnp.float32) * ss
        ws_p = (jnp.zeros((cin_p, cout_p), jnp.float32)
                .at[:cin, :cout].set(ws).astype(jnp.bfloat16))
        b2_total = b2 + bs            # shortcut BN bias folded into conv2 bias

    b1_p = jnp.zeros((1, cout_p), jnp.float32).at[0, :cout].set(b1)
    b2_p = jnp.zeros((1, cout_p), jnp.float32).at[0, :cout].set(b2_total)

    # NCHW -> NHWC; halo + sublane-aligned width pad + channel pad in one pass.
    x = jnp.transpose(x_nchw, (0, 2, 3, 1)).astype(jnp.float32)
    xp = jnp.pad(x, ((0, 0), (1, 1), (1, wp - (W + 1)), (0, cin_p - cin))
                 ).astype(jnp.bfloat16)

    kernel = partial(_residual_block_kernel, identity_shortcut=identity_shortcut)

    out_nhwc = pl.pallas_call(
        kernel,
        out_shape=jax.ShapeDtypeStruct((N, H, W, cout_p), jnp.bfloat16),
        grid=(N,),
        in_specs=[
            pl.BlockSpec((1, H + 2, wp, cin_p), lambda n: (n, 0, 0, 0)),
            _full_spec(w1_cat.shape), _full_spec(b1_p.shape),
            _full_spec(w2_cat.shape), _full_spec(b2_p.shape),
            _full_spec(ws_p.shape),
        ],
        out_specs=pl.BlockSpec((1, H, W, cout_p), lambda n: (n, 0, 0, 0)),
        scratch_shapes=[
            pltpu.VMEM((H * W, cout_p), jnp.float32),        # shared f32 accumulator
            pltpu.VMEM((H + 2, wp, cout_p), jnp.bfloat16),   # conv2 staging (bf16)
        ],
        compiler_params=pltpu.CompilerParams(
            dimension_semantics=("parallel",),   # batch elts split across v7x's 2 TCs
            vmem_limit_bytes=32 * 1024 * 1024,
        ),
    )(xp, w1_cat, b1_p, w2_cat, b2_p, ws_p)

    # Drop channel padding (kernel stores were lane-dense), back to NCHW / f32.
    return jnp.transpose(out_nhwc[..., :cout].astype(jnp.float32), (0, 3, 1, 2))


# ---------------------------------------------------------------------------
# Pure-JAX reference (original conv->BN semantics, for correctness check)
# ---------------------------------------------------------------------------
def reference_forward(x_nchw, params, eps=1e-5):
    def conv(x, w, pad):
        return lax.conv_general_dilated(
            x, w, (1, 1), ((pad, pad), (pad, pad)),
            dimension_numbers=("NCHW", "OIHW", "NCHW"),
            precision=lax.Precision.HIGHEST)

    def bn(x, g, b, m, v):
        g, b, m, v = (t[None, :, None, None] for t in (g, b, m, v))
        return (x - m) / jnp.sqrt(v + eps) * g + b

    out = jax.nn.relu(bn(conv(x_nchw, params["w1"], 1),
                         params["g1"], params["b1"], params["m1"], params["v1"]))
    out = bn(conv(out, params["w2"], 1),
             params["g2"], params["b2"], params["m2"], params["v2"])
    if params.get("ws") is not None:
        sc = bn(conv(x_nchw, params["ws"], 0),
                params["gs"], params["bs"], params["ms"], params["vs"])
    else:
        sc = x_nchw
    return jax.nn.relu(out + sc)


# ---------------------------------------------------------------------------
# Deterministic parameter init (shapes follow the PyTorch module's __init__)
# ---------------------------------------------------------------------------
def init_params(key, in_channels, out_channels):
    ks = jax.random.split(key, 12)
    p = {
        "w1": 0.1 * jax.random.normal(ks[0], (out_channels, in_channels, 3, 3), jnp.float32),
        "g1": 1.0 + 0.1 * jax.random.normal(ks[1], (out_channels,), jnp.float32),
        "b1": 0.1 * jax.random.normal(ks[2], (out_channels,), jnp.float32),
        "m1": 0.1 * jax.random.normal(ks[3], (out_channels,), jnp.float32),
        "v1": 1.0 + 0.1 * jax.random.uniform(ks[4], (out_channels,), jnp.float32),
        "w2": 0.1 * jax.random.normal(ks[5], (out_channels, out_channels, 3, 3), jnp.float32),
        "g2": 1.0 + 0.1 * jax.random.normal(ks[6], (out_channels,), jnp.float32),
        "b2": 0.1 * jax.random.normal(ks[7], (out_channels,), jnp.float32),
        "m2": 0.1 * jax.random.normal(ks[8], (out_channels,), jnp.float32),
        "v2": 1.0 + 0.1 * jax.random.uniform(ks[9], (out_channels,), jnp.float32),
    }
    if in_channels != out_channels:  # projection shortcut (stride fixed to 1 here)
        ks2 = jax.random.split(ks[10], 5)
        p.update({
            "ws": 0.1 * jax.random.normal(ks2[0], (out_channels, in_channels, 1, 1), jnp.float32),
            "gs": 1.0 + 0.1 * jax.random.normal(ks2[1], (out_channels,), jnp.float32),
            "bs": 0.1 * jax.random.normal(ks2[2], (out_channels,), jnp.float32),
            "ms": 0.1 * jax.random.normal(ks2[3], (out_channels,), jnp.float32),
            "vs": 1.0 + 0.1 * jax.random.uniform(ks2[4], (out_channels,), jnp.float32),
        })
    else:
        p["ws"] = None
    return p


if __name__ == "__main__":
    key = jax.random.PRNGKey(0)
    k_x, k_p = jax.random.split(key)

    N, Cin, Cout, H, W = 2, 4, 8, 16, 16
    x = jax.random.normal(k_x, (N, Cin, H, W), jnp.float32)
    params = init_params(k_p, Cin, Cout)

    out = jax.block_until_ready(residual_block_forward(x, params))
    ref = jax.block_until_ready(reference_forward(x, params))

    assert out.shape == (N, Cout, H, W), out.shape
    # Kernel uses bf16 MXU operands, f32 accumulation, and a bf16 output cast;
    # compare against the pure-f32 reference with a bf16-appropriate tolerance.
    assert jnp.allclose(out, ref, atol=5e-2, rtol=5e-2), float(jnp.max(jnp.abs(out - ref)))

    print("KERNEL_OK")
</pallas_src>

<mosaic_0001>
module attributes {stable_mosaic.version = 11 : i64} {
  func.func @_residual_block_kernel(%arg0: i32, %arg1: memref<1x18x24x128xbf16, #tpu.memory_space<vmem>>, %arg2: memref<3x384x128xbf16, #tpu.memory_space<vmem>>, %arg3: memref<1x128xf32, #tpu.memory_space<vmem>>, %arg4: memref<3x384x128xbf16, #tpu.memory_space<vmem>>, %arg5: memref<1x128xf32, #tpu.memory_space<vmem>>, %arg6: memref<128x128xbf16, #tpu.memory_space<vmem>>, %arg7: memref<1x16x16x128xbf16, #tpu.memory_space<vmem>>, %arg8: memref<256x128xf32, #tpu.memory_space<vmem>>, %arg9: memref<18x24x128xbf16, #tpu.memory_space<vmem>>) attributes {dimension_semantics = [#tpu.dimension_semantics<parallel>], iteration_bounds = array<i64: 2>, scalar_prefetch = 0 : i64, scratch_operands = 2 : i64, tpu.core_type = #tpu.core_type<tc>, window_params = [{transform_indices = @transform_0, window_bounds = array<i64: 1, 18, 24, 128>}, {pipeline_mode = #tpu.pipeline_mode<synchronous>, transform_indices = @transform_1, window_bounds = array<i64: 3, 384, 128>}, {pipeline_mode = #tpu.pipeline_mode<synchronous>, transform_indices = @transform_2, window_bounds = array<i64: 1, 128>}, {pipeline_mode = #tpu.pipeline_mode<synchronous>, transform_indices = @transform_3, window_bounds = array<i64: 3, 384, 128>}, {pipeline_mode = #tpu.pipeline_mode<synchronous>, transform_indices = @transform_4, window_bounds = array<i64: 1, 128>}, {pipeline_mode = #tpu.pipeline_mode<synchronous>, transform_indices = @transform_5, window_bounds = array<i64: 128, 128>}, {transform_indices = @transform_6, window_bounds = array<i64: 1, 16, 16, 128>}]} {
    %c0 = arith.constant 0 : index
    %c0_0 = arith.constant 0 : index
    %0 = vector.load %arg3[%c0, %c0_0] : memref<1x128xf32, #tpu.memory_space<vmem>>, vector<1x128xf32>
    %1 = vector.shape_cast %0 : vector<1x128xf32> to vector<1x128xf32>
    %2 = vector.broadcast %1 : vector<1x128xf32> to vector<256x128xf32>
    %c0_1 = arith.constant 0 : index
    %c0_2 = arith.constant 0 : index
    %3 = vector.load %arg8[%c0_1, %c0_2] : memref<256x128xf32, #tpu.memory_space<vmem>>, vector<256x128xf32>
    tpu.vector_store %arg8[%c0_1, %c0_2], %2 {strides = array<i32>} : memref<256x128xf32, #tpu.memory_space<vmem>>, vector<256x128xf32>,
    %c0_3 = arith.constant 0 : index
    %c0_4 = arith.constant 0 : index
    %c0_5 = arith.constant 0 : index
    %c0_6 = arith.constant 0 : index
    %4 = vector.load %arg1[%c0_3, %c0_4, %c0_5, %c0_6] : memref<1x18x24x128xbf16, #tpu.memory_space<vmem>>, vector<1x16x24x128xbf16>
    %5 = vector.shape_cast %4 : vector<1x16x24x128xbf16> to vector<16x24x128xbf16>
    %6 = vector.extract_strided_slice %5 {offsets = [0, 0, 0], sizes = [16, 16, 128], strides = [1, 1, 1]} : vector<16x24x128xbf16> to vector<16x16x128xbf16>
    %7 = vector.extract_strided_slice %5 {offsets = [0, 1, 0], sizes = [16, 16, 128], strides = [1, 1, 1]} : vector<16x24x128xbf16> to vector<16x16x128xbf16>
    %8 = vector.extract_strided_slice %5 {offsets = [0, 2, 0], sizes = [16, 16, 128], strides = [1, 1, 1]} : vector<16x24x128xbf16> to vector<16x16x128xbf16>
    %9 = tpu.concatenate %6, %7, %8 in 2 : vector<16x16x128xbf16>, vector<16x16x128xbf16>, vector<16x16x128xbf16> -> vector<16x16x384xbf16>
    %c0_7 = arith.constant 0 : index
    %c0_8 = arith.constant 0 : index
    %10 = vector.load %arg8[%c0_7, %c0_8] : memref<256x128xf32, #tpu.memory_space<vmem>>, vector<256x128xf32>
    %11 = vector.shape_cast %9 : vector<16x16x384xbf16> to vector<256x384xbf16>
    %c0_9 = arith.constant 0 : index
    %c0_10 = arith.constant 0 : index
    %c0_11 = arith.constant 0 : index
    %12 = vector.load %arg2[%c0_9, %c0_10, %c0_11] : memref<3x384x128xbf16, #tpu.memory_space<vmem>>, vector<1x384x128xbf16>
    %13 = vector.shape_cast %12 : vector<1x384x128xbf16> to vector<384x128xbf16>
    %cst = arith.constant dense<0.000000e+00> : vector<256x128xf32>
    %14 = tpu.matmul %11, %13, %cst {dimension_numbers = #tpu.dot_dimension_numbers<[1], [0], [0], [1], [0, 0, 1, 1], [], []>} : vector<256x384xbf16>, vector<384x128xbf16>, vector<256x128xf32> -> vector<256x128xf32>
    %15 = arith.addf %10, %14 : vector<256x128xf32>
    %c0_12 = arith.constant 0 : index
    %c0_13 = arith.constant 0 : index
    %16 = vector.load %arg8[%c0_12, %c0_13] : memref<256x128xf32, #tpu.memory_space<vmem>>, vector<256x128xf32>
    tpu.vector_store %arg8[%c0_12, %c0_13], %15 {strides = array<i32>} : memref<256x128xf32, #tpu.memory_space<vmem>>, vector<256x128xf32>,
    %c0_14 = arith.constant 0 : index
    %c1 = arith.constant 1 : index
    %c0_15 = arith.constant 0 : index
    %c0_16 = arith.constant 0 : index
    %17 = vector.load %arg1[%c0_14, %c1, %c0_15, %c0_16] : memref<1x18x24x128xbf16, #tpu.memory_space<vmem>>, vector<1x16x24x128xbf16>
    %18 = vector.shape_cast %17 : vector<1x16x24x128xbf16> to vector<16x24x128xbf16>
    %19 = vector.extract_strided_slice %18 {offsets = [0, 0, 0], sizes = [16, 16, 128], strides = [1, 1, 1]} : vector<16x24x128xbf16> to vector<16x16x128xbf16>
    %20 = vector.extract_strided_slice %18 {offsets = [0, 1, 0], sizes = [16, 16, 128], strides = [1, 1, 1]} : vector<16x24x128xbf16> to vector<16x16x128xbf16>
    %21 = vector.extract_strided_slice %18 {offsets = [0, 2, 0], sizes = [16, 16, 128], strides = [1, 1, 1]} : vector<16x24x128xbf16> to vector<16x16x128xbf16>
    %22 = tpu.concatenate %19, %20, %21 in 2 : vector<16x16x128xbf16>, vector<16x16x128xbf16>, vector<16x16x128xbf16> -> vector<16x16x384xbf16>
    %c0_17 = arith.constant 0 : index
    %c0_18 = arith.constant 0 : index
    %23 = vector.load %arg8[%c0_17, %c0_18] : memref<256x128xf32, #tpu.memory_space<vmem>>, vector<256x128xf32>
    %24 = vector.shape_cast %22 : vector<16x16x384xbf16> to vector<256x384xbf16>
    %c1_19 = arith.constant 1 : index
    %c0_20 = arith.constant 0 : index
    %c0_21 = arith.constant 0 : index
    %25 = vector.load %arg2[%c1_19, %c0_20, %c0_21] : memref<3x384x128xbf16, #tpu.memory_space<vmem>>, vector<1x384x128xbf16>
    %26 = vector.shape_cast %25 : vector<1x384x128xbf16> to vector<384x128xbf16>
    %cst_22 = arith.constant dense<0.000000e+00> : vector<256x128xf32>
    %27 = tpu.matmul %24, %26, %cst_22 {dimension_numbers = #tpu.dot_dimension_numbers<[1], [0], [0], [1], [0, 0, 1, 1], [], []>} : vector<256x384xbf16>, vector<384x128xbf16>, vector<256x128xf32> -> vector<256x128xf32>
    %28 = arith.addf %23, %27 : vector<256x128xf32>
    %c0_23 = arith.constant 0 : index
    %c0_24 = arith.constant 0 : index
    %29 = vector.load %arg8[%c0_23, %c0_24] : memref<256x128xf32, #tpu.memory_space<vmem>>, vector<256x128xf32>
    tpu.vector_store %arg8[%c0_23, %c0_24], %28 {strides = array<i32>} : memref<256x128xf32, #tpu.memory_space<vmem>>, vector<256x128xf32>,
    %c0_25 = arith.constant 0 : index
    %c2 = arith.constant 2 : index
    %c0_26 = arith.constant 0 : index
    %c0_27 = arith.constant 0 : index
    %30 = vector.load %arg1[%c0_25, %c2, %c0_26, %c0_27] : memref<1x18x24x128xbf16, #tpu.memory_space<vmem>>, vector<1x16x24x128xbf16>
    %31 = vector.shape_cast %30 : vector<1x16x24x128xbf16> to vector<16x24x128xbf16>
    %32 = vector.extract_strided_slice %31 {offsets = [0, 0, 0], sizes = [16, 16, 128], strides = [1, 1, 1]} : vector<16x24x128xbf16> to vector<16x16x128xbf16>
    %33 = vector.extract_strided_slice %31 {offsets = [0, 1, 0], sizes = [16, 16, 128], strides = [1, 1, 1]} : vector<16x24x128xbf16> to vector<16x16x128xbf16>
    %34 = vector.extract_strided_slice %31 {offsets = [0, 2, 0], sizes = [16, 16, 128], strides = [1, 1, 1]} : vector<16x24x128xbf16> to vector<16x16x128xbf16>
    %35 = tpu.concatenate %32, %33, %34 in 2 : vector<16x16x128xbf16>, vector<16x16x128xbf16>, vector<16x16x128xbf16> -> vector<16x16x384xbf16>
    %c0_28 = arith.constant 0 : index
    %c0_29 = arith.constant 0 : index
    %36 = vector.load %arg8[%c0_28, %c0_29] : memref<256x128xf32, #tpu.memory_space<vmem>>, vector<256x128xf32>
    %37 = vector.shape_cast %35 : vector<16x16x384xbf16> to vector<256x384xbf16>
    %c2_30 = arith.constant 2 : index
    %c0_31 = arith.constant 0 : index
    %c0_32 = arith.constant 0 : index
    %38 = vector.load %arg2[%c2_30, %c0_31, %c0_32] : memref<3x384x128xbf16, #tpu.memory_space<vmem>>, vector<1x384x128xbf16>
    %39 = vector.shape_cast %38 : vector<1x384x128xbf16> to vector<384x128xbf16>
    %cst_33 = arith.constant dense<0.000000e+00> : vector<256x128xf32>
    %40 = tpu.matmul %37, %39, %cst_33 {dimension_numbers = #tpu.dot_dimension_numbers<[1], [0], [0], [1], [0, 0, 1, 1], [], []>} : vector<256x384xbf16>, vector<384x128xbf16>, vector<256x128xf32> -> vector<256x128xf32>
    %41 = arith.addf %36, %40 : vector<256x128xf32>
    %c0_34 = arith.constant 0 : index
    %c0_35 = arith.constant 0 : index
    %42 = vector.load %arg8[%c0_34, %c0_35] : memref<256x128xf32, #tpu.memory_space<vmem>>, vector<256x128xf32>
    tpu.vector_store %arg8[%c0_34, %c0_35], %41 {strides = array<i32>} : memref<256x128xf32, #tpu.memory_space<vmem>>, vector<256x128xf32>,
    %cst_36 = arith.constant 0.000000e+00 : bf16
    %43 = vector.broadcast %cst_36 : bf16 to vector<1x24x128xbf16>
    %c0_37 = arith.constant 0 : index
    %c0_38 = arith.constant 0 : index
    %c0_39 = arith.constant 0 : index
    %44 = vector.load %arg9[%c0_37, %c0_38, %c0_39] : memref<18x24x128xbf16, #tpu.memory_space<vmem>>, vector<1x24x128xbf16>
    tpu.vector_store %arg9[%c0_37, %c0_38, %c0_39], %43 {strides = array<i32>} : memref<18x24x128xbf16, #tpu.memory_space<vmem>>, vector<1x24x128xbf16>,
    %cst_40 = arith.constant 0.000000e+00 : bf16
    %45 = vector.broadcast %cst_40 : bf16 to vector<1x24x128xbf16>
    %c17 = arith.constant 17 : index
    %c0_41 = arith.constant 0 : index
    %c0_42 = arith.constant 0 : index
    %46 = vector.load %arg9[%c17, %c0_41, %c0_42] : memref<18x24x128xbf16, #tpu.memory_space<vmem>>, vector<1x24x128xbf16>
    tpu.vector_store %arg9[%c17, %c0_41, %c0_42], %45 {strides = array<i32>} : memref<18x24x128xbf16, #tpu.memory_space<vmem>>, vector<1x24x128xbf16>,
    %cst_43 = arith.constant 0.000000e+00 : bf16
    %47 = vector.broadcast %cst_43 : bf16 to vector<16x1x128xbf16>
    %c1_44 = arith.constant 1 : index
    %c0_45 = arith.constant 0 : index
    %c0_46 = arith.constant 0 : index
    %48 = vector.load %arg9[%c1_44, %c0_45, %c0_46] : memref<18x24x128xbf16, #tpu.memory_space<vmem>>, vector<16x1x128xbf16>
    tpu.vector_store %arg9[%c1_44, %c0_45, %c0_46], %47 {strides = array<i32>} : memref<18x24x128xbf16, #tpu.memory_space<vmem>>, vector<16x1x128xbf16>,
    %cst_47 = arith.constant 0.000000e+00 : bf16
    %49 = vector.broadcast %cst_47 : bf16 to vector<16x7x128xbf16>
    %c1_48 = arith.constant 1 : index
    %c17_49 = arith.constant 17 : index
    %c0_50 = arith.constant 0 : index
    %50 = vector.load %arg9[%c1_48, %c17_49, %c0_50] : memref<18x24x128xbf16, #tpu.memory_space<vmem>>, vector<16x7x128xbf16>
    tpu.vector_store %arg9[%c1_48, %c17_49, %c0_50], %49 {strides = array<i32>} : memref<18x24x128xbf16, #tpu.memory_space<vmem>>, vector<16x7x128xbf16>,
    %c0_51 = arith.constant 0 : index
    %c0_52 = arith.constant 0 : index
    %51 = vector.load %arg8[%c0_51, %c0_52] : memref<256x128xf32, #tpu.memory_space<vmem>>, vector<256x128xf32>
    %cst_53 = arith.constant 0.000000e+00 : f32
    %52 = vector.broadcast %cst_53 : f32 to vector<256x128xf32>
    %53 = arith.maximumf %51, %52 : vector<256x128xf32>
    %54 = arith.truncf %53 : vector<256x128xf32> to vector<256x128xbf16>
    %55 = vector.shape_cast %54 : vector<256x128xbf16> to vector<16x16x128xbf16>
    %c1_54 = arith.constant 1 : index
    %c1_55 = arith.constant 1 : index
    %c0_56 = arith.constant 0 : index
    %56 = vector.load %arg9[%c1_54, %c1_55, %c0_56] : memref<18x24x128xbf16, #tpu.memory_space<vmem>>, vector<16x16x128xbf16>
    tpu.vector_store %arg9[%c1_54, %c1_55, %c0_56], %55 {strides = array<i32>} : memref<18x24x128xbf16, #tpu.memory_space<vmem>>, vector<16x16x128xbf16>,
    %c0_57 = arith.constant 0 : index
    %c1_58 = arith.constant 1 : index
    %c1_59 = arith.constant 1 : index
    %c0_60 = arith.constant 0 : index
    %57 = vector.load %arg1[%c0_57, %c1_58, %c1_59, %c0_60] : memref<1x18x24x128xbf16, #tpu.memory_space<vmem>>, vector<1x16x16x128xbf16>
    %58 = vector.shape_cast %57 : vector<1x16x16x128xbf16> to vector<16x16x128xbf16>
    %59 = vector.shape_cast %58 : vector<16x16x128xbf16> to vector<256x128xbf16>
    %c0_61 = arith.constant 0 : index
    %c0_62 = arith.constant 0 : index
    %60 = vector.load %arg6[%c0_61, %c0_62] : memref<128x128xbf16, #tpu.memory_space<vmem>>, vector<128x128xbf16>
    %cst_63 = arith.constant dense<0.000000e+00> : vector<256x128xf32>
    %61 = tpu.matmul %59, %60, %cst_63 {dimension_numbers = #tpu.dot_dimension_numbers<[1], [0], [0], [1], [0, 0, 1, 1], [], []>} : vector<256x128xbf16>, vector<128x128xbf16>, vector<256x128xf32> -> vector<256x128xf32>
    %c0_64 = arith.constant 0 : index
    %c0_65 = arith.constant 0 : index
    %62 = vector.load %arg5[%c0_64, %c0_65] : memref<1x128xf32, #tpu.memory_space<vmem>>, vector<1x128xf32>
    %63 = vector.broadcast %62 : vector<1x128xf32> to vector<256x128xf32>
    %64 = arith.addf %61, %63 : vector<256x128xf32>
    %c0_66 = arith.constant 0 : index
    %c0_67 = arith.constant 0 : index
    %65 = vector.load %arg8[%c0_66, %c0_67] : memref<256x128xf32, #tpu.memory_space<vmem>>, vector<256x128xf32>
    tpu.vector_store %arg8[%c0_66, %c0_67], %64 {strides = array<i32>} : memref<256x128xf32, #tpu.memory_space<vmem>>, vector<256x128xf32>,
    %c0_68 = arith.constant 0 : index
    %c0_69 = arith.constant 0 : index
    %c0_70 = arith.constant 0 : index
    %66 = vector.load %arg9[%c0_68, %c0_69, %c0_70] : memref<18x24x128xbf16, #tpu.memory_space<vmem>>, vector<16x24x128xbf16>
    %67 = vector.extract_strided_slice %66 {offsets = [0, 0, 0], sizes = [16, 16, 128], strides = [1, 1, 1]} : vector<16x24x128xbf16> to vector<16x16x128xbf16>
    %68 = vector.extract_strided_slice %66 {offsets = [0, 1, 0], sizes = [16, 16, 128], strides = [1, 1, 1]} : vector<16x24x128xbf16> to vector<16x16x128xbf16>
    %69 = vector.extract_strided_slice %66 {offsets = [0, 2, 0], sizes = [16, 16, 128], strides = [1, 1, 1]} : vector<16x24x128xbf16> to vector<16x16x128xbf16>
    %70 = tpu.concatenate %67, %68, %69 in 2 : vector<16x16x128xbf16>, vector<16x16x128xbf16>, vector<16x16x128xbf16> -> vector<16x16x384xbf16>
    %c0_71 = arith.constant 0 : index
    %c0_72 = arith.constant 0 : index
    %71 = vector.load %arg8[%c0_71, %c0_72] : memref<256x128xf32, #tpu.memory_space<vmem>>, vector<256x128xf32>
    %72 = vector.shape_cast %70 : vector<16x16x384xbf16> to vector<256x384xbf16>
    %c0_73 = arith.constant 0 : index
    %c0_74 = arith.constant 0 : index
    %c0_75 = arith.constant 0 : index
    %73 = vector.load %arg4[%c0_73, %c0_74, %c0_75] : memref<3x384x128xbf16, #tpu.memory_space<vmem>>, vector<1x384x128xbf16>
    %74 = vector.shape_cast %73 : vector<1x384x128xbf16> to vector<384x128xbf16>
    %cst_76 = arith.constant dense<0.000000e+00> : vector<256x128xf32>
    %75 = tpu.matmul %72, %74, %cst_76 {dimension_numbers = #tpu.dot_dimension_numbers<[1], [0], [0], [1], [0, 0, 1, 1], [], []>} : vector<256x384xbf16>, vector<384x128xbf16>, vector<256x128xf32> -> vector<256x128xf32>
    %76 = arith.addf %71, %75 : vector<256x128xf32>
    %c0_77 = arith.constant 0 : index
    %c0_78 = arith.constant 0 : index
    %77 = vector.load %arg8[%c0_77, %c0_78] : memref<256x128xf32, #tpu.memory_space<vmem>>, vector<256x128xf32>
    tpu.vector_store %arg8[%c0_77, %c0_78], %76 {strides = array<i32>} : memref<256x128xf32, #tpu.memory_space<vmem>>, vector<256x128xf32>,
    %c1_79 = arith.constant 1 : index
    %c0_80 = arith.constant 0 : index
    %c0_81 = arith.constant 0 : index
    %78 = vector.load %arg9[%c1_79, %c0_80, %c0_81] : memref<18x24x128xbf16, #tpu.memory_space<vmem>>, vector<16x24x128xbf16>
    %79 = vector.extract_strided_slice %78 {offsets = [0, 0, 0], sizes = [16, 16, 128], strides = [1, 1, 1]} : vector<16x24x128xbf16> to vector<16x16x128xbf16>
    %80 = vector.extract_strided_slice %78 {offsets = [0, 1, 0], sizes = [16, 16, 128], strides = [1, 1, 1]} : vector<16x24x128xbf16> to vector<16x16x128xbf16>
    %81 = vector.extract_strided_slice %78 {offsets = [0, 2, 0], sizes = [16, 16, 128], strides = [1, 1, 1]} : vector<16x24x128xbf16> to vector<16x16x128xbf16>
    %82 = tpu.concatenate %79, %80, %81 in 2 : vector<16x16x128xbf16>, vector<16x16x128xbf16>, vector<16x16x128xbf16> -> vector<16x16x384xbf16>
    %c0_82 = arith.constant 0 : index
    %c0_83 = arith.constant 0 : index
    %83 = vector.load %arg8[%c0_82, %c0_83] : memref<256x128xf32, #tpu.memory_space<vmem>>, vector<256x128xf32>
    %84 = vector.shape_cast %82 : vector<16x16x384xbf16> to vector<256x384xbf16>
    %c1_84 = arith.constant 1 : index
    %c0_85 = arith.constant 0 : index
    %c0_86 = arith.constant 0 : index
    %85 = vector.load %arg4[%c1_84, %c0_85, %c0_86] : memref<3x384x128xbf16, #tpu.memory_space<vmem>>, vector<1x384x128xbf16>
    %86 = vector.shape_cast %85 : vector<1x384x128xbf16> to vector<384x128xbf16>
    %cst_87 = arith.constant dense<0.000000e+00> : vector<256x128xf32>
    %87 = tpu.matmul %84, %86, %cst_87 {dimension_numbers = #tpu.dot_dimension_numbers<[1], [0], [0], [1], [0, 0, 1, 1], [], []>} : vector<256x384xbf16>, vector<384x128xbf16>, vector<256x128xf32> -> vector<256x128xf32>
    %88 = arith.addf %83, %87 : vector<256x128xf32>
    %c0_88 = arith.constant 0 : index
    %c0_89 = arith.constant 0 : index
    %89 = vector.load %arg8[%c0_88, %c0_89] : memref<256x128xf32, #tpu.memory_space<vmem>>, vector<256x128xf32>
    tpu.vector_store %arg8[%c0_88, %c0_89], %88 {strides = array<i32>} : memref<256x128xf32, #tpu.memory_space<vmem>>, vector<256x128xf32>,
    %c2_90 = arith.constant 2 : index
    %c0_91 = arith.constant 0 : index
    %c0_92 = arith.constant 0 : index
    %90 = vector.load %arg9[%c2_90, %c0_91, %c0_92] : memref<18x24x128xbf16, #tpu.memory_space<vmem>>, vector<16x24x128xbf16>
    %91 = vector.extract_strided_slice %90 {offsets = [0, 0, 0], sizes = [16, 16, 128], strides = [1, 1, 1]} : vector<16x24x128xbf16> to vector<16x16x128xbf16>
    %92 = vector.extract_strided_slice %90 {offsets = [0, 1, 0], sizes = [16, 16, 128], strides = [1, 1, 1]} : vector<16x24x128xbf16> to vector<16x16x128xbf16>
    %93 = vector.extract_strided_slice %90 {offsets = [0, 2, 0], sizes = [16, 16, 128], strides = [1, 1, 1]} : vector<16x24x128xbf16> to vector<16x16x128xbf16>
    %94 = tpu.concatenate %91, %92, %93 in 2 : vector<16x16x128xbf16>, vector<16x16x128xbf16>, vector<16x16x128xbf16> -> vector<16x16x384xbf16>
    %c0_93 = arith.constant 0 : index
    %c0_94 = arith.constant 0 : index
    %95 = vector.load %arg8[%c0_93, %c0_94] : memref<256x128xf32, #tpu.memory_space<vmem>>, vector<256x128xf32>
    %96 = vector.shape_cast %94 : vector<16x16x384xbf16> to vector<256x384xbf16>
    %c2_95 = arith.constant 2 : index
    %c0_96 = arith.constant 0 : index
    %c0_97 = arith.constant 0 : index
    %97 = vector.load %arg4[%c2_95, %c0_96, %c0_97] : memref<3x384x128xbf16, #tpu.memory_space<vmem>>, vector<1x384x128xbf16>
    %98 = vector.shape_cast %97 : vector<1x384x128xbf16> to vector<384x128xbf16>
    %cst_98 = arith.constant dense<0.000000e+00> : vector<256x128xf32>
    %99 = tpu.matmul %96, %98, %cst_98 {dimension_numbers = #tpu.dot_dimension_numbers<[1], [0], [0], [1], [0, 0, 1, 1], [], []>} : vector<256x384xbf16>, vector<384x128xbf16>, vector<256x128xf32> -> vector<256x128xf32>
    %100 = arith.addf %95, %99 : vector<256x128xf32>
    %c0_99 = arith.constant 0 : index
    %c0_100 = arith.constant 0 : index
    %101 = vector.load %arg8[%c0_99, %c0_100] : memref<256x128xf32, #tpu.memory_space<vmem>>, vector<256x128xf32>
    tpu.vector_store %arg8[%c0_99, %c0_100], %100 {strides = array<i32>} : memref<256x128xf32, #tpu.memory_space<vmem>>, vector<256x128xf32>,
    %c0_101 = arith.constant 0 : index
    %c0_102 = arith.constant 0 : index
    %102 = vector.load %arg8[%c0_101, %c0_102] : memref<256x128xf32, #tpu.memory_space<vmem>>, vector<256x128xf32>
    %cst_103 = arith.constant 0.000000e+00 : f32
    %103 = vector.broadcast %cst_103 : f32 to vector<256x128xf32>
    %104 = arith.maximumf %102, %103 : vector<256x128xf32>
    %105 = vector.shape_cast %104 : vector<256x128xf32> to vector<1x16x16x128xf32>
    %106 = arith.truncf %105 : vector<1x16x16x128xf32> to vector<1x16x16x128xbf16>
    %c0_104 = arith.constant 0 : index
    %c0_105 = arith.constant 0 : index
    %c0_106 = arith.constant 0 : index
    %c0_107 = arith.constant 0 : index
    %107 = vector.load %arg7[%c0_104, %c0_105, %c0_106, %c0_107] : memref<1x16x16x128xbf16, #tpu.memory_space<vmem>>, vector<1x16x16x128xbf16>
    tpu.vector_store %arg7[%c0_104, %c0_105, %c0_106, %c0_107], %106 {strides = array<i32>} : memref<1x16x16x128xbf16, #tpu.memory_space<vmem>>, vector<1x16x16x128xbf16>,
    return
  }
  func.func @transform_0(%arg0: i32) -> (i32, i32, i32, i32) {
    %c0_i32 = arith.constant 0 : i32
    %c0_i32_0 = arith.constant 0 : i32
    %c0_i32_1 = arith.constant 0 : i32
    %c0_i32_2 = arith.constant 0 : i32
    return %arg0, %c0_i32, %c0_i32_0, %c0_i32_1 : i32, i32, i32, i32
  }
  func.func @transform_1(%arg0: i32) -> (i32, i32, i32) {
    %c0_i32 = arith.constant 0 : i32
    %c0_i32_0 = arith.constant 0 : i32
    %c0_i32_1 = arith.constant 0 : i32
    %c0_i32_2 = arith.constant 0 : i32
    return %c0_i32, %c0_i32_0, %c0_i32_1 : i32, i32, i32
  }
  func.func @transform_2(%arg0: i32) -> (i32, i32) {
    %c0_i32 = arith.constant 0 : i32
    %c0_i32_0 = arith.constant 0 : i32
    %c0_i32_1 = arith.constant 0 : i32
    return %c0_i32, %c0_i32_0 : i32, i32
  }
  func.func @transform_3(%arg0: i32) -> (i32, i32, i32) {
    %c0_i32 = arith.constant 0 : i32
    %c0_i32_0 = arith.constant 0 : i32
    %c0_i32_1 = arith.constant 0 : i32
    %c0_i32_2 = arith.constant 0 : i32
    return %c0_i32, %c0_i32_0, %c0_i32_1 : i32, i32, i32
  }
  func.func @transform_4(%arg0: i32) -> (i32, i32) {
    %c0_i32 = arith.constant 0 : i32
    %c0_i32_0 = arith.constant 0 : i32
    %c0_i32_1 = arith.constant 0 : i32
    return %c0_i32, %c0_i32_0 : i32, i32
  }
  func.func @transform_5(%arg0: i32) -> (i32, i32) {
    %c0_i32 = arith.constant 0 : i32
    %c0_i32_0 = arith.constant 0 : i32
    %c0_i32_1 = arith.constant 0 : i32
    return %c0_i32, %c0_i32_0 : i32, i32
  }
  func.func @transform_6(%arg0: i32) -> (i32, i32, i32, i32) {
    %c0_i32 = arith.constant 0 : i32
    %c0_i32_0 = arith.constant 0 : i32
    %c0_i32_1 = arith.constant 0 : i32
    %c0_i32_2 = arith.constant 0 : i32
    return %arg0, %c0_i32, %c0_i32_0, %c0_i32_1 : i32, i32, i32, i32
  }
}

</mosaic_0001>

<llo_original>
// kernel: tpu_custom_call.1
$region0: #{tpu_custom_call.1}
  #allocation0 [shape = 'u32[]', space=smem, size = 0x4, offset = 0x4, fixed_abs, tag = 'smem constant byte address 0x4 - core index']
  #allocation1 [shape = 'u32[144,128]{1,0:T(1,128)}', space=vmem, size = 0x12000, scoped, tag = 'internal scratch']
  #allocation2 [shape = 'f32[256,128]{1,0:T(8,128)}', space=vmem, size = 0x20000, scoped, tag = 'scratch operand']
  #allocation3 [shape = 'bf16[18,24,128]{2,1,0:T(8,128)(2,1)}', space=vmem, size = 0x1b000, scoped, tag = 'scratch operand']
  %s0 = inlined_call_operand.hbm [shape: bf16[2,18,24,128], index: 0, kind: input, shape index: {}]
  %s1 = inlined_call_operand.hbm [shape: bf16[3,384,128], index: 1, kind: input, shape index: {}]
  %s2 = inlined_call_operand.vmem [shape: f32[1,128], index: 2, kind: input, shape index: {}]
  %s3 = inlined_call_operand.hbm [shape: bf16[3,384,128], index: 3, kind: input, shape index: {}]
  %s4 = inlined_call_operand.vmem [shape: f32[1,128], index: 4, kind: input, shape index: {}]
  %s5 = inlined_call_operand.hbm [shape: bf16[128,128], index: 5, kind: input, shape index: {}]
  %s6 = inlined_call_operand.hbm [shape: bf16[2,16,16,128], index: 6, kind: output, shape index: {}]
  %s7 = sld [smem:[#allocation0]]
  $region73: #{tpu_custom_call.1} parent=0
    _
  %s9 = ssub.s32 1, %s7
  %s10 = scalar_select 0, %s9, %s7
  $region1: #{tpu_custom_call.1} parent=0
    #allocation4 [shape = 'u8[221184]{0}', space=vmem, size = 0x36000, scoped, tag = 'input window, operand 0']
    #allocation5 [shape = 's32[2]{0}', space=sflag, size = 0x8, scoped, tag = 'scoped memory for tpu_custom_call.1']
    #allocation6 [shape = 's32[2]{0}', space=sflag, size = 0x8, scoped, tag = 'scoped memory for tpu_custom_call.1']
    #allocation7 [shape = 'u8[294912]{0}', space=vmem, size = 0x48000, scoped, tag = 'input window, operand 1, single buffered']
    #allocation8 [shape = 's32[1]{0}', space=sflag, size = 0x4, scoped, tag = 'scoped memory for tpu_custom_call.1']
    #allocation9 [shape = 'u8[294912]{0}', space=vmem, size = 0x48000, scoped, tag = 'input window, operand 3, single buffered']
    #allocation10 [shape = 'u8[32768]{0}', space=vmem, size = 0x8000, scoped, tag = 'input window, operand 5, single buffered']
    #allocation11 [shape = 's32[1]{0}', space=sflag, size = 0x4, scoped, tag = 'scoped memory for tpu_custom_call.1']
    #allocation12 [shape = 'u8[131072]{0}', space=vmem, size = 0x20000, scoped, tag = 'output window, operand 0']
    %11 = vsyncpa [#allocation5], 0
    %s12 = scalar_lea.sflag [#allocation5], 1
    %13 = vsyncpa %s12, 0
    %14 = vsyncpa [#allocation8], 0
    %15 = vsyncpa [#allocation11], 0
    %16 = vsyncpa [#allocation6], 0
    %s17 = scalar_lea.sflag [#allocation6], 1
    %18 = vsyncpa %s17, 0
    loop: start=0, step=1, limit=4
    $region2: #{tpu_custom_call.1} parent=1 // loop_pre_header
      _
    $region3: #{tpu_custom_call.1} parent=1 // loop_header
      %s20 = sphi 0, %s24
      %p21 = scmp.ge.s32.totalorder %s20, 4
      %s30 = sphi 0, %s32
      %s33 = sphi 0, %s30
      %s34 = sphi 0, %s33
      %s50 = sphi 0, %s34
      %s54 = sphi 0, %s54
      %s56 = sphi 0, %s54
      %s57 = sphi 0, %s56
      %s71 = sphi 0, %s57
      %s75 = sphi 0, %s75
      %s77 = sphi 0, %s75
      %s78 = sphi 0, %s77
      %s92 = sphi 0, %s78
      %s96 = sphi 0, %s96
      %s98 = sphi 0, %s96
      %s99 = sphi 0, %s98
      %s113 = sphi 0, %s99
      %s117 = sphi 0, %s117
      %s119 = sphi 0, %s117
      %s120 = sphi 0, %s119
      %s134 = sphi 0, %s120
      %s138 = sphi 0, %s138
      %s140 = sphi 0, %s138
      %s141 = sphi 0, %s140
      %s155 = sphi 0, %s141
      %s161 = sphi 0, %s163
      %s164 = sphi 0, %s161
      %s165 = sphi 0, %s164
      %s181 = sphi 0, %s165
    $region4: #{tpu_custom_call.1} parent=1 // loop_header_branch
      %23 = sbr.rel (%p21) target = $region8
    $region5: #{tpu_custom_call.1} parent=1 // loop_body
      %s25 = ssub.s32 %s20, 1
      %s26 = ssub.s32 %s20, 2
      %s27 = sadd.s32 %s20, 1
      %s28 = ssub.s32 %s20, %s27
      %p29 = scmp.eq.s32.totalorder %s28, 0
      %s31 = sadd.s32 %s30, 1
      %s32 = scalar_select %p29, %s30, %s31
      %p35 = pneg %p29
      %p36 = scmp.eq.s32.totalorder %s20, 1
      %p37 = por %p35, %p36
      %p38 = scmp.ne.s32.totalorder %s30, %s33
      %p39 = scmp.eq.s32.totalorder %s20, 0
      %p40 = por %p38, %p39
      %p41 = scmp.ne.s32.totalorder %s30, %s33
      %p42 = scmp.eq.s32.totalorder %s25, 1
      %p43 = por %p41, %p42
      %p44 = scmp.ne.s32.totalorder %s33, %s34
      %p45 = scmp.eq.s32.totalorder %s25, 0
      %p46 = por %p44, %p45
      %p47 = scmp.ne.s32.totalorder %s33, %s34
      %p48 = scmp.eq.s32.totalorder %s26, 1
      %p49 = por %p47, %p48
      %p51 = scmp.ne.s32.totalorder %s34, %s50
      %p52 = scmp.eq.s32.totalorder %s26, 0
      %p53 = por %p51, %p52
      %s55 = sadd.s32 %s54, 1
      %p58 = scmp.eq.s32.totalorder %s20, 1
      %p59 = scmp.ne.s32.totalorder %s54, %s56
      %p60 = scmp.eq.s32.totalorder %s20, 0
      %p61 = por %p59, %p60
      %p62 = scmp.ne.s32.totalorder %s54, %s56
      %p63 = scmp.eq.s32.totalorder %s25, 1
      %p64 = por %p62, %p63
      %p65 = scmp.ne.s32.totalorder %s56, %s57
      %p66 = scmp.eq.s32.totalorder %s25, 0
      %p67 = por %p65, %p66
      %p68 = scmp.ne.s32.totalorder %s56, %s57
      %p69 = scmp.eq.s32.totalorder %s26, 1
      %p70 = por %p68, %p69
      %p72 = scmp.ne.s32.totalorder %s57, %s71
      %p73 = scmp.eq.s32.totalorder %s26, 0
      %p74 = por %p72, %p73
      %s76 = sadd.s32 %s75, 1
      %p79 = scmp.eq.s32.totalorder %s20, 1
      %p80 = scmp.ne.s32.totalorder %s75, %s77
      %p81 = scmp.eq.s32.totalorder %s20, 0
      %p82 = por %p80, %p81
      %p83 = scmp.ne.s32.totalorder %s75, %s77
      %p84 = scmp.eq.s32.totalorder %s25, 1
      %p85 = por %p83, %p84
      %p86 = scmp.ne.s32.totalorder %s77, %s78
      %p87 = scmp.eq.s32.totalorder %s25, 0
      %p88 = por %p86, %p87
      %p89 = scmp.ne.s32.totalorder %s77, %s78
      %p90 = scmp.eq.s32.totalorder %s26, 1
      %p91 = por %p89, %p90
      %p93 = scmp.ne.s32.totalorder %s78, %s92
      %p94 = scmp.eq.s32.totalorder %s26, 0
      %p95 = por %p93, %p94
      %s97 = sadd.s32 %s96, 1
      %p100 = scmp.eq.s32.totalorder %s20, 1
      %p101 = scmp.ne.s32.totalorder %s96, %s98
      %p102 = scmp.eq.s32.totalorder %s20, 0
      %p103 = por %p101, %p102
      %p104 = scmp.ne.s32.totalorder %s96, %s98
      %p105 = scmp.eq.s32.totalorder %s25, 1
      %p106 = por %p104, %p105
      %p107 = scmp.ne.s32.totalorder %s98, %s99
      %p108 = scmp.eq.s32.totalorder %s25, 0
      %p109 = por %p107, %p108
      %p110 = scmp.ne.s32.totalorder %s98, %s99
      %p111 = scmp.eq.s32.totalorder %s26, 1
      %p112 = por %p110, %p111
      %p114 = scmp.ne.s32.totalorder %s99, %s113
      %p115 = scmp.eq.s32.totalorder %s26, 0
      %p116 = por %p114, %p115
      %s118 = sadd.s32 %s117, 1
      %p121 = scmp.eq.s32.totalorder %s20, 1
      %p122 = scmp.ne.s32.totalorder %s117, %s119
      %p123 = scmp.eq.s32.totalorder %s20, 0
      %p124 = por %p122, %p123
      %p125 = scmp.ne.s32.totalorder %s117, %s119
      %p126 = scmp.eq.s32.totalorder %s25, 1
      %p127 = por %p125, %p126
      %p128 = scmp.ne.s32.totalorder %s119, %s120
      %p129 = scmp.eq.s32.totalorder %s25, 0
      %p130 = por %p128, %p129
      %p131 = scmp.ne.s32.totalorder %s119, %s120
      %p132 = scmp.eq.s32.totalorder %s26, 1
      %p133 = por %p131, %p132
      %p135 = scmp.ne.s32.totalorder %s120, %s134
      %p136 = scmp.eq.s32.totalorder %s26, 0
      %p137 = por %p135, %p136
      %s139 = sadd.s32 %s138, 1
      %p142 = scmp.eq.s32.totalorder %s20, 1
      %p143 = scmp.ne.s32.totalorder %s138, %s140
      %p144 = scmp.eq.s32.totalorder %s20, 0
      %p145 = por %p143, %p144
      %p146 = scmp.ne.s32.totalorder %s138, %s140
      %p147 = scmp.eq.s32.totalorder %s25, 1
      %p148 = por %p146, %p147
      %p149 = scmp.ne.s32.totalorder %s140, %s141
      %p150 = scmp.eq.s32.totalorder %s25, 0
      %p151 = por %p149, %p150
      %p152 = scmp.ne.s32.totalorder %s140, %s141
      %p153 = scmp.eq.s32.totalorder %s26, 1
      %p154 = por %p152, %p153
      %p156 = scmp.ne.s32.totalorder %s141, %s155
      %p157 = scmp.eq.s32.totalorder %s26, 0
      %p158 = por %p156, %p157
      %s159 = ssub.s32 %s20, %s27
      %p160 = scmp.eq.s32.totalorder %s159, 0
      %s162 = sadd.s32 %s161, 1
      %s163 = scalar_select %p160, %s161, %s162
      %p166 = pneg %p160
      %p167 = scmp.eq.s32.totalorder %s20, 1
      %p168 = por %p166, %p167
      %p169 = scmp.ne.s32.totalorder %s161, %s164
      %p170 = scmp.eq.s32.totalorder %s20, 0
      %p171 = por %p169, %p170
      %p172 = scmp.ne.s32.totalorder %s161, %s164
      %p173 = scmp.eq.s32.totalorder %s25, 1
      %p174 = por %p172, %p173
      %p175 = scmp.ne.s32.totalorder %s164, %s165
      %p176 = scmp.eq.s32.totalorder %s25, 0
      %p177 = por %p175, %p176
      %p178 = scmp.ne.s32.totalorder %s164, %s165
      %p179 = scmp.eq.s32.totalorder %s26, 1
      %p180 = por %p178, %p179
      %p182 = scmp.ne.s32.totalorder %s165, %s181
      %p183 = scmp.eq.s32.totalorder %s26, 0
      %p184 = por %p182, %p183
      %p185 = scmp.le.s32.totalorder 1, %s20
      %p186 = scmp.lt.s32.totalorder %s20, 3
      %p187 = pnand %p185, %p186
      %p188 = pneg %p187
      // Predicated region
      $region9: #{tpu_custom_call.1} parent=5 // pred_check
        _
      $region10: #{tpu_custom_call.1} parent=5 // pred_check_branch
        %190 = sbr.rel (%p187) target = $region12
      $region11: #{tpu_custom_call.1} parent=5 // pred_region
        %s191 = ssub.s32 %s20, 1
        // Predicated region
        $region13: #{tpu_custom_call.1} parent=11 // pred_check
          %p192 = pneg %p67
        $region14: #{tpu_custom_call.1} parent=11 // pred_check_branch
          %194 = sbr.rel (%p192) target = $region16
        $region15: #{tpu_custom_call.1} parent=11 // pred_region
          %s196 = ssub.s32 9216, 9216
          %197 = vsyncadd [#allocation8], %s196
          %s198 = sshll.u32 [#allocation7], 4
          %s199 = int_to_ptr.vmem [resolvable:$true] %s198
          %204 = dma.hbm_to_vmem [thread:$0]  %s1, 9216, %s199, [#allocation8], 64, 64, 4
        $region16: #{tpu_custom_call.1} parent=11 // pred_fallthru
          _
        // Predicated region
        $region17: #{tpu_custom_call.1} parent=11 // pred_check
          %p205 = pneg %p88
        $region18: #{tpu_custom_call.1} parent=11 // pred_check_branch
          %207 = sbr.rel (%p205) target = $region20
        $region19: #{tpu_custom_call.1} parent=11 // pred_region
          _
        $region20: #{tpu_custom_call.1} parent=11 // pred_fallthru
          _
        // Predicated region
        $region21: #{tpu_custom_call.1} parent=11 // pred_check
          %p208 = pneg %p109
        $region22: #{tpu_custom_call.1} parent=11 // pred_check_branch
          %210 = sbr.rel (%p208) target = $region24
        $region23: #{tpu_custom_call.1} parent=11 // pred_region
          %s212 = ssub.s32 9216, 9216
          %213 = vsyncadd [#allocation8], %s212
          %s214 = sshll.u32 [#allocation9], 4
          %s215 = int_to_ptr.vmem [resolvable:$true] %s214
          %220 = dma.hbm_to_vmem [thread:$0]  %s3, 9216, %s215, [#allocation8], 64, 64, 4
        $region24: #{tpu_custom_call.1} parent=11 // pred_fallthru
          _
        // Predicated region
        $region25: #{tpu_custom_call.1} parent=11 // pred_check
          %p221 = pneg %p130
        $region26: #{tpu_custom_call.1} parent=11 // pred_check_branch
          %223 = sbr.rel (%p221) target = $region28
        $region27: #{tpu_custom_call.1} parent=11 // pred_region
          _
        $region28: #{tpu_custom_call.1} parent=11 // pred_fallthru
          _
        // Predicated region
        $region29: #{tpu_custom_call.1} parent=11 // pred_check
          %p224 = pneg %p151
        $region30: #{tpu_custom_call.1} parent=11 // pred_check_branch
          %226 = sbr.rel (%p224) target = $region32
        $region31: #{tpu_custom_call.1} parent=11 // pred_region
          %s228 = ssub.s32 1024, 1024
          %229 = vsyncadd [#allocation11], %s228
          %s230 = sshll.u32 [#allocation10], 4
          %s231 = int_to_ptr.vmem [resolvable:$true] %s230
          %236 = dma.hbm_to_vmem [thread:$0]  %s5, 1024, %s231, [#allocation11], 64, 64, 4
        $region32: #{tpu_custom_call.1} parent=11 // pred_fallthru
          _
      $region12: #{tpu_custom_call.1} parent=5 // pred_fallthru
        _
      %p237 = scmp.lt.s32.totalorder %s20, 2
      // Predicated region
      $region33: #{tpu_custom_call.1} parent=5 // pred_check
        %p238 = pneg %p237
      $region34: #{tpu_custom_call.1} parent=5 // pred_check_branch
        %240 = sbr.rel (%p238) target = $region36
      $region35: #{tpu_custom_call.1} parent=5 // pred_region
        // Predicated region
        $region37: #{tpu_custom_call.1} parent=35 // pred_check
          %p241 = pneg %p40
        $region38: #{tpu_custom_call.1} parent=35 // pred_check_branch
          %243 = sbr.rel (%p241) target = $region40
        $region39: #{tpu_custom_call.1} parent=35 // pred_region
          %s244 = sand.u32 %s30, 1
          %s245 = scalar_lea.sflag [#allocation5], %s244
          %s246 = sand.u32 %s30, 1
          %s247 = smul.addr %s246, 216
          %s248 = scalar_lea.vmem [#allocation4], %s247
          %s250 = ssub.s32 3456, 3456
          %251 = vsyncadd %s245, %s250
          %s252 = smul.addr %s20, 54
          %s253 = smul.addr %s252, 64
          %s254 = scalar_lea.hbm %s0, %s253
          %s255 = sshll.u32 %s248, 4
          %s256 = int_to_ptr.vmem [resolvable:$true] %s255
          %261 = dma.hbm_to_vmem [thread:$0]  %s254, 3456, %s256, %s245, 64, 64, 4
        $region40: #{tpu_custom_call.1} parent=35 // pred_fallthru
          _
      $region36: #{tpu_custom_call.1} parent=5 // pred_fallthru
        _
      %p262 = scmp.le.s32.totalorder 1, %s20
      %p263 = scmp.lt.s32.totalorder %s20, 3
      %p264 = pnand %p262, %p263
      %p265 = pneg %p264
      // Predicated region
      $region41: #{tpu_custom_call.1} parent=5 // pred_check
        _
      $region42: #{tpu_custom_call.1} parent=5 // pred_check_branch
        %267 = sbr.rel (%p264) target = $region44
      $region43: #{tpu_custom_call.1} parent=5 // pred_region
        %s268 = ssub.s32 %s20, 1
        %s269 = sand.u32 %s33, 1
        %s270 = scalar_lea.sflag [#allocation5], %s269
        %s271 = sand.u32 %s33, 1
        %s272 = smul.addr %s271, 216
        %s273 = scalar_lea.vmem [#allocation4], %s272
        // Predicated region
        $region45: #{tpu_custom_call.1} parent=43 // pred_check
          %p274 = pneg %p46
        $region46: #{tpu_custom_call.1} parent=43 // pred_check_branch
          %276 = sbr.rel (%p274) target = $region48
        $region47: #{tpu_custom_call.1} parent=43 // pred_region
          %277 = dma.done %s270, 3456
        $region48: #{tpu_custom_call.1} parent=43 // pred_fallthru
          _
        // Predicated region
        $region49: #{tpu_custom_call.1} parent=43 // pred_check
          %p278 = pneg %p67
        $region50: #{tpu_custom_call.1} parent=43 // pred_check_branch
          %280 = sbr.rel (%p278) target = $region52
        $region51: #{tpu_custom_call.1} parent=43 // pred_region
          %281 = dma.done [#allocation8], 9216
        $region52: #{tpu_custom_call.1} parent=43 // pred_fallthru
          _
        // Predicated region
        $region53: #{tpu_custom_call.1} parent=43 // pred_check
          %p282 = pneg %p109
        $region54: #{tpu_custom_call.1} parent=43 // pred_check_branch
          %284 = sbr.rel (%p282) target = $region56
        $region55: #{tpu_custom_call.1} parent=43 // pred_region
          %285 = dma.done [#allocation8], 9216
        $region56: #{tpu_custom_call.1} parent=43 // pred_fallthru
          _
        // Predicated region
        $region57: #{tpu_custom_call.1} parent=43 // pred_check
          %p286 = pneg %p151
        $region58: #{tpu_custom_call.1} parent=43 // pred_check_branch
          %288 = sbr.rel (%p286) target = $region60
        $region59: #{tpu_custom_call.1} parent=43 // pred_region
          %289 = dma.done [#allocation11], 1024
        $region60: #{tpu_custom_call.1} parent=43 // pred_fallthru
          _
        %s290 = sand.u32 %s33, 1
        %s291 = scalar_lea.sflag [#allocation5], %s290
        %s292 = sand.u32 %s33, 1
        %s293 = smul.addr %s292, 216
        %s294 = scalar_lea.vmem [#allocation4], %s293
        %p295 = pneg %p46
        %p296 = pneg %p43
        %p297 = pneg %p67
        %p298 = pneg %p64
        %p299 = pneg %p88
        %p300 = pneg %p85
        %p301 = pneg %p109
        %p302 = pneg %p106
        %p303 = pneg %p130
        %p304 = pneg %p127
        %p305 = pneg %p151
        %p306 = pneg %p148
        %p307 = pneg %p177
        %p308 = pneg %p174
        %s309 = sand.u32 %s164, 1
        %s310 = scalar_lea.sflag [#allocation6], %s309
        %s311 = sand.u32 %s164, 1
        %s312 = smul.addr %s311, 128
        %s313 = scalar_lea.vmem [#allocation12], %s312
        %v315 = vld [vmem:[%s2] sm:$0x1]
        %v317 = vlaneseq
        %v318 = vshrl.u32 %v317, 7
        %v319 = vsub.s32 0, %v318
        %v320 = vrot.slane %v315, %v319
        %322 = vst [vmem:[#allocation2] sm:$0xff] %v320
        %323 = vst [vmem:[#allocation2 + $0x8] sm:$0xff] %v320
        %324 = vst [vmem:[#allocation2 + $0x10] sm:$0xff] %v320
        %325 = vst [vmem:[#allocation2 + $0x18] sm:$0xff] %v320
        %326 = vst [vmem:[#allocation2 + $0x20] sm:$0xff] %v320
        %327 = vst [vmem:[#allocation2 + $0x28] sm:$0xff] %v320
        %328 = vst [vmem:[#allocation2 + $0x30] sm:$0xff] %v320
        %329 = vst [vmem:[#allocation2 + $0x38] sm:$0xff] %v320
        %330 = vst [vmem:[#allocation2 + $0x40] sm:$0xff] %v320
        %331 = vst [vmem:[#allocation2 + $0x48] sm:$0xff] %v320
        %332 = vst [vmem:[#allocation2 + $0x50] sm:$0xff] %v320
        %333 = vst [vmem:[#allocation2 + $0x58] sm:$0xff] %v320
        %334 = vst [vmem:[#allocation2 + $0x60] sm:$0xff] %v320
        %335 = vst [vmem:[#allocation2 + $0x68] sm:$0xff] %v320
        %336 = vst [vmem:[#allocation2 + $0x70] sm:$0xff] %v320
        %337 = vst [vmem:[#allocation2 + $0x78] sm:$0xff] %v320
        %338 = vst [vmem:[#allocation2 + $0x80] sm:$0xff] %v320
        %339 = vst [vmem:[#allocation2 + $0x88] sm:$0xff] %v320
        %340 = vst [vmem:[#allocation2 + $0x90] sm:$0xff] %v320
        %341 = vst [vmem:[#allocation2 + $0x98] sm:$0xff] %v320
        %342 = vst [vmem:[#allocation2 + $0xa0] sm:$0xff] %v320
        %343 = vst [vmem:[#allocation2 + $0xa8] sm:$0xff] %v320
        %344 = vst [vmem:[#allocation2 + $0xb0] sm:$0xff] %v320
        %345 = vst [vmem:[#allocation2 + $0xb8] sm:$0xff] %v320
        %346 = vst [vmem:[#allocation2 + $0xc0] sm:$0xff] %v320
        %347 = vst [vmem:[#allocation2 + $0xc8] sm:$0xff] %v320
        %348 = vst [vmem:[#allocation2 + $0xd0] sm:$0xff] %v320
        %349 = vst [vmem:[#allocation2 + $0xd8] sm:$0xff] %v320
        %350 = vst [vmem:[#allocation2 + $0xe0] sm:$0xff] %v320
        %351 = vst [vmem:[#allocation2 + $0xe8] sm:$0xff] %v320
        %352 = vst [vmem:[#allocation2 + $0xf0] sm:$0xff] %v320
        %353 = vst [vmem:[#allocation2 + $0xf8] sm:$0xff] %v320
        %v354 = vld [vmem:[%s273] sm:$0xf]
        %v355 = vld [vmem:[%s273 + $0x4] sm:$0xf]
        %v356 = vld [vmem:[%s273 + $0x8] sm:$0xf]
        %v357 = vld [vmem:[%s273 + $0xc] sm:$0xf]
        %v358 = vld [vmem:[%s273 + $0x10] sm:$0xf]
        %v359 = vld [vmem:[%s273 + $0x14] sm:$0xf]
        %v360 = vld [vmem:[%s273 + $0x18] sm:$0xf]
        %v361 = vld [vmem:[%s273 + $0x1c] sm:$0xf]
        %v362 = vld [vmem:[%s273 + $0x20] sm:$0xf]
        %v363 = vld [vmem:[%s273 + $0x24] sm:$0xf]
        %v364 = vld [vmem:[%s273 + $0x28] sm:$0xf]
        %v365 = vld [vmem:[%s273 + $0x2c] sm:$0xf]
        %v366 = vld [vmem:[%s273 + $0x30] sm:$0xf]
        %v367 = vld [vmem:[%s273 + $0x34] sm:$0xf]
        %v368 = vld [vmem:[%s273 + $0x38] sm:$0xf]
        %v369 = vld [vmem:[%s273 + $0x3c] sm:$0xf]
        %v370 = vld [vmem:[%s273 + $0x40] sm:$0xf]
        %v371 = vld [vmem:[%s273 + $0x44] sm:$0xf]
        %v372 = vld [vmem:[%s273 + $0x48] sm:$0xf]
        %v373 = vld [vmem:[%s273 + $0x4c] sm:$0xf]
        %v374 = vld [vmem:[%s273 + $0x50] sm:$0xf]
        %v375 = vld [vmem:[%s273 + $0x54] sm:$0xf]
        %v376 = vld [vmem:[%s273 + $0x58] sm:$0xf]
        %v377 = vld [vmem:[%s273 + $0x5c] sm:$0xf]
        %v378 = vld [vmem:[%s273 + $0x60] sm:$0xf]
        %v379 = vld [vmem:[%s273 + $0x64] sm:$0xf]
        %v380 = vld [vmem:[%s273 + $0x68] sm:$0xf]
        %v381 = vld [vmem:[%s273 + $0x6c] sm:$0xf]
        %v382 = vld [vmem:[%s273 + $0x70] sm:$0xf]
        %v383 = vld [vmem:[%s273 + $0x74] sm:$0xf]
        %v384 = vld [vmem:[%s273 + $0x78] sm:$0xf]
        %v385 = vld [vmem:[%s273 + $0x7c] sm:$0xf]
        %v386 = vld [vmem:[%s273 + $0x80] sm:$0xf]
        %v387 = vld [vmem:[%s273 + $0x84] sm:$0xf]
        %v388 = vld [vmem:[%s273 + $0x88] sm:$0xf]
        %v389 = vld [vmem:[%s273 + $0x8c] sm:$0xf]
        %v390 = vld [vmem:[%s273 + $0x90] sm:$0xf]
        %v391 = vld [vmem:[%s273 + $0x94] sm:$0xf]
        %v392 = vld [vmem:[%s273 + $0x98] sm:$0xf]
        %v393 = vld [vmem:[%s273 + $0x9c] sm:$0xf]
        %v394 = vld [vmem:[%s273 + $0xa0] sm:$0xf]
        %v395 = vld [vmem:[%s273 + $0xa4] sm:$0xf]
        %v396 = vld [vmem:[%s273 + $0xa8] sm:$0xf]
        %v397 = vld [vmem:[%s273 + $0xac] sm:$0xf]
        %v398 = vld [vmem:[%s273 + $0xb0] sm:$0xf]
        %v399 = vld [vmem:[%s273 + $0xb4] sm:$0xf]
        %v400 = vld [vmem:[%s273 + $0xb8] sm:$0xf]
        %v401 = vld [vmem:[%s273 + $0xbc] sm:$0xf]
        %v434 = vunpack.c.l.b16 %v354
        %v435 = vunpack.c.l.b16 %v355
        %v436 = vunpack.c.l.b16 %v357
        %v437 = vunpack.c.l.b16 %v358
        %v438 = vunpack.c.l.b16 %v360
        %v439 = vunpack.c.l.b16 %v361
        %v440 = vunpack.c.l.b16 %v363
        %v441 = vunpack.c.l.b16 %v364
        %v442 = vunpack.c.l.b16 %v366
        %v443 = vunpack.c.l.b16 %v367
        %v444 = vunpack.c.l.b16 %v369
        %v445 = vunpack.c.l.b16 %v370
        %v446 = vunpack.c.l.b16 %v372
        %v447 = vunpack.c.l.b16 %v373
        %v448 = vunpack.c.l.b16 %v375
        %v449 = vunpack.c.l.b16 %v376
        %v450 = vunpack.c.l.b16 %v378
        %v451 = vunpack.c.l.b16 %v379
        %v452 = vunpack.c.l.b16 %v381
        %v453 = vunpack.c.l.b16 %v382
        %v454 = vunpack.c.l.b16 %v384
        %v455 = vunpack.c.l.b16 %v385
        %v456 = vunpack.c.l.b16 %v387
        %v457 = vunpack.c.l.b16 %v388
        %v458 = vunpack.c.l.b16 %v390
        %v459 = vunpack.c.l.b16 %v391
        %v460 = vunpack.c.l.b16 %v393
        %v461 = vunpack.c.l.b16 %v394
        %v462 = vunpack.c.l.b16 %v396
        %v463 = vunpack.c.l.b16 %v397
        %v464 = vunpack.c.l.b16 %v399
        %v465 = vunpack.c.l.b16 %v400
        %v466 = vpack.c.b16 %v435, %v434
        %v467 = vpack.c.b16 %v437, %v436
        %v468 = vpack.c.b16 %v439, %v438
        %v469 = vpack.c.b16 %v441, %v440
        %v470 = vpack.c.b16 %v443, %v442
        %v471 = vpack.c.b16 %v445, %v444
        %v472 = vpack.c.b16 %v447, %v446
        %v473 = vpack.c.b16 %v449, %v448
        %v474 = vpack.c.b16 %v451, %v450
        %v475 = vpack.c.b16 %v453, %v452
        %v476 = vpack.c.b16 %v455, %v454
        %v477 = vpack.c.b16 %v457, %v456
        %v478 = vpack.c.b16 %v459, %v458
        %v479 = vpack.c.b16 %v461, %v460
        %v480 = vpack.c.b16 %v463, %v462
        %v481 = vpack.c.b16 %v465, %v464
        %v514 = vunpack.c.l.b16 %v356
        %v515 = vunpack.c.l.b16 %v359
        %v516 = vunpack.c.l.b16 %v362
        %v517 = vunpack.c.l.b16 %v365
        %v518 = vunpack.c.l.b16 %v368
        %v519 = vunpack.c.l.b16 %v371
        %v520 = vunpack.c.l.b16 %v374
        %v521 = vunpack.c.l.b16 %v377
        %v522 = vunpack.c.l.b16 %v380
        %v523 = vunpack.c.l.b16 %v383
        %v524 = vunpack.c.l.b16 %v386
        %v525 = vunpack.c.l.b16 %v389
        %v526 = vunpack.c.l.b16 %v392
        %v527 = vunpack.c.l.b16 %v395
        %v528 = vunpack.c.l.b16 %v398
        %v529 = vunpack.c.l.b16 %v401
        %v530 = vpack.c.b16 %v514, %v514
        %v531 = vpack.c.b16 %v515, %v515
        %v532 = vpack.c.b16 %v516, %v516
        %v533 = vpack.c.b16 %v517, %v517
        %v534 = vpack.c.b16 %v518, %v518
        %v535 = vpack.c.b16 %v519, %v519
        %v536 = vpack.c.b16 %v520, %v520
        %v537 = vpack.c.b16 %v521, %v521
        %v538 = vpack.c.b16 %v522, %v522
        %v539 = vpack.c.b16 %v523, %v523
        %v540 = vpack.c.b16 %v524, %v524
        %v541 = vpack.c.b16 %v525, %v525
        %v542 = vpack.c.b16 %v526, %v526
        %v543 = vpack.c.b16 %v527, %v527
        %v544 = vpack.c.b16 %v528, %v528
        %v545 = vpack.c.b16 %v529, %v529
        %vm546 = vsmask.f32 7424
        %v548 = vshrl.u32 %v466, 16
        %v550 = vshll.u32 %v466, 16
        %v552 = vrot.slane %v550, 1
        %v553 = vor.u32 %v548, %v552
        %v555 = vshll.u32 %v530, 16
        %v557 = vrot.slane %v555, 1
        %v558 = vsel %vm546, %v553, %v557
        %v560 = vshrl.u32 %v467, 16
        %v562 = vshll.u32 %v467, 16
        %v564 = vrot.slane %v562, 1
        %v565 = vor.u32 %v560, %v564
        %v567 = vshll.u32 %v531, 16
        %v569 = vrot.slane %v567, 1
        %v570 = vsel %vm546, %v565, %v569
        %v572 = vshrl.u32 %v468, 16
        %v574 = vshll.u32 %v468, 16
        %v576 = vrot.slane %v574, 1
        %v577 = vor.u32 %v572, %v576
        %v579 = vshll.u32 %v532, 16
        %v581 = vrot.slane %v579, 1
        %v582 = vsel %vm546, %v577, %v581
        %v584 = vshrl.u32 %v469, 16
        %v586 = vshll.u32 %v469, 16
        %v588 = vrot.slane %v586, 1
        %v589 = vor.u32 %v584, %v588
        %v591 = vshll.u32 %v533, 16
        %v593 = vrot.slane %v591, 1
        %v594 = vsel %vm546, %v589, %v593
        %v596 = vshrl.u32 %v470, 16
        %v598 = vshll.u32 %v470, 16
        %v600 = vrot.slane %v598, 1
        %v601 = vor.u32 %v596, %v600
        %v603 = vshll.u32 %v534, 16
        %v605 = vrot.slane %v603, 1
        %v606 = vsel %vm546, %v601, %v605
        %v608 = vshrl.u32 %v471, 16
        %v610 = vshll.u32 %v471, 16
        %v612 = vrot.slane %v610, 1
        %v613 = vor.u32 %v608, %v612
        %v615 = vshll.u32 %v535, 16
        %v617 = vrot.slane %v615, 1
        %v618 = vsel %vm546, %v613, %v617
        %v620 = vshrl.u32 %v472, 16
        %v622 = vshll.u32 %v472, 16
        %v624 = vrot.slane %v622, 1
        %v625 = vor.u32 %v620, %v624
        %v627 = vshll.u32 %v536, 16
        %v629 = vrot.slane %v627, 1
        %v630 = vsel %vm546, %v625, %v629
        %v632 = vshrl.u32 %v473, 16
        %v634 = vshll.u32 %v473, 16
        %v636 = vrot.slane %v634, 1
        %v637 = vor.u32 %v632, %v636
        %v639 = vshll.u32 %v537, 16
        %v641 = vrot.slane %v639, 1
        %v642 = vsel %vm546, %v637, %v641
        %v644 = vshrl.u32 %v474, 16
        %v646 = vshll.u32 %v474, 16
        %v648 = vrot.slane %v646, 1
        %v649 = vor.u32 %v644, %v648
        %v651 = vshll.u32 %v538, 16
        %v653 = vrot.slane %v651, 1
        %v654 = vsel %vm546, %v649, %v653
        %v656 = vshrl.u32 %v475, 16
        %v658 = vshll.u32 %v475, 16
        %v660 = vrot.slane %v658, 1
        %v661 = vor.u32 %v656, %v660
        %v663 = vshll.u32 %v539, 16
        %v665 = vrot.slane %v663, 1
        %v666 = vsel %vm546, %v661, %v665
        %v668 = vshrl.u32 %v476, 16
        %v670 = vshll.u32 %v476, 16
        %v672 = vrot.slane %v670, 1
        %v673 = vor.u32 %v668, %v672
        %v675 = vshll.u32 %v540, 16
        %v677 = vrot.slane %v675, 1
        %v678 = vsel %vm546, %v673, %v677
        %v680 = vshrl.u32 %v477, 16
        %v682 = vshll.u32 %v477, 16
        %v684 = vrot.slane %v682, 1
        %v685 = vor.u32 %v680, %v684
        %v687 = vshll.u32 %v541, 16
        %v689 = vrot.slane %v687, 1
        %v690 = vsel %vm546, %v685, %v689
        %v692 = vshrl.u32 %v478, 16
        %v694 = vshll.u32 %v478, 16
        %v696 = vrot.slane %v694, 1
        %v697 = vor.u32 %v692, %v696
        %v699 = vshll.u32 %v542, 16
        %v701 = vrot.slane %v699, 1
        %v702 = vsel %vm546, %v697, %v701
        %v704 = vshrl.u32 %v479, 16
        %v706 = vshll.u32 %v479, 16
        %v708 = vrot.slane %v706, 1
        %v709 = vor.u32 %v704, %v708
        %v711 = vshll.u32 %v543, 16
        %v713 = vrot.slane %v711, 1
        %v714 = vsel %vm546, %v709, %v713
        %v716 = vshrl.u32 %v480, 16
        %v718 = vshll.u32 %v480, 16
        %v720 = vrot.slane %v718, 1
        %v721 = vor.u32 %v716, %v720
        %v723 = vshll.u32 %v544, 16
        %v725 = vrot.slane %v723, 1
        %v726 = vsel %vm546, %v721, %v725
        %v728 = vshrl.u32 %v481, 16
        %v730 = vshll.u32 %v481, 16
        %v732 = vrot.slane %v730, 1
        %v733 = vor.u32 %v728, %v732
        %v735 = vshll.u32 %v545, 16
        %v737 = vrot.slane %v735, 1
        %v738 = vsel %vm546, %v733, %v737
        %vm755 = vcmask 1046528
        %v756 = vrot.slane %v466, 1
        %v757 = vrot.slane %v530, 1
        %v758 = vsel %vm755, %v756, %v757
        %v759 = vrot.slane %v467, 1
        %v760 = vrot.slane %v531, 1
        %v761 = vsel %vm755, %v759, %v760
        %v762 = vrot.slane %v468, 1
        %v763 = vrot.slane %v532, 1
        %v764 = vsel %vm755, %v762, %v763
        %v765 = vrot.slane %v469, 1
        %v766 = vrot.slane %v533, 1
        %v767 = vsel %vm755, %v765, %v766
        %v768 = vrot.slane %v470, 1
        %v769 = vrot.slane %v534, 1
        %v770 = vsel %vm755, %v768, %v769
        %v771 = vrot.slane %v471, 1
        %v772 = vrot.slane %v535, 1
        %v773 = vsel %vm755, %v771, %v772
        %v774 = vrot.slane %v472, 1
        %v775 = vrot.slane %v536, 1
        %v776 = vsel %vm755, %v774, %v775
        %v777 = vrot.slane %v473, 1
        %v778 = vrot.slane %v537, 1
        %v779 = vsel %vm755, %v777, %v778
        %v780 = vrot.slane %v474, 1
        %v781 = vrot.slane %v538, 1
        %v782 = vsel %vm755, %v780, %v781
        %v783 = vrot.slane %v475, 1
        %v784 = vrot.slane %v539, 1
        %v785 = vsel %vm755, %v783, %v784
        %v786 = vrot.slane %v476, 1
        %v787 = vrot.slane %v540, 1
        %v788 = vsel %vm755, %v786, %v787
        %v789 = vrot.slane %v477, 1
        %v790 = vrot.slane %v541, 1
        %v791 = vsel %vm755, %v789, %v790
        %v792 = vrot.slane %v478, 1
        %v793 = vrot.slane %v542, 1
        %v794 = vsel %vm755, %v792, %v793
        %v795 = vrot.slane %v479, 1
        %v796 = vrot.slane %v543, 1
        %v797 = vsel %vm755, %v795, %v796
        %v798 = vrot.slane %v480, 1
        %v799 = vrot.slane %v544, 1
        %v800 = vsel %vm755, %v798, %v799
        %v801 = vrot.slane %v481, 1
        %v802 = vrot.slane %v545, 1
        %v803 = vsel %vm755, %v801, %v802
        %v820 = vld [vmem:[#allocation2] sm:$0xff]
        %v821 = vld [vmem:[#allocation2 + $0x8] sm:$0xff]
        %v822 = vld [vmem:[#allocation2 + $0x10] sm:$0xff]
        %v823 = vld [vmem:[#allocation2 + $0x18] sm:$0xff]
        %v824 = vld [vmem:[#allocation2 + $0x20] sm:$0xff]
        %v825 = vld [vmem:[#allocation2 + $0x28] sm:$0xff]
        %v826 = vld [vmem:[#allocation2 + $0x30] sm:$0xff]
        %v827 = vld [vmem:[#allocation2 + $0x38] sm:$0xff]
        %v828 = vld [vmem:[#allocation2 + $0x40] sm:$0xff]
        %v829 = vld [vmem:[#allocation2 + $0x48] sm:$0xff]
        %v830 = vld [vmem:[#allocation2 + $0x50] sm:$0xff]
        %v831 = vld [vmem:[#allocation2 + $0x58] sm:$0xff]
        %v832 = vld [vmem:[#allocation2 + $0x60] sm:$0xff]
        %v833 = vld [vmem:[#allocation2 + $0x68] sm:$0xff]
        %v834 = vld [vmem:[#allocation2 + $0x70] sm:$0xff]
        %v835 = vld [vmem:[#allocation2 + $0x78] sm:$0xff]
        %v836 = vld [vmem:[#allocation2 + $0x80] sm:$0xff]
        %v837 = vld [vmem:[#allocation2 + $0x88] sm:$0xff]
        %v838 = vld [vmem:[#allocation2 + $0x90] sm:$0xff]
        %v839 = vld [vmem:[#allocation2 + $0x98] sm:$0xff]
        %v840 = vld [vmem:[#allocation2 + $0xa0] sm:$0xff]
        %v841 = vld [vmem:[#allocation2 + $0xa8] sm:$0xff]
        %v842 = vld [vmem:[#allocation2 + $0xb0] sm:$0xff]
        %v843 = vld [vmem:[#allocation2 + $0xb8] sm:$0xff]
        %v844 = vld [vmem:[#allocation2 + $0xc0] sm:$0xff]
        %v845 = vld [vmem:[#allocation2 + $0xc8] sm:$0xff]
        %v846 = vld [vmem:[#allocation2 + $0xd0] sm:$0xff]
        %v847 = vld [vmem:[#allocation2 + $0xd8] sm:$0xff]
        %v848 = vld [vmem:[#allocation2 + $0xe0] sm:$0xff]
        %v849 = vld [vmem:[#allocation2 + $0xe8] sm:$0xff]
        %v850 = vld [vmem:[#allocation2 + $0xf0] sm:$0xff]
        %v851 = vld [vmem:[#allocation2 + $0xf8] sm:$0xff]
        %v852 = vld [vmem:[#allocation7] sm:$0xf]
        %v853 = vld [vmem:[#allocation7 + $0x4] sm:$0xf]
        %v854 = vld [vmem:[#allocation7 + $0x8] sm:$0xf]
        %v855 = vld [vmem:[#allocation7 + $0xc] sm:$0xf]
        %v856 = vld [vmem:[#allocation7 + $0x10] sm:$0xf]
        %v857 = vld [vmem:[#allocation7 + $0x14] sm:$0xf]
        %v858 = vld [vmem:[#allocation7 + $0x18] sm:$0xf]
        %v859 = vld [vmem:[#allocation7 + $0x1c] sm:$0xf]
        %v860 = vld [vmem:[#allocation7 + $0x20] sm:$0xf]
        %v861 = vld [vmem:[#allocation7 + $0x24] sm:$0xf]
        %v862 = vld [vmem:[#allocation7 + $0x28] sm:$0xf]
        %v863 = vld [vmem:[#allocation7 + $0x2c] sm:$0xf]
        %v864 = vld [vmem:[#allocation7 + $0x30] sm:$0xf]
        %v865 = vld [vmem:[#allocation7 + $0x34] sm:$0xf]
        %v866 = vld [vmem:[#allocation7 + $0x38] sm:$0xf]
        %v867 = vld [vmem:[#allocation7 + $0x3c] sm:$0xf]
        %v868 = vld [vmem:[#allocation7 + $0x40] sm:$0xf]
        %v869 = vld [vmem:[#allocation7 + $0x44] sm:$0xf]
        %v870 = vld [vmem:[#allocation7 + $0x48] sm:$0xf]
        %v871 = vld [vmem:[#allocation7 + $0x4c] sm:$0xf]
        %v872 = vld [vmem:[#allocation7 + $0x50] sm:$0xf]
        %v873 = vld [vmem:[#allocation7 + $0x54] sm:$0xf]
        %v874 = vld [vmem:[#allocation7 + $0x58] sm:$0xf]
        %v875 = vld [vmem:[#allocation7 + $0x5c] sm:$0xf]
        %v876 = vld [vmem:[#allocation7 + $0x60] sm:$0xf]
        %v877 = vld [vmem:[#allocation7 + $0x64] sm:$0xf]
        %v878 = vld [vmem:[#allocation7 + $0x68] sm:$0xf]
        %v879 = vld [vmem:[#allocation7 + $0x6c] sm:$0xf]
        %v880 = vld [vmem:[#allocation7 + $0x70] sm:$0xf]
        %v881 = vld [vmem:[#allocation7 + $0x74] sm:$0xf]
        %v882 = vld [vmem:[#allocation7 + $0x78] sm:$0xf]
        %v883 = vld [vmem:[#allocation7 + $0x7c] sm:$0xf]
        %v884 = vld [vmem:[#allocation7 + $0x80] sm:$0xf]
        %v885 = vld [vmem:[#allocation7 + $0x84] sm:$0xf]
        %v886 = vld [vmem:[#allocation7 + $0x88] sm:$0xf]
        %v887 = vld [vmem:[#allocation7 + $0x8c] sm:$0xf]
        %v888 = vld [vmem:[#allocation7 + $0x90] sm:$0xf]
        %v889 = vld [vmem:[#allocation7 + $0x94] sm:$0xf]
        %v890 = vld [vmem:[#allocation7 + $0x98] sm:$0xf]
        %v891 = vld [vmem:[#allocation7 + $0x9c] sm:$0xf]
        %v892 = vld [vmem:[#allocation7 + $0xa0] sm:$0xf]
        %v893 = vld [vmem:[#allocation7 + $0xa4] sm:$0xf]
        %v894 = vld [vmem:[#allocation7 + $0xa8] sm:$0xf]
        %v895 = vld [vmem:[#allocation7 + $0xac] sm:$0xf]
        %v896 = vld [vmem:[#allocation7 + $0xb0] sm:$0xf]
        %v897 = vld [vmem:[#allocation7 + $0xb4] sm:$0xf]
        %v898 = vld [vmem:[#allocation7 + $0xb8] sm:$0xf]
        %v899 = vld [vmem:[#allocation7 + $0xbc] sm:$0xf]
        %v948 = vunpack.c.l.b16 %v852
        %v949 = vunpack.c.l.b16 %v853
        %v950 = vunpack.c.l.b16 %v854
        %v951 = vunpack.c.l.b16 %v855
        %v952 = vunpack.c.l.b16 %v856
        %v953 = vunpack.c.l.b16 %v857
        %v954 = vunpack.c.l.b16 %v858
        %v955 = vunpack.c.l.b16 %v859
        %v956 = vunpack.c.l.b16 %v860
        %v957 = vunpack.c.l.b16 %v861
        %v958 = vunpack.c.l.b16 %v862
        %v959 = vunpack.c.l.b16 %v863
        %v960 = vunpack.c.l.b16 %v864
        %v961 = vunpack.c.l.b16 %v865
        %v962 = vunpack.c.l.b16 %v866
        %v963 = vunpack.c.l.b16 %v867
        %v964 = vunpack.c.l.b16 %v868
        %v965 = vunpack.c.l.b16 %v869
        %v966 = vunpack.c.l.b16 %v870
        %v967 = vunpack.c.l.b16 %v871
        %v968 = vunpack.c.l.b16 %v872
        %v969 = vunpack.c.l.b16 %v873
        %v970 = vunpack.c.l.b16 %v874
        %v971 = vunpack.c.l.b16 %v875
        %v972 = vunpack.c.l.b16 %v876
        %v973 = vunpack.c.l.b16 %v877
        %v974 = vunpack.c.l.b16 %v878
        %v975 = vunpack.c.l.b16 %v879
        %v976 = vunpack.c.l.b16 %v880
        %v977 = vunpack.c.l.b16 %v881
        %v978 = vunpack.c.l.b16 %v882
        %v979 = vunpack.c.l.b16 %v883
        %v980 = vunpack.c.l.b16 %v884
        %v981 = vunpack.c.l.b16 %v885
        %v982 = vunpack.c.l.b16 %v886
        %v983 = vunpack.c.l.b16 %v887
        %v984 = vunpack.c.l.b16 %v888
        %v985 = vunpack.c.l.b16 %v889
        %v986 = vunpack.c.l.b16 %v890
        %v987 = vunpack.c.l.b16 %v891
        %v988 = vunpack.c.l.b16 %v892
        %v989 = vunpack.c.l.b16 %v893
        %v990 = vunpack.c.l.b16 %v894
        %v991 = vunpack.c.l.b16 %v895
        %v992 = vunpack.c.l.b16 %v896
        %v993 = vunpack.c.l.b16 %v897
        %v994 = vunpack.c.l.b16 %v898
        %v995 = vunpack.c.l.b16 %v899
        %v996 = vpack.c.b16 %v949, %v948
        %v997 = vpack.c.b16 %v951, %v950
        %v998 = vpack.c.b16 %v953, %v952
        %v999 = vpack.c.b16 %v955, %v954
        %v1000 = vpack.c.b16 %v957, %v956
        %v1001 = vpack.c.b16 %v959, %v958
        %v1002 = vpack.c.b16 %v961, %v960
        %v1003 = vpack.c.b16 %v963, %v962
        %v1004 = vpack.c.b16 %v965, %v964
        %v1005 = vpack.c.b16 %v967, %v966
        %v1006 = vpack.c.b16 %v969, %v968
        %v1007 = vpack.c.b16 %v971, %v970
        %v1008 = vpack.c.b16 %v973, %v972
        %v1009 = vpack.c.b16 %v975, %v974
        %v1010 = vpack.c.b16 %v977, %v976
        %v1011 = vpack.c.b16 %v979, %v978
        %v1012 = vpack.c.b16 %v981, %v980
        %v1013 = vpack.c.b16 %v983, %v982
        %v1014 = vpack.c.b16 %v985, %v984
        %v1015 = vpack.c.b16 %v987, %v986
        %v1016 = vpack.c.b16 %v989, %v988
        %v1017 = vpack.c.b16 %v991, %v990
        %v1018 = vpack.c.b16 %v993, %v992
        %v1019 = vpack.c.b16 %v995, %v994
        %1044 = vmatprep.subr.bf16.mxu0 0
        %1045 = vmatpush1.bf16.msra.mxu0 %v1003
        %1046 = vmatprep.subr.bf16.mxu0 0
        %1047 = vmatpush1.bf16.msra.mxu0 %v1002
        %1048 = vmatprep.subr.bf16.mxu0 0
        %1049 = vmatpush1.bf16.msra.mxu0 %v1001
        %1050 = vmatprep.subr.bf16.mxu0 0
        %1051 = vmatpush1.bf16.msra.mxu0 %v1000
        %1052 = vmatprep.subr.bf16.mxu0 0
        %1053 = vmatpush1.bf16.msra.mxu0 %v999
        %1054 = vmatprep.subr.bf16.mxu0 0
        %1055 = vmatpush1.bf16.msra.mxu0 %v998
        %1056 = vmatprep.subr.bf16.mxu0 0
        %1057 = vmatpush1.bf16.msra.mxu0 %v997
        %1058 = vmatprep.subr.bf16.mxu0 0
        %1059 = vmatpush1.bf16.msra.mxu0 %v996
        %1060 = vmatprep.subr.bf16.mxu0 0
        %1061 = vmatpush2.bf16.msra.mxu0 %v1011
        %1062 = vmatprep.subr.bf16.mxu0 0
        %1063 = vmatpush2.bf16.msra.mxu0 %v1010
        %1064 = vmatprep.subr.bf16.mxu0 0
        %1065 = vmatpush2.bf16.msra.mxu0 %v1009
        %1066 = vmatprep.subr.bf16.mxu0 0
        %1067 = vmatpush2.bf16.msra.mxu0 %v1008
        %1068 = vmatprep.subr.bf16.mxu0 0
        %1069 = vmatpush2.bf16.msra.mxu0 %v1007
        %1070 = vmatprep.subr.bf16.mxu0 0
        %1071 = vmatpush2.bf16.msra.mxu0 %v1006
        %1072 = vmatprep.subr.bf16.mxu0 0
        %1073 = vmatpush2.bf16.msra.mxu0 %v1005
        %1074 = vmatprep.subr.bf16.mxu0 0
        %1075 = vmatpush2.bf16.msra.mxu0 %v1004
        %1076 = vmatprep.mubr.bf16.mxu0 %v558
        %1077 = vmatmul.mubr.bf16.gmra.mxu0 %v466
        %v1078 = vpop.f32.mrf.mxu0
        %v1079 = vadd.f32 0.0, %v1078
        %v1080 = vpop.f32.mrf.mxu0
        %v1081 = vpop.f32.mrf.mxu0
        %v1082 = vadd.f32 0.0, %v1081
        %v1083 = vpop.f32.mrf.mxu0
        %1084 = vmatprep.mubr.bf16.mxu0 %v570
        %1085 = vmatmul.mubr.bf16.gmra.mxu0 %v467
        %v1086 = vpop.f32.mrf.mxu0
        %v1087 = vadd.f32 0.0, %v1086
        %v1088 = vpop.f32.mrf.mxu0
        %v1089 = vpop.f32.mrf.mxu0
        %v1090 = vadd.f32 0.0, %v1089
        %v1091 = vpop.f32.mrf.mxu0
        %1092 = vmatprep.mubr.bf16.mxu0 %v582
        %1093 = vmatmul.mubr.bf16.gmra.mxu0 %v468
        %v1094 = vpop.f32.mrf.mxu0
        %v1095 = vadd.f32 0.0, %v1094
        %v1096 = vpop.f32.mrf.mxu0
        %v1097 = vpop.f32.mrf.mxu0
        %v1098 = vadd.f32 0.0, %v1097
        %v1099 = vpop.f32.mrf.mxu0
        %1100 = vmatprep.mubr.bf16.mxu0 %v594
        %1101 = vmatmul.mubr.bf16.gmra.mxu0 %v469
        %v1102 = vpop.f32.mrf.mxu0
        %v1103 = vadd.f32 0.0, %v1102
        %v1104 = vpop.f32.mrf.mxu0
        %v1105 = vpop.f32.mrf.mxu0
        %v1106 = vadd.f32 0.0, %v1105
        %v1107 = vpop.f32.mrf.mxu0
        %1108 = vmatprep.mubr.bf16.mxu0 %v606
        %1109 = vmatmul.mubr.bf16.gmra.mxu0 %v470
        %v1110 = vpop.f32.mrf.mxu0
        %v1111 = vadd.f32 0.0, %v1110
        %v1112 = vpop.f32.mrf.mxu0
        %v1113 = vpop.f32.mrf.mxu0
        %v1114 = vadd.f32 0.0, %v1113
        %v1115 = vpop.f32.mrf.mxu0
        %1116 = vmatprep.mubr.bf16.mxu0 %v618
        %1117 = vmatmul.mubr.bf16.gmra.mxu0 %v471
        %v1118 = vpop.f32.mrf.mxu0
        %v1119 = vadd.f32 0.0, %v1118
        %v1120 = vpop.f32.mrf.mxu0
        %v1121 = vpop.f32.mrf.mxu0
        %v1122 = vadd.f32 0.0, %v1121
        %v1123 = vpop.f32.mrf.mxu0
        %1124 = vmatprep.mubr.bf16.mxu0 %v630
        %1125 = vmatmul.mubr.bf16.gmra.mxu0 %v472
        %v1126 = vpop.f32.mrf.mxu0
        %v1127 = vadd.f32 0.0, %v1126
        %v1128 = vpop.f32.mrf.mxu0
        %v1129 = vpop.f32.mrf.mxu0
        %v1130 = vadd.f32 0.0, %v1129
        %v1131 = vpop.f32.mrf.mxu0
        %1132 = vmatprep.mubr.bf16.mxu0 %v642
        %1133 = vmatmul.mubr.bf16.gmra.mxu0 %v473
        %v1134 = vpop.f32.mrf.mxu0
        %v1135 = vadd.f32 0.0, %v1134
        %v1136 = vpop.f32.mrf.mxu0
        %v1137 = vpop.f32.mrf.mxu0
        %v1138 = vadd.f32 0.0, %v1137
        %v1139 = vpop.f32.mrf.mxu0
        %1140 = vmatprep.mubr.bf16.mxu0 %v654
        %1141 = vmatmul.mubr.bf16.gmra.mxu0 %v474
        %v1142 = vpop.f32.mrf.mxu0
        %v1143 = vadd.f32 0.0, %v1142
        %v1144 = vpop.f32.mrf.mxu0
        %v1145 = vpop.f32.mrf.mxu0
        %v1146 = vadd.f32 0.0, %v1145
        %v1147 = vpop.f32.mrf.mxu0
        %1148 = vmatprep.mubr.bf16.mxu0 %v666
        %1149 = vmatmul.mubr.bf16.gmra.mxu0 %v475
        %v1150 = vpop.f32.mrf.mxu0
        %v1151 = vadd.f32 0.0, %v1150
        %v1152 = vpop.f32.mrf.mxu0
        %v1153 = vpop.f32.mrf.mxu0
        %v1154 = vadd.f32 0.0, %v1153
        %v1155 = vpop.f32.mrf.mxu0
        %1156 = vmatprep.mubr.bf16.mxu0 %v678
        %1157 = vmatmul.mubr.bf16.gmra.mxu0 %v476
        %v1158 = vpop.f32.mrf.mxu0
        %v1159 = vadd.f32 0.0, %v1158
        %v1160 = vpop.f32.mrf.mxu0
        %v1161 = vpop.f32.mrf.mxu0
        %v1162 = vadd.f32 0.0, %v1161
        %v1163 = vpop.f32.mrf.mxu0
        %1164 = vmatprep.mubr.bf16.mxu0 %v690
        %1165 = vmatmul.mubr.bf16.gmra.mxu0 %v477
        %v1166 = vpop.f32.mrf.mxu0
        %v1167 = vadd.f32 0.0, %v1166
        %v1168 = vpop.f32.mrf.mxu0
        %v1169 = vpop.f32.mrf.mxu0
        %v1170 = vadd.f32 0.0, %v1169
        %v1171 = vpop.f32.mrf.mxu0
        %1172 = vmatprep.mubr.bf16.mxu0 %v702
        %1173 = vmatmul.mubr.bf16.gmra.mxu0 %v478
        %v1174 = vpop.f32.mrf.mxu0
        %v1175 = vadd.f32 0.0, %v1174
        %v1176 = vpop.f32.mrf.mxu0
        %v1177 = vpop.f32.mrf.mxu0
        %v1178 = vadd.f32 0.0, %v1177
        %v1179 = vpop.f32.mrf.mxu0
        %1180 = vmatprep.mubr.bf16.mxu0 %v714
        %1181 = vmatmul.mubr.bf16.gmra.mxu0 %v479
        %v1182 = vpop.f32.mrf.mxu0
        %v1183 = vadd.f32 0.0, %v1182
        %v1184 = vpop.f32.mrf.mxu0
        %v1185 = vpop.f32.mrf.mxu0
        %v1186 = vadd.f32 0.0, %v1185
        %v1187 = vpop.f32.mrf.mxu0
        %1188 = vmatprep.mubr.bf16.mxu0 %v726
        %1189 = vmatmul.mubr.bf16.gmra.mxu0 %v480
        %v1190 = vpop.f32.mrf.mxu0
        %v1191 = vadd.f32 0.0, %v1190
        %v1192 = vpop.f32.mrf.mxu0
        %v1193 = vpop.f32.mrf.mxu0
        %v1194 = vadd.f32 0.0, %v1193
        %v1195 = vpop.f32.mrf.mxu0
        %1196 = vmatprep.mubr.bf16.mxu0 %v738
        %1197 = vmatmul.mubr.bf16.gmra.mxu0 %v481
        %v1198 = vpop.f32.mrf.mxu0
        %v1199 = vadd.f32 0.0, %v1198
        %v1200 = vpop.f32.mrf.mxu0
        %v1201 = vpop.f32.mrf.mxu0
        %v1202 = vadd.f32 0.0, %v1201
        %v1203 = vpop.f32.mrf.mxu0
        %1204 = vdwg.mxu0
        %1205 = vmatprep.subr.bf16.mxu0 0
        %1206 = vmatpush1.bf16.msra.mxu0 %v1019
        %1207 = vmatprep.subr.bf16.mxu0 0
        %1208 = vmatpush1.bf16.msra.mxu0 %v1018
        %1209 = vmatprep.subr.bf16.mxu0 0
        %1210 = vmatpush1.bf16.msra.mxu0 %v1017
        %1211 = vmatprep.subr.bf16.mxu0 0
        %1212 = vmatpush1.bf16.msra.mxu0 %v1016
        %1213 = vmatprep.subr.bf16.mxu0 0
        %1214 = vmatpush1.bf16.msra.mxu0 %v1015
        %1215 = vmatprep.subr.bf16.mxu0 0
        %1216 = vmatpush1.bf16.msra.mxu0 %v1014
        %1217 = vmatprep.subr.bf16.mxu0 0
        %1218 = vmatpush1.bf16.msra.mxu0 %v1013
        %1219 = vmatprep.subr.bf16.mxu0 0
        %1220 = vmatpush1.bf16.msra.mxu0 %v1012
        %1221 = vmatprep.subr.bf16.mxu0 0
        %1222 = vmatpush2.bf16.msra.mxu0 0
        %1223 = vmatprep.subr.bf16.mxu0 0
        %1224 = vmatpush2.bf16.msra.mxu0 0
        %1225 = vmatprep.subr.bf16.mxu0 0
        %1226 = vmatpush2.bf16.msra.mxu0 0
        %1227 = vmatprep.subr.bf16.mxu0 0
        %1228 = vmatpush2.bf16.msra.mxu0 0
        %1229 = vmatprep.subr.bf16.mxu0 0
        %1230 = vmatpush2.bf16.msra.mxu0 0
        %1231 = vmatprep.subr.bf16.mxu0 0
        %1232 = vmatpush2.bf16.msra.mxu0 0
        %1233 = vmatprep.subr.bf16.mxu0 0
        %1234 = vmatpush2.bf16.msra.mxu0 0
        %1235 = vmatprep.subr.bf16.mxu0 0
        %1236 = vmatpush2.bf16.msra.mxu0 0
        %1237 = vmatprep.mubr.bf16.mxu0 0
        %1238 = vmatmul.mubr.bf16.gmra.mxu0 %v758
        %v1239 = vpop.f32.mrf.mxu0
        %v1240 = vadd.f32 %v1079, %v1239
        %v1241 = vpop.f32.mrf.mxu0
        %v1242 = vpop.f32.mrf.mxu0
        %v1243 = vadd.f32 %v1082, %v1242
        %v1244 = vpop.f32.mrf.mxu0
        %1245 = vmatprep.mubr.bf16.mxu0 0
        %1246 = vmatmul.mubr.bf16.gmra.mxu0 %v761
        %v1247 = vpop.f32.mrf.mxu0
        %v1248 = vadd.f32 %v1087, %v1247
        %v1249 = vpop.f32.mrf.mxu0
        %v1250 = vpop.f32.mrf.mxu0
        %v1251 = vadd.f32 %v1090, %v1250
        %v1252 = vpop.f32.mrf.mxu0
        %1253 = vmatprep.mubr.bf16.mxu0 0
        %1254 = vmatmul.mubr.bf16.gmra.mxu0 %v764
        %v1255 = vpop.f32.mrf.mxu0
        %v1256 = vadd.f32 %v1095, %v1255
        %v1257 = vpop.f32.mrf.mxu0
        %v1258 = vpop.f32.mrf.mxu0
        %v1259 = vadd.f32 %v1098, %v1258
        %v1260 = vpop.f32.mrf.mxu0
        %1261 = vmatprep.mubr.bf16.mxu0 0
        %1262 = vmatmul.mubr.bf16.gmra.mxu0 %v767
        %v1263 = vpop.f32.mrf.mxu0
        %v1264 = vadd.f32 %v1103, %v1263
        %v1265 = vpop.f32.mrf.mxu0
        %v1266 = vpop.f32.mrf.mxu0
        %v1267 = vadd.f32 %v1106, %v1266
        %v1268 = vpop.f32.mrf.mxu0
        %1269 = vmatprep.mubr.bf16.mxu0 0
        %1270 = vmatmul.mubr.bf16.gmra.mxu0 %v770
        %v1271 = vpop.f32.mrf.mxu0
        %v1272 = vadd.f32 %v1111, %v1271
        %v1273 = vpop.f32.mrf.mxu0
        %v1274 = vpop.f32.mrf.mxu0
        %v1275 = vadd.f32 %v1114, %v1274
        %v1276 = vpop.f32.mrf.mxu0
        %1277 = vmatprep.mubr.bf16.mxu0 0
        %1278 = vmatmul.mubr.bf16.gmra.mxu0 %v773
        %v1279 = vpop.f32.mrf.mxu0
        %v1280 = vadd.f32 %v1119, %v1279
        %v1281 = vpop.f32.mrf.mxu0
        %v1282 = vpop.f32.mrf.mxu0
        %v1283 = vadd.f32 %v1122, %v1282
        %v1284 = vpop.f32.mrf.mxu0
        %1285 = vmatprep.mubr.bf16.mxu0 0
        %1286 = vmatmul.mubr.bf16.gmra.mxu0 %v776
        %v1287 = vpop.f32.mrf.mxu0
        %v1288 = vadd.f32 %v1127, %v1287
        %v1289 = vpop.f32.mrf.mxu0
        %v1290 = vpop.f32.mrf.mxu0
        %v1291 = vadd.f32 %v1130, %v1290
        %v1292 = vpop.f32.mrf.mxu0
        %1293 = vmatprep.mubr.bf16.mxu0 0
        %1294 = vmatmul.mubr.bf16.gmra.mxu0 %v779
        %v1295 = vpop.f32.mrf.mxu0
        %v1296 = vadd.f32 %v1135, %v1295
        %v1297 = vpop.f32.mrf.mxu0
        %v1298 = vpop.f32.mrf.mxu0
        %v1299 = vadd.f32 %v1138, %v1298
        %v1300 = vpop.f32.mrf.mxu0
        %1301 = vmatprep.mubr.bf16.mxu0 0
        %1302 = vmatmul.mubr.bf16.gmra.mxu0 %v782
        %v1303 = vpop.f32.mrf.mxu0
        %v1304 = vadd.f32 %v1143, %v1303
        %v1305 = vpop.f32.mrf.mxu0
        %v1306 = vpop.f32.mrf.mxu0
        %v1307 = vadd.f32 %v1146, %v1306
        %v1308 = vpop.f32.mrf.mxu0
        %1309 = vmatprep.mubr.bf16.mxu0 0
        %1310 = vmatmul.mubr.bf16.gmra.mxu0 %v785
        %v1311 = vpop.f32.mrf.mxu0
        %v1312 = vadd.f32 %v1151, %v1311
        %v1313 = vpop.f32.mrf.mxu0
        %v1314 = vpop.f32.mrf.mxu0
        %v1315 = vadd.f32 %v1154, %v1314
        %v1316 = vpop.f32.mrf.mxu0
        %1317 = vmatprep.mubr.bf16.mxu0 0
        %1318 = vmatmul.mubr.bf16.gmra.mxu0 %v788
        %v1319 = vpop.f32.mrf.mxu0
        %v1320 = vadd.f32 %v1159, %v1319
        %v1321 = vpop.f32.mrf.mxu0
        %v1322 = vpop.f32.mrf.mxu0
        %v1323 = vadd.f32 %v1162, %v1322
        %v1324 = vpop.f32.mrf.mxu0
        %1325 = vmatprep.mubr.bf16.mxu0 0
        %1326 = vmatmul.mubr.bf16.gmra.mxu0 %v791
        %v1327 = vpop.f32.mrf.mxu0
        %v1328 = vadd.f32 %v1167, %v1327
        %v1329 = vpop.f32.mrf.mxu0
        %v1330 = vpop.f32.mrf.mxu0
        %v1331 = vadd.f32 %v1170, %v1330
        %v1332 = vpop.f32.mrf.mxu0
        %1333 = vmatprep.mubr.bf16.mxu0 0
        %1334 = vmatmul.mubr.bf16.gmra.mxu0 %v794
        %v1335 = vpop.f32.mrf.mxu0
        %v1336 = vadd.f32 %v1175, %v1335
        %v1337 = vpop.f32.mrf.mxu0
        %v1338 = vpop.f32.mrf.mxu0
        %v1339 = vadd.f32 %v1178, %v1338
        %v1340 = vpop.f32.mrf.mxu0
        %1341 = vmatprep.mubr.bf16.mxu0 0
        %1342 = vmatmul.mubr.bf16.gmra.mxu0 %v797
        %v1343 = vpop.f32.mrf.mxu0
        %v1344 = vadd.f32 %v1183, %v1343
        %v1345 = vpop.f32.mrf.mxu0
        %v1346 = vpop.f32.mrf.mxu0
        %v1347 = vadd.f32 %v1186, %v1346
        %v1348 = vpop.f32.mrf.mxu0
        %1349 = vmatprep.mubr.bf16.mxu0 0
        %1350 = vmatmul.mubr.bf16.gmra.mxu0 %v800
        %v1351 = vpop.f32.mrf.mxu0
        %v1352 = vadd.f32 %v1191, %v1351
        %v1353 = vpop.f32.mrf.mxu0
        %v1354 = vpop.f32.mrf.mxu0
        %v1355 = vadd.f32 %v1194, %v1354
        %v1356 = vpop.f32.mrf.mxu0
        %1357 = vmatprep.mubr.bf16.mxu0 0
        %1358 = vmatmul.mubr.bf16.gmra.mxu0 %v803
        %v1359 = vpop.f32.mrf.mxu0
        %v1360 = vadd.f32 %v1199, %v1359
        %v1361 = vpop.f32.mrf.mxu0
        %v1362 = vpop.f32.mrf.mxu0
        %v1363 = vadd.f32 %v1202, %v1362
        %v1364 = vpop.f32.mrf.mxu0
        %1365 = vdwg.mxu0
        %v1366 = vadd.f32 %v820, %v1240
        %v1367 = vadd.f32 %v821, %v1243
        %v1368 = vadd.f32 %v822, %v1248
        %v1369 = vadd.f32 %v823, %v1251
        %v1370 = vadd.f32 %v824, %v1256
        %v1371 = vadd.f32 %v825, %v1259
        %v1372 = vadd.f32 %v826, %v1264
        %v1373 = vadd.f32 %v827, %v1267
        %v1374 = vadd.f32 %v828, %v1272
        %v1375 = vadd.f32 %v829, %v1275
        %v1376 = vadd.f32 %v830, %v1280
        %v1377 = vadd.f32 %v831, %v1283
        %v1378 = vadd.f32 %v832, %v1288
        %v1379 = vadd.f32 %v833, %v1291
        %v1380 = vadd.f32 %v834, %v1296
        %v1381 = vadd.f32 %v835, %v1299
        %v1382 = vadd.f32 %v836, %v1304
        %v1383 = vadd.f32 %v837, %v1307
        %v1384 = vadd.f32 %v838, %v1312
        %v1385 = vadd.f32 %v839, %v1315
        %v1386 = vadd.f32 %v840, %v1320
        %v1387 = vadd.f32 %v841, %v1323
        %v1388 = vadd.f32 %v842, %v1328
        %v1389 = vadd.f32 %v843, %v1331
        %v1390 = vadd.f32 %v844, %v1336
        %v1391 = vadd.f32 %v845, %v1339
        %v1392 = vadd.f32 %v846, %v1344
        %v1393 = vadd.f32 %v847, %v1347
        %v1394 = vadd.f32 %v848, %v1352
        %v1395 = vadd.f32 %v849, %v1355
        %v1396 = vadd.f32 %v850, %v1360
        %v1397 = vadd.f32 %v851, %v1363
        %1398 = vst [vmem:[#allocation2] sm:$0xff] %v1366
        %1399 = vst [vmem:[#allocation2 + $0x8] sm:$0xff] %v1367
        %1400 = vst [vmem:[#allocation2 + $0x10] sm:$0xff] %v1368
        %1401 = vst [vmem:[#allocation2 + $0x18] sm:$0xff] %v1369
        %1402 = vst [vmem:[#allocation2 + $0x20] sm:$0xff] %v1370
        %1403 = vst [vmem:[#allocation2 + $0x28] sm:$0xff] %v1371
        %1404 = vst [vmem:[#allocation2 + $0x30] sm:$0xff] %v1372
        %1405 = vst [vmem:[#allocation2 + $0x38] sm:$0xff] %v1373
        %1406 = vst [vmem:[#allocation2 + $0x40] sm:$0xff] %v1374
        %1407 = vst [vmem:[#allocation2 + $0x48] sm:$0xff] %v1375
        %1408 = vst [vmem:[#allocation2 + $0x50] sm:$0xff] %v1376
        %1409 = vst [vmem:[#allocation2 + $0x58] sm:$0xff] %v1377
        %1410 = vst [vmem:[#allocation2 + $0x60] sm:$0xff] %v1378
        %1411 = vst [vmem:[#allocation2 + $0x68] sm:$0xff] %v1379
        %1412 = vst [vmem:[#allocation2 + $0x70] sm:$0xff] %v1380
        %1413 = vst [vmem:[#allocation2 + $0x78] sm:$0xff] %v1381
        %1414 = vst [vmem:[#allocation2 + $0x80] sm:$0xff] %v1382
        %1415 = vst [vmem:[#allocation2 + $0x88] sm:$0xff] %v1383
        %1416 = vst [vmem:[#allocation2 + $0x90] sm:$0xff] %v1384
        %1417 = vst [vmem:[#allocation2 + $0x98] sm:$0xff] %v1385
        %1418 = vst [vmem:[#allocation2 + $0xa0] sm:$0xff] %v1386
        %1419 = vst [vmem:[#allocation2 + $0xa8] sm:$0xff] %v1387
        %1420 = vst [vmem:[#allocation2 + $0xb0] sm:$0xff] %v1388
        %1421 = vst [vmem:[#allocation2 + $0xb8] sm:$0xff] %v1389
        %1422 = vst [vmem:[#allocation2 + $0xc0] sm:$0xff] %v1390
        %1423 = vst [vmem:[#allocation2 + $0xc8] sm:$0xff] %v1391
        %1424 = vst [vmem:[#allocation2 + $0xd0] sm:$0xff] %v1392
        %1425 = vst [vmem:[#allocation2 + $0xd8] sm:$0xff] %v1393
        %1426 = vst [vmem:[#allocation2 + $0xe0] sm:$0xff] %v1394
        %1427 = vst [vmem:[#allocation2 + $0xe8] sm:$0xff] %v1395
        %1428 = vst [vmem:[#allocation2 + $0xf0] sm:$0xff] %v1396
        %1429 = vst [vmem:[#allocation2 + $0xf8] sm:$0xff] %v1397
        %s1430 = scalar_lea.vmem %s273, 12 [#allocation4]
        %v1431 = vld [vmem:[%s1430] sm:$0xf]
        %v1432 = vld [vmem:[%s1430 + $0x4] sm:$0xf]
        %v1433 = vld [vmem:[%s1430 + $0x8] sm:$0xf]
        %v1434 = vld [vmem:[%s1430 + $0xc] sm:$0xf]
        %v1435 = vld [vmem:[%s1430 + $0x10] sm:$0xf]
        %v1436 = vld [vmem:[%s1430 + $0x14] sm:$0xf]
        %v1437 = vld [vmem:[%s1430 + $0x18] sm:$0xf]
        %v1438 = vld [vmem:[%s1430 + $0x1c] sm:$0xf]
        %v1439 = vld [vmem:[%s1430 + $0x20] sm:$0xf]
        %v1440 = vld [vmem:[%s1430 + $0x24] sm:$0xf]
        %v1441 = vld [vmem:[%s1430 + $0x28] sm:$0xf]
        %v1442 = vld [vmem:[%s1430 + $0x2c] sm:$0xf]
        %v1443 = vld [vmem:[%s1430 + $0x30] sm:$0xf]
        %v1444 = vld [vmem:[%s1430 + $0x34] sm:$0xf]
        %v1445 = vld [vmem:[%s1430 + $0x38] sm:$0xf]
        %v1446 = vld [vmem:[%s1430 + $0x3c] sm:$0xf]
        %v1447 = vld [vmem:[%s1430 + $0x40] sm:$0xf]
        %v1448 = vld [vmem:[%s1430 + $0x44] sm:$0xf]
        %v1449 = vld [vmem:[%s1430 + $0x48] sm:$0xf]
        %v1450 = vld [vmem:[%s1430 + $0x4c] sm:$0xf]
        %v1451 = vld [vmem:[%s1430 + $0x50] sm:$0xf]
        %v1452 = vld [vmem:[%s1430 + $0x54] sm:$0xf]
        %v1453 = vld [vmem:[%s1430 + $0x58] sm:$0xf]
        %v1454 = vld [vmem:[%s1430 + $0x5c] sm:$0xf]
        %v1455 = vld [vmem:[%s1430 + $0x60] sm:$0xf]
        %v1456 = vld [vmem:[%s1430 + $0x64] sm:$0xf]
        %v1457 = vld [vmem:[%s1430 + $0x68] sm:$0xf]
        %v1458 = vld [vmem:[%s1430 + $0x6c] sm:$0xf]
        %v1459 = vld [vmem:[%s1430 + $0x70] sm:$0xf]
        %v1460 = vld [vmem:[%s1430 + $0x74] sm:$0xf]
        %v1461 = vld [vmem:[%s1430 + $0x78] sm:$0xf]
        %v1462 = vld [vmem:[%s1430 + $0x7c] sm:$0xf]
        %v1463 = vld [vmem:[%s1430 + $0x80] sm:$0xf]
        %v1464 = vld [vmem:[%s1430 + $0x84] sm:$0xf]
        %v1465 = vld [vmem:[%s1430 + $0x88] sm:$0xf]
        %v1466 = vld [vmem:[%s1430 + $0x8c] sm:$0xf]
        %v1467 = vld [vmem:[%s1430 + $0x90] sm:$0xf]
        %v1468 = vld [vmem:[%s1430 + $0x94] sm:$0xf]
        %v1469 = vld [vmem:[%s1430 + $0x98] sm:$0xf]
        %v1470 = vld [vmem:[%s1430 + $0x9c] sm:$0xf]
        %v1471 = vld [vmem:[%s1430 + $0xa0] sm:$0xf]
        %v1472 = vld [vmem:[%s1430 + $0xa4] sm:$0xf]
        %v1473 = vld [vmem:[%s1430 + $0xa8] sm:$0xf]
        %v1474 = vld [vmem:[%s1430 + $0xac] sm:$0xf]
        %v1475 = vld [vmem:[%s1430 + $0xb0] sm:$0xf]
        %v1476 = vld [vmem:[%s1430 + $0xb4] sm:$0xf]
        %v1477 = vld [vmem:[%s1430 + $0xb8] sm:$0xf]
        %v1478 = vld [vmem:[%s1430 + $0xbc] sm:$0xf]
        %v1511 = vunpack.c.l.b16 %v1431
        %v1512 = vunpack.c.l.b16 %v1432
        %v1513 = vunpack.c.l.b16 %v1434
        %v1514 = vunpack.c.l.b16 %v1435
        %v1515 = vunpack.c.l.b16 %v1437
        %v1516 = vunpack.c.l.b16 %v1438
        %v1517 = vunpack.c.l.b16 %v1440
        %v1518 = vunpack.c.l.b16 %v1441
        %v1519 = vunpack.c.l.b16 %v1443
        %v1520 = vunpack.c.l.b16 %v1444
        %v1521 = vunpack.c.l.b16 %v1446
        %v1522 = vunpack.c.l.b16 %v1447
        %v1523 = vunpack.c.l.b16 %v1449
        %v1524 = vunpack.c.l.b16 %v1450
        %v1525 = vunpack.c.l.b16 %v1452
        %v1526 = vunpack.c.l.b16 %v1453
        %v1527 = vunpack.c.l.b16 %v1455
        %v1528 = vunpack.c.l.b16 %v1456
        %v1529 = vunpack.c.l.b16 %v1458
        %v1530 = vunpack.c.l.b16 %v1459
        %v1531 = vunpack.c.l.b16 %v1461
        %v1532 = vunpack.c.l.b16 %v1462
        %v1533 = vunpack.c.l.b16 %v1464
        %v1534 = vunpack.c.l.b16 %v1465
        %v1535 = vunpack.c.l.b16 %v1467
        %v1536 = vunpack.c.l.b16 %v1468
        %v1537 = vunpack.c.l.b16 %v1470
        %v1538 = vunpack.c.l.b16 %v1471
        %v1539 = vunpack.c.l.b16 %v1473
        %v1540 = vunpack.c.l.b16 %v1474
        %v1541 = vunpack.c.l.b16 %v1476
        %v1542 = vunpack.c.l.b16 %v1477
        %v1543 = vpack.c.b16 %v1512, %v1511
        %v1544 = vpack.c.b16 %v1514, %v1513
        %v1545 = vpack.c.b16 %v1516, %v1515
        %v1546 = vpack.c.b16 %v1518, %v1517
        %v1547 = vpack.c.b16 %v1520, %v1519
        %v1548 = vpack.c.b16 %v1522, %v1521
        %v1549 = vpack.c.b16 %v1524, %v1523
        %v1550 = vpack.c.b16 %v1526, %v1525
        %v1551 = vpack.c.b16 %v1528, %v1527
        %v1552 = vpack.c.b16 %v1530, %v1529
        %v1553 = vpack.c.b16 %v1532, %v1531
        %v1554 = vpack.c.b16 %v1534, %v1533
        %v1555 = vpack.c.b16 %v1536, %v1535
        %v1556 = vpack.c.b16 %v1538, %v1537
        %v1557 = vpack.c.b16 %v1540, %v1539
        %v1558 = vpack.c.b16 %v1542, %v1541
        %v1591 = vunpack.c.l.b16 %v1433
        %v1592 = vunpack.c.l.b16 %v1436
        %v1593 = vunpack.c.l.b16 %v1439
        %v1594 = vunpack.c.l.b16 %v1442
        %v1595 = vunpack.c.l.b16 %v1445
        %v1596 = vunpack.c.l.b16 %v1448
        %v1597 = vunpack.c.l.b16 %v1451
        %v1598 = vunpack.c.l.b16 %v1454
        %v1599 = vunpack.c.l.b16 %v1457
        %v1600 = vunpack.c.l.b16 %v1460
        %v1601 = vunpack.c.l.b16 %v1463
        %v1602 = vunpack.c.l.b16 %v1466
        %v1603 = vunpack.c.l.b16 %v1469
        %v1604 = vunpack.c.l.b16 %v1472
        %v1605 = vunpack.c.l.b16 %v1475
        %v1606 = vunpack.c.l.b16 %v1478
        %v1607 = vpack.c.b16 %v1591, %v1591
        %v1608 = vpack.c.b16 %v1592, %v1592
        %v1609 = vpack.c.b16 %v1593, %v1593
        %v1610 = vpack.c.b16 %v1594, %v1594
        %v1611 = vpack.c.b16 %v1595, %v1595
        %v1612 = vpack.c.b16 %v1596, %v1596
        %v1613 = vpack.c.b16 %v1597, %v1597
        %v1614 = vpack.c.b16 %v1598, %v1598
        %v1615 = vpack.c.b16 %v1599, %v1599
        %v1616 = vpack.c.b16 %v1600, %v1600
        %v1617 = vpack.c.b16 %v1601, %v1601
        %v1618 = vpack.c.b16 %v1602, %v1602
        %v1619 = vpack.c.b16 %v1603, %v1603
        %v1620 = vpack.c.b16 %v1604, %v1604
        %v1621 = vpack.c.b16 %v1605, %v1605
        %v1622 = vpack.c.b16 %v1606, %v1606
        %v1624 = vshrl.u32 %v1543, 16
        %v1626 = vshll.u32 %v1543, 16
        %v1628 = vrot.slane %v1626, 1
        %v1629 = vor.u32 %v1624, %v1628
        %v1631 = vshll.u32 %v1607, 16
        %v1633 = vrot.slane %v1631, 1
        %v1634 = vsel %vm546, %v1629, %v1633
        %v1636 = vshrl.u32 %v1544, 16
        %v1638 = vshll.u32 %v1544, 16
        %v1640 = vrot.slane %v1638, 1
        %v1641 = vor.u32 %v1636, %v1640
        %v1643 = vshll.u32 %v1608, 16
        %v1645 = vrot.slane %v1643, 1
        %v1646 = vsel %vm546, %v1641, %v1645
        %v1648 = vshrl.u32 %v1545, 16
        %v1650 = vshll.u32 %v1545, 16
        %v1652 = vrot.slane %v1650, 1
        %v1653 = vor.u32 %v1648, %v1652
        %v1655 = vshll.u32 %v1609, 16
        %v1657 = vrot.slane %v1655, 1
        %v1658 = vsel %vm546, %v1653, %v1657
        %v1660 = vshrl.u32 %v1546, 16
        %v1662 = vshll.u32 %v1546, 16
        %v1664 = vrot.slane %v1662, 1
        %v1665 = vor.u32 %v1660, %v1664
        %v1667 = vshll.u32 %v1610, 16
        %v1669 = vrot.slane %v1667, 1
        %v1670 = vsel %vm546, %v1665, %v1669
        %v1672 = vshrl.u32 %v1547, 16
        %v1674 = vshll.u32 %v1547, 16
        %v1676 = vrot.slane %v1674, 1
        %v1677 = vor.u32 %v1672, %v1676
        %v1679 = vshll.u32 %v1611, 16
        %v1681 = vrot.slane %v1679, 1
        %v1682 = vsel %vm546, %v1677, %v1681
        %v1684 = vshrl.u32 %v1548, 16
        %v1686 = vshll.u32 %v1548, 16
        %v1688 = vrot.slane %v1686, 1
        %v1689 = vor.u32 %v1684, %v1688
        %v1691 = vshll.u32 %v1612, 16
        %v1693 = vrot.slane %v1691, 1
        %v1694 = vsel %vm546, %v1689, %v1693
        %v1696 = vshrl.u32 %v1549, 16
        %v1698 = vshll.u32 %v1549, 16
        %v1700 = vrot.slane %v1698, 1
        %v1701 = vor.u32 %v1696, %v1700
        %v1703 = vshll.u32 %v1613, 16
        %v1705 = vrot.slane %v1703, 1
        %v1706 = vsel %vm546, %v1701, %v1705
        %v1708 = vshrl.u32 %v1550, 16
        %v1710 = vshll.u32 %v1550, 16
        %v1712 = vrot.slane %v1710, 1
        %v1713 = vor.u32 %v1708, %v1712
        %v1715 = vshll.u32 %v1614, 16
        %v1717 = vrot.slane %v1715, 1
        %v1718 = vsel %vm546, %v1713, %v1717
        %v1720 = vshrl.u32 %v1551, 16
        %v1722 = vshll.u32 %v1551, 16
        %v1724 = vrot.slane %v1722, 1
        %v1725 = vor.u32 %v1720, %v1724
        %v1727 = vshll.u32 %v1615, 16
        %v1729 = vrot.slane %v1727, 1
        %v1730 = vsel %vm546, %v1725, %v1729
        %v1732 = vshrl.u32 %v1552, 16
        %v1734 = vshll.u32 %v1552, 16
        %v1736 = vrot.slane %v1734, 1
        %v1737 = vor.u32 %v1732, %v1736
        %v1739 = vshll.u32 %v1616, 16
        %v1741 = vrot.slane %v1739, 1
        %v1742 = vsel %vm546, %v1737, %v1741
        %v1744 = vshrl.u32 %v1553, 16
        %v1746 = vshll.u32 %v1553, 16
        %v1748 = vrot.slane %v1746, 1
        %v1749 = vor.u32 %v1744, %v1748
        %v1751 = vshll.u32 %v1617, 16
        %v1753 = vrot.slane %v1751, 1
        %v1754 = vsel %vm546, %v1749, %v1753
        %v1756 = vshrl.u32 %v1554, 16
        %v1758 = vshll.u32 %v1554, 16
        %v1760 = vrot.slane %v1758, 1
        %v1761 = vor.u32 %v1756, %v1760
        %v1763 = vshll.u32 %v1618, 16
        %v1765 = vrot.slane %v1763, 1
        %v1766 = vsel %vm546, %v1761, %v1765
        %v1768 = vshrl.u32 %v1555, 16
        %v1770 = vshll.u32 %v1555, 16
        %v1772 = vrot.slane %v1770, 1
        %v1773 = vor.u32 %v1768, %v1772
        %v1775 = vshll.u32 %v1619, 16
        %v1777 = vrot.slane %v1775, 1
        %v1778 = vsel %vm546, %v1773, %v1777
        %v1780 = vshrl.u32 %v1556, 16
        %v1782 = vshll.u32 %v1556, 16
        %v1784 = vrot.slane %v1782, 1
        %v1785 = vor.u32 %v1780, %v1784
        %v1787 = vshll.u32 %v1620, 16
        %v1789 = vrot.slane %v1787, 1
        %v1790 = vsel %vm546, %v1785, %v1789
        %v1792 = vshrl.u32 %v1557, 16
        %v1794 = vshll.u32 %v1557, 16
        %v1796 = vrot.slane %v1794, 1
        %v1797 = vor.u32 %v1792, %v1796
        %v1799 = vshll.u32 %v1621, 16
        %v1801 = vrot.slane %v1799, 1
        %v1802 = vsel %vm546, %v1797, %v1801
        %v1804 = vshrl.u32 %v1558, 16
        %v1806 = vshll.u32 %v1558, 16
        %v1808 = vrot.slane %v1806, 1
        %v1809 = vor.u32 %v1804, %v1808
        %v1811 = vshll.u32 %v1622, 16
        %v1813 = vrot.slane %v1811, 1
        %v1814 = vsel %vm546, %v1809, %v1813
        %v1831 = vrot.slane %v1543, 1
        %v1832 = vrot.slane %v1607, 1
        %v1833 = vsel %vm755, %v1831, %v1832
        %v1834 = vrot.slane %v1544, 1
        %v1835 = vrot.slane %v1608, 1
        %v1836 = vsel %vm755, %v1834, %v1835
        %v1837 = vrot.slane %v1545, 1
        %v1838 = vrot.slane %v1609, 1
        %v1839 = vsel %vm755, %v1837, %v1838
        %v1840 = vrot.slane %v1546, 1
        %v1841 = vrot.slane %v1610, 1
        %v1842 = vsel %vm755, %v1840, %v1841
        %v1843 = vrot.slane %v1547, 1
        %v1844 = vrot.slane %v1611, 1
        %v1845 = vsel %vm755, %v1843, %v1844
        %v1846 = vrot.slane %v1548, 1
        %v1847 = vrot.slane %v1612, 1
        %v1848 = vsel %vm755, %v1846, %v1847
        %v1849 = vrot.slane %v1549, 1
        %v1850 = vrot.slane %v1613, 1
        %v1851 = vsel %vm755, %v1849, %v1850
        %v1852 = vrot.slane %v1550, 1
        %v1853 = vrot.slane %v1614, 1
        %v1854 = vsel %vm755, %v1852, %v1853
        %v1855 = vrot.slane %v1551, 1
        %v1856 = vrot.slane %v1615, 1
        %v1857 = vsel %vm755, %v1855, %v1856
        %v1858 = vrot.slane %v1552, 1
        %v1859 = vrot.slane %v1616, 1
        %v1860 = vsel %vm755, %v1858, %v1859
        %v1861 = vrot.slane %v1553, 1
        %v1862 = vrot.slane %v1617, 1
        %v1863 = vsel %vm755, %v1861, %v1862
        %v1864 = vrot.slane %v1554, 1
        %v1865 = vrot.slane %v1618, 1
        %v1866 = vsel %vm755, %v1864, %v1865
        %v1867 = vrot.slane %v1555, 1
        %v1868 = vrot.slane %v1619, 1
        %v1869 = vsel %vm755, %v1867, %v1868
        %v1870 = vrot.slane %v1556, 1
        %v1871 = vrot.slane %v1620, 1
        %v1872 = vsel %vm755, %v1870, %v1871
        %v1873 = vrot.slane %v1557, 1
        %v1874 = vrot.slane %v1621, 1
        %v1875 = vsel %vm755, %v1873, %v1874
        %v1876 = vrot.slane %v1558, 1
        %v1877 = vrot.slane %v1622, 1
        %v1878 = vsel %vm755, %v1876, %v1877
        %v1895 = vld [vmem:[#allocation2] sm:$0xff]
        %v1896 = vld [vmem:[#allocation2 + $0x8] sm:$0xff]
        %v1897 = vld [vmem:[#allocation2 + $0x10] sm:$0xff]
        %v1898 = vld [vmem:[#allocation2 + $0x18] sm:$0xff]
        %v1899 = vld [vmem:[#allocation2 + $0x20] sm:$0xff]
        %v1900 = vld [vmem:[#allocation2 + $0x28] sm:$0xff]
        %v1901 = vld [vmem:[#allocation2 + $0x30] sm:$0xff]
        %v1902 = vld [vmem:[#allocation2 + $0x38] sm:$0xff]
        %v1903 = vld [vmem:[#allocation2 + $0x40] sm:$0xff]
        %v1904 = vld [vmem:[#allocation2 + $0x48] sm:$0xff]
        %v1905 = vld [vmem:[#allocation2 + $0x50] sm:$0xff]
        %v1906 = vld [vmem:[#allocation2 + $0x58] sm:$0xff]
        %v1907 = vld [vmem:[#allocation2 + $0x60] sm:$0xff]
        %v1908 = vld [vmem:[#allocation2 + $0x68] sm:$0xff]
        %v1909 = vld [vmem:[#allocation2 + $0x70] sm:$0xff]
        %v1910 = vld [vmem:[#allocation2 + $0x78] sm:$0xff]
        %v1911 = vld [vmem:[#allocation2 + $0x80] sm:$0xff]
        %v1912 = vld [vmem:[#allocation2 + $0x88] sm:$0xff]
        %v1913 = vld [vmem:[#allocation2 + $0x90] sm:$0xff]
        %v1914 = vld [vmem:[#allocation2 + $0x98] sm:$0xff]
        %v1915 = vld [vmem:[#allocation2 + $0xa0] sm:$0xff]
        %v1916 = vld [vmem:[#allocation2 + $0xa8] sm:$0xff]
        %v1917 = vld [vmem:[#allocation2 + $0xb0] sm:$0xff]
        %v1918 = vld [vmem:[#allocation2 + $0xb8] sm:$0xff]
        %v1919 = vld [vmem:[#allocation2 + $0xc0] sm:$0xff]
        %v1920 = vld [vmem:[#allocation2 + $0xc8] sm:$0xff]
        %v1921 = vld [vmem:[#allocation2 + $0xd0] sm:$0xff]
        %v1922 = vld [vmem:[#allocation2 + $0xd8] sm:$0xff]
        %v1923 = vld [vmem:[#allocation2 + $0xe0] sm:$0xff]
        %v1924 = vld [vmem:[#allocation2 + $0xe8] sm:$0xff]
        %v1925 = vld [vmem:[#allocation2 + $0xf0] sm:$0xff]
        %v1926 = vld [vmem:[#allocation2 + $0xf8] sm:$0xff]
        %s1927 = scalar_lea.vmem [#allocation7], 192
        %v1928 = vld [vmem:[%s1927] sm:$0xf]
        %v1929 = vld [vmem:[%s1927 + $0x4] sm:$0xf]
        %v1930 = vld [vmem:[%s1927 + $0x8] sm:$0xf]
        %v1931 = vld [vmem:[%s1927 + $0xc] sm:$0xf]
        %v1932 = vld [vmem:[%s1927 + $0x10] sm:$0xf]
        %v1933 = vld [vmem:[%s1927 + $0x14] sm:$0xf]
        %v1934 = vld [vmem:[%s1927 + $0x18] sm:$0xf]
        %v1935 = vld [vmem:[%s1927 + $0x1c] sm:$0xf]
        %v1936 = vld [vmem:[%s1927 + $0x20] sm:$0xf]
        %v1937 = vld [vmem:[%s1927 + $0x24] sm:$0xf]
        %v1938 = vld [vmem:[%s1927 + $0x28] sm:$0xf]
        %v1939 = vld [vmem:[%s1927 + $0x2c] sm:$0xf]
        %v1940 = vld [vmem:[%s1927 + $0x30] sm:$0xf]
        %v1941 = vld [vmem:[%s1927 + $0x34] sm:$0xf]
        %v1942 = vld [vmem:[%s1927 + $0x38] sm:$0xf]
        %v1943 = vld [vmem:[%s1927 + $0x3c] sm:$0xf]
        %v1944 = vld [vmem:[%s1927 + $0x40] sm:$0xf]
        %v1945 = vld [vmem:[%s1927 + $0x44] sm:$0xf]
        %v1946 = vld [vmem:[%s1927 + $0x48] sm:$0xf]
        %v1947 = vld [vmem:[%s1927 + $0x4c] sm:$0xf]
        %v1948 = vld [vmem:[%s1927 + $0x50] sm:$0xf]
        %v1949 = vld [vmem:[%s1927 + $0x54] sm:$0xf]
        %v1950 = vld [vmem:[%s1927 + $0x58] sm:$0xf]
        %v1951 = vld [vmem:[%s1927 + $0x5c] sm:$0xf]
        %v1952 = vld [vmem:[%s1927 + $0x60] sm:$0xf]
        %v1953 = vld [vmem:[%s1927 + $0x64] sm:$0xf]
        %v1954 = vld [vmem:[%s1927 + $0x68] sm:$0xf]
        %v1955 = vld [vmem:[%s1927 + $0x6c] sm:$0xf]
        %v1956 = vld [vmem:[%s1927 + $0x70] sm:$0xf]
        %v1957 = vld [vmem:[%s1927 + $0x74] sm:$0xf]
        %v1958 = vld [vmem:[%s1927 + $0x78] sm:$0xf]
        %v1959 = vld [vmem:[%s1927 + $0x7c] sm:$0xf]
        %v1960 = vld [vmem:[%s1927 + $0x80] sm:$0xf]
        %v1961 = vld [vmem:[%s1927 + $0x84] sm:$0xf]
        %v1962 = vld [vmem:[%s1927 + $0x88] sm:$0xf]
        %v1963 = vld [vmem:[%s1927 + $0x8c] sm:$0xf]
        %v1964 = vld [vmem:[%s1927 + $0x90] sm:$0xf]
        %v1965 = vld [vmem:[%s1927 + $0x94] sm:$0xf]
        %v1966 = vld [vmem:[%s1927 + $0x98] sm:$0xf]
        %v1967 = vld [vmem:[%s1927 + $0x9c] sm:$0xf]
        %v1968 = vld [vmem:[%s1927 + $0xa0] sm:$0xf]
        %v1969 = vld [vmem:[%s1927 + $0xa4] sm:$0xf]
        %v1970 = vld [vmem:[%s1927 + $0xa8] sm:$0xf]
        %v1971 = vld [vmem:[%s1927 + $0xac] sm:$0xf]
        %v1972 = vld [vmem:[%s1927 + $0xb0] sm:$0xf]
        %v1973 = vld [vmem:[%s1927 + $0xb4] sm:$0xf]
        %v1974 = vld [vmem:[%s1927 + $0xb8] sm:$0xf]
        %v1975 = vld [vmem:[%s1927 + $0xbc] sm:$0xf]
        %v2024 = vunpack.c.l.b16 %v1928
        %v2025 = vunpack.c.l.b16 %v1929
        %v2026 = vunpack.c.l.b16 %v1930
        %v2027 = vunpack.c.l.b16 %v1931
        %v2028 = vunpack.c.l.b16 %v1932
        %v2029 = vunpack.c.l.b16 %v1933
        %v2030 = vunpack.c.l.b16 %v1934
        %v2031 = vunpack.c.l.b16 %v1935
        %v2032 = vunpack.c.l.b16 %v1936
        %v2033 = vunpack.c.l.b16 %v1937
        %v2034 = vunpack.c.l.b16 %v1938
        %v2035 = vunpack.c.l.b16 %v1939
        %v2036 = vunpack.c.l.b16 %v1940
        %v2037 = vunpack.c.l.b16 %v1941
        %v2038 = vunpack.c.l.b16 %v1942
        %v2039 = vunpack.c.l.b16 %v1943
        %v2040 = vunpack.c.l.b16 %v1944
        %v2041 = vunpack.c.l.b16 %v1945
        %v2042 = vunpack.c.l.b16 %v1946
        %v2043 = vunpack.c.l.b16 %v1947
        %v2044 = vunpack.c.l.b16 %v1948
        %v2045 = vunpack.c.l.b16 %v1949
        %v2046 = vunpack.c.l.b16 %v1950
        %v2047 = vunpack.c.l.b16 %v1951
        %v2048 = vunpack.c.l.b16 %v1952
        %v2049 = vunpack.c.l.b16 %v1953
        %v2050 = vunpack.c.l.b16 %v1954
        %v2051 = vunpack.c.l.b16 %v1955
        %v2052 = vunpack.c.l.b16 %v1956
        %v2053 = vunpack.c.l.b16 %v1957
        %v2054 = vunpack.c.l.b16 %v1958
        %v2055 = vunpack.c.l.b16 %v1959
        %v2056 = vunpack.c.l.b16 %v1960
        %v2057 = vunpack.c.l.b16 %v1961
        %v2058 = vunpack.c.l.b16 %v1962
        %v2059 = vunpack.c.l.b16 %v1963
        %v2060 = vunpack.c.l.b16 %v1964
        %v2061 = vunpack.c.l.b16 %v1965
        %v2062 = vunpack.c.l.b16 %v1966
        %v2063 = vunpack.c.l.b16 %v1967
        %v2064 = vunpack.c.l.b16 %v1968
        %v2065 = vunpack.c.l.b16 %v1969
        %v2066 = vunpack.c.l.b16 %v1970
        %v2067 = vunpack.c.l.b16 %v1971
        %v2068 = vunpack.c.l.b16 %v1972
        %v2069 = vunpack.c.l.b16 %v1973
        %v2070 = vunpack.c.l.b16 %v1974
        %v2071 = vunpack.c.l.b16 %v1975
        %v2072 = vpack.c.b16 %v2025, %v2024
        %v2073 = vpack.c.b16 %v2027, %v2026
        %v2074 = vpack.c.b16 %v2029, %v2028
        %v2075 = vpack.c.b16 %v2031, %v2030
        %v2076 = vpack.c.b16 %v2033, %v2032
        %v2077 = vpack.c.b16 %v2035, %v2034
        %v2078 = vpack.c.b16 %v2037, %v2036
        %v2079 = vpack.c.b16 %v2039, %v2038
        %v2080 = vpack.c.b16 %v2041, %v2040
        %v2081 = vpack.c.b16 %v2043, %v2042
        %v2082 = vpack.c.b16 %v2045, %v2044
        %v2083 = vpack.c.b16 %v2047, %v2046
        %v2084 = vpack.c.b16 %v2049, %v2048
        %v2085 = vpack.c.b16 %v2051, %v2050
        %v2086 = vpack.c.b16 %v2053, %v2052
        %v2087 = vpack.c.b16 %v2055, %v2054
        %v2088 = vpack.c.b16 %v2057, %v2056
        %v2089 = vpack.c.b16 %v2059, %v2058
        %v2090 = vpack.c.b16 %v2061, %v2060
        %v2091 = vpack.c.b16 %v2063, %v2062
        %v2092 = vpack.c.b16 %v2065, %v2064
        %v2093 = vpack.c.b16 %v2067, %v2066
        %v2094 = vpack.c.b16 %v2069, %v2068
        %v2095 = vpack.c.b16 %v2071, %v2070
        %2120 = vmatprep.subr.bf16.mxu0 0
        %2121 = vmatpush1.bf16.msra.mxu0 %v2079
        %2122 = vmatprep.subr.bf16.mxu0 0
        %2123 = vmatpush1.bf16.msra.mxu0 %v2078
        %2124 = vmatprep.subr.bf16.mxu0 0
        %2125 = vmatpush1.bf16.msra.mxu0 %v2077
        %2126 = vmatprep.subr.bf16.mxu0 0
        %2127 = vmatpush1.bf16.msra.mxu0 %v2076
        %2128 = vmatprep.subr.bf16.mxu0 0
        %2129 = vmatpush1.bf16.msra.mxu0 %v2075
        %2130 = vmatprep.subr.bf16.mxu0 0
        %2131 = vmatpush1.bf16.msra.mxu0 %v2074
        %2132 = vmatprep.subr.bf16.mxu0 0
        %2133 = vmatpush1.bf16.msra.mxu0 %v2073
        %2134 = vmatprep.subr.bf16.mxu0 0
        %2135 = vmatpush1.bf16.msra.mxu0 %v2072
        %2136 = vmatprep.subr.bf16.mxu0 0
        %2137 = vmatpush2.bf16.msra.mxu0 %v2087
        %2138 = vmatprep.subr.bf16.mxu0 0
        %2139 = vmatpush2.bf16.msra.mxu0 %v2086
        %2140 = vmatprep.subr.bf16.mxu0 0
        %2141 = vmatpush2.bf16.msra.mxu0 %v2085
        %2142 = vmatprep.subr.bf16.mxu0 0
        %2143 = vmatpush2.bf16.msra.mxu0 %v2084
        %2144 = vmatprep.subr.bf16.mxu0 0
        %2145 = vmatpush2.bf16.msra.mxu0 %v2083
        %2146 = vmatprep.subr.bf16.mxu0 0
        %2147 = vmatpush2.bf16.msra.mxu0 %v2082
        %2148 = vmatprep.subr.bf16.mxu0 0
        %2149 = vmatpush2.bf16.msra.mxu0 %v2081
        %2150 = vmatprep.subr.bf16.mxu0 0
        %2151 = vmatpush2.bf16.msra.mxu0 %v2080
        %2152 = vmatprep.mubr.bf16.mxu0 %v1634
        %2153 = vmatmul.mubr.bf16.gmra.mxu0 %v1543
        %v2154 = vpop.f32.mrf.mxu0
        %v2155 = vadd.f32 0.0, %v2154
        %v2156 = vpop.f32.mrf.mxu0
        %v2157 = vpop.f32.mrf.mxu0
        %v2158 = vadd.f32 0.0, %v2157
        %v2159 = vpop.f32.mrf.mxu0
        %2160 = vmatprep.mubr.bf16.mxu0 %v1646
        %2161 = vmatmul.mubr.bf16.gmra.mxu0 %v1544
        %v2162 = vpop.f32.mrf.mxu0
        %v2163 = vadd.f32 0.0, %v2162
        %v2164 = vpop.f32.mrf.mxu0
        %v2165 = vpop.f32.mrf.mxu0
        %v2166 = vadd.f32 0.0, %v2165
        %v2167 = vpop.f32.mrf.mxu0
        %2168 = vmatprep.mubr.bf16.mxu0 %v1658
        %2169 = vmatmul.mubr.bf16.gmra.mxu0 %v1545
        %v2170 = vpop.f32.mrf.mxu0
        %v2171 = vadd.f32 0.0, %v2170
        %v2172 = vpop.f32.mrf.mxu0
        %v2173 = vpop.f32.mrf.mxu0
        %v2174 = vadd.f32 0.0, %v2173
        %v2175 = vpop.f32.mrf.mxu0
        %2176 = vmatprep.mubr.bf16.mxu0 %v1670
        %2177 = vmatmul.mubr.bf16.gmra.mxu0 %v1546
        %v2178 = vpop.f32.mrf.mxu0
        %v2179 = vadd.f32 0.0, %v2178
        %v2180 = vpop.f32.mrf.mxu0
        %v2181 = vpop.f32.mrf.mxu0
        %v2182 = vadd.f32 0.0, %v2181
        %v2183 = vpop.f32.mrf.mxu0
        %2184 = vmatprep.mubr.bf16.mxu0 %v1682
        %2185 = vmatmul.mubr.bf16.gmra.mxu0 %v1547
        %v2186 = vpop.f32.mrf.mxu0
        %v2187 = vadd.f32 0.0, %v2186
        %v2188 = vpop.f32.mrf.mxu0
        %v2189 = vpop.f32.mrf.mxu0
        %v2190 = vadd.f32 0.0, %v2189
        %v2191 = vpop.f32.mrf.mxu0
        %2192 = vmatprep.mubr.bf16.mxu0 %v1694
        %2193 = vmatmul.mubr.bf16.gmra.mxu0 %v1548
        %v2194 = vpop.f32.mrf.mxu0
        %v2195 = vadd.f32 0.0, %v2194
        %v2196 = vpop.f32.mrf.mxu0
        %v2197 = vpop.f32.mrf.mxu0
        %v2198 = vadd.f32 0.0, %v2197
        %v2199 = vpop.f32.mrf.mxu0
        %2200 = vmatprep.mubr.bf16.mxu0 %v1706
        %2201 = vmatmul.mubr.bf16.gmra.mxu0 %v1549
        %v2202 = vpop.f32.mrf.mxu0
        %v2203 = vadd.f32 0.0, %v2202
        %v2204 = vpop.f32.mrf.mxu0
        %v2205 = vpop.f32.mrf.mxu0
        %v2206 = vadd.f32 0.0, %v2205
        %v2207 = vpop.f32.mrf.mxu0
        %2208 = vmatprep.mubr.bf16.mxu0 %v1718
        %2209 = vmatmul.mubr.bf16.gmra.mxu0 %v1550
        %v2210 = vpop.f32.mrf.mxu0
        %v2211 = vadd.f32 0.0, %v2210
        %v2212 = vpop.f32.mrf.mxu0
        %v2213 = vpop.f32.mrf.mxu0
        %v2214 = vadd.f32 0.0, %v2213
        %v2215 = vpop.f32.mrf.mxu0
        %2216 = vmatprep.mubr.bf16.mxu0 %v1730
        %2217 = vmatmul.mubr.bf16.gmra.mxu0 %v1551
        %v2218 = vpop.f32.mrf.mxu0
        %v2219 = vadd.f32 0.0, %v2218
        %v2220 = vpop.f32.mrf.mxu0
        %v2221 = vpop.f32.mrf.mxu0
        %v2222 = vadd.f32 0.0, %v2221
        %v2223 = vpop.f32.mrf.mxu0
        %2224 = vmatprep.mubr.bf16.mxu0 %v1742
        %2225 = vmatmul.mubr.bf16.gmra.mxu0 %v1552
        %v2226 = vpop.f32.mrf.mxu0
        %v2227 = vadd.f32 0.0, %v2226
        %v2228 = vpop.f32.mrf.mxu0
        %v2229 = vpop.f32.mrf.mxu0
        %v2230 = vadd.f32 0.0, %v2229
        %v2231 = vpop.f32.mrf.mxu0
        %2232 = vmatprep.mubr.bf16.mxu0 %v1754
        %2233 = vmatmul.mubr.bf16.gmra.mxu0 %v1553
        %v2234 = vpop.f32.mrf.mxu0
        %v2235 = vadd.f32 0.0, %v2234
        %v2236 = vpop.f32.mrf.mxu0
        %v2237 = vpop.f32.mrf.mxu0
        %v2238 = vadd.f32 0.0, %v2237
        %v2239 = vpop.f32.mrf.mxu0
        %2240 = vmatprep.mubr.bf16.mxu0 %v1766
        %2241 = vmatmul.mubr.bf16.gmra.mxu0 %v1554
        %v2242 = vpop.f32.mrf.mxu0
        %v2243 = vadd.f32 0.0, %v2242
        %v2244 = vpop.f32.mrf.mxu0
        %v2245 = vpop.f32.mrf.mxu0
        %v2246 = vadd.f32 0.0, %v2245
        %v2247 = vpop.f32.mrf.mxu0
        %2248 = vmatprep.mubr.bf16.mxu0 %v1778
        %2249 = vmatmul.mubr.bf16.gmra.mxu0 %v1555
        %v2250 = vpop.f32.mrf.mxu0
        %v2251 = vadd.f32 0.0, %v2250
        %v2252 = vpop.f32.mrf.mxu0
        %v2253 = vpop.f32.mrf.mxu0
        %v2254 = vadd.f32 0.0, %v2253
        %v2255 = vpop.f32.mrf.mxu0
        %2256 = vmatprep.mubr.bf16.mxu0 %v1790
        %2257 = vmatmul.mubr.bf16.gmra.mxu0 %v1556
        %v2258 = vpop.f32.mrf.mxu0
        %v2259 = vadd.f32 0.0, %v2258
        %v2260 = vpop.f32.mrf.mxu0
        %v2261 = vpop.f32.mrf.mxu0
        %v2262 = vadd.f32 0.0, %v2261
        %v2263 = vpop.f32.mrf.mxu0
        %2264 = vmatprep.mubr.bf16.mxu0 %v1802
        %2265 = vmatmul.mubr.bf16.gmra.mxu0 %v1557
        %v2266 = vpop.f32.mrf.mxu0
        %v2267 = vadd.f32 0.0, %v2266
        %v2268 = vpop.f32.mrf.mxu0
        %v2269 = vpop.f32.mrf.mxu0
        %v2270 = vadd.f32 0.0, %v2269
        %v2271 = vpop.f32.mrf.mxu0
        %2272 = vmatprep.mubr.bf16.mxu0 %v1814
        %2273 = vmatmul.mubr.bf16.gmra.mxu0 %v1558
        %v2274 = vpop.f32.mrf.mxu0
        %v2275 = vadd.f32 0.0, %v2274
        %v2276 = vpop.f32.mrf.mxu0
        %v2277 = vpop.f32.mrf.mxu0
        %v2278 = vadd.f32 0.0, %v2277
        %v2279 = vpop.f32.mrf.mxu0
        %2280 = vdwg.mxu0
        %2281 = vmatprep.subr.bf16.mxu0 0
        %2282 = vmatpush1.bf16.msra.mxu0 %v2095
        %2283 = vmatprep.subr.bf16.mxu0 0
        %2284 = vmatpush1.bf16.msra.mxu0 %v2094
        %2285 = vmatprep.subr.bf16.mxu0 0
        %2286 = vmatpush1.bf16.msra.mxu0 %v2093
        %2287 = vmatprep.subr.bf16.mxu0 0
        %2288 = vmatpush1.bf16.msra.mxu0 %v2092
        %2289 = vmatprep.subr.bf16.mxu0 0
        %2290 = vmatpush1.bf16.msra.mxu0 %v2091
        %2291 = vmatprep.subr.bf16.mxu0 0
        %2292 = vmatpush1.bf16.msra.mxu0 %v2090
        %2293 = vmatprep.subr.bf16.mxu0 0
        %2294 = vmatpush1.bf16.msra.mxu0 %v2089
        %2295 = vmatprep.subr.bf16.mxu0 0
        %2296 = vmatpush1.bf16.msra.mxu0 %v2088
        %2297 = vmatprep.subr.bf16.mxu0 0
        %2298 = vmatpush2.bf16.msra.mxu0 0
        %2299 = vmatprep.subr.bf16.mxu0 0
        %2300 = vmatpush2.bf16.msra.mxu0 0
        %2301 = vmatprep.subr.bf16.mxu0 0
        %2302 = vmatpush2.bf16.msra.mxu0 0
        %2303 = vmatprep.subr.bf16.mxu0 0
        %2304 = vmatpush2.bf16.msra.mxu0 0
        %2305 = vmatprep.subr.bf16.mxu0 0
        %2306 = vmatpush2.bf16.msra.mxu0 0
        %2307 = vmatprep.subr.bf16.mxu0 0
        %2308 = vmatpush2.bf16.msra.mxu0 0
        %2309 = vmatprep.subr.bf16.mxu0 0
        %2310 = vmatpush2.bf16.msra.mxu0 0
        %2311 = vmatprep.subr.bf16.mxu0 0
        %2312 = vmatpush2.bf16.msra.mxu0 0
        %2313 = vmatprep.mubr.bf16.mxu0 0
        %2314 = vmatmul.mubr.bf16.gmra.mxu0 %v1833
        %v2315 = vpop.f32.mrf.mxu0
        %v2316 = vadd.f32 %v2155, %v2315
        %v2317 = vpop.f32.mrf.mxu0
        %v2318 = vpop.f32.mrf.mxu0
        %v2319 = vadd.f32 %v2158, %v2318
        %v2320 = vpop.f32.mrf.mxu0
        %2321 = vmatprep.mubr.bf16.mxu0 0
        %2322 = vmatmul.mubr.bf16.gmra.mxu0 %v1836
        %v2323 = vpop.f32.mrf.mxu0
        %v2324 = vadd.f32 %v2163, %v2323
        %v2325 = vpop.f32.mrf.mxu0
        %v2326 = vpop.f32.mrf.mxu0
        %v2327 = vadd.f32 %v2166, %v2326
        %v2328 = vpop.f32.mrf.mxu0
        %2329 = vmatprep.mubr.bf16.mxu0 0
        %2330 = vmatmul.mubr.bf16.gmra.mxu0 %v1839
        %v2331 = vpop.f32.mrf.mxu0
        %v2332 = vadd.f32 %v2171, %v2331
        %v2333 = vpop.f32.mrf.mxu0
        %v2334 = vpop.f32.mrf.mxu0
        %v2335 = vadd.f32 %v2174, %v2334
        %v2336 = vpop.f32.mrf.mxu0
        %2337 = vmatprep.mubr.bf16.mxu0 0
        %2338 = vmatmul.mubr.bf16.gmra.mxu0 %v1842
        %v2339 = vpop.f32.mrf.mxu0
        %v2340 = vadd.f32 %v2179, %v2339
        %v2341 = vpop.f32.mrf.mxu0
        %v2342 = vpop.f32.mrf.mxu0
        %v2343 = vadd.f32 %v2182, %v2342
        %v2344 = vpop.f32.mrf.mxu0
        %2345 = vmatprep.mubr.bf16.mxu0 0
        %2346 = vmatmul.mubr.bf16.gmra.mxu0 %v1845
        %v2347 = vpop.f32.mrf.mxu0
        %v2348 = vadd.f32 %v2187, %v2347
        %v2349 = vpop.f32.mrf.mxu0
        %v2350 = vpop.f32.mrf.mxu0
        %v2351 = vadd.f32 %v2190, %v2350
        %v2352 = vpop.f32.mrf.mxu0
        %2353 = vmatprep.mubr.bf16.mxu0 0
        %2354 = vmatmul.mubr.bf16.gmra.mxu0 %v1848
        %v2355 = vpop.f32.mrf.mxu0
        %v2356 = vadd.f32 %v2195, %v2355
        %v2357 = vpop.f32.mrf.mxu0
        %v2358 = vpop.f32.mrf.mxu0
        %v2359 = vadd.f32 %v2198, %v2358
        %v2360 = vpop.f32.mrf.mxu0
        %2361 = vmatprep.mubr.bf16.mxu0 0
        %2362 = vmatmul.mubr.bf16.gmra.mxu0 %v1851
        %v2363 = vpop.f32.mrf.mxu0
        %v2364 = vadd.f32 %v2203, %v2363
        %v2365 = vpop.f32.mrf.mxu0
        %v2366 = vpop.f32.mrf.mxu0
        %v2367 = vadd.f32 %v2206, %v2366
        %v2368 = vpop.f32.mrf.mxu0
        %2369 = vmatprep.mubr.bf16.mxu0 0
        %2370 = vmatmul.mubr.bf16.gmra.mxu0 %v1854
        %v2371 = vpop.f32.mrf.mxu0
        %v2372 = vadd.f32 %v2211, %v2371
        %v2373 = vpop.f32.mrf.mxu0
        %v2374 = vpop.f32.mrf.mxu0
        %v2375 = vadd.f32 %v2214, %v2374
        %v2376 = vpop.f32.mrf.mxu0
        %2377 = vmatprep.mubr.bf16.mxu0 0
        %2378 = vmatmul.mubr.bf16.gmra.mxu0 %v1857
        %v2379 = vpop.f32.mrf.mxu0
        %v2380 = vadd.f32 %v2219, %v2379
        %v2381 = vpop.f32.mrf.mxu0
        %v2382 = vpop.f32.mrf.mxu0
        %v2383 = vadd.f32 %v2222, %v2382
        %v2384 = vpop.f32.mrf.mxu0
        %2385 = vmatprep.mubr.bf16.mxu0 0
        %2386 = vmatmul.mubr.bf16.gmra.mxu0 %v1860
        %v2387 = vpop.f32.mrf.mxu0
        %v2388 = vadd.f32 %v2227, %v2387
        %v2389 = vpop.f32.mrf.mxu0
        %v2390 = vpop.f32.mrf.mxu0
        %v2391 = vadd.f32 %v2230, %v2390
        %v2392 = vpop.f32.mrf.mxu0
        %2393 = vmatprep.mubr.bf16.mxu0 0
        %2394 = vmatmul.mubr.bf16.gmra.mxu0 %v1863
        %v2395 = vpop.f32.mrf.mxu0
        %v2396 = vadd.f32 %v2235, %v2395
        %v2397 = vpop.f32.mrf.mxu0
        %v2398 = vpop.f32.mrf.mxu0
        %v2399 = vadd.f32 %v2238, %v2398
        %v2400 = vpop.f32.mrf.mxu0
        %2401 = vmatprep.mubr.bf16.mxu0 0
        %2402 = vmatmul.mubr.bf16.gmra.mxu0 %v1866
        %v2403 = vpop.f32.mrf.mxu0
        %v2404 = vadd.f32 %v2243, %v2403
        %v2405 = vpop.f32.mrf.mxu0
        %v2406 = vpop.f32.mrf.mxu0
        %v2407 = vadd.f32 %v2246, %v2406
        %v2408 = vpop.f32.mrf.mxu0
        %2409 = vmatprep.mubr.bf16.mxu0 0
        %2410 = vmatmul.mubr.bf16.gmra.mxu0 %v1869
        %v2411 = vpop.f32.mrf.mxu0
        %v2412 = vadd.f32 %v2251, %v2411
        %v2413 = vpop.f32.mrf.mxu0
        %v2414 = vpop.f32.mrf.mxu0
        %v2415 = vadd.f32 %v2254, %v2414
        %v2416 = vpop.f32.mrf.mxu0
        %2417 = vmatprep.mubr.bf16.mxu0 0
        %2418 = vmatmul.mubr.bf16.gmra.mxu0 %v1872
        %v2419 = vpop.f32.mrf.mxu0
        %v2420 = vadd.f32 %v2259, %v2419
        %v2421 = vpop.f32.mrf.mxu0
        %v2422 = vpop.f32.mrf.mxu0
        %v2423 = vadd.f32 %v2262, %v2422
        %v2424 = vpop.f32.mrf.mxu0
        %2425 = vmatprep.mubr.bf16.mxu0 0
        %2426 = vmatmul.mubr.bf16.gmra.mxu0 %v1875
        %v2427 = vpop.f32.mrf.mxu0
        %v2428 = vadd.f32 %v2267, %v2427
        %v2429 = vpop.f32.mrf.mxu0
        %v2430 = vpop.f32.mrf.mxu0
        %v2431 = vadd.f32 %v2270, %v2430
        %v2432 = vpop.f32.mrf.mxu0
        %2433 = vmatprep.mubr.bf16.mxu0 0
        %2434 = vmatmul.mubr.bf16.gmra.mxu0 %v1878
        %v2435 = vpop.f32.mrf.mxu0
        %v2436 = vadd.f32 %v2275, %v2435
        %v2437 = vpop.f32.mrf.mxu0
        %v2438 = vpop.f32.mrf.mxu0
        %v2439 = vadd.f32 %v2278, %v2438
        %v2440 = vpop.f32.mrf.mxu0
        %2441 = vdwg.mxu0
        %v2442 = vadd.f32 %v1895, %v2316
        %v2443 = vadd.f32 %v1896, %v2319
        %v2444 = vadd.f32 %v1897, %v2324
        %v2445 = vadd.f32 %v1898, %v2327
        %v2446 = vadd.f32 %v1899, %v2332
        %v2447 = vadd.f32 %v1900, %v2335
        %v2448 = vadd.f32 %v1901, %v2340
        %v2449 = vadd.f32 %v1902, %v2343
        %v2450 = vadd.f32 %v1903, %v2348
        %v2451 = vadd.f32 %v1904, %v2351
        %v2452 = vadd.f32 %v1905, %v2356
        %v2453 = vadd.f32 %v1906, %v2359
        %v2454 = vadd.f32 %v1907, %v2364
        %v2455 = vadd.f32 %v1908, %v2367
        %v2456 = vadd.f32 %v1909, %v2372
        %v2457 = vadd.f32 %v1910, %v2375
        %v2458 = vadd.f32 %v1911, %v2380
        %v2459 = vadd.f32 %v1912, %v2383
        %v2460 = vadd.f32 %v1913, %v2388
        %v2461 = vadd.f32 %v1914, %v2391
        %v2462 = vadd.f32 %v1915, %v2396
        %v2463 = vadd.f32 %v1916, %v2399
        %v2464 = vadd.f32 %v1917, %v2404
        %v2465 = vadd.f32 %v1918, %v2407
        %v2466 = vadd.f32 %v1919, %v2412
        %v2467 = vadd.f32 %v1920, %v2415
        %v2468 = vadd.f32 %v1921, %v2420
        %v2469 = vadd.f32 %v1922, %v2423
        %v2470 = vadd.f32 %v1923, %v2428
        %v2471 = vadd.f32 %v1924, %v2431
        %v2472 = vadd.f32 %v1925, %v2436
        %v2473 = vadd.f32 %v1926, %v2439
        %2474 = vst [vmem:[#allocation2] sm:$0xff] %v2442
        %2475 = vst [vmem:[#allocation2 + $0x8] sm:$0xff] %v2443
        %2476 = vst [vmem:[#allocation2 + $0x10] sm:$0xff] %v2444
        %2477 = vst [vmem:[#allocation2 + $0x18] sm:$0xff] %v2445
        %2478 = vst [vmem:[#allocation2 + $0x20] sm:$0xff] %v2446
        %2479 = vst [vmem:[#allocation2 + $0x28] sm:$0xff] %v2447
        %2480 = vst [vmem:[#allocation2 + $0x30] sm:$0xff] %v2448
        %2481 = vst [vmem:[#allocation2 + $0x38] sm:$0xff] %v2449
        %2482 = vst [vmem:[#allocation2 + $0x40] sm:$0xff] %v2450
        %2483 = vst [vmem:[#allocation2 + $0x48] sm:$0xff] %v2451
        %2484 = vst [vmem:[#allocation2 + $0x50] sm:$0xff] %v2452
        %2485 = vst [vmem:[#allocation2 + $0x58] sm:$0xff] %v2453
        %2486 = vst [vmem:[#allocation2 + $0x60] sm:$0xff] %v2454
        %2487 = vst [vmem:[#allocation2 + $0x68] sm:$0xff] %v2455
        %2488 = vst [vmem:[#allocation2 + $0x70] sm:$0xff] %v2456
        %2489 = vst [vmem:[#allocation2 + $0x78] sm:$0xff] %v2457
        %2490 = vst [vmem:[#allocation2 + $0x80] sm:$0xff] %v2458
        %2491 = vst [vmem:[#allocation2 + $0x88] sm:$0xff] %v2459
        %2492 = vst [vmem:[#allocation2 + $0x90] sm:$0xff] %v2460
        %2493 = vst [vmem:[#allocation2 + $0x98] sm:$0xff] %v2461
        %2494 = vst [vmem:[#allocation2 + $0xa0] sm:$0xff] %v2462
        %2495 = vst [vmem:[#allocation2 + $0xa8] sm:$0xff] %v2463
        %2496 = vst [vmem:[#allocation2 + $0xb0] sm:$0xff] %v2464
        %2497 = vst [vmem:[#allocation2 + $0xb8] sm:$0xff] %v2465
        %2498 = vst [vmem:[#allocation2 + $0xc0] sm:$0xff] %v2466
        %2499 = vst [vmem:[#allocation2 + $0xc8] sm:$0xff] %v2467
        %2500 = vst [vmem:[#allocation2 + $0xd0] sm:$0xff] %v2468
        %2501 = vst [vmem:[#allocation2 + $0xd8] sm:$0xff] %v2469
        %2502 = vst [vmem:[#allocation2 + $0xe0] sm:$0xff] %v2470
        %2503 = vst [vmem:[#allocation2 + $0xe8] sm:$0xff] %v2471
        %2504 = vst [vmem:[#allocation2 + $0xf0] sm:$0xff] %v2472
        %2505 = vst [vmem:[#allocation2 + $0xf8] sm:$0xff] %v2473
        %s2506 = scalar_lea.vmem %s273, 24 [#allocation4]
        %v2507 = vld [vmem:[%s2506] sm:$0xf]
        %v2508 = vld [vmem:[%s2506 + $0x4] sm:$0xf]
        %v2509 = vld [vmem:[%s2506 + $0x8] sm:$0xf]
        %v2510 = vld [vmem:[%s2506 + $0xc] sm:$0xf]
        %v2511 = vld [vmem:[%s2506 + $0x10] sm:$0xf]
        %v2512 = vld [vmem:[%s2506 + $0x14] sm:$0xf]
        %v2513 = vld [vmem:[%s2506 + $0x18] sm:$0xf]
        %v2514 = vld [vmem:[%s2506 + $0x1c] sm:$0xf]
        %v2515 = vld [vmem:[%s2506 + $0x20] sm:$0xf]
        %v2516 = vld [vmem:[%s2506 + $0x24] sm:$0xf]
        %v2517 = vld [vmem:[%s2506 + $0x28] sm:$0xf]
        %v2518 = vld [vmem:[%s2506 + $0x2c] sm:$0xf]
        %v2519 = vld [vmem:[%s2506 + $0x30] sm:$0xf]
        %v2520 = vld [vmem:[%s2506 + $0x34] sm:$0xf]
        %v2521 = vld [vmem:[%s2506 + $0x38] sm:$0xf]
        %v2522 = vld [vmem:[%s2506 + $0x3c] sm:$0xf]
        %v2523 = vld [vmem:[%s2506 + $0x40] sm:$0xf]
        %v2524 = vld [vmem:[%s2506 + $0x44] sm:$0xf]
        %v2525 = vld [vmem:[%s2506 + $0x48] sm:$0xf]
        %v2526 = vld [vmem:[%s2506 + $0x4c] sm:$0xf]
        %v2527 = vld [vmem:[%s2506 + $0x50] sm:$0xf]
        %v2528 = vld [vmem:[%s2506 + $0x54] sm:$0xf]
        %v2529 = vld [vmem:[%s2506 + $0x58] sm:$0xf]
        %v2530 = vld [vmem:[%s2506 + $0x5c] sm:$0xf]
        %v2531 = vld [vmem:[%s2506 + $0x60] sm:$0xf]
        %v2532 = vld [vmem:[%s2506 + $0x64] sm:$0xf]
        %v2533 = vld [vmem:[%s2506 + $0x68] sm:$0xf]
        %v2534 = vld [vmem:[%s2506 + $0x6c] sm:$0xf]
        %v2535 = vld [vmem:[%s2506 + $0x70] sm:$0xf]
        %v2536 = vld [vmem:[%s2506 + $0x74] sm:$0xf]
        %v2537 = vld [vmem:[%s2506 + $0x78] sm:$0xf]
        %v2538 = vld [vmem:[%s2506 + $0x7c] sm:$0xf]
        %v2539 = vld [vmem:[%s2506 + $0x80] sm:$0xf]
        %v2540 = vld [vmem:[%s2506 + $0x84] sm:$0xf]
        %v2541 = vld [vmem:[%s2506 + $0x88] sm:$0xf]
        %v2542 = vld [vmem:[%s2506 + $0x8c] sm:$0xf]
        %v2543 = vld [vmem:[%s2506 + $0x90] sm:$0xf]
        %v2544 = vld [vmem:[%s2506 + $0x94] sm:$0xf]
        %v2545 = vld [vmem:[%s2506 + $0x98] sm:$0xf]
        %v2546 = vld [vmem:[%s2506 + $0x9c] sm:$0xf]
        %v2547 = vld [vmem:[%s2506 + $0xa0] sm:$0xf]
        %v2548 = vld [vmem:[%s2506 + $0xa4] sm:$0xf]
        %v2549 = vld [vmem:[%s2506 + $0xa8] sm:$0xf]
        %v2550 = vld [vmem:[%s2506 + $0xac] sm:$0xf]
        %v2551 = vld [vmem:[%s2506 + $0xb0] sm:$0xf]
        %v2552 = vld [vmem:[%s2506 + $0xb4] sm:$0xf]
        %v2553 = vld [vmem:[%s2506 + $0xb8] sm:$0xf]
        %v2554 = vld [vmem:[%s2506 + $0xbc] sm:$0xf]
        %v2587 = vunpack.c.l.b16 %v2507
        %v2588 = vunpack.c.l.b16 %v2508
        %v2589 = vunpack.c.l.b16 %v2510
        %v2590 = vunpack.c.l.b16 %v2511
        %v2591 = vunpack.c.l.b16 %v2513
        %v2592 = vunpack.c.l.b16 %v2514
        %v2593 = vunpack.c.l.b16 %v2516
        %v2594 = vunpack.c.l.b16 %v2517
        %v2595 = vunpack.c.l.b16 %v2519
        %v2596 = vunpack.c.l.b16 %v2520
        %v2597 = vunpack.c.l.b16 %v2522
        %v2598 = vunpack.c.l.b16 %v2523
        %v2599 = vunpack.c.l.b16 %v2525
        %v2600 = vunpack.c.l.b16 %v2526
        %v2601 = vunpack.c.l.b16 %v2528
        %v2602 = vunpack.c.l.b16 %v2529
        %v2603 = vunpack.c.l.b16 %v2531
        %v2604 = vunpack.c.l.b16 %v2532
        %v2605 = vunpack.c.l.b16 %v2534
        %v2606 = vunpack.c.l.b16 %v2535
        %v2607 = vunpack.c.l.b16 %v2537
        %v2608 = vunpack.c.l.b16 %v2538
        %v2609 = vunpack.c.l.b16 %v2540
        %v2610 = vunpack.c.l.b16 %v2541
        %v2611 = vunpack.c.l.b16 %v2543
        %v2612 = vunpack.c.l.b16 %v2544
        %v2613 = vunpack.c.l.b16 %v2546
        %v2614 = vunpack.c.l.b16 %v2547
        %v2615 = vunpack.c.l.b16 %v2549
        %v2616 = vunpack.c.l.b16 %v2550
        %v2617 = vunpack.c.l.b16 %v2552
        %v2618 = vunpack.c.l.b16 %v2553
        %v2619 = vpack.c.b16 %v2588, %v2587
        %v2620 = vpack.c.b16 %v2590, %v2589
        %v2621 = vpack.c.b16 %v2592, %v2591
        %v2622 = vpack.c.b16 %v2594, %v2593
        %v2623 = vpack.c.b16 %v2596, %v2595
        %v2624 = vpack.c.b16 %v2598, %v2597
        %v2625 = vpack.c.b16 %v2600, %v2599
        %v2626 = vpack.c.b16 %v2602, %v2601
        %v2627 = vpack.c.b16 %v2604, %v2603
        %v2628 = vpack.c.b16 %v2606, %v2605
        %v2629 = vpack.c.b16 %v2608, %v2607
        %v2630 = vpack.c.b16 %v2610, %v2609
        %v2631 = vpack.c.b16 %v2612, %v2611
        %v2632 = vpack.c.b16 %v2614, %v2613
        %v2633 = vpack.c.b16 %v2616, %v2615
        %v2634 = vpack.c.b16 %v2618, %v2617
        %v2667 = vunpack.c.l.b16 %v2509
        %v2668 = vunpack.c.l.b16 %v2512
        %v2669 = vunpack.c.l.b16 %v2515
        %v2670 = vunpack.c.l.b16 %v2518
        %v2671 = vunpack.c.l.b16 %v2521
        %v2672 = vunpack.c.l.b16 %v2524
        %v2673 = vunpack.c.l.b16 %v2527
        %v2674 = vunpack.c.l.b16 %v2530
        %v2675 = vunpack.c.l.b16 %v2533
        %v2676 = vunpack.c.l.b16 %v2536
        %v2677 = vunpack.c.l.b16 %v2539
        %v2678 = vunpack.c.l.b16 %v2542
        %v2679 = vunpack.c.l.b16 %v2545
        %v2680 = vunpack.c.l.b16 %v2548
        %v2681 = vunpack.c.l.b16 %v2551
        %v2682 = vunpack.c.l.b16 %v2554
        %v2683 = vpack.c.b16 %v2667, %v2667
        %v2684 = vpack.c.b16 %v2668, %v2668
        %v2685 = vpack.c.b16 %v2669, %v2669
        %v2686 = vpack.c.b16 %v2670, %v2670
        %v2687 = vpack.c.b16 %v2671, %v2671
        %v2688 = vpack.c.b16 %v2672, %v2672
        %v2689 = vpack.c.b16 %v2673, %v2673
        %v2690 = vpack.c.b16 %v2674, %v2674
        %v2691 = vpack.c.b16 %v2675, %v2675
        %v2692 = vpack.c.b16 %v2676, %v2676
        %v2693 = vpack.c.b16 %v2677, %v2677
        %v2694 = vpack.c.b16 %v2678, %v2678
        %v2695 = vpack.c.b16 %v2679, %v2679
        %v2696 = vpack.c.b16 %v2680, %v2680
        %v2697 = vpack.c.b16 %v2681, %v2681
        %v2698 = vpack.c.b16 %v2682, %v2682
        %v2700 = vshrl.u32 %v2619, 16
        %v2702 = vshll.u32 %v2619, 16
        %v2704 = vrot.slane %v2702, 1
        %v2705 = vor.u32 %v2700, %v2704
        %v2707 = vshll.u32 %v2683, 16
        %v2709 = vrot.slane %v2707, 1
        %v2710 = vsel %vm546, %v2705, %v2709
        %v2712 = vshrl.u32 %v2620, 16
        %v2714 = vshll.u32 %v2620, 16
        %v2716 = vrot.slane %v2714, 1
        %v2717 = vor.u32 %v2712, %v2716
        %v2719 = vshll.u32 %v2684, 16
        %v2721 = vrot.slane %v2719, 1
        %v2722 = vsel %vm546, %v2717, %v2721
        %v2724 = vshrl.u32 %v2621, 16
        %v2726 = vshll.u32 %v2621, 16
        %v2728 = vrot.slane %v2726, 1
        %v2729 = vor.u32 %v2724, %v2728
        %v2731 = vshll.u32 %v2685, 16
        %v2733 = vrot.slane %v2731, 1
        %v2734 = vsel %vm546, %v2729, %v2733
        %v2736 = vshrl.u32 %v2622, 16
        %v2738 = vshll.u32 %v2622, 16
        %v2740 = vrot.slane %v2738, 1
        %v2741 = vor.u32 %v2736, %v2740
        %v2743 = vshll.u32 %v2686, 16
        %v2745 = vrot.slane %v2743, 1
        %v2746 = vsel %vm546, %v2741, %v2745
        %v2748 = vshrl.u32 %v2623, 16
        %v2750 = vshll.u32 %v2623, 16
        %v2752 = vrot.slane %v2750, 1
        %v2753 = vor.u32 %v2748, %v2752
        %v2755 = vshll.u32 %v2687, 16
        %v2757 = vrot.slane %v2755, 1
        %v2758 = vsel %vm546, %v2753, %v2757
        %v2760 = vshrl.u32 %v2624, 16
        %v2762 = vshll.u32 %v2624, 16
        %v2764 = vrot.slane %v2762, 1
        %v2765 = vor.u32 %v2760, %v2764
        %v2767 = vshll.u32 %v2688, 16
        %v2769 = vrot.slane %v2767, 1
        %v2770 = vsel %vm546, %v2765, %v2769
        %v2772 = vshrl.u32 %v2625, 16
        %v2774 = vshll.u32 %v2625, 16
        %v2776 = vrot.slane %v2774, 1
        %v2777 = vor.u32 %v2772, %v2776
        %v2779 = vshll.u32 %v2689, 16
        %v2781 = vrot.slane %v2779, 1
        %v2782 = vsel %vm546, %v2777, %v2781
        %v2784 = vshrl.u32 %v2626, 16
        %v2786 = vshll.u32 %v2626, 16
        %v2788 = vrot.slane %v2786, 1
        %v2789 = vor.u32 %v2784, %v2788
        %v2791 = vshll.u32 %v2690, 16
        %v2793 = vrot.slane %v2791, 1
        %v2794 = vsel %vm546, %v2789, %v2793
        %v2796 = vshrl.u32 %v2627, 16
        %v2798 = vshll.u32 %v2627, 16
        %v2800 = vrot.slane %v2798, 1
        %v2801 = vor.u32 %v2796, %v2800
        %v2803 = vshll.u32 %v2691, 16
        %v2805 = vrot.slane %v2803, 1
        %v2806 = vsel %vm546, %v2801, %v2805
        %v2808 = vshrl.u32 %v2628, 16
        %v2810 = vshll.u32 %v2628, 16
        %v2812 = vrot.slane %v2810, 1
        %v2813 = vor.u32 %v2808, %v2812
        %v2815 = vshll.u32 %v2692, 16
        %v2817 = vrot.slane %v2815, 1
        %v2818 = vsel %vm546, %v2813, %v2817
        %v2820 = vshrl.u32 %v2629, 16
        %v2822 = vshll.u32 %v2629, 16
        %v2824 = vrot.slane %v2822, 1
        %v2825 = vor.u32 %v2820, %v2824
        %v2827 = vshll.u32 %v2693, 16
        %v2829 = vrot.slane %v2827, 1
        %v2830 = vsel %vm546, %v2825, %v2829
        %v2832 = vshrl.u32 %v2630, 16
        %v2834 = vshll.u32 %v2630, 16
        %v2836 = vrot.slane %v2834, 1
        %v2837 = vor.u32 %v2832, %v2836
        %v2839 = vshll.u32 %v2694, 16
        %v2841 = vrot.slane %v2839, 1
        %v2842 = vsel %vm546, %v2837, %v2841
        %v2844 = vshrl.u32 %v2631, 16
        %v2846 = vshll.u32 %v2631, 16
        %v2848 = vrot.slane %v2846, 1
        %v2849 = vor.u32 %v2844, %v2848
        %v2851 = vshll.u32 %v2695, 16
        %v2853 = vrot.slane %v2851, 1
        %v2854 = vsel %vm546, %v2849, %v2853
        %v2856 = vshrl.u32 %v2632, 16
        %v2858 = vshll.u32 %v2632, 16
        %v2860 = vrot.slane %v2858, 1
        %v2861 = vor.u32 %v2856, %v2860
        %v2863 = vshll.u32 %v2696, 16
        %v2865 = vrot.slane %v2863, 1
        %v2866 = vsel %vm546, %v2861, %v2865
        %v2868 = vshrl.u32 %v2633, 16
        %v2870 = vshll.u32 %v2633, 16
        %v2872 = vrot.slane %v2870, 1
        %v2873 = vor.u32 %v2868, %v2872
        %v2875 = vshll.u32 %v2697, 16
        %v2877 = vrot.slane %v2875, 1
        %v2878 = vsel %vm546, %v2873, %v2877
        %v2880 = vshrl.u32 %v2634, 16
        %v2882 = vshll.u32 %v2634, 16
        %v2884 = vrot.slane %v2882, 1
        %v2885 = vor.u32 %v2880, %v2884
        %v2887 = vshll.u32 %v2698, 16
        %v2889 = vrot.slane %v2887, 1
        %v2890 = vsel %vm546, %v2885, %v2889
        %v2907 = vrot.slane %v2619, 1
        %v2908 = vrot.slane %v2683, 1
        %v2909 = vsel %vm755, %v2907, %v2908
        %v2910 = vrot.slane %v2620, 1
        %v2911 = vrot.slane %v2684, 1
        %v2912 = vsel %vm755, %v2910, %v2911
        %v2913 = vrot.slane %v2621, 1
        %v2914 = vrot.slane %v2685, 1
        %v2915 = vsel %vm755, %v2913, %v2914
        %v2916 = vrot.slane %v2622, 1
        %v2917 = vrot.slane %v2686, 1
        %v2918 = vsel %vm755, %v2916, %v2917
        %v2919 = vrot.slane %v2623, 1
        %v2920 = vrot.slane %v2687, 1
        %v2921 = vsel %vm755, %v2919, %v2920
        %v2922 = vrot.slane %v2624, 1
        %v2923 = vrot.slane %v2688, 1
        %v2924 = vsel %vm755, %v2922, %v2923
        %v2925 = vrot.slane %v2625, 1
        %v2926 = vrot.slane %v2689, 1
        %v2927 = vsel %vm755, %v2925, %v2926
        %v2928 = vrot.slane %v2626, 1
        %v2929 = vrot.slane %v2690, 1
        %v2930 = vsel %vm755, %v2928, %v2929
        %v2931 = vrot.slane %v2627, 1
        %v2932 = vrot.slane %v2691, 1
        %v2933 = vsel %vm755, %v2931, %v2932
        %v2934 = vrot.slane %v2628, 1
        %v2935 = vrot.slane %v2692, 1
        %v2936 = vsel %vm755, %v2934, %v2935
        %v2937 = vrot.slane %v2629, 1
        %v2938 = vrot.slane %v2693, 1
        %v2939 = vsel %vm755, %v2937, %v2938
        %v2940 = vrot.slane %v2630, 1
        %v2941 = vrot.slane %v2694, 1
        %v2942 = vsel %vm755, %v2940, %v2941
        %v2943 = vrot.slane %v2631, 1
        %v2944 = vrot.slane %v2695, 1
        %v2945 = vsel %vm755, %v2943, %v2944
        %v2946 = vrot.slane %v2632, 1
        %v2947 = vrot.slane %v2696, 1
        %v2948 = vsel %vm755, %v2946, %v2947
        %v2949 = vrot.slane %v2633, 1
        %v2950 = vrot.slane %v2697, 1
        %v2951 = vsel %vm755, %v2949, %v2950
        %v2952 = vrot.slane %v2634, 1
        %v2953 = vrot.slane %v2698, 1
        %v2954 = vsel %vm755, %v2952, %v2953
        %v2971 = vld [vmem:[#allocation2] sm:$0xff]
        %v2972 = vld [vmem:[#allocation2 + $0x8] sm:$0xff]
        %v2973 = vld [vmem:[#allocation2 + $0x10] sm:$0xff]
        %v2974 = vld [vmem:[#allocation2 + $0x18] sm:$0xff]
        %v2975 = vld [vmem:[#allocation2 + $0x20] sm:$0xff]
        %v2976 = vld [vmem:[#allocation2 + $0x28] sm:$0xff]
        %v2977 = vld [vmem:[#allocation2 + $0x30] sm:$0xff]
        %v2978 = vld [vmem:[#allocation2 + $0x38] sm:$0xff]
        %v2979 = vld [vmem:[#allocation2 + $0x40] sm:$0xff]
        %v2980 = vld [vmem:[#allocation2 + $0x48] sm:$0xff]
        %v2981 = vld [vmem:[#allocation2 + $0x50] sm:$0xff]
        %v2982 = vld [vmem:[#allocation2 + $0x58] sm:$0xff]
        %v2983 = vld [vmem:[#allocation2 + $0x60] sm:$0xff]
        %v2984 = vld [vmem:[#allocation2 + $0x68] sm:$0xff]
        %v2985 = vld [vmem:[#allocation2 + $0x70] sm:$0xff]
        %v2986 = vld [vmem:[#allocation2 + $0x78] sm:$0xff]
        %v2987 = vld [vmem:[#allocation2 + $0x80] sm:$0xff]
        %v2988 = vld [vmem:[#allocation2 + $0x88] sm:$0xff]
        %v2989 = vld [vmem:[#allocation2 + $0x90] sm:$0xff]
        %v2990 = vld [vmem:[#allocation2 + $0x98] sm:$0xff]
        %v2991 = vld [vmem:[#allocation2 + $0xa0] sm:$0xff]
        %v2992 = vld [vmem:[#allocation2 + $0xa8] sm:$0xff]
        %v2993 = vld [vmem:[#allocation2 + $0xb0] sm:$0xff]
        %v2994 = vld [vmem:[#allocation2 + $0xb8] sm:$0xff]
        %v2995 = vld [vmem:[#allocation2 + $0xc0] sm:$0xff]
        %v2996 = vld [vmem:[#allocation2 + $0xc8] sm:$0xff]
        %v2997 = vld [vmem:[#allocation2 + $0xd0] sm:$0xff]
        %v2998 = vld [vmem:[#allocation2 + $0xd8] sm:$0xff]
        %v2999 = vld [vmem:[#allocation2 + $0xe0] sm:$0xff]
        %v3000 = vld [vmem:[#allocation2 + $0xe8] sm:$0xff]
        %v3001 = vld [vmem:[#allocation2 + $0xf0] sm:$0xff]
        %v3002 = vld [vmem:[#allocation2 + $0xf8] sm:$0xff]
        %s3003 = scalar_lea.vmem [#allocation7], 384
        %v3004 = vld [vmem:[%s3003] sm:$0xf]
        %v3005 = vld [vmem:[%s3003 + $0x4] sm:$0xf]
        %v3006 = vld [vmem:[%s3003 + $0x8] sm:$0xf]
        %v3007 = vld [vmem:[%s3003 + $0xc] sm:$0xf]
        %v3008 = vld [vmem:[%s3003 + $0x10] sm:$0xf]
        %v3009 = vld [vmem:[%s3003 + $0x14] sm:$0xf]
        %v3010 = vld [vmem:[%s3003 + $0x18] sm:$0xf]
        %v3011 = vld [vmem:[%s3003 + $0x1c] sm:$0xf]
        %v3012 = vld [vmem:[%s3003 + $0x20] sm:$0xf]
        %v3013 = vld [vmem:[%s3003 + $0x24] sm:$0xf]
        %v3014 = vld [vmem:[%s3003 + $0x28] sm:$0xf]
        %v3015 = vld [vmem:[%s3003 + $0x2c] sm:$0xf]
        %v3016 = vld [vmem:[%s3003 + $0x30] sm:$0xf]
        %v3017 = vld [vmem:[%s3003 + $0x34] sm:$0xf]
        %v3018 = vld [vmem:[%s3003 + $0x38] sm:$0xf]
        %v3019 = vld [vmem:[%s3003 + $0x3c] sm:$0xf]
        %v3020 = vld [vmem:[%s3003 + $0x40] sm:$0xf]
        %v3021 = vld [vmem:[%s3003 + $0x44] sm:$0xf]
        %v3022 = vld [vmem:[%s3003 + $0x48] sm:$0xf]
        %v3023 = vld [vmem:[%s3003 + $0x4c] sm:$0xf]
        %v3024 = vld [vmem:[%s3003 + $0x50] sm:$0xf]
        %v3025 = vld [vmem:[%s3003 + $0x54] sm:$0xf]
        %v3026 = vld [vmem:[%s3003 + $0x58] sm:$0xf]
        %v3027 = vld [vmem:[%s3003 + $0x5c] sm:$0xf]
        %v3028 = vld [vmem:[%s3003 + $0x60] sm:$0xf]
        %v3029 = vld [vmem:[%s3003 + $0x64] sm:$0xf]
        %v3030 = vld [vmem:[%s3003 + $0x68] sm:$0xf]
        %v3031 = vld [vmem:[%s3003 + $0x6c] sm:$0xf]
        %v3032 = vld [vmem:[%s3003 + $0x70] sm:$0xf]
        %v3033 = vld [vmem:[%s3003 + $0x74] sm:$0xf]
        %v3034 = vld [vmem:[%s3003 + $0x78] sm:$0xf]
        %v3035 = vld [vmem:[%s3003 + $0x7c] sm:$0xf]
        %v3036 = vld [vmem:[%s3003 + $0x80] sm:$0xf]
        %v3037 = vld [vmem:[%s3003 + $0x84] sm:$0xf]
        %v3038 = vld [vmem:[%s3003 + $0x88] sm:$0xf]
        %v3039 = vld [vmem:[%s3003 + $0x8c] sm:$0xf]
        %v3040 = vld [vmem:[%s3003 + $0x90] sm:$0xf]
        %v3041 = vld [vmem:[%s3003 + $0x94] sm:$0xf]
        %v3042 = vld [vmem:[%s3003 + $0x98] sm:$0xf]
        %v3043 = vld [vmem:[%s3003 + $0x9c] sm:$0xf]
        %v3044 = vld [vmem:[%s3003 + $0xa0] sm:$0xf]
        %v3045 = vld [vmem:[%s3003 + $0xa4] sm:$0xf]
        %v3046 = vld [vmem:[%s3003 + $0xa8] sm:$0xf]
        %v3047 = vld [vmem:[%s3003 + $0xac] sm:$0xf]
        %v3048 = vld [vmem:[%s3003 + $0xb0] sm:$0xf]
        %v3049 = vld [vmem:[%s3003 + $0xb4] sm:$0xf]
        %v3050 = vld [vmem:[%s3003 + $0xb8] sm:$0xf]
        %v3051 = vld [vmem:[%s3003 + $0xbc] sm:$0xf]
        %v3100 = vunpack.c.l.b16 %v3004
        %v3101 = vunpack.c.l.b16 %v3005
        %v3102 = vunpack.c.l.b16 %v3006
        %v3103 = vunpack.c.l.b16 %v3007
        %v3104 = vunpack.c.l.b16 %v3008
        %v3105 = vunpack.c.l.b16 %v3009
        %v3106 = vunpack.c.l.b16 %v3010
        %v3107 = vunpack.c.l.b16 %v3011
        %v3108 = vunpack.c.l.b16 %v3012
        %v3109 = vunpack.c.l.b16 %v3013
        %v3110 = vunpack.c.l.b16 %v3014
        %v3111 = vunpack.c.l.b16 %v3015
        %v3112 = vunpack.c.l.b16 %v3016
        %v3113 = vunpack.c.l.b16 %v3017
        %v3114 = vunpack.c.l.b16 %v3018
        %v3115 = vunpack.c.l.b16 %v3019
        %v3116 = vunpack.c.l.b16 %v3020
        %v3117 = vunpack.c.l.b16 %v3021
        %v3118 = vunpack.c.l.b16 %v3022
        %v3119 = vunpack.c.l.b16 %v3023
        %v3120 = vunpack.c.l.b16 %v3024
        %v3121 = vunpack.c.l.b16 %v3025
        %v3122 = vunpack.c.l.b16 %v3026
        %v3123 = vunpack.c.l.b16 %v3027
        %v3124 = vunpack.c.l.b16 %v3028
        %v3125 = vunpack.c.l.b16 %v3029
        %v3126 = vunpack.c.l.b16 %v3030
        %v3127 = vunpack.c.l.b16 %v3031
        %v3128 = vunpack.c.l.b16 %v3032
        %v3129 = vunpack.c.l.b16 %v3033
        %v3130 = vunpack.c.l.b16 %v3034
        %v3131 = vunpack.c.l.b16 %v3035
        %v3132 = vunpack.c.l.b16 %v3036
        %v3133 = vunpack.c.l.b16 %v3037
        %v3134 = vunpack.c.l.b16 %v3038
        %v3135 = vunpack.c.l.b16 %v3039
        %v3136 = vunpack.c.l.b16 %v3040
        %v3137 = vunpack.c.l.b16 %v3041
        %v3138 = vunpack.c.l.b16 %v3042
        %v3139 = vunpack.c.l.b16 %v3043
        %v3140 = vunpack.c.l.b16 %v3044
        %v3141 = vunpack.c.l.b16 %v3045
        %v3142 = vunpack.c.l.b16 %v3046
        %v3143 = vunpack.c.l.b16 %v3047
        %v3144 = vunpack.c.l.b16 %v3048
        %v3145 = vunpack.c.l.b16 %v3049
        %v3146 = vunpack.c.l.b16 %v3050
        %v3147 = vunpack.c.l.b16 %v3051
        %v3148 = vpack.c.b16 %v3101, %v3100
        %v3149 = vpack.c.b16 %v3103, %v3102
        %v3150 = vpack.c.b16 %v3105, %v3104
        %v3151 = vpack.c.b16 %v3107, %v3106
        %v3152 = vpack.c.b16 %v3109, %v3108
        %v3153 = vpack.c.b16 %v3111, %v3110
        %v3154 = vpack.c.b16 %v3113, %v3112
        %v3155 = vpack.c.b16 %v3115, %v3114
        %v3156 = vpack.c.b16 %v3117, %v3116
        %v3157 = vpack.c.b16 %v3119, %v3118
        %v3158 = vpack.c.b16 %v3121, %v3120
        %v3159 = vpack.c.b16 %v3123, %v3122
        %v3160 = vpack.c.b16 %v3125, %v3124
        %v3161 = vpack.c.b16 %v3127, %v3126
        %v3162 = vpack.c.b16 %v3129, %v3128
        %v3163 = vpack.c.b16 %v3131, %v3130
        %v3164 = vpack.c.b16 %v3133, %v3132
        %v3165 = vpack.c.b16 %v3135, %v3134
        %v3166 = vpack.c.b16 %v3137, %v3136
        %v3167 = vpack.c.b16 %v3139, %v3138
        %v3168 = vpack.c.b16 %v3141, %v3140
        %v3169 = vpack.c.b16 %v3143, %v3142
        %v3170 = vpack.c.b16 %v3145, %v3144
        %v3171 = vpack.c.b16 %v3147, %v3146
        %3196 = vmatprep.subr.bf16.mxu0 0
        %3197 = vmatpush1.bf16.msra.mxu0 %v3155
        %3198 = vmatprep.subr.bf16.mxu0 0
        %3199 = vmatpush1.bf16.msra.mxu0 %v3154
        %3200 = vmatprep.subr.bf16.mxu0 0
        %3201 = vmatpush1.bf16.msra.mxu0 %v3153
        %3202 = vmatprep.subr.bf16.mxu0 0
        %3203 = vmatpush1.bf16.msra.mxu0 %v3152
        %3204 = vmatprep.subr.bf16.mxu0 0
        %3205 = vmatpush1.bf16.msra.mxu0 %v3151
        %3206 = vmatprep.subr.bf16.mxu0 0
        %3207 = vmatpush1.bf16.msra.mxu0 %v3150
        %3208 = vmatprep.subr.bf16.mxu0 0
        %3209 = vmatpush1.bf16.msra.mxu0 %v3149
        %3210 = vmatprep.subr.bf16.mxu0 0
        %3211 = vmatpush1.bf16.msra.mxu0 %v3148
        %3212 = vmatprep.subr.bf16.mxu0 0
        %3213 = vmatpush2.bf16.msra.mxu0 %v3163
        %3214 = vmatprep.subr.bf16.mxu0 0
        %3215 = vmatpush2.bf16.msra.mxu0 %v3162
        %3216 = vmatprep.subr.bf16.mxu0 0
        %3217 = vmatpush2.bf16.msra.mxu0 %v3161
        %3218 = vmatprep.subr.bf16.mxu0 0
        %3219 = vmatpush2.bf16.msra.mxu0 %v3160
        %3220 = vmatprep.subr.bf16.mxu0 0
        %3221 = vmatpush2.bf16.msra.mxu0 %v3159
        %3222 = vmatprep.subr.bf16.mxu0 0
        %3223 = vmatpush2.bf16.msra.mxu0 %v3158
        %3224 = vmatprep.subr.bf16.mxu0 0
        %3225 = vmatpush2.bf16.msra.mxu0 %v3157
        %3226 = vmatprep.subr.bf16.mxu0 0
        %3227 = vmatpush2.bf16.msra.mxu0 %v3156
        %3228 = vmatprep.mubr.bf16.mxu0 %v2710
        %3229 = vmatmul.mubr.bf16.gmra.mxu0 %v2619
        %v3230 = vpop.f32.mrf.mxu0
        %v3231 = vadd.f32 0.0, %v3230
        %v3232 = vpop.f32.mrf.mxu0
        %v3233 = vpop.f32.mrf.mxu0
        %v3234 = vadd.f32 0.0, %v3233
        %v3235 = vpop.f32.mrf.mxu0
        %3236 = vmatprep.mubr.bf16.mxu0 %v2722
        %3237 = vmatmul.mubr.bf16.gmra.mxu0 %v2620
        %v3238 = vpop.f32.mrf.mxu0
        %v3239 = vadd.f32 0.0, %v3238
        %v3240 = vpop.f32.mrf.mxu0
        %v3241 = vpop.f32.mrf.mxu0
        %v3242 = vadd.f32 0.0, %v3241
        %v3243 = vpop.f32.mrf.mxu0
        %3244 = vmatprep.mubr.bf16.mxu0 %v2734
        %3245 = vmatmul.mubr.bf16.gmra.mxu0 %v2621
        %v3246 = vpop.f32.mrf.mxu0
        %v3247 = vadd.f32 0.0, %v3246
        %v3248 = vpop.f32.mrf.mxu0
        %v3249 = vpop.f32.mrf.mxu0
        %v3250 = vadd.f32 0.0, %v3249
        %v3251 = vpop.f32.mrf.mxu0
        %3252 = vmatprep.mubr.bf16.mxu0 %v2746
        %3253 = vmatmul.mubr.bf16.gmra.mxu0 %v2622
        %v3254 = vpop.f32.mrf.mxu0
        %v3255 = vadd.f32 0.0, %v3254
        %v3256 = vpop.f32.mrf.mxu0
        %v3257 = vpop.f32.mrf.mxu0
        %v3258 = vadd.f32 0.0, %v3257
        %v3259 = vpop.f32.mrf.mxu0
        %3260 = vmatprep.mubr.bf16.mxu0 %v2758
        %3261 = vmatmul.mubr.bf16.gmra.mxu0 %v2623
        %v3262 = vpop.f32.mrf.mxu0
        %v3263 = vadd.f32 0.0, %v3262
        %v3264 = vpop.f32.mrf.mxu0
        %v3265 = vpop.f32.mrf.mxu0
        %v3266 = vadd.f32 0.0, %v3265
        %v3267 = vpop.f32.mrf.mxu0
        %3268 = vmatprep.mubr.bf16.mxu0 %v2770
        %3269 = vmatmul.mubr.bf16.gmra.mxu0 %v2624
        %v3270 = vpop.f32.mrf.mxu0
        %v3271 = vadd.f32 0.0, %v3270
        %v3272 = vpop.f32.mrf.mxu0
        %v3273 = vpop.f32.mrf.mxu0
        %v3274 = vadd.f32 0.0, %v3273
        %v3275 = vpop.f32.mrf.mxu0
        %3276 = vmatprep.mubr.bf16.mxu0 %v2782
        %3277 = vmatmul.mubr.bf16.gmra.mxu0 %v2625
        %v3278 = vpop.f32.mrf.mxu0
        %v3279 = vadd.f32 0.0, %v3278
        %v3280 = vpop.f32.mrf.mxu0
        %v3281 = vpop.f32.mrf.mxu0
        %v3282 = vadd.f32 0.0, %v3281
        %v3283 = vpop.f32.mrf.mxu0
        %3284 = vmatprep.mubr.bf16.mxu0 %v2794
        %3285 = vmatmul.mubr.bf16.gmra.mxu0 %v2626
        %v3286 = vpop.f32.mrf.mxu0
        %v3287 = vadd.f32 0.0, %v3286
        %v3288 = vpop.f32.mrf.mxu0
        %v3289 = vpop.f32.mrf.mxu0
        %v3290 = vadd.f32 0.0, %v3289
        %v3291 = vpop.f32.mrf.mxu0
        %3292 = vmatprep.mubr.bf16.mxu0 %v2806
        %3293 = vmatmul.mubr.bf16.gmra.mxu0 %v2627
        %v3294 = vpop.f32.mrf.mxu0
        %v3295 = vadd.f32 0.0, %v3294
        %v3296 = vpop.f32.mrf.mxu0
        %v3297 = vpop.f32.mrf.mxu0
        %v3298 = vadd.f32 0.0, %v3297
        %v3299 = vpop.f32.mrf.mxu0
        %3300 = vmatprep.mubr.bf16.mxu0 %v2818
        %3301 = vmatmul.mubr.bf16.gmra.mxu0 %v2628
        %v3302 = vpop.f32.mrf.mxu0
        %v3303 = vadd.f32 0.0, %v3302
        %v3304 = vpop.f32.mrf.mxu0
        %v3305 = vpop.f32.mrf.mxu0
        %v3306 = vadd.f32 0.0, %v3305
        %v3307 = vpop.f32.mrf.mxu0
        %3308 = vmatprep.mubr.bf16.mxu0 %v2830
        %3309 = vmatmul.mubr.bf16.gmra.mxu0 %v2629
        %v3310 = vpop.f32.mrf.mxu0
        %v3311 = vadd.f32 0.0, %v3310
        %v3312 = vpop.f32.mrf.mxu0
        %v3313 = vpop.f32.mrf.mxu0
        %v3314 = vadd.f32 0.0, %v3313
        %v3315 = vpop.f32.mrf.mxu0
        %3316 = vmatprep.mubr.bf16.mxu0 %v2842
        %3317 = vmatmul.mubr.bf16.gmra.mxu0 %v2630
        %v3318 = vpop.f32.mrf.mxu0
        %v3319 = vadd.f32 0.0, %v3318
        %v3320 = vpop.f32.mrf.mxu0
        %v3321 = vpop.f32.mrf.mxu0
        %v3322 = vadd.f32 0.0, %v3321
        %v3323 = vpop.f32.mrf.mxu0
        %3324 = vmatprep.mubr.bf16.mxu0 %v2854
        %3325 = vmatmul.mubr.bf16.gmra.mxu0 %v2631
        %v3326 = vpop.f32.mrf.mxu0
        %v3327 = vadd.f32 0.0, %v3326
        %v3328 = vpop.f32.mrf.mxu0
        %v3329 = vpop.f32.mrf.mxu0
        %v3330 = vadd.f32 0.0, %v3329
        %v3331 = vpop.f32.mrf.mxu0
        %3332 = vmatprep.mubr.bf16.mxu0 %v2866
        %3333 = vmatmul.mubr.bf16.gmra.mxu0 %v2632
        %v3334 = vpop.f32.mrf.mxu0
        %v3335 = vadd.f32 0.0, %v3334
        %v3336 = vpop.f32.mrf.mxu0
        %v3337 = vpop.f32.mrf.mxu0
        %v3338 = vadd.f32 0.0, %v3337
        %v3339 = vpop.f32.mrf.mxu0
        %3340 = vmatprep.mubr.bf16.mxu0 %v2878
        %3341 = vmatmul.mubr.bf16.gmra.mxu0 %v2633
        %v3342 = vpop.f32.mrf.mxu0
        %v3343 = vadd.f32 0.0, %v3342
        %v3344 = vpop.f32.mrf.mxu0
        %v3345 = vpop.f32.mrf.mxu0
        %v3346 = vadd.f32 0.0, %v3345
        %v3347 = vpop.f32.mrf.mxu0
        %3348 = vmatprep.mubr.bf16.mxu0 %v2890
        %3349 = vmatmul.mubr.bf16.gmra.mxu0 %v2634
        %v3350 = vpop.f32.mrf.mxu0
        %v3351 = vadd.f32 0.0, %v3350
        %v3352 = vpop.f32.mrf.mxu0
        %v3353 = vpop.f32.mrf.mxu0
        %v3354 = vadd.f32 0.0, %v3353
        %v3355 = vpop.f32.mrf.mxu0
        %3356 = vdwg.mxu0
        %3357 = vmatprep.subr.bf16.mxu0 0
        %3358 = vmatpush1.bf16.msra.mxu0 %v3171
        %3359 = vmatprep.subr.bf16.mxu0 0
        %3360 = vmatpush1.bf16.msra.mxu0 %v3170
        %3361 = vmatprep.subr.bf16.mxu0 0
        %3362 = vmatpush1.bf16.msra.mxu0 %v3169
        %3363 = vmatprep.subr.bf16.mxu0 0
        %3364 = vmatpush1.bf16.msra.mxu0 %v3168
        %3365 = vmatprep.subr.bf16.mxu0 0
        %3366 = vmatpush1.bf16.msra.mxu0 %v3167
        %3367 = vmatprep.subr.bf16.mxu0 0
        %3368 = vmatpush1.bf16.msra.mxu0 %v3166
        %3369 = vmatprep.subr.bf16.mxu0 0
        %3370 = vmatpush1.bf16.msra.mxu0 %v3165
        %3371 = vmatprep.subr.bf16.mxu0 0
        %3372 = vmatpush1.bf16.msra.mxu0 %v3164
        %3373 = vmatprep.subr.bf16.mxu0 0
        %3374 = vmatpush2.bf16.msra.mxu0 0
        %3375 = vmatprep.subr.bf16.mxu0 0
        %3376 = vmatpush2.bf16.msra.mxu0 0
        %3377 = vmatprep.subr.bf16.mxu0 0
        %3378 = vmatpush2.bf16.msra.mxu0 0
        %3379 = vmatprep.subr.bf16.mxu0 0
        %3380 = vmatpush2.bf16.msra.mxu0 0
        %3381 = vmatprep.subr.bf16.mxu0 0
        %3382 = vmatpush2.bf16.msra.mxu0 0
        %3383 = vmatprep.subr.bf16.mxu0 0
        %3384 = vmatpush2.bf16.msra.mxu0 0
        %3385 = vmatprep.subr.bf16.mxu0 0
        %3386 = vmatpush2.bf16.msra.mxu0 0
        %3387 = vmatprep.subr.bf16.mxu0 0
        %3388 = vmatpush2.bf16.msra.mxu0 0
        %3389 = vmatprep.mubr.bf16.mxu0 0
        %3390 = vmatmul.mubr.bf16.gmra.mxu0 %v2909
        %v3391 = vpop.f32.mrf.mxu0
        %v3392 = vadd.f32 %v3231, %v3391
        %v3393 = vpop.f32.mrf.mxu0
        %v3394 = vpop.f32.mrf.mxu0
        %v3395 = vadd.f32 %v3234, %v3394
        %v3396 = vpop.f32.mrf.mxu0
        %3397 = vmatprep.mubr.bf16.mxu0 0
        %3398 = vmatmul.mubr.bf16.gmra.mxu0 %v2912
        %v3399 = vpop.f32.mrf.mxu0
        %v3400 = vadd.f32 %v3239, %v3399
        %v3401 = vpop.f32.mrf.mxu0
        %v3402 = vpop.f32.mrf.mxu0
        %v3403 = vadd.f32 %v3242, %v3402
        %v3404 = vpop.f32.mrf.mxu0
        %3405 = vmatprep.mubr.bf16.mxu0 0
        %3406 = vmatmul.mubr.bf16.gmra.mxu0 %v2915
        %v3407 = vpop.f32.mrf.mxu0
        %v3408 = vadd.f32 %v3247, %v3407
        %v3409 = vpop.f32.mrf.mxu0
        %v3410 = vpop.f32.mrf.mxu0
        %v3411 = vadd.f32 %v3250, %v3410
        %v3412 = vpop.f32.mrf.mxu0
        %3413 = vmatprep.mubr.bf16.mxu0 0
        %3414 = vmatmul.mubr.bf16.gmra.mxu0 %v2918
        %v3415 = vpop.f32.mrf.mxu0
        %v3416 = vadd.f32 %v3255, %v3415
        %v3417 = vpop.f32.mrf.mxu0
        %v3418 = vpop.f32.mrf.mxu0
        %v3419 = vadd.f32 %v3258, %v3418
        %v3420 = vpop.f32.mrf.mxu0
        %3421 = vmatprep.mubr.bf16.mxu0 0
        %3422 = vmatmul.mubr.bf16.gmra.mxu0 %v2921
        %v3423 = vpop.f32.mrf.mxu0
        %v3424 = vadd.f32 %v3263, %v3423
        %v3425 = vpop.f32.mrf.mxu0
        %v3426 = vpop.f32.mrf.mxu0
        %v3427 = vadd.f32 %v3266, %v3426
        %v3428 = vpop.f32.mrf.mxu0
        %3429 = vmatprep.mubr.bf16.mxu0 0
        %3430 = vmatmul.mubr.bf16.gmra.mxu0 %v2924
        %v3431 = vpop.f32.mrf.mxu0
        %v3432 = vadd.f32 %v3271, %v3431
        %v3433 = vpop.f32.mrf.mxu0
        %v3434 = vpop.f32.mrf.mxu0
        %v3435 = vadd.f32 %v3274, %v3434
        %v3436 = vpop.f32.mrf.mxu0
        %3437 = vmatprep.mubr.bf16.mxu0 0
        %3438 = vmatmul.mubr.bf16.gmra.mxu0 %v2927
        %v3439 = vpop.f32.mrf.mxu0
        %v3440 = vadd.f32 %v3279, %v3439
        %v3441 = vpop.f32.mrf.mxu0
        %v3442 = vpop.f32.mrf.mxu0
        %v3443 = vadd.f32 %v3282, %v3442
        %v3444 = vpop.f32.mrf.mxu0
        %3445 = vmatprep.mubr.bf16.mxu0 0
        %3446 = vmatmul.mubr.bf16.gmra.mxu0 %v2930
        %v3447 = vpop.f32.mrf.mxu0
        %v3448 = vadd.f32 %v3287, %v3447
        %v3449 = vpop.f32.mrf.mxu0
        %v3450 = vpop.f32.mrf.mxu0
        %v3451 = vadd.f32 %v3290, %v3450
        %v3452 = vpop.f32.mrf.mxu0
        %3453 = vmatprep.mubr.bf16.mxu0 0
        %3454 = vmatmul.mubr.bf16.gmra.mxu0 %v2933
        %v3455 = vpop.f32.mrf.mxu0
        %v3456 = vadd.f32 %v3295, %v3455
        %v3457 = vpop.f32.mrf.mxu0
        %v3458 = vpop.f32.mrf.mxu0
        %v3459 = vadd.f32 %v3298, %v3458
        %v3460 = vpop.f32.mrf.mxu0
        %3461 = vmatprep.mubr.bf16.mxu0 0
        %3462 = vmatmul.mubr.bf16.gmra.mxu0 %v2936
        %v3463 = vpop.f32.mrf.mxu0
        %v3464 = vadd.f32 %v3303, %v3463
        %v3465 = vpop.f32.mrf.mxu0
        %v3466 = vpop.f32.mrf.mxu0
        %v3467 = vadd.f32 %v3306, %v3466
        %v3468 = vpop.f32.mrf.mxu0
        %3469 = vmatprep.mubr.bf16.mxu0 0
        %3470 = vmatmul.mubr.bf16.gmra.mxu0 %v2939
        %v3471 = vpop.f32.mrf.mxu0
        %v3472 = vadd.f32 %v3311, %v3471
        %v3473 = vpop.f32.mrf.mxu0
        %v3474 = vpop.f32.mrf.mxu0
        %v3475 = vadd.f32 %v3314, %v3474
        %v3476 = vpop.f32.mrf.mxu0
        %3477 = vmatprep.mubr.bf16.mxu0 0
        %3478 = vmatmul.mubr.bf16.gmra.mxu0 %v2942
        %v3479 = vpop.f32.mrf.mxu0
        %v3480 = vadd.f32 %v3319, %v3479
        %v3481 = vpop.f32.mrf.mxu0
        %v3482 = vpop.f32.mrf.mxu0
        %v3483 = vadd.f32 %v3322, %v3482
        %v3484 = vpop.f32.mrf.mxu0
        %3485 = vmatprep.mubr.bf16.mxu0 0
        %3486 = vmatmul.mubr.bf16.gmra.mxu0 %v2945
        %v3487 = vpop.f32.mrf.mxu0
        %v3488 = vadd.f32 %v3327, %v3487
        %v3489 = vpop.f32.mrf.mxu0
        %v3490 = vpop.f32.mrf.mxu0
        %v3491 = vadd.f32 %v3330, %v3490
        %v3492 = vpop.f32.mrf.mxu0
        %3493 = vmatprep.mubr.bf16.mxu0 0
        %3494 = vmatmul.mubr.bf16.gmra.mxu0 %v2948
        %v3495 = vpop.f32.mrf.mxu0
        %v3496 = vadd.f32 %v3335, %v3495
        %v3497 = vpop.f32.mrf.mxu0
        %v3498 = vpop.f32.mrf.mxu0
        %v3499 = vadd.f32 %v3338, %v3498
        %v3500 = vpop.f32.mrf.mxu0
        %3501 = vmatprep.mubr.bf16.mxu0 0
        %3502 = vmatmul.mubr.bf16.gmra.mxu0 %v2951
        %v3503 = vpop.f32.mrf.mxu0
        %v3504 = vadd.f32 %v3343, %v3503
        %v3505 = vpop.f32.mrf.mxu0
        %v3506 = vpop.f32.mrf.mxu0
        %v3507 = vadd.f32 %v3346, %v3506
        %v3508 = vpop.f32.mrf.mxu0
        %3509 = vmatprep.mubr.bf16.mxu0 0
        %3510 = vmatmul.mubr.bf16.gmra.mxu0 %v2954
        %v3511 = vpop.f32.mrf.mxu0
        %v3512 = vadd.f32 %v3351, %v3511
        %v3513 = vpop.f32.mrf.mxu0
        %v3514 = vpop.f32.mrf.mxu0
        %v3515 = vadd.f32 %v3354, %v3514
        %v3516 = vpop.f32.mrf.mxu0
        %3517 = vdwg.mxu0
        %v3518 = vadd.f32 %v2971, %v3392
        %v3519 = vadd.f32 %v2972, %v3395
        %v3520 = vadd.f32 %v2973, %v3400
        %v3521 = vadd.f32 %v2974, %v3403
        %v3522 = vadd.f32 %v2975, %v3408
        %v3523 = vadd.f32 %v2976, %v3411
        %v3524 = vadd.f32 %v2977, %v3416
        %v3525 = vadd.f32 %v2978, %v3419
        %v3526 = vadd.f32 %v2979, %v3424
        %v3527 = vadd.f32 %v2980, %v3427
        %v3528 = vadd.f32 %v2981, %v3432
        %v3529 = vadd.f32 %v2982, %v3435
        %v3530 = vadd.f32 %v2983, %v3440
        %v3531 = vadd.f32 %v2984, %v3443
        %v3532 = vadd.f32 %v2985, %v3448
        %v3533 = vadd.f32 %v2986, %v3451
        %v3534 = vadd.f32 %v2987, %v3456
        %v3535 = vadd.f32 %v2988, %v3459
        %v3536 = vadd.f32 %v2989, %v3464
        %v3537 = vadd.f32 %v2990, %v3467
        %v3538 = vadd.f32 %v2991, %v3472
        %v3539 = vadd.f32 %v2992, %v3475
        %v3540 = vadd.f32 %v2993, %v3480
        %v3541 = vadd.f32 %v2994, %v3483
        %v3542 = vadd.f32 %v2995, %v3488
        %v3543 = vadd.f32 %v2996, %v3491
        %v3544 = vadd.f32 %v2997, %v3496
        %v3545 = vadd.f32 %v2998, %v3499
        %v3546 = vadd.f32 %v2999, %v3504
        %v3547 = vadd.f32 %v3000, %v3507
        %v3548 = vadd.f32 %v3001, %v3512
        %v3549 = vadd.f32 %v3002, %v3515
        %3550 = vst [vmem:[#allocation2] sm:$0xff] %v3518
        %3551 = vst [vmem:[#allocation2 + $0x8] sm:$0xff] %v3519
        %3552 = vst [vmem:[#allocation2 + $0x10] sm:$0xff] %v3520
        %3553 = vst [vmem:[#allocation2 + $0x18] sm:$0xff] %v3521
        %3554 = vst [vmem:[#allocation2 + $0x20] sm:$0xff] %v3522
        %3555 = vst [vmem:[#allocation2 + $0x28] sm:$0xff] %v3523
        %3556 = vst [vmem:[#allocation2 + $0x30] sm:$0xff] %v3524
        %3557 = vst [vmem:[#allocation2 + $0x38] sm:$0xff] %v3525
        %3558 = vst [vmem:[#allocation2 + $0x40] sm:$0xff] %v3526
        %3559 = vst [vmem:[#allocation2 + $0x48] sm:$0xff] %v3527
        %3560 = vst [vmem:[#allocation2 + $0x50] sm:$0xff] %v3528
        %3561 = vst [vmem:[#allocation2 + $0x58] sm:$0xff] %v3529
        %3562 = vst [vmem:[#allocation2 + $0x60] sm:$0xff] %v3530
        %3563 = vst [vmem:[#allocation2 + $0x68] sm:$0xff] %v3531
        %3564 = vst [vmem:[#allocation2 + $0x70] sm:$0xff] %v3532
        %3565 = vst [vmem:[#allocation2 + $0x78] sm:$0xff] %v3533
        %3566 = vst [vmem:[#allocation2 + $0x80] sm:$0xff] %v3534
        %3567 = vst [vmem:[#allocation2 + $0x88] sm:$0xff] %v3535
        %3568 = vst [vmem:[#allocation2 + $0x90] sm:$0xff] %v3536
        %3569 = vst [vmem:[#allocation2 + $0x98] sm:$0xff] %v3537
        %3570 = vst [vmem:[#allocation2 + $0xa0] sm:$0xff] %v3538
        %3571 = vst [vmem:[#allocation2 + $0xa8] sm:$0xff] %v3539
        %3572 = vst [vmem:[#allocation2 + $0xb0] sm:$0xff] %v3540
        %3573 = vst [vmem:[#allocation2 + $0xb8] sm:$0xff] %v3541
        %3574 = vst [vmem:[#allocation2 + $0xc0] sm:$0xff] %v3542
        %3575 = vst [vmem:[#allocation2 + $0xc8] sm:$0xff] %v3543
        %3576 = vst [vmem:[#allocation2 + $0xd0] sm:$0xff] %v3544
        %3577 = vst [vmem:[#allocation2 + $0xd8] sm:$0xff] %v3545
        %3578 = vst [vmem:[#allocation2 + $0xe0] sm:$0xff] %v3546
        %3579 = vst [vmem:[#allocation2 + $0xe8] sm:$0xff] %v3547
        %3580 = vst [vmem:[#allocation2 + $0xf0] sm:$0xff] %v3548
        %3581 = vst [vmem:[#allocation2 + $0xf8] sm:$0xff] %v3549
        %3582 = vst [vmem:[#allocation3] sm:$0xf] 0
        %3583 = vst [vmem:[#allocation3 + $0x4] sm:$0xf] 0
        %3584 = vst [vmem:[#allocation3 + $0x8] sm:$0xf] 0
        %s3585 = scalar_lea.vmem [#allocation3], 204
        %3586 = vst [vmem:[%s3585] sm:$0xf] 0
        %3587 = vst [vmem:[%s3585 + $0x4] sm:$0xf] 0
        %3588 = vst [vmem:[%s3585 + $0x8] sm:$0xf] 0
        %s3589 = scalar_lea.vmem [#allocation3], 12
        %vm3590 = vcmask 1040384
        %vm3591 = vsmask.f32 256
        %vm3592 = vmand %vm3590, %vm3591
        %v3593 = vld [vmem:[%s3589] sm:$0x1]
        %v3594 = vsel %vm3592, 0, %v3593
        %3595 = vst [vmem:[%s3589] sm:$0x1] %v3594
        %v3596 = vld [vmem:[%s3589 + $0xc] sm:$0x1]
        %v3597 = vsel %vm3592, 0, %v3596
        %3598 = vst [vmem:[%s3589 + $0xc] sm:$0x1] %v3597
        %v3599 = vld [vmem:[%s3589 + $0x18] sm:$0x1]
        %v3600 = vsel %vm3592, 0, %v3599
        %3601 = vst [vmem:[%s3589 + $0x18] sm:$0x1] %v3600
        %v3602 = vld [vmem:[%s3589 + $0x24] sm:$0x1]
        %v3603 = vsel %vm3592, 0, %v3602
        %3604 = vst [vmem:[%s3589 + $0x24] sm:$0x1] %v3603
        %v3605 = vld [vmem:[%s3589 + $0x30] sm:$0x1]
        %v3606 = vsel %vm3592, 0, %v3605
        %3607 = vst [vmem:[%s3589 + $0x30] sm:$0x1] %v3606
        %v3608 = vld [vmem:[%s3589 + $0x3c] sm:$0x1]
        %v3609 = vsel %vm3592, 0, %v3608
        %3610 = vst [vmem:[%s3589 + $0x3c] sm:$0x1] %v3609
        %v3611 = vld [vmem:[%s3589 + $0x48] sm:$0x1]
        %v3612 = vsel %vm3592, 0, %v3611
        %3613 = vst [vmem:[%s3589 + $0x48] sm:$0x1] %v3612
        %v3614 = vld [vmem:[%s3589 + $0x54] sm:$0x1]
        %v3615 = vsel %vm3592, 0, %v3614
        %3616 = vst [vmem:[%s3589 + $0x54] sm:$0x1] %v3615
        %v3617 = vld [vmem:[%s3589 + $0x60] sm:$0x1]
        %v3618 = vsel %vm3592, 0, %v3617
        %3619 = vst [vmem:[%s3589 + $0x60] sm:$0x1] %v3618
        %v3620 = vld [vmem:[%s3589 + $0x6c] sm:$0x1]
        %v3621 = vsel %vm3592, 0, %v3620
        %3622 = vst [vmem:[%s3589 + $0x6c] sm:$0x1] %v3621
        %v3623 = vld [vmem:[%s3589 + $0x78] sm:$0x1]
        %v3624 = vsel %vm3592, 0, %v3623
        %3625 = vst [vmem:[%s3589 + $0x78] sm:$0x1] %v3624
        %v3626 = vld [vmem:[%s3589 + $0x84] sm:$0x1]
        %v3627 = vsel %vm3592, 0, %v3626
        %3628 = vst [vmem:[%s3589 + $0x84] sm:$0x1] %v3627
        %v3629 = vld [vmem:[%s3589 + $0x90] sm:$0x1]
        %v3630 = vsel %vm3592, 0, %v3629
        %3631 = vst [vmem:[%s3589 + $0x90] sm:$0x1] %v3630
        %v3632 = vld [vmem:[%s3589 + $0x9c] sm:$0x1]
        %v3633 = vsel %vm3592, 0, %v3632
        %3634 = vst [vmem:[%s3589 + $0x9c] sm:$0x1] %v3633
        %v3635 = vld [vmem:[%s3589 + $0xa8] sm:$0x1]
        %v3636 = vsel %vm3592, 0, %v3635
        %3637 = vst [vmem:[%s3589 + $0xa8] sm:$0x1] %v3636
        %v3638 = vld [vmem:[%s3589 + $0xb4] sm:$0x1]
        %v3639 = vsel %vm3592, 0, %v3638
        %3640 = vst [vmem:[%s3589 + $0xb4] sm:$0x1] %v3639
        %vm3641 = vcmask 1043456
        %vm3642 = vsmask.f32 7938
        %vm3643 = vmand %vm3641, %vm3642
        %v3644 = vld [vmem:[%s3589 + $0x8] sm:$0xf]
        %v3645 = vsel %vm3643, 0, %v3644
        %3646 = vst [vmem:[%s3589 + $0x8] sm:$0xf] %v3645
        %v3647 = vld [vmem:[%s3589 + $0x14] sm:$0xf]
        %v3648 = vsel %vm3643, 0, %v3647
        %3649 = vst [vmem:[%s3589 + $0x14] sm:$0xf] %v3648
        %v3650 = vld [vmem:[%s3589 + $0x20] sm:$0xf]
        %v3651 = vsel %vm3643, 0, %v3650
        %3652 = vst [vmem:[%s3589 + $0x20] sm:$0xf] %v3651
        %v3653 = vld [vmem:[%s3589 + $0x2c] sm:$0xf]
        %v3654 = vsel %vm3643, 0, %v3653
        %3655 = vst [vmem:[%s3589 + $0x2c] sm:$0xf] %v3654
        %v3656 = vld [vmem:[%s3589 + $0x38] sm:$0xf]
        %v3657 = vsel %vm3643, 0, %v3656
        %3658 = vst [vmem:[%s3589 + $0x38] sm:$0xf] %v3657
        %v3659 = vld [vmem:[%s3589 + $0x44] sm:$0xf]
        %v3660 = vsel %vm3643, 0, %v3659
        %3661 = vst [vmem:[%s3589 + $0x44] sm:$0xf] %v3660
        %v3662 = vld [vmem:[%s3589 + $0x50] sm:$0xf]
        %v3663 = vsel %vm3643, 0, %v3662
        %3664 = vst [vmem:[%s3589 + $0x50] sm:$0xf] %v3663
        %v3665 = vld [vmem:[%s3589 + $0x5c] sm:$0xf]
        %v3666 = vsel %vm3643, 0, %v3665
        %3667 = vst [vmem:[%s3589 + $0x5c] sm:$0xf] %v3666
        %v3668 = vld [vmem:[%s3589 + $0x68] sm:$0xf]
        %v3669 = vsel %vm3643, 0, %v3668
        %3670 = vst [vmem:[%s3589 + $0x68] sm:$0xf] %v3669
        %v3671 = vld [vmem:[%s3589 + $0x74] sm:$0xf]
        %v3672 = vsel %vm3643, 0, %v3671
        %3673 = vst [vmem:[%s3589 + $0x74] sm:$0xf] %v3672
        %v3674 = vld [vmem:[%s3589 + $0x80] sm:$0xf]
        %v3675 = vsel %vm3643, 0, %v3674
        %3676 = vst [vmem:[%s3589 + $0x80] sm:$0xf] %v3675
        %v3677 = vld [vmem:[%s3589 + $0x8c] sm:$0xf]
        %v3678 = vsel %vm3643, 0, %v3677
        %3679 = vst [vmem:[%s3589 + $0x8c] sm:$0xf] %v3678
        %v3680 = vld [vmem:[%s3589 + $0x98] sm:$0xf]
        %v3681 = vsel %vm3643, 0, %v3680
        %3682 = vst [vmem:[%s3589 + $0x98] sm:$0xf] %v3681
        %v3683 = vld [vmem:[%s3589 + $0xa4] sm:$0xf]
        %v3684 = vsel %vm3643, 0, %v3683
        %3685 = vst [vmem:[%s3589 + $0xa4] sm:$0xf] %v3684
        %v3686 = vld [vmem:[%s3589 + $0xb0] sm:$0xf]
        %v3687 = vsel %vm3643, 0, %v3686
        %3688 = vst [vmem:[%s3589 + $0xb0] sm:$0xf] %v3687
        %v3689 = vld [vmem:[%s3589 + $0xbc] sm:$0xf]
        %v3690 = vsel %vm3643, 0, %v3689
        %3691 = vst [vmem:[%s3589 + $0xbc] sm:$0xf] %v3690
        %v3692 = vld [vmem:[#allocation2] sm:$0xff]
        %v3693 = vld [vmem:[#allocation2 + $0x8] sm:$0xff]
        %v3694 = vld [vmem:[#allocation2 + $0x10] sm:$0xff]
        %v3695 = vld [vmem:[#allocation2 + $0x18] sm:$0xff]
        %v3696 = vld [vmem:[#allocation2 + $0x20] sm:$0xff]
        %v3697 = vld [vmem:[#allocation2 + $0x28] sm:$0xff]
        %v3698 = vld [vmem:[#allocation2 + $0x30] sm:$0xff]
        %v3699 = vld [vmem:[#allocation2 + $0x38] sm:$0xff]
        %v3700 = vld [vmem:[#allocation2 + $0x40] sm:$0xff]
        %v3701 = vld [vmem:[#allocation2 + $0x48] sm:$0xff]
        %v3702 = vld [vmem:[#allocation2 + $0x50] sm:$0xff]
        %v3703 = vld [vmem:[#allocation2 + $0x58] sm:$0xff]
        %v3704 = vld [vmem:[#allocation2 + $0x60] sm:$0xff]
        %v3705 = vld [vmem:[#allocation2 + $0x68] sm:$0xff]
        %v3706 = vld [vmem:[#allocation2 + $0x70] sm:$0xff]
        %v3707 = vld [vmem:[#allocation2 + $0x78] sm:$0xff]
        %v3708 = vld [vmem:[#allocation2 + $0x80] sm:$0xff]
        %v3709 = vld [vmem:[#allocation2 + $0x88] sm:$0xff]
        %v3710 = vld [vmem:[#allocation2 + $0x90] sm:$0xff]
        %v3711 = vld [vmem:[#allocation2 + $0x98] sm:$0xff]
        %v3712 = vld [vmem:[#allocation2 + $0xa0] sm:$0xff]
        %v3713 = vld [vmem:[#allocation2 + $0xa8] sm:$0xff]
        %v3714 = vld [vmem:[#allocation2 + $0xb0] sm:$0xff]
        %v3715 = vld [vmem:[#allocation2 + $0xb8] sm:$0xff]
        %v3716 = vld [vmem:[#allocation2 + $0xc0] sm:$0xff]
        %v3717 = vld [vmem:[#allocation2 + $0xc8] sm:$0xff]
        %v3718 = vld [vmem:[#allocation2 + $0xd0] sm:$0xff]
        %v3719 = vld [vmem:[#allocation2 + $0xd8] sm:$0xff]
        %v3720 = vld [vmem:[#allocation2 + $0xe0] sm:$0xff]
        %v3721 = vld [vmem:[#allocation2 + $0xe8] sm:$0xff]
        %v3722 = vld [vmem:[#allocation2 + $0xf0] sm:$0xff]
        %v3723 = vld [vmem:[#allocation2 + $0xf8] sm:$0xff]
        %v3724 = vmax.f32 %v3692, 0.0
        %v3725 = vmax.f32 %v3693, 0.0
        %v3726 = vmax.f32 %v3694, 0.0
        %v3727 = vmax.f32 %v3695, 0.0
        %v3728 = vmax.f32 %v3696, 0.0
        %v3729 = vmax.f32 %v3697, 0.0
        %v3730 = vmax.f32 %v3698, 0.0
        %v3731 = vmax.f32 %v3699, 0.0
        %v3732 = vmax.f32 %v3700, 0.0
        %v3733 = vmax.f32 %v3701, 0.0
        %v3734 = vmax.f32 %v3702, 0.0
        %v3735 = vmax.f32 %v3703, 0.0
        %v3736 = vmax.f32 %v3704, 0.0
        %v3737 = vmax.f32 %v3705, 0.0
        %v3738 = vmax.f32 %v3706, 0.0
        %v3739 = vmax.f32 %v3707, 0.0
        %v3740 = vmax.f32 %v3708, 0.0
        %v3741 = vmax.f32 %v3709, 0.0
        %v3742 = vmax.f32 %v3710, 0.0
        %v3743 = vmax.f32 %v3711, 0.0
        %v3744 = vmax.f32 %v3712, 0.0
        %v3745 = vmax.f32 %v3713, 0.0
        %v3746 = vmax.f32 %v3714, 0.0
        %v3747 = vmax.f32 %v3715, 0.0
        %v3748 = vmax.f32 %v3716, 0.0
        %v3749 = vmax.f32 %v3717, 0.0
        %v3750 = vmax.f32 %v3718, 0.0
        %v3751 = vmax.f32 %v3719, 0.0
        %v3752 = vmax.f32 %v3720, 0.0
        %v3753 = vmax.f32 %v3721, 0.0
        %v3754 = vmax.f32 %v3722, 0.0
        %v3755 = vmax.f32 %v3723, 0.0
        %v3756 = vpack.c.bf16 %v3725, %v3724
        %v3757 = vpack.c.bf16 %v3727, %v3726
        %v3758 = vpack.c.bf16 %v3729, %v3728
        %v3759 = vpack.c.bf16 %v3731, %v3730
        %v3760 = vpack.c.bf16 %v3733, %v3732
        %v3761 = vpack.c.bf16 %v3735, %v3734
        %v3762 = vpack.c.bf16 %v3737, %v3736
        %v3763 = vpack.c.bf16 %v3739, %v3738
        %v3764 = vpack.c.bf16 %v3741, %v3740
        %v3765 = vpack.c.bf16 %v3743, %v3742
        %v3766 = vpack.c.bf16 %v3745, %v3744
        %v3767 = vpack.c.bf16 %v3747, %v3746
        %v3768 = vpack.c.bf16 %v3749, %v3748
        %v3769 = vpack.c.bf16 %v3751, %v3750
        %v3770 = vpack.c.bf16 %v3753, %v3752
        %v3771 = vpack.c.bf16 %v3755, %v3754
        %v3788 = vunpack.c.l.b16 %v3756
        %v3789 = vunpack.c.h.b16 %v3756
        %v3790 = vunpack.c.l.b16 %v3757
        %v3791 = vunpack.c.h.b16 %v3757
        %v3792 = vunpack.c.l.b16 %v3758
        %v3793 = vunpack.c.h.b16 %v3758
        %v3794 = vunpack.c.l.b16 %v3759
        %v3795 = vunpack.c.h.b16 %v3759
        %v3796 = vunpack.c.l.b16 %v3760
        %v3797 = vunpack.c.h.b16 %v3760
        %v3798 = vunpack.c.l.b16 %v3761
        %v3799 = vunpack.c.h.b16 %v3761
        %v3800 = vunpack.c.l.b16 %v3762
        %v3801 = vunpack.c.h.b16 %v3762
        %v3802 = vunpack.c.l.b16 %v3763
        %v3803 = vunpack.c.h.b16 %v3763
        %v3804 = vunpack.c.l.b16 %v3764
        %v3805 = vunpack.c.h.b16 %v3764
        %v3806 = vunpack.c.l.b16 %v3765
        %v3807 = vunpack.c.h.b16 %v3765
        %v3808 = vunpack.c.l.b16 %v3766
        %v3809 = vunpack.c.h.b16 %v3766
        %v3810 = vunpack.c.l.b16 %v3767
        %v3811 = vunpack.c.h.b16 %v3767
        %v3812 = vunpack.c.l.b16 %v3768
        %v3813 = vunpack.c.h.b16 %v3768
        %v3814 = vunpack.c.l.b16 %v3769
        %v3815 = vunpack.c.h.b16 %v3769
        %v3816 = vunpack.c.l.b16 %v3770
        %v3817 = vunpack.c.h.b16 %v3770
        %v3818 = vunpack.c.l.b16 %v3771
        %v3819 = vunpack.c.h.b16 %v3771
        %v3820 = vpack.c.b16 %v3788, %v3788
        %v3821 = vpack.c.b16 %v3789, %v3789
        %v3822 = vpack.c.b16 %v3790, %v3790
        %v3823 = vpack.c.b16 %v3791, %v3791
        %v3824 = vpack.c.b16 %v3792, %v3792
        %v3825 = vpack.c.b16 %v3793, %v3793
        %v3826 = vpack.c.b16 %v3794, %v3794
        %v3827 = vpack.c.b16 %v3795, %v3795
        %v3828 = vpack.c.b16 %v3796, %v3796
        %v3829 = vpack.c.b16 %v3797, %v3797
        %v3830 = vpack.c.b16 %v3798, %v3798
        %v3831 = vpack.c.b16 %v3799, %v3799
        %v3832 = vpack.c.b16 %v3800, %v3800
        %v3833 = vpack.c.b16 %v3801, %v3801
        %v3834 = vpack.c.b16 %v3802, %v3802
        %v3835 = vpack.c.b16 %v3803, %v3803
        %v3836 = vpack.c.b16 %v3804, %v3804
        %v3837 = vpack.c.b16 %v3805, %v3805
        %v3838 = vpack.c.b16 %v3806, %v3806
        %v3839 = vpack.c.b16 %v3807, %v3807
        %v3840 = vpack.c.b16 %v3808, %v3808
        %v3841 = vpack.c.b16 %v3809, %v3809
        %v3842 = vpack.c.b16 %v3810, %v3810
        %v3843 = vpack.c.b16 %v3811, %v3811
        %v3844 = vpack.c.b16 %v3812, %v3812
        %v3845 = vpack.c.b16 %v3813, %v3813
        %v3846 = vpack.c.b16 %v3814, %v3814
        %v3847 = vpack.c.b16 %v3815, %v3815
        %v3848 = vpack.c.b16 %v3816, %v3816
        %v3849 = vpack.c.b16 %v3817, %v3817
        %v3850 = vpack.c.b16 %v3818, %v3818
        %v3851 = vpack.c.b16 %v3819, %v3819
        %vm3852 = vsmask.f32 4368
        %vm3853 = vmor %vm3591, %vm3852
        %v3855 = vshrl.u32 %v3820, 16
        %v3857 = vrot.slane %v3855, 7
        %v3858 = vshll.u32 %v3820, 16
        %v3860 = vor.u32 %v3857, %v3858
        %v3861 = vrot.slane %v3857, 4
        %v3863 = vshrl.u32 %v3821, 16
        %v3865 = vrot.slane %v3863, 7
        %v3866 = vshll.u32 %v3821, 16
        %v3868 = vor.u32 %v3865, %v3866
        %v3869 = vsel %vm3853, %v3861, %v3868
        %v3870 = vrot.slane %v3865, 4
        %v3872 = vshrl.u32 %v3822, 16
        %v3874 = vrot.slane %v3872, 7
        %v3875 = vshll.u32 %v3822, 16
        %v3877 = vor.u32 %v3874, %v3875
        %v3878 = vrot.slane %v3874, 4
        %v3880 = vshrl.u32 %v3823, 16
        %v3882 = vrot.slane %v3880, 7
        %v3883 = vshll.u32 %v3823, 16
        %v3885 = vor.u32 %v3882, %v3883
        %v3886 = vsel %vm3853, %v3878, %v3885
        %v3887 = vrot.slane %v3882, 4
        %v3889 = vshrl.u32 %v3824, 16
        %v3891 = vrot.slane %v3889, 7
        %v3892 = vshll.u32 %v3824, 16
        %v3894 = vor.u32 %v3891, %v3892
        %v3895 = vrot.slane %v3891, 4
        %v3897 = vshrl.u32 %v3825, 16
        %v3899 = vrot.slane %v3897, 7
        %v3900 = vshll.u32 %v3825, 16
        %v3902 = vor.u32 %v3899, %v3900
        %v3903 = vsel %vm3853, %v3895, %v3902
        %v3904 = vrot.slane %v3899, 4
        %v3906 = vshrl.u32 %v3826, 16
        %v3908 = vrot.slane %v3906, 7
        %v3909 = vshll.u32 %v3826, 16
        %v3911 = vor.u32 %v3908, %v3909
        %v3912 = vrot.slane %v3908, 4
        %v3914 = vshrl.u32 %v3827, 16
        %v3916 = vrot.slane %v3914, 7
        %v3917 = vshll.u32 %v3827, 16
        %v3919 = vor.u32 %v3916, %v3917
        %v3920 = vsel %vm3853, %v3912, %v3919
        %v3921 = vrot.slane %v3916, 4
        %v3923 = vshrl.u32 %v3828, 16
        %v3925 = vrot.slane %v3923, 7
        %v3926 = vshll.u32 %v3828, 16
        %v3928 = vor.u32 %v3925, %v3926
        %v3929 = vrot.slane %v3925, 4
        %v3931 = vshrl.u32 %v3829, 16
        %v3933 = vrot.slane %v3931, 7
        %v3934 = vshll.u32 %v3829, 16
        %v3936 = vor.u32 %v3933, %v3934
        %v3937 = vsel %vm3853, %v3929, %v3936
        %v3938 = vrot.slane %v3933, 4
        %v3940 = vshrl.u32 %v3830, 16
        %v3942 = vrot.slane %v3940, 7
        %v3943 = vshll.u32 %v3830, 16
        %v3945 = vor.u32 %v3942, %v3943
        %v3946 = vrot.slane %v3942, 4
        %v3948 = vshrl.u32 %v3831, 16
        %v3950 = vrot.slane %v3948, 7
        %v3951 = vshll.u32 %v3831, 16
        %v3953 = vor.u32 %v3950, %v3951
        %v3954 = vsel %vm3853, %v3946, %v3953
        %v3955 = vrot.slane %v3950, 4
        %v3957 = vshrl.u32 %v3832, 16
        %v3959 = vrot.slane %v3957, 7
        %v3960 = vshll.u32 %v3832, 16
        %v3962 = vor.u32 %v3959, %v3960
        %v3963 = vrot.slane %v3959, 4
        %v3965 = vshrl.u32 %v3833, 16
        %v3967 = vrot.slane %v3965, 7
        %v3968 = vshll.u32 %v3833, 16
        %v3970 = vor.u32 %v3967, %v3968
        %v3971 = vsel %vm3853, %v3963, %v3970
        %v3972 = vrot.slane %v3967, 4
        %v3974 = vshrl.u32 %v3834, 16
        %v3976 = vrot.slane %v3974, 7
        %v3977 = vshll.u32 %v3834, 16
        %v3979 = vor.u32 %v3976, %v3977
        %v3980 = vrot.slane %v3976, 4
        %v3982 = vshrl.u32 %v3835, 16
        %v3984 = vrot.slane %v3982, 7
        %v3985 = vshll.u32 %v3835, 16
        %v3987 = vor.u32 %v3984, %v3985
        %v3988 = vsel %vm3853, %v3980, %v3987
        %v3989 = vrot.slane %v3984, 4
        %v3991 = vshrl.u32 %v3836, 16
        %v3993 = vrot.slane %v3991, 7
        %v3994 = vshll.u32 %v3836, 16
        %v3996 = vor.u32 %v3993, %v3994
        %v3997 = vrot.slane %v3993, 4
        %v3999 = vshrl.u32 %v3837, 16
        %v4001 = vrot.slane %v3999, 7
        %v4002 = vshll.u32 %v3837, 16
        %v4004 = vor.u32 %v4001, %v4002
        %v4005 = vsel %vm3853, %v3997, %v4004
        %v4006 = vrot.slane %v4001, 4
        %v4008 = vshrl.u32 %v3838, 16
        %v4010 = vrot.slane %v4008, 7
        %v4011 = vshll.u32 %v3838, 16
        %v4013 = vor.u32 %v4010, %v4011
        %v4014 = vrot.slane %v4010, 4
        %v4016 = vshrl.u32 %v3839, 16
        %v4018 = vrot.slane %v4016, 7
        %v4019 = vshll.u32 %v3839, 16
        %v4021 = vor.u32 %v4018, %v4019
        %v4022 = vsel %vm3853, %v4014, %v4021
        %v4023 = vrot.slane %v4018, 4
        %v4025 = vshrl.u32 %v3840, 16
        %v4027 = vrot.slane %v4025, 7
        %v4028 = vshll.u32 %v3840, 16
        %v4030 = vor.u32 %v4027, %v4028
        %v4031 = vrot.slane %v4027, 4
        %v4033 = vshrl.u32 %v3841, 16
        %v4035 = vrot.slane %v4033, 7
        %v4036 = vshll.u32 %v3841, 16
        %v4038 = vor.u32 %v4035, %v4036
        %v4039 = vsel %vm3853, %v4031, %v4038
        %v4040 = vrot.slane %v4035, 4
        %v4042 = vshrl.u32 %v3842, 16
        %v4044 = vrot.slane %v4042, 7
        %v4045 = vshll.u32 %v3842, 16
        %v4047 = vor.u32 %v4044, %v4045
        %v4048 = vrot.slane %v4044, 4
        %v4050 = vshrl.u32 %v3843, 16
        %v4052 = vrot.slane %v4050, 7
        %v4053 = vshll.u32 %v3843, 16
        %v4055 = vor.u32 %v4052, %v4053
        %v4056 = vsel %vm3853, %v4048, %v4055
        %v4057 = vrot.slane %v4052, 4
        %v4059 = vshrl.u32 %v3844, 16
        %v4061 = vrot.slane %v4059, 7
        %v4062 = vshll.u32 %v3844, 16
        %v4064 = vor.u32 %v4061, %v4062
        %v4065 = vrot.slane %v4061, 4
        %v4067 = vshrl.u32 %v3845, 16
        %v4069 = vrot.slane %v4067, 7
        %v4070 = vshll.u32 %v3845, 16
        %v4072 = vor.u32 %v4069, %v4070
        %v4073 = vsel %vm3853, %v4065, %v4072
        %v4074 = vrot.slane %v4069, 4
        %v4076 = vshrl.u32 %v3846, 16
        %v4078 = vrot.slane %v4076, 7
        %v4079 = vshll.u32 %v3846, 16
        %v4081 = vor.u32 %v4078, %v4079
        %v4082 = vrot.slane %v4078, 4
        %v4084 = vshrl.u32 %v3847, 16
        %v4086 = vrot.slane %v4084, 7
        %v4087 = vshll.u32 %v3847, 16
        %v4089 = vor.u32 %v4086, %v4087
        %v4090 = vsel %vm3853, %v4082, %v4089
        %v4091 = vrot.slane %v4086, 4
        %v4093 = vshrl.u32 %v3848, 16
        %v4095 = vrot.slane %v4093, 7
        %v4096 = vshll.u32 %v3848, 16
        %v4098 = vor.u32 %v4095, %v4096
        %v4099 = vrot.slane %v4095, 4
        %v4101 = vshrl.u32 %v3849, 16
        %v4103 = vrot.slane %v4101, 7
        %v4104 = vshll.u32 %v3849, 16
        %v4106 = vor.u32 %v4103, %v4104
        %v4107 = vsel %vm3853, %v4099, %v4106
        %v4108 = vrot.slane %v4103, 4
        %v4110 = vshrl.u32 %v3850, 16
        %v4112 = vrot.slane %v4110, 7
        %v4113 = vshll.u32 %v3850, 16
        %v4115 = vor.u32 %v4112, %v4113
        %v4116 = vrot.slane %v4112, 4
        %v4118 = vshrl.u32 %v3851, 16
        %v4120 = vrot.slane %v4118, 7
        %v4121 = vshll.u32 %v3851, 16
        %v4123 = vor.u32 %v4120, %v4121
        %v4124 = vsel %vm3853, %v4116, %v4123
        %v4125 = vrot.slane %v4120, 4
        %v4174 = vld [vmem:[%s3589] sm:$0xf]
        %v4175 = vsel %vm3643, %v3860, %v4174
        %4176 = vst [vmem:[%s3589] sm:$0xf] %v4175
        %4177 = vst [vmem:[%s3589 + $0x4] sm:$0xf] %v3869
        %v4178 = vld [vmem:[%s3589 + $0x8] sm:$0x1]
        %v4179 = vsel %vm3592, %v3870, %v4178
        %4180 = vst [vmem:[%s3589 + $0x8] sm:$0x1] %v4179
        %v4181 = vld [vmem:[%s3589 + $0xc] sm:$0xf]
        %v4182 = vsel %vm3643, %v3877, %v4181
        %4183 = vst [vmem:[%s3589 + $0xc] sm:$0xf] %v4182
        %4184 = vst [vmem:[%s3589 + $0x10] sm:$0xf] %v3886
        %v4185 = vld [vmem:[%s3589 + $0x14] sm:$0x1]
        %v4186 = vsel %vm3592, %v3887, %v4185
        %4187 = vst [vmem:[%s3589 + $0x14] sm:$0x1] %v4186
        %v4188 = vld [vmem:[%s3589 + $0x18] sm:$0xf]
        %v4189 = vsel %vm3643, %v3894, %v4188
        %4190 = vst [vmem:[%s3589 + $0x18] sm:$0xf] %v4189
        %4191 = vst [vmem:[%s3589 + $0x1c] sm:$0xf] %v3903
        %v4192 = vld [vmem:[%s3589 + $0x20] sm:$0x1]
        %v4193 = vsel %vm3592, %v3904, %v4192
        %4194 = vst [vmem:[%s3589 + $0x20] sm:$0x1] %v4193
        %v4195 = vld [vmem:[%s3589 + $0x24] sm:$0xf]
        %v4196 = vsel %vm3643, %v3911, %v4195
        %4197 = vst [vmem:[%s3589 + $0x24] sm:$0xf] %v4196
        %4198 = vst [vmem:[%s3589 + $0x28] sm:$0xf] %v3920
        %v4199 = vld [vmem:[%s3589 + $0x2c] sm:$0x1]
        %v4200 = vsel %vm3592, %v3921, %v4199
        %4201 = vst [vmem:[%s3589 + $0x2c] sm:$0x1] %v4200
        %v4202 = vld [vmem:[%s3589 + $0x30] sm:$0xf]
        %v4203 = vsel %vm3643, %v3928, %v4202
        %4204 = vst [vmem:[%s3589 + $0x30] sm:$0xf] %v4203
        %4205 = vst [vmem:[%s3589 + $0x34] sm:$0xf] %v3937
        %v4206 = vld [vmem:[%s3589 + $0x38] sm:$0x1]
        %v4207 = vsel %vm3592, %v3938, %v4206
        %4208 = vst [vmem:[%s3589 + $0x38] sm:$0x1] %v4207
        %v4209 = vld [vmem:[%s3589 + $0x3c] sm:$0xf]
        %v4210 = vsel %vm3643, %v3945, %v4209
        %4211 = vst [vmem:[%s3589 + $0x3c] sm:$0xf] %v4210
        %4212 = vst [vmem:[%s3589 + $0x40] sm:$0xf] %v3954
        %v4213 = vld [vmem:[%s3589 + $0x44] sm:$0x1]
        %v4214 = vsel %vm3592, %v3955, %v4213
        %4215 = vst [vmem:[%s3589 + $0x44] sm:$0x1] %v4214
        %v4216 = vld [vmem:[%s3589 + $0x48] sm:$0xf]
        %v4217 = vsel %vm3643, %v3962, %v4216
        %4218 = vst [vmem:[%s3589 + $0x48] sm:$0xf] %v4217
        %4219 = vst [vmem:[%s3589 + $0x4c] sm:$0xf] %v3971
        %v4220 = vld [vmem:[%s3589 + $0x50] sm:$0x1]
        %v4221 = vsel %vm3592, %v3972, %v4220
        %4222 = vst [vmem:[%s3589 + $0x50] sm:$0x1] %v4221
        %v4223 = vld [vmem:[%s3589 + $0x54] sm:$0xf]
        %v4224 = vsel %vm3643, %v3979, %v4223
        %4225 = vst [vmem:[%s3589 + $0x54] sm:$0xf] %v4224
        %4226 = vst [vmem:[%s3589 + $0x58] sm:$0xf] %v3988
        %v4227 = vld [vmem:[%s3589 + $0x5c] sm:$0x1]
        %v4228 = vsel %vm3592, %v3989, %v4227
        %4229 = vst [vmem:[%s3589 + $0x5c] sm:$0x1] %v4228
        %v4230 = vld [vmem:[%s3589 + $0x60] sm:$0xf]
        %v4231 = vsel %vm3643, %v3996, %v4230
        %4232 = vst [vmem:[%s3589 + $0x60] sm:$0xf] %v4231
        %4233 = vst [vmem:[%s3589 + $0x64] sm:$0xf] %v4005
        %v4234 = vld [vmem:[%s3589 + $0x68] sm:$0x1]
        %v4235 = vsel %vm3592, %v4006, %v4234
        %4236 = vst [vmem:[%s3589 + $0x68] sm:$0x1] %v4235
        %v4237 = vld [vmem:[%s3589 + $0x6c] sm:$0xf]
        %v4238 = vsel %vm3643, %v4013, %v4237
        %4239 = vst [vmem:[%s3589 + $0x6c] sm:$0xf] %v4238
        %4240 = vst [vmem:[%s3589 + $0x70] sm:$0xf] %v4022
        %v4241 = vld [vmem:[%s3589 + $0x74] sm:$0x1]
        %v4242 = vsel %vm3592, %v4023, %v4241
        %4243 = vst [vmem:[%s3589 + $0x74] sm:$0x1] %v4242
        %v4244 = vld [vmem:[%s3589 + $0x78] sm:$0xf]
        %v4245 = vsel %vm3643, %v4030, %v4244
        %4246 = vst [vmem:[%s3589 + $0x78] sm:$0xf] %v4245
        %4247 = vst [vmem:[%s3589 + $0x7c] sm:$0xf] %v4039
        %v4248 = vld [vmem:[%s3589 + $0x80] sm:$0x1]
        %v4249 = vsel %vm3592, %v4040, %v4248
        %4250 = vst [vmem:[%s3589 + $0x80] sm:$0x1] %v4249
        %v4251 = vld [vmem:[%s3589 + $0x84] sm:$0xf]
        %v4252 = vsel %vm3643, %v4047, %v4251
        %4253 = vst [vmem:[%s3589 + $0x84] sm:$0xf] %v4252
        %4254 = vst [vmem:[%s3589 + $0x88] sm:$0xf] %v4056
        %v4255 = vld [vmem:[%s3589 + $0x8c] sm:$0x1]
        %v4256 = vsel %vm3592, %v4057, %v4255
        %4257 = vst [vmem:[%s3589 + $0x8c] sm:$0x1] %v4256
        %v4258 = vld [vmem:[%s3589 + $0x90] sm:$0xf]
        %v4259 = vsel %vm3643, %v4064, %v4258
        %4260 = vst [vmem:[%s3589 + $0x90] sm:$0xf] %v4259
        %4261 = vst [vmem:[%s3589 + $0x94] sm:$0xf] %v4073
        %v4262 = vld [vmem:[%s3589 + $0x98] sm:$0x1]
        %v4263 = vsel %vm3592, %v4074, %v4262
        %4264 = vst [vmem:[%s3589 + $0x98] sm:$0x1] %v4263
        %v4265 = vld [vmem:[%s3589 + $0x9c] sm:$0xf]
        %v4266 = vsel %vm3643, %v4081, %v4265
        %4267 = vst [vmem:[%s3589 + $0x9c] sm:$0xf] %v4266
        %4268 = vst [vmem:[%s3589 + $0xa0] sm:$0xf] %v4090
        %v4269 = vld [vmem:[%s3589 + $0xa4] sm:$0x1]
        %v4270 = vsel %vm3592, %v4091, %v4269
        %4271 = vst [vmem:[%s3589 + $0xa4] sm:$0x1] %v4270
        %v4272 = vld [vmem:[%s3589 + $0xa8] sm:$0xf]
        %v4273 = vsel %vm3643, %v4098, %v4272
        %4274 = vst [vmem:[%s3589 + $0xa8] sm:$0xf] %v4273
        %4275 = vst [vmem:[%s3589 + $0xac] sm:$0xf] %v4107
        %v4276 = vld [vmem:[%s3589 + $0xb0] sm:$0x1]
        %v4277 = vsel %vm3592, %v4108, %v4276
        %4278 = vst [vmem:[%s3589 + $0xb0] sm:$0x1] %v4277
        %v4279 = vld [vmem:[%s3589 + $0xb4] sm:$0xf]
        %v4280 = vsel %vm3643, %v4115, %v4279
        %4281 = vst [vmem:[%s3589 + $0xb4] sm:$0xf] %v4280
        %4282 = vst [vmem:[%s3589 + $0xb8] sm:$0xf] %v4124
        %v4283 = vld [vmem:[%s3589 + $0xbc] sm:$0x1]
        %v4284 = vsel %vm3592, %v4125, %v4283
        %4285 = vst [vmem:[%s3589 + $0xbc] sm:$0x1] %v4284
        %v4286 = vld [vmem:[%s1430] sm:$0xf]
        %v4287 = vld [vmem:[%s1430 + $0x4] sm:$0xf]
        %v4288 = vld [vmem:[%s1430 + $0x8] sm:$0x1]
        %v4289 = vld [vmem:[%s1430 + $0xc] sm:$0xf]
        %v4290 = vld [vmem:[%s1430 + $0x10] sm:$0xf]
        %v4291 = vld [vmem:[%s1430 + $0x14] sm:$0x1]
        %v4292 = vld [vmem:[%s1430 + $0x18] sm:$0xf]
        %v4293 = vld [vmem:[%s1430 + $0x1c] sm:$0xf]
        %v4294 = vld [vmem:[%s1430 + $0x20] sm:$0x1]
        %v4295 = vld [vmem:[%s1430 + $0x24] sm:$0xf]
        %v4296 = vld [vmem:[%s1430 + $0x28] sm:$0xf]
        %v4297 = vld [vmem:[%s1430 + $0x2c] sm:$0x1]
        %v4298 = vld [vmem:[%s1430 + $0x30] sm:$0xf]
        %v4299 = vld [vmem:[%s1430 + $0x34] sm:$0xf]
        %v4300 = vld [vmem:[%s1430 + $0x38] sm:$0x1]
        %v4301 = vld [vmem:[%s1430 + $0x3c] sm:$0xf]
        %v4302 = vld [vmem:[%s1430 + $0x40] sm:$0xf]
        %v4303 = vld [vmem:[%s1430 + $0x44] sm:$0x1]
        %v4304 = vld [vmem:[%s1430 + $0x48] sm:$0xf]
        %v4305 = vld [vmem:[%s1430 + $0x4c] sm:$0xf]
        %v4306 = vld [vmem:[%s1430 + $0x50] sm:$0x1]
        %v4307 = vld [vmem:[%s1430 + $0x54] sm:$0xf]
        %v4308 = vld [vmem:[%s1430 + $0x58] sm:$0xf]
        %v4309 = vld [vmem:[%s1430 + $0x5c] sm:$0x1]
        %v4310 = vld [vmem:[%s1430 + $0x60] sm:$0xf]
        %v4311 = vld [vmem:[%s1430 + $0x64] sm:$0xf]
        %v4312 = vld [vmem:[%s1430 + $0x68] sm:$0x1]
        %v4313 = vld [vmem:[%s1430 + $0x6c] sm:$0xf]
        %v4314 = vld [vmem:[%s1430 + $0x70] sm:$0xf]
        %v4315 = vld [vmem:[%s1430 + $0x74] sm:$0x1]
        %v4316 = vld [vmem:[%s1430 + $0x78] sm:$0xf]
        %v4317 = vld [vmem:[%s1430 + $0x7c] sm:$0xf]
        %v4318 = vld [vmem:[%s1430 + $0x80] sm:$0x1]
        %v4319 = vld [vmem:[%s1430 + $0x84] sm:$0xf]
        %v4320 = vld [vmem:[%s1430 + $0x88] sm:$0xf]
        %v4321 = vld [vmem:[%s1430 + $0x8c] sm:$0x1]
        %v4322 = vld [vmem:[%s1430 + $0x90] sm:$0xf]
        %v4323 = vld [vmem:[%s1430 + $0x94] sm:$0xf]
        %v4324 = vld [vmem:[%s1430 + $0x98] sm:$0x1]
        %v4325 = vld [vmem:[%s1430 + $0x9c] sm:$0xf]
        %v4326 = vld [vmem:[%s1430 + $0xa0] sm:$0xf]
        %v4327 = vld [vmem:[%s1430 + $0xa4] sm:$0x1]
        %v4328 = vld [vmem:[%s1430 + $0xa8] sm:$0xf]
        %v4329 = vld [vmem:[%s1430 + $0xac] sm:$0xf]
        %v4330 = vld [vmem:[%s1430 + $0xb0] sm:$0x1]
        %v4331 = vld [vmem:[%s1430 + $0xb4] sm:$0xf]
        %v4332 = vld [vmem:[%s1430 + $0xb8] sm:$0xf]
        %v4333 = vld [vmem:[%s1430 + $0xbc] sm:$0x1]
        %vm4334 = vsmask.f32 3328
        %vm4335 = vsmask.f32 7440
        %vm4336 = vmor %vm4334, %vm4335
        %v4338 = vshrl.u32 %v4286, 16
        %v4340 = vrot.slane %v4338, 4
        %v4341 = vshll.u32 %v4286, 16
        %v4343 = vrot.slane %v4341, 5
        %v4344 = vor.u32 %v4340, %v4343
        %v4345 = vrot.slane %v4344, 4
        %v4347 = vshll.u32 %v4287, 16
        %v4349 = vrot.slane %v4347, 5
        %v4350 = vsel %vm4336, %v4345, %v4349
        %v4351 = vshrl.u32 %v4287, 16
        %v4353 = vrot.slane %v4351, 4
        %v4354 = vor.u32 %v4353, %v4349
        %v4355 = vrot.slane %v4354, 4
        %v4357 = vshll.u32 %v4288, 16
        %v4359 = vrot.slane %v4357, 5
        %v4360 = vsel %vm4336, %v4355, %v4359
        %v4362 = vshrl.u32 %v4289, 16
        %v4364 = vrot.slane %v4362, 4
        %v4365 = vshll.u32 %v4289, 16
        %v4367 = vrot.slane %v4365, 5
        %v4368 = vor.u32 %v4364, %v4367
        %v4369 = vrot.slane %v4368, 4
        %v4371 = vshll.u32 %v4290, 16
        %v4373 = vrot.slane %v4371, 5
        %v4374 = vsel %vm4336, %v4369, %v4373
        %v4375 = vshrl.u32 %v4290, 16
        %v4377 = vrot.slane %v4375, 4
        %v4378 = vor.u32 %v4377, %v4373
        %v4379 = vrot.slane %v4378, 4
        %v4381 = vshll.u32 %v4291, 16
        %v4383 = vrot.slane %v4381, 5
        %v4384 = vsel %vm4336, %v4379, %v4383
        %v4386 = vshrl.u32 %v4292, 16
        %v4388 = vrot.slane %v4386, 4
        %v4389 = vshll.u32 %v4292, 16
        %v4391 = vrot.slane %v4389, 5
        %v4392 = vor.u32 %v4388, %v4391
        %v4393 = vrot.slane %v4392, 4
        %v4395 = vshll.u32 %v4293, 16
        %v4397 = vrot.slane %v4395, 5
        %v4398 = vsel %vm4336, %v4393, %v4397
        %v4399 = vshrl.u32 %v4293, 16
        %v4401 = vrot.slane %v4399, 4
        %v4402 = vor.u32 %v4401, %v4397
        %v4403 = vrot.slane %v4402, 4
        %v4405 = vshll.u32 %v4294, 16
        %v4407 = vrot.slane %v4405, 5
        %v4408 = vsel %vm4336, %v4403, %v4407
        %v4410 = vshrl.u32 %v4295, 16
        %v4412 = vrot.slane %v4410, 4
        %v4413 = vshll.u32 %v4295, 16
        %v4415 = vrot.slane %v4413, 5
        %v4416 = vor.u32 %v4412, %v4415
        %v4417 = vrot.slane %v4416, 4
        %v4419 = vshll.u32 %v4296, 16
        %v4421 = vrot.slane %v4419, 5
        %v4422 = vsel %vm4336, %v4417, %v4421
        %v4423 = vshrl.u32 %v4296, 16
        %v4425 = vrot.slane %v4423, 4
        %v4426 = vor.u32 %v4425, %v4421
        %v4427 = vrot.slane %v4426, 4
        %v4429 = vshll.u32 %v4297, 16
        %v4431 = vrot.slane %v4429, 5
        %v4432 = vsel %vm4336, %v4427, %v4431
        %v4434 = vshrl.u32 %v4298, 16
        %v4436 = vrot.slane %v4434, 4
        %v4437 = vshll.u32 %v4298, 16
        %v4439 = vrot.slane %v4437, 5
        %v4440 = vor.u32 %v4436, %v4439
        %v4441 = vrot.slane %v4440, 4
        %v4443 = vshll.u32 %v4299, 16
        %v4445 = vrot.slane %v4443, 5
        %v4446 = vsel %vm4336, %v4441, %v4445
        %v4447 = vshrl.u32 %v4299, 16
        %v4449 = vrot.slane %v4447, 4
        %v4450 = vor.u32 %v4449, %v4445
        %v4451 = vrot.slane %v4450, 4
        %v4453 = vshll.u32 %v4300, 16
        %v4455 = vrot.slane %v4453, 5
        %v4456 = vsel %vm4336, %v4451, %v4455
        %v4458 = vshrl.u32 %v4301, 16
        %v4460 = vrot.slane %v4458, 4
        %v4461 = vshll.u32 %v4301, 16
        %v4463 = vrot.slane %v4461, 5
        %v4464 = vor.u32 %v4460, %v4463
        %v4465 = vrot.slane %v4464, 4
        %v4467 = vshll.u32 %v4302, 16
        %v4469 = vrot.slane %v4467, 5
        %v4470 = vsel %vm4336, %v4465, %v4469
        %v4471 = vshrl.u32 %v4302, 16
        %v4473 = vrot.slane %v4471, 4
        %v4474 = vor.u32 %v4473, %v4469
        %v4475 = vrot.slane %v4474, 4
        %v4477 = vshll.u32 %v4303, 16
        %v4479 = vrot.slane %v4477, 5
        %v4480 = vsel %vm4336, %v4475, %v4479
        %v4482 = vshrl.u32 %v4304, 16
        %v4484 = vrot.slane %v4482, 4
        %v4485 = vshll.u32 %v4304, 16
        %v4487 = vrot.slane %v4485, 5
        %v4488 = vor.u32 %v4484, %v4487
        %v4489 = vrot.slane %v4488, 4
        %v4491 = vshll.u32 %v4305, 16
        %v4493 = vrot.slane %v4491, 5
        %v4494 = vsel %vm4336, %v4489, %v4493
        %v4495 = vshrl.u32 %v4305, 16
        %v4497 = vrot.slane %v4495, 4
        %v4498 = vor.u32 %v4497, %v4493
        %v4499 = vrot.slane %v4498, 4
        %v4501 = vshll.u32 %v4306, 16
        %v4503 = vrot.slane %v4501, 5
        %v4504 = vsel %vm4336, %v4499, %v4503
        %v4506 = vshrl.u32 %v4307, 16
        %v4508 = vrot.slane %v4506, 4
        %v4509 = vshll.u32 %v4307, 16
        %v4511 = vrot.slane %v4509, 5
        %v4512 = vor.u32 %v4508, %v4511
        %v4513 = vrot.slane %v4512, 4
        %v4515 = vshll.u32 %v4308, 16
        %v4517 = vrot.slane %v4515, 5
        %v4518 = vsel %vm4336, %v4513, %v4517
        %v4519 = vshrl.u32 %v4308, 16
        %v4521 = vrot.slane %v4519, 4
        %v4522 = vor.u32 %v4521, %v4517
        %v4523 = vrot.slane %v4522, 4
        %v4525 = vshll.u32 %v4309, 16
        %v4527 = vrot.slane %v4525, 5
        %v4528 = vsel %vm4336, %v4523, %v4527
        %v4530 = vshrl.u32 %v4310, 16
        %v4532 = vrot.slane %v4530, 4
        %v4533 = vshll.u32 %v4310, 16
        %v4535 = vrot.slane %v4533, 5
        %v4536 = vor.u32 %v4532, %v4535
        %v4537 = vrot.slane %v4536, 4
        %v4539 = vshll.u32 %v4311, 16
        %v4541 = vrot.slane %v4539, 5
        %v4542 = vsel %vm4336, %v4537, %v4541
        %v4543 = vshrl.u32 %v4311, 16
        %v4545 = vrot.slane %v4543, 4
        %v4546 = vor.u32 %v4545, %v4541
        %v4547 = vrot.slane %v4546, 4
        %v4549 = vshll.u32 %v4312, 16
        %v4551 = vrot.slane %v4549, 5
        %v4552 = vsel %vm4336, %v4547, %v4551
        %v4554 = vshrl.u32 %v4313, 16
        %v4556 = vrot.slane %v4554, 4
        %v4557 = vshll.u32 %v4313, 16
        %v4559 = vrot.slane %v4557, 5
        %v4560 = vor.u32 %v4556, %v4559
        %v4561 = vrot.slane %v4560, 4
        %v4563 = vshll.u32 %v4314, 16
        %v4565 = vrot.slane %v4563, 5
        %v4566 = vsel %vm4336, %v4561, %v4565
        %v4567 = vshrl.u32 %v4314, 16
        %v4569 = vrot.slane %v4567, 4
        %v4570 = vor.u32 %v4569, %v4565
        %v4571 = vrot.slane %v4570, 4
        %v4573 = vshll.u32 %v4315, 16
        %v4575 = vrot.slane %v4573, 5
        %v4576 = vsel %vm4336, %v4571, %v4575
        %v4578 = vshrl.u32 %v4316, 16
        %v4580 = vrot.slane %v4578, 4
        %v4581 = vshll.u32 %v4316, 16
        %v4583 = vrot.slane %v4581, 5
        %v4584 = vor.u32 %v4580, %v4583
        %v4585 = vrot.slane %v4584, 4
        %v4587 = vshll.u32 %v4317, 16
        %v4589 = vrot.slane %v4587, 5
        %v4590 = vsel %vm4336, %v4585, %v4589
        %v4591 = vshrl.u32 %v4317, 16
        %v4593 = vrot.slane %v4591, 4
        %v4594 = vor.u32 %v4593, %v4589
        %v4595 = vrot.slane %v4594, 4
        %v4597 = vshll.u32 %v4318, 16
        %v4599 = vrot.slane %v4597, 5
        %v4600 = vsel %vm4336, %v4595, %v4599
        %v4602 = vshrl.u32 %v4319, 16
        %v4604 = vrot.slane %v4602, 4
        %v4605 = vshll.u32 %v4319, 16
        %v4607 = vrot.slane %v4605, 5
        %v4608 = vor.u32 %v4604, %v4607
        %v4609 = vrot.slane %v4608, 4
        %v4611 = vshll.u32 %v4320, 16
        %v4613 = vrot.slane %v4611, 5
        %v4614 = vsel %vm4336, %v4609, %v4613
        %v4615 = vshrl.u32 %v4320, 16
        %v4617 = vrot.slane %v4615, 4
        %v4618 = vor.u32 %v4617, %v4613
        %v4619 = vrot.slane %v4618, 4
        %v4621 = vshll.u32 %v4321, 16
        %v4623 = vrot.slane %v4621, 5
        %v4624 = vsel %vm4336, %v4619, %v4623
        %v4626 = vshrl.u32 %v4322, 16
        %v4628 = vrot.slane %v4626, 4
        %v4629 = vshll.u32 %v4322, 16
        %v4631 = vrot.slane %v4629, 5
        %v4632 = vor.u32 %v4628, %v4631
        %v4633 = vrot.slane %v4632, 4
        %v4635 = vshll.u32 %v4323, 16
        %v4637 = vrot.slane %v4635, 5
        %v4638 = vsel %vm4336, %v4633, %v4637
        %v4639 = vshrl.u32 %v4323, 16
        %v4641 = vrot.slane %v4639, 4
        %v4642 = vor.u32 %v4641, %v4637
        %v4643 = vrot.slane %v4642, 4
        %v4645 = vshll.u32 %v4324, 16
        %v4647 = vrot.slane %v4645, 5
        %v4648 = vsel %vm4336, %v4643, %v4647
        %v4650 = vshrl.u32 %v4325, 16
        %v4652 = vrot.slane %v4650, 4
        %v4653 = vshll.u32 %v4325, 16
        %v4655 = vrot.slane %v4653, 5
        %v4656 = vor.u32 %v4652, %v4655
        %v4657 = vrot.slane %v4656, 4
        %v4659 = vshll.u32 %v4326, 16
        %v4661 = vrot.slane %v4659, 5
        %v4662 = vsel %vm4336, %v4657, %v4661
        %v4663 = vshrl.u32 %v4326, 16
        %v4665 = vrot.slane %v4663, 4
        %v4666 = vor.u32 %v4665, %v4661
        %v4667 = vrot.slane %v4666, 4
        %v4669 = vshll.u32 %v4327, 16
        %v4671 = vrot.slane %v4669, 5
        %v4672 = vsel %vm4336, %v4667, %v4671
        %v4674 = vshrl.u32 %v4328, 16
        %v4676 = vrot.slane %v4674, 4
        %v4677 = vshll.u32 %v4328, 16
        %v4679 = vrot.slane %v4677, 5
        %v4680 = vor.u32 %v4676, %v4679
        %v4681 = vrot.slane %v4680, 4
        %v4683 = vshll.u32 %v4329, 16
        %v4685 = vrot.slane %v4683, 5
        %v4686 = vsel %vm4336, %v4681, %v4685
        %v4687 = vshrl.u32 %v4329, 16
        %v4689 = vrot.slane %v4687, 4
        %v4690 = vor.u32 %v4689, %v4685
        %v4691 = vrot.slane %v4690, 4
        %v4693 = vshll.u32 %v4330, 16
        %v4695 = vrot.slane %v4693, 5
        %v4696 = vsel %vm4336, %v4691, %v4695
        %v4698 = vshrl.u32 %v4331, 16
        %v4700 = vrot.slane %v4698, 4
        %v4701 = vshll.u32 %v4331, 16
        %v4703 = vrot.slane %v4701, 5
        %v4704 = vor.u32 %v4700, %v4703
        %v4705 = vrot.slane %v4704, 4
        %v4707 = vshll.u32 %v4332, 16
        %v4709 = vrot.slane %v4707, 5
        %v4710 = vsel %vm4336, %v4705, %v4709
        %v4711 = vshrl.u32 %v4332, 16
        %v4713 = vrot.slane %v4711, 4
        %v4714 = vor.u32 %v4713, %v4709
        %v4715 = vrot.slane %v4714, 4
        %v4717 = vshll.u32 %v4333, 16
        %v4719 = vrot.slane %v4717, 5
        %v4720 = vsel %vm4336, %v4715, %v4719
        %v4721 = vld [vmem:[#allocation10] sm:$0xf]
        %v4722 = vld [vmem:[#allocation10 + $0x4] sm:$0xf]
        %v4723 = vld [vmem:[#allocation10 + $0x8] sm:$0xf]
        %v4724 = vld [vmem:[#allocation10 + $0xc] sm:$0xf]
        %v4725 = vld [vmem:[#allocation10 + $0x10] sm:$0xf]
        %v4726 = vld [vmem:[#allocation10 + $0x14] sm:$0xf]
        %v4727 = vld [vmem:[#allocation10 + $0x18] sm:$0xf]
        %v4728 = vld [vmem:[#allocation10 + $0x1c] sm:$0xf]
        %v4729 = vld [vmem:[#allocation10 + $0x20] sm:$0xf]
        %v4730 = vld [vmem:[#allocation10 + $0x24] sm:$0xf]
        %v4731 = vld [vmem:[#allocation10 + $0x28] sm:$0xf]
        %v4732 = vld [vmem:[#allocation10 + $0x2c] sm:$0xf]
        %v4733 = vld [vmem:[#allocation10 + $0x30] sm:$0xf]
        %v4734 = vld [vmem:[#allocation10 + $0x34] sm:$0xf]
        %v4735 = vld [vmem:[#allocation10 + $0x38] sm:$0xf]
        %v4736 = vld [vmem:[#allocation10 + $0x3c] sm:$0xf]
        %v4737 = vld [vmem:[%s4] sm:$0x1]
        %v4739 = vlaneseq
        %v4740 = vshrl.u32 %v4739, 7
        %v4741 = vsub.s32 0, %v4740
        %v4742 = vrot.slane %v4737, %v4741
        %v4744 = vunpack.c.l.b16 %v4350
        %v4745 = vunpack.c.l.b16 %v4360
        %v4746 = vunpack.c.l.b16 %v4374
        %v4747 = vunpack.c.l.b16 %v4384
        %v4748 = vunpack.c.l.b16 %v4398
        %v4749 = vunpack.c.l.b16 %v4408
        %v4750 = vunpack.c.l.b16 %v4422
        %v4751 = vunpack.c.l.b16 %v4432
        %v4752 = vunpack.c.l.b16 %v4446
        %v4753 = vunpack.c.l.b16 %v4456
        %v4754 = vunpack.c.l.b16 %v4470
        %v4755 = vunpack.c.l.b16 %v4480
        %v4756 = vunpack.c.l.b16 %v4494
        %v4757 = vunpack.c.l.b16 %v4504
        %v4758 = vunpack.c.l.b16 %v4518
        %v4759 = vunpack.c.l.b16 %v4528
        %v4760 = vunpack.c.l.b16 %v4542
        %v4761 = vunpack.c.l.b16 %v4552
        %v4762 = vunpack.c.l.b16 %v4566
        %v4763 = vunpack.c.l.b16 %v4576
        %v4764 = vunpack.c.l.b16 %v4590
        %v4765 = vunpack.c.l.b16 %v4600
        %v4766 = vunpack.c.l.b16 %v4614
        %v4767 = vunpack.c.l.b16 %v4624
        %v4768 = vunpack.c.l.b16 %v4638
        %v4769 = vunpack.c.l.b16 %v4648
        %v4770 = vunpack.c.l.b16 %v4662
        %v4771 = vunpack.c.l.b16 %v4672
        %v4772 = vunpack.c.l.b16 %v4686
        %v4773 = vunpack.c.l.b16 %v4696
        %v4774 = vunpack.c.l.b16 %v4710
        %v4775 = vunpack.c.l.b16 %v4720
        %v4776 = vpack.c.b16 %v4745, %v4744
        %v4777 = vpack.c.b16 %v4747, %v4746
        %v4778 = vpack.c.b16 %v4749, %v4748
        %v4779 = vpack.c.b16 %v4751, %v4750
        %v4780 = vpack.c.b16 %v4753, %v4752
        %v4781 = vpack.c.b16 %v4755, %v4754
        %v4782 = vpack.c.b16 %v4757, %v4756
        %v4783 = vpack.c.b16 %v4759, %v4758
        %v4784 = vpack.c.b16 %v4761, %v4760
        %v4785 = vpack.c.b16 %v4763, %v4762
        %v4786 = vpack.c.b16 %v4765, %v4764
        %v4787 = vpack.c.b16 %v4767, %v4766
        %v4788 = vpack.c.b16 %v4769, %v4768
        %v4789 = vpack.c.b16 %v4771, %v4770
        %v4790 = vpack.c.b16 %v4773, %v4772
        %v4791 = vpack.c.b16 %v4775, %v4774
        %v4824 = vunpack.c.l.b16 %v4721
        %v4825 = vunpack.c.l.b16 %v4722
        %v4826 = vunpack.c.l.b16 %v4723
        %v4827 = vunpack.c.l.b16 %v4724
        %v4828 = vunpack.c.l.b16 %v4725
        %v4829 = vunpack.c.l.b16 %v4726
        %v4830 = vunpack.c.l.b16 %v4727
        %v4831 = vunpack.c.l.b16 %v4728
        %v4832 = vunpack.c.l.b16 %v4729
        %v4833 = vunpack.c.l.b16 %v4730
        %v4834 = vunpack.c.l.b16 %v4731
        %v4835 = vunpack.c.l.b16 %v4732
        %v4836 = vunpack.c.l.b16 %v4733
        %v4837 = vunpack.c.l.b16 %v4734
        %v4838 = vunpack.c.l.b16 %v4735
        %v4839 = vunpack.c.l.b16 %v4736
        %v4840 = vpack.c.b16 %v4825, %v4824
        %v4841 = vpack.c.b16 %v4827, %v4826
        %v4842 = vpack.c.b16 %v4829, %v4828
        %v4843 = vpack.c.b16 %v4831, %v4830
        %v4844 = vpack.c.b16 %v4833, %v4832
        %v4845 = vpack.c.b16 %v4835, %v4834
        %v4846 = vpack.c.b16 %v4837, %v4836
        %v4847 = vpack.c.b16 %v4839, %v4838
        %4856 = vmatprep.subr.bf16.mxu0 0
        %4857 = vmatpush1.bf16.msra.mxu0 %v4847
        %4858 = vmatprep.subr.bf16.mxu0 0
        %4859 = vmatpush1.bf16.msra.mxu0 %v4846
        %4860 = vmatprep.subr.bf16.mxu0 0
        %4861 = vmatpush1.bf16.msra.mxu0 %v4845
        %4862 = vmatprep.subr.bf16.mxu0 0
        %4863 = vmatpush1.bf16.msra.mxu0 %v4844
        %4864 = vmatprep.subr.bf16.mxu0 0
        %4865 = vmatpush1.bf16.msra.mxu0 %v4843
        %4866 = vmatprep.subr.bf16.mxu0 0
        %4867 = vmatpush1.bf16.msra.mxu0 %v4842
        %4868 = vmatprep.subr.bf16.mxu0 0
        %4869 = vmatpush1.bf16.msra.mxu0 %v4841
        %4870 = vmatprep.subr.bf16.mxu0 0
        %4871 = vmatpush1.bf16.msra.mxu0 %v4840
        %4872 = vmatprep.subr.bf16.mxu0 0
        %4873 = vmatpush2.bf16.msra.mxu0 0
        %4874 = vmatprep.subr.bf16.mxu0 0
        %4875 = vmatpush2.bf16.msra.mxu0 0
        %4876 = vmatprep.subr.bf16.mxu0 0
        %4877 = vmatpush2.bf16.msra.mxu0 0
        %4878 = vmatprep.subr.bf16.mxu0 0
        %4879 = vmatpush2.bf16.msra.mxu0 0
        %4880 = vmatprep.subr.bf16.mxu0 0
        %4881 = vmatpush2.bf16.msra.mxu0 0
        %4882 = vmatprep.subr.bf16.mxu0 0
        %4883 = vmatpush2.bf16.msra.mxu0 0
        %4884 = vmatprep.subr.bf16.mxu0 0
        %4885 = vmatpush2.bf16.msra.mxu0 0
        %4886 = vmatprep.subr.bf16.mxu0 0
        %4887 = vmatpush2.bf16.msra.mxu0 0
        %4888 = vmatprep.mubr.bf16.mxu0 0
        %4889 = vmatmul.mubr.bf16.gmra.mxu0 %v4776
        %v4890 = vpop.f32.mrf.mxu0
        %v4891 = vadd.f32 %v4742, %v4890
        %v4892 = vpop.f32.mrf.mxu0
        %v4893 = vpop.f32.mrf.mxu0
        %v4894 = vadd.f32 %v4742, %v4893
        %v4895 = vpop.f32.mrf.mxu0
        %4896 = vmatprep.mubr.bf16.mxu0 0
        %4897 = vmatmul.mubr.bf16.gmra.mxu0 %v4777
        %v4898 = vpop.f32.mrf.mxu0
        %v4899 = vadd.f32 %v4742, %v4898
        %v4900 = vpop.f32.mrf.mxu0
        %v4901 = vpop.f32.mrf.mxu0
        %v4902 = vadd.f32 %v4742, %v4901
        %v4903 = vpop.f32.mrf.mxu0
        %4904 = vmatprep.mubr.bf16.mxu0 0
        %4905 = vmatmul.mubr.bf16.gmra.mxu0 %v4778
        %v4906 = vpop.f32.mrf.mxu0
        %v4907 = vadd.f32 %v4742, %v4906
        %v4908 = vpop.f32.mrf.mxu0
        %v4909 = vpop.f32.mrf.mxu0
        %v4910 = vadd.f32 %v4742, %v4909
        %v4911 = vpop.f32.mrf.mxu0
        %4912 = vmatprep.mubr.bf16.mxu0 0
        %4913 = vmatmul.mubr.bf16.gmra.mxu0 %v4779
        %v4914 = vpop.f32.mrf.mxu0
        %v4915 = vadd.f32 %v4742, %v4914
        %v4916 = vpop.f32.mrf.mxu0
        %v4917 = vpop.f32.mrf.mxu0
        %v4918 = vadd.f32 %v4742, %v4917
        %v4919 = vpop.f32.mrf.mxu0
        %4920 = vmatprep.mubr.bf16.mxu0 0
        %4921 = vmatmul.mubr.bf16.gmra.mxu0 %v4780
        %v4922 = vpop.f32.mrf.mxu0
        %v4923 = vadd.f32 %v4742, %v4922
        %v4924 = vpop.f32.mrf.mxu0
        %v4925 = vpop.f32.mrf.mxu0
        %v4926 = vadd.f32 %v4742, %v4925
        %v4927 = vpop.f32.mrf.mxu0
        %4928 = vmatprep.mubr.bf16.mxu0 0
        %4929 = vmatmul.mubr.bf16.gmra.mxu0 %v4781
        %v4930 = vpop.f32.mrf.mxu0
        %v4931 = vadd.f32 %v4742, %v4930
        %v4932 = vpop.f32.mrf.mxu0
        %v4933 = vpop.f32.mrf.mxu0
        %v4934 = vadd.f32 %v4742, %v4933
        %v4935 = vpop.f32.mrf.mxu0
        %4936 = vmatprep.mubr.bf16.mxu0 0
        %4937 = vmatmul.mubr.bf16.gmra.mxu0 %v4782
        %v4938 = vpop.f32.mrf.mxu0
        %v4939 = vadd.f32 %v4742, %v4938
        %v4940 = vpop.f32.mrf.mxu0
        %v4941 = vpop.f32.mrf.mxu0
        %v4942 = vadd.f32 %v4742, %v4941
        %v4943 = vpop.f32.mrf.mxu0
        %4944 = vmatprep.mubr.bf16.mxu0 0
        %4945 = vmatmul.mubr.bf16.gmra.mxu0 %v4783
        %v4946 = vpop.f32.mrf.mxu0
        %v4947 = vadd.f32 %v4742, %v4946
        %v4948 = vpop.f32.mrf.mxu0
        %v4949 = vpop.f32.mrf.mxu0
        %v4950 = vadd.f32 %v4742, %v4949
        %v4951 = vpop.f32.mrf.mxu0
        %4952 = vmatprep.mubr.bf16.mxu0 0
        %4953 = vmatmul.mubr.bf16.gmra.mxu0 %v4784
        %v4954 = vpop.f32.mrf.mxu0
        %v4955 = vadd.f32 %v4742, %v4954
        %v4956 = vpop.f32.mrf.mxu0
        %v4957 = vpop.f32.mrf.mxu0
        %v4958 = vadd.f32 %v4742, %v4957
        %v4959 = vpop.f32.mrf.mxu0
        %4960 = vmatprep.mubr.bf16.mxu0 0
        %4961 = vmatmul.mubr.bf16.gmra.mxu0 %v4785
        %v4962 = vpop.f32.mrf.mxu0
        %v4963 = vadd.f32 %v4742, %v4962
        %v4964 = vpop.f32.mrf.mxu0
        %v4965 = vpop.f32.mrf.mxu0
        %v4966 = vadd.f32 %v4742, %v4965
        %v4967 = vpop.f32.mrf.mxu0
        %4968 = vmatprep.mubr.bf16.mxu0 0
        %4969 = vmatmul.mubr.bf16.gmra.mxu0 %v4786
        %v4970 = vpop.f32.mrf.mxu0
        %v4971 = vadd.f32 %v4742, %v4970
        %v4972 = vpop.f32.mrf.mxu0
        %v4973 = vpop.f32.mrf.mxu0
        %v4974 = vadd.f32 %v4742, %v4973
        %v4975 = vpop.f32.mrf.mxu0
        %4976 = vmatprep.mubr.bf16.mxu0 0
        %4977 = vmatmul.mubr.bf16.gmra.mxu0 %v4787
        %v4978 = vpop.f32.mrf.mxu0
        %v4979 = vadd.f32 %v4742, %v4978
        %v4980 = vpop.f32.mrf.mxu0
        %v4981 = vpop.f32.mrf.mxu0
        %v4982 = vadd.f32 %v4742, %v4981
        %v4983 = vpop.f32.mrf.mxu0
        %4984 = vmatprep.mubr.bf16.mxu0 0
        %4985 = vmatmul.mubr.bf16.gmra.mxu0 %v4788
        %v4986 = vpop.f32.mrf.mxu0
        %v4987 = vadd.f32 %v4742, %v4986
        %v4988 = vpop.f32.mrf.mxu0
        %v4989 = vpop.f32.mrf.mxu0
        %v4990 = vadd.f32 %v4742, %v4989
        %v4991 = vpop.f32.mrf.mxu0
        %4992 = vmatprep.mubr.bf16.mxu0 0
        %4993 = vmatmul.mubr.bf16.gmra.mxu0 %v4789
        %v4994 = vpop.f32.mrf.mxu0
        %v4995 = vadd.f32 %v4742, %v4994
        %v4996 = vpop.f32.mrf.mxu0
        %v4997 = vpop.f32.mrf.mxu0
        %v4998 = vadd.f32 %v4742, %v4997
        %v4999 = vpop.f32.mrf.mxu0
        %5000 = vmatprep.mubr.bf16.mxu0 0
        %5001 = vmatmul.mubr.bf16.gmra.mxu0 %v4790
        %v5002 = vpop.f32.mrf.mxu0
        %v5003 = vadd.f32 %v4742, %v5002
        %v5004 = vpop.f32.mrf.mxu0
        %v5005 = vpop.f32.mrf.mxu0
        %v5006 = vadd.f32 %v4742, %v5005
        %v5007 = vpop.f32.mrf.mxu0
        %5008 = vmatprep.mubr.bf16.mxu0 0
        %5009 = vmatmul.mubr.bf16.gmra.mxu0 %v4791
        %v5010 = vpop.f32.mrf.mxu0
        %v5011 = vadd.f32 %v4742, %v5010
        %v5012 = vpop.f32.mrf.mxu0
        %v5013 = vpop.f32.mrf.mxu0
        %v5014 = vadd.f32 %v4742, %v5013
        %v5015 = vpop.f32.mrf.mxu0
        %5016 = vdwg.mxu0
        %5017 = vst [vmem:[#allocation2] sm:$0xff] %v4891
        %5018 = vst [vmem:[#allocation2 + $0x8] sm:$0xff] %v4894
        %5019 = vst [vmem:[#allocation2 + $0x10] sm:$0xff] %v4899
        %5020 = vst [vmem:[#allocation2 + $0x18] sm:$0xff] %v4902
        %5021 = vst [vmem:[#allocation2 + $0x20] sm:$0xff] %v4907
        %5022 = vst [vmem:[#allocation2 + $0x28] sm:$0xff] %v4910
        %5023 = vst [vmem:[#allocation2 + $0x30] sm:$0xff] %v4915
        %5024 = vst [vmem:[#allocation2 + $0x38] sm:$0xff] %v4918
        %5025 = vst [vmem:[#allocation2 + $0x40] sm:$0xff] %v4923
        %5026 = vst [vmem:[#allocation2 + $0x48] sm:$0xff] %v4926
        %5027 = vst [vmem:[#allocation2 + $0x50] sm:$0xff] %v4931
        %5028 = vst [vmem:[#allocation2 + $0x58] sm:$0xff] %v4934
        %5029 = vst [vmem:[#allocation2 + $0x60] sm:$0xff] %v4939
        %5030 = vst [vmem:[#allocation2 + $0x68] sm:$0xff] %v4942
        %5031 = vst [vmem:[#allocation2 + $0x70] sm:$0xff] %v4947
        %5032 = vst [vmem:[#allocation2 + $0x78] sm:$0xff] %v4950
        %5033 = vst [vmem:[#allocation2 + $0x80] sm:$0xff] %v4955
        %5034 = vst [vmem:[#allocation2 + $0x88] sm:$0xff] %v4958
        %5035 = vst [vmem:[#allocation2 + $0x90] sm:$0xff] %v4963
        %5036 = vst [vmem:[#allocation2 + $0x98] sm:$0xff] %v4966
        %5037 = vst [vmem:[#allocation2 + $0xa0] sm:$0xff] %v4971
        %5038 = vst [vmem:[#allocation2 + $0xa8] sm:$0xff] %v4974
        %5039 = vst [vmem:[#allocation2 + $0xb0] sm:$0xff] %v4979
        %5040 = vst [vmem:[#allocation2 + $0xb8] sm:$0xff] %v4982
        %5041 = vst [vmem:[#allocation2 + $0xc0] sm:$0xff] %v4987
        %5042 = vst [vmem:[#allocation2 + $0xc8] sm:$0xff] %v4990
        %5043 = vst [vmem:[#allocation2 + $0xd0] sm:$0xff] %v4995
        %5044 = vst [vmem:[#allocation2 + $0xd8] sm:$0xff] %v4998
        %5045 = vst [vmem:[#allocation2 + $0xe0] sm:$0xff] %v5003
        %5046 = vst [vmem:[#allocation2 + $0xe8] sm:$0xff] %v5006
        %5047 = vst [vmem:[#allocation2 + $0xf0] sm:$0xff] %v5011
        %5048 = vst [vmem:[#allocation2 + $0xf8] sm:$0xff] %v5014
        %v5049 = vld [vmem:[#allocation3] sm:$0xf]
        %v5050 = vld [vmem:[#allocation3 + $0x4] sm:$0xf]
        %v5051 = vld [vmem:[#allocation3 + $0x8] sm:$0xf]
        %v5052 = vld [vmem:[#allocation3 + $0xc] sm:$0xf]
        %v5053 = vld [vmem:[#allocation3 + $0x10] sm:$0xf]
        %v5054 = vld [vmem:[#allocation3 + $0x14] sm:$0xf]
        %v5055 = vld [vmem:[#allocation3 + $0x18] sm:$0xf]
        %v5056 = vld [vmem:[#allocation3 + $0x1c] sm:$0xf]
        %v5057 = vld [vmem:[#allocation3 + $0x20] sm:$0xf]
        %v5058 = vld [vmem:[#allocation3 + $0x24] sm:$0xf]
        %v5059 = vld [vmem:[#allocation3 + $0x28] sm:$0xf]
        %v5060 = vld [vmem:[#allocation3 + $0x2c] sm:$0xf]
        %v5061 = vld [vmem:[#allocation3 + $0x30] sm:$0xf]
        %v5062 = vld [vmem:[#allocation3 + $0x34] sm:$0xf]
        %v5063 = vld [vmem:[#allocation3 + $0x38] sm:$0xf]
        %v5064 = vld [vmem:[#allocation3 + $0x3c] sm:$0xf]
        %v5065 = vld [vmem:[#allocation3 + $0x40] sm:$0xf]
        %v5066 = vld [vmem:[#allocation3 + $0x44] sm:$0xf]
        %v5067 = vld [vmem:[#allocation3 + $0x48] sm:$0xf]
        %v5068 = vld [vmem:[#allocation3 + $0x4c] sm:$0xf]
        %v5069 = vld [vmem:[#allocation3 + $0x50] sm:$0xf]
        %v5070 = vld [vmem:[#allocation3 + $0x54] sm:$0xf]
        %v5071 = vld [vmem:[#allocation3 + $0x58] sm:$0xf]
        %v5072 = vld [vmem:[#allocation3 + $0x5c] sm:$0xf]
        %v5073 = vld [vmem:[#allocation3 + $0x60] sm:$0xf]
        %v5074 = vld [vmem:[#allocation3 + $0x64] sm:$0xf]
        %v5075 = vld [vmem:[#allocation3 + $0x68] sm:$0xf]
        %v5076 = vld [vmem:[#allocation3 + $0x6c] sm:$0xf]
        %v5077 = vld [vmem:[#allocation3 + $0x70] sm:$0xf]
        %v5078 = vld [vmem:[#allocation3 + $0x74] sm:$0xf]
        %v5079 = vld [vmem:[#allocation3 + $0x78] sm:$0xf]
        %v5080 = vld [vmem:[#allocation3 + $0x7c] sm:$0xf]
        %v5081 = vld [vmem:[#allocation3 + $0x80] sm:$0xf]
        %v5082 = vld [vmem:[#allocation3 + $0x84] sm:$0xf]
        %v5083 = vld [vmem:[#allocation3 + $0x88] sm:$0xf]
        %v5084 = vld [vmem:[#allocation3 + $0x8c] sm:$0xf]
        %v5085 = vld [vmem:[#allocation3 + $0x90] sm:$0xf]
        %v5086 = vld [vmem:[#allocation3 + $0x94] sm:$0xf]
        %v5087 = vld [vmem:[#allocation3 + $0x98] sm:$0xf]
        %v5088 = vld [vmem:[#allocation3 + $0x9c] sm:$0xf]
        %v5089 = vld [vmem:[#allocation3 + $0xa0] sm:$0xf]
        %v5090 = vld [vmem:[#allocation3 + $0xa4] sm:$0xf]
        %v5091 = vld [vmem:[#allocation3 + $0xa8] sm:$0xf]
        %v5092 = vld [vmem:[#allocation3 + $0xac] sm:$0xf]
        %v5093 = vld [vmem:[#allocation3 + $0xb0] sm:$0xf]
        %v5094 = vld [vmem:[#allocation3 + $0xb4] sm:$0xf]
        %v5095 = vld [vmem:[#allocation3 + $0xb8] sm:$0xf]
        %v5096 = vld [vmem:[#allocation3 + $0xbc] sm:$0xf]
        %v5129 = vunpack.c.l.b16 %v5049
        %v5130 = vunpack.c.l.b16 %v5050
        %v5131 = vunpack.c.l.b16 %v5052
        %v5132 = vunpack.c.l.b16 %v5053
        %v5133 = vunpack.c.l.b16 %v5055
        %v5134 = vunpack.c.l.b16 %v5056
        %v5135 = vunpack.c.l.b16 %v5058
        %v5136 = vunpack.c.l.b16 %v5059
        %v5137 = vunpack.c.l.b16 %v5061
        %v5138 = vunpack.c.l.b16 %v5062
        %v5139 = vunpack.c.l.b16 %v5064
        %v5140 = vunpack.c.l.b16 %v5065
        %v5141 = vunpack.c.l.b16 %v5067
        %v5142 = vunpack.c.l.b16 %v5068
        %v5143 = vunpack.c.l.b16 %v5070
        %v5144 = vunpack.c.l.b16 %v5071
        %v5145 = vunpack.c.l.b16 %v5073
        %v5146 = vunpack.c.l.b16 %v5074
        %v5147 = vunpack.c.l.b16 %v5076
        %v5148 = vunpack.c.l.b16 %v5077
        %v5149 = vunpack.c.l.b16 %v5079
        %v5150 = vunpack.c.l.b16 %v5080
        %v5151 = vunpack.c.l.b16 %v5082
        %v5152 = vunpack.c.l.b16 %v5083
        %v5153 = vunpack.c.l.b16 %v5085
        %v5154 = vunpack.c.l.b16 %v5086
        %v5155 = vunpack.c.l.b16 %v5088
        %v5156 = vunpack.c.l.b16 %v5089
        %v5157 = vunpack.c.l.b16 %v5091
        %v5158 = vunpack.c.l.b16 %v5092
        %v5159 = vunpack.c.l.b16 %v5094
        %v5160 = vunpack.c.l.b16 %v5095
        %v5161 = vpack.c.b16 %v5130, %v5129
        %v5162 = vpack.c.b16 %v5132, %v5131
        %v5163 = vpack.c.b16 %v5134, %v5133
        %v5164 = vpack.c.b16 %v5136, %v5135
        %v5165 = vpack.c.b16 %v5138, %v5137
        %v5166 = vpack.c.b16 %v5140, %v5139
        %v5167 = vpack.c.b16 %v5142, %v5141
        %v5168 = vpack.c.b16 %v5144, %v5143
        %v5169 = vpack.c.b16 %v5146, %v5145
        %v5170 = vpack.c.b16 %v5148, %v5147
        %v5171 = vpack.c.b16 %v5150, %v5149
        %v5172 = vpack.c.b16 %v5152, %v5151
        %v5173 = vpack.c.b16 %v5154, %v5153
        %v5174 = vpack.c.b16 %v5156, %v5155
        %v5175 = vpack.c.b16 %v5158, %v5157
        %v5176 = vpack.c.b16 %v5160, %v5159
        %v5209 = vunpack.c.l.b16 %v5051
        %v5210 = vunpack.c.l.b16 %v5054
        %v5211 = vunpack.c.l.b16 %v5057
        %v5212 = vunpack.c.l.b16 %v5060
        %v5213 = vunpack.c.l.b16 %v5063
        %v5214 = vunpack.c.l.b16 %v5066
        %v5215 = vunpack.c.l.b16 %v5069
        %v5216 = vunpack.c.l.b16 %v5072
        %v5217 = vunpack.c.l.b16 %v5075
        %v5218 = vunpack.c.l.b16 %v5078
        %v5219 = vunpack.c.l.b16 %v5081
        %v5220 = vunpack.c.l.b16 %v5084
        %v5221 = vunpack.c.l.b16 %v5087
        %v5222 = vunpack.c.l.b16 %v5090
        %v5223 = vunpack.c.l.b16 %v5093
        %v5224 = vunpack.c.l.b16 %v5096
        %v5225 = vpack.c.b16 %v5209, %v5209
        %v5226 = vpack.c.b16 %v5210, %v5210
        %v5227 = vpack.c.b16 %v5211, %v5211
        %v5228 = vpack.c.b16 %v5212, %v5212
        %v5229 = vpack.c.b16 %v5213, %v5213
        %v5230 = vpack.c.b16 %v5214, %v5214
        %v5231 = vpack.c.b16 %v5215, %v5215
        %v5232 = vpack.c.b16 %v5216, %v5216
        %v5233 = vpack.c.b16 %v5217, %v5217
        %v5234 = vpack.c.b16 %v5218, %v5218
        %v5235 = vpack.c.b16 %v5219, %v5219
        %v5236 = vpack.c.b16 %v5220, %v5220
        %v5237 = vpack.c.b16 %v5221, %v5221
        %v5238 = vpack.c.b16 %v5222, %v5222
        %v5239 = vpack.c.b16 %v5223, %v5223
        %v5240 = vpack.c.b16 %v5224, %v5224
        %v5242 = vshrl.u32 %v5161, 16
        %v5244 = vshll.u32 %v5161, 16
        %v5246 = vrot.slane %v5244, 1
        %v5247 = vor.u32 %v5242, %v5246
        %v5249 = vshll.u32 %v5225, 16
        %v5251 = vrot.slane %v5249, 1
        %v5252 = vsel %vm546, %v5247, %v5251
        %v5254 = vshrl.u32 %v5162, 16
        %v5256 = vshll.u32 %v5162, 16
        %v5258 = vrot.slane %v5256, 1
        %v5259 = vor.u32 %v5254, %v5258
        %v5261 = vshll.u32 %v5226, 16
        %v5263 = vrot.slane %v5261, 1
        %v5264 = vsel %vm546, %v5259, %v5263
        %v5266 = vshrl.u32 %v5163, 16
        %v5268 = vshll.u32 %v5163, 16
        %v5270 = vrot.slane %v5268, 1
        %v5271 = vor.u32 %v5266, %v5270
        %v5273 = vshll.u32 %v5227, 16
        %v5275 = vrot.slane %v5273, 1
        %v5276 = vsel %vm546, %v5271, %v5275
        %v5278 = vshrl.u32 %v5164, 16
        %v5280 = vshll.u32 %v5164, 16
        %v5282 = vrot.slane %v5280, 1
        %v5283 = vor.u32 %v5278, %v5282
        %v5285 = vshll.u32 %v5228, 16
        %v5287 = vrot.slane %v5285, 1
        %v5288 = vsel %vm546, %v5283, %v5287
        %v5290 = vshrl.u32 %v5165, 16
        %v5292 = vshll.u32 %v5165, 16
        %v5294 = vrot.slane %v5292, 1
        %v5295 = vor.u32 %v5290, %v5294
        %v5297 = vshll.u32 %v5229, 16
        %v5299 = vrot.slane %v5297, 1
        %v5300 = vsel %vm546, %v5295, %v5299
        %v5302 = vshrl.u32 %v5166, 16
        %v5304 = vshll.u32 %v5166, 16
        %v5306 = vrot.slane %v5304, 1
        %v5307 = vor.u32 %v5302, %v5306
        %v5309 = vshll.u32 %v5230, 16
        %v5311 = vrot.slane %v5309, 1
        %v5312 = vsel %vm546, %v5307, %v5311
        %v5314 = vshrl.u32 %v5167, 16
        %v5316 = vshll.u32 %v5167, 16
        %v5318 = vrot.slane %v5316, 1
        %v5319 = vor.u32 %v5314, %v5318
        %v5321 = vshll.u32 %v5231, 16
        %v5323 = vrot.slane %v5321, 1
        %v5324 = vsel %vm546, %v5319, %v5323
        %v5326 = vshrl.u32 %v5168, 16
        %v5328 = vshll.u32 %v5168, 16
        %v5330 = vrot.slane %v5328, 1
        %v5331 = vor.u32 %v5326, %v5330
        %v5333 = vshll.u32 %v5232, 16
        %v5335 = vrot.slane %v5333, 1
        %v5336 = vsel %vm546, %v5331, %v5335
        %v5338 = vshrl.u32 %v5169, 16
        %v5340 = vshll.u32 %v5169, 16
        %v5342 = vrot.slane %v5340, 1
        %v5343 = vor.u32 %v5338, %v5342
        %v5345 = vshll.u32 %v5233, 16
        %v5347 = vrot.slane %v5345, 1
        %v5348 = vsel %vm546, %v5343, %v5347
        %v5350 = vshrl.u32 %v5170, 16
        %v5352 = vshll.u32 %v5170, 16
        %v5354 = vrot.slane %v5352, 1
        %v5355 = vor.u32 %v5350, %v5354
        %v5357 = vshll.u32 %v5234, 16
        %v5359 = vrot.slane %v5357, 1
        %v5360 = vsel %vm546, %v5355, %v5359
        %v5362 = vshrl.u32 %v5171, 16
        %v5364 = vshll.u32 %v5171, 16
        %v5366 = vrot.slane %v5364, 1
        %v5367 = vor.u32 %v5362, %v5366
        %v5369 = vshll.u32 %v5235, 16
        %v5371 = vrot.slane %v5369, 1
        %v5372 = vsel %vm546, %v5367, %v5371
        %v5374 = vshrl.u32 %v5172, 16
        %v5376 = vshll.u32 %v5172, 16
        %v5378 = vrot.slane %v5376, 1
        %v5379 = vor.u32 %v5374, %v5378
        %v5381 = vshll.u32 %v5236, 16
        %v5383 = vrot.slane %v5381, 1
        %v5384 = vsel %vm546, %v5379, %v5383
        %v5386 = vshrl.u32 %v5173, 16
        %v5388 = vshll.u32 %v5173, 16
        %v5390 = vrot.slane %v5388, 1
        %v5391 = vor.u32 %v5386, %v5390
        %v5393 = vshll.u32 %v5237, 16
        %v5395 = vrot.slane %v5393, 1
        %v5396 = vsel %vm546, %v5391, %v5395
        %v5398 = vshrl.u32 %v5174, 16
        %v5400 = vshll.u32 %v5174, 16
        %v5402 = vrot.slane %v5400, 1
        %v5403 = vor.u32 %v5398, %v5402
        %v5405 = vshll.u32 %v5238, 16
        %v5407 = vrot.slane %v5405, 1
        %v5408 = vsel %vm546, %v5403, %v5407
        %v5410 = vshrl.u32 %v5175, 16
        %v5412 = vshll.u32 %v5175, 16
        %v5414 = vrot.slane %v5412, 1
        %v5415 = vor.u32 %v5410, %v5414
        %v5417 = vshll.u32 %v5239, 16
        %v5419 = vrot.slane %v5417, 1
        %v5420 = vsel %vm546, %v5415, %v5419
        %v5422 = vshrl.u32 %v5176, 16
        %v5424 = vshll.u32 %v5176, 16
        %v5426 = vrot.slane %v5424, 1
        %v5427 = vor.u32 %v5422, %v5426
        %v5429 = vshll.u32 %v5240, 16
        %v5431 = vrot.slane %v5429, 1
        %v5432 = vsel %vm546, %v5427, %v5431
        %v5449 = vrot.slane %v5161, 1
        %v5450 = vrot.slane %v5225, 1
        %v5451 = vsel %vm755, %v5449, %v5450
        %v5452 = vrot.slane %v5162, 1
        %v5453 = vrot.slane %v5226, 1
        %v5454 = vsel %vm755, %v5452, %v5453
        %v5455 = vrot.slane %v5163, 1
        %v5456 = vrot.slane %v5227, 1
        %v5457 = vsel %vm755, %v5455, %v5456
        %v5458 = vrot.slane %v5164, 1
        %v5459 = vrot.slane %v5228, 1
        %v5460 = vsel %vm755, %v5458, %v5459
        %v5461 = vrot.slane %v5165, 1
        %v5462 = vrot.slane %v5229, 1
        %v5463 = vsel %vm755, %v5461, %v5462
        %v5464 = vrot.slane %v5166, 1
        %v5465 = vrot.slane %v5230, 1
        %v5466 = vsel %vm755, %v5464, %v5465
        %v5467 = vrot.slane %v5167, 1
        %v5468 = vrot.slane %v5231, 1
        %v5469 = vsel %vm755, %v5467, %v5468
        %v5470 = vrot.slane %v5168, 1
        %v5471 = vrot.slane %v5232, 1
        %v5472 = vsel %vm755, %v5470, %v5471
        %v5473 = vrot.slane %v5169, 1
        %v5474 = vrot.slane %v5233, 1
        %v5475 = vsel %vm755, %v5473, %v5474
        %v5476 = vrot.slane %v5170, 1
        %v5477 = vrot.slane %v5234, 1
        %v5478 = vsel %vm755, %v5476, %v5477
        %v5479 = vrot.slane %v5171, 1
        %v5480 = vrot.slane %v5235, 1
        %v5481 = vsel %vm755, %v5479, %v5480
        %v5482 = vrot.slane %v5172, 1
        %v5483 = vrot.slane %v5236, 1
        %v5484 = vsel %vm755, %v5482, %v5483
        %v5485 = vrot.slane %v5173, 1
        %v5486 = vrot.slane %v5237, 1
        %v5487 = vsel %vm755, %v5485, %v5486
        %v5488 = vrot.slane %v5174, 1
        %v5489 = vrot.slane %v5238, 1
        %v5490 = vsel %vm755, %v5488, %v5489
        %v5491 = vrot.slane %v5175, 1
        %v5492 = vrot.slane %v5239, 1
        %v5493 = vsel %vm755, %v5491, %v5492
        %v5494 = vrot.slane %v5176, 1
        %v5495 = vrot.slane %v5240, 1
        %v5496 = vsel %vm755, %v5494, %v5495
        %v5513 = vld [vmem:[#allocation2] sm:$0xff]
        %v5514 = vld [vmem:[#allocation2 + $0x8] sm:$0xff]
        %v5515 = vld [vmem:[#allocation2 + $0x10] sm:$0xff]
        %v5516 = vld [vmem:[#allocation2 + $0x18] sm:$0xff]
        %v5517 = vld [vmem:[#allocation2 + $0x20] sm:$0xff]
        %v5518 = vld [vmem:[#allocation2 + $0x28] sm:$0xff]
        %v5519 = vld [vmem:[#allocation2 + $0x30] sm:$0xff]
        %v5520 = vld [vmem:[#allocation2 + $0x38] sm:$0xff]
        %v5521 = vld [vmem:[#allocation2 + $0x40] sm:$0xff]
        %v5522 = vld [vmem:[#allocation2 + $0x48] sm:$0xff]
        %v5523 = vld [vmem:[#allocation2 + $0x50] sm:$0xff]
        %v5524 = vld [vmem:[#allocation2 + $0x58] sm:$0xff]
        %v5525 = vld [vmem:[#allocation2 + $0x60] sm:$0xff]
        %v5526 = vld [vmem:[#allocation2 + $0x68] sm:$0xff]
        %v5527 = vld [vmem:[#allocation2 + $0x70] sm:$0xff]
        %v5528 = vld [vmem:[#allocation2 + $0x78] sm:$0xff]
        %v5529 = vld [vmem:[#allocation2 + $0x80] sm:$0xff]
        %v5530 = vld [vmem:[#allocation2 + $0x88] sm:$0xff]
        %v5531 = vld [vmem:[#allocation2 + $0x90] sm:$0xff]
        %v5532 = vld [vmem:[#allocation2 + $0x98] sm:$0xff]
        %v5533 = vld [vmem:[#allocation2 + $0xa0] sm:$0xff]
        %v5534 = vld [vmem:[#allocation2 + $0xa8] sm:$0xff]
        %v5535 = vld [vmem:[#allocation2 + $0xb0] sm:$0xff]
        %v5536 = vld [vmem:[#allocation2 + $0xb8] sm:$0xff]
        %v5537 = vld [vmem:[#allocation2 + $0xc0] sm:$0xff]
        %v5538 = vld [vmem:[#allocation2 + $0xc8] sm:$0xff]
        %v5539 = vld [vmem:[#allocation2 + $0xd0] sm:$0xff]
        %v5540 = vld [vmem:[#allocation2 + $0xd8] sm:$0xff]
        %v5541 = vld [vmem:[#allocation2 + $0xe0] sm:$0xff]
        %v5542 = vld [vmem:[#allocation2 + $0xe8] sm:$0xff]
        %v5543 = vld [vmem:[#allocation2 + $0xf0] sm:$0xff]
        %v5544 = vld [vmem:[#allocation2 + $0xf8] sm:$0xff]
        %v5545 = vld [vmem:[#allocation9] sm:$0xf]
        %v5546 = vld [vmem:[#allocation9 + $0x4] sm:$0xf]
        %v5547 = vld [vmem:[#allocation9 + $0x8] sm:$0xf]
        %v5548 = vld [vmem:[#allocation9 + $0xc] sm:$0xf]
        %v5549 = vld [vmem:[#allocation9 + $0x10] sm:$0xf]
        %v5550 = vld [vmem:[#allocation9 + $0x14] sm:$0xf]
        %v5551 = vld [vmem:[#allocation9 + $0x18] sm:$0xf]
        %v5552 = vld [vmem:[#allocation9 + $0x1c] sm:$0xf]
        %v5553 = vld [vmem:[#allocation9 + $0x20] sm:$0xf]
        %v5554 = vld [vmem:[#allocation9 + $0x24] sm:$0xf]
        %v5555 = vld [vmem:[#allocation9 + $0x28] sm:$0xf]
        %v5556 = vld [vmem:[#allocation9 + $0x2c] sm:$0xf]
        %v5557 = vld [vmem:[#allocation9 + $0x30] sm:$0xf]
        %v5558 = vld [vmem:[#allocation9 + $0x34] sm:$0xf]
        %v5559 = vld [vmem:[#allocation9 + $0x38] sm:$0xf]
        %v5560 = vld [vmem:[#allocation9 + $0x3c] sm:$0xf]
        %v5561 = vld [vmem:[#allocation9 + $0x40] sm:$0xf]
        %v5562 = vld [vmem:[#allocation9 + $0x44] sm:$0xf]
        %v5563 = vld [vmem:[#allocation9 + $0x48] sm:$0xf]
        %v5564 = vld [vmem:[#allocation9 + $0x4c] sm:$0xf]
        %v5565 = vld [vmem:[#allocation9 + $0x50] sm:$0xf]
        %v5566 = vld [vmem:[#allocation9 + $0x54] sm:$0xf]
        %v5567 = vld [vmem:[#allocation9 + $0x58] sm:$0xf]
        %v5568 = vld [vmem:[#allocation9 + $0x5c] sm:$0xf]
        %v5569 = vld [vmem:[#allocation9 + $0x60] sm:$0xf]
        %v5570 = vld [vmem:[#allocation9 + $0x64] sm:$0xf]
        %v5571 = vld [vmem:[#allocation9 + $0x68] sm:$0xf]
        %v5572 = vld [vmem:[#allocation9 + $0x6c] sm:$0xf]
        %v5573 = vld [vmem:[#allocation9 + $0x70] sm:$0xf]
        %v5574 = vld [vmem:[#allocation9 + $0x74] sm:$0xf]
        %v5575 = vld [vmem:[#allocation9 + $0x78] sm:$0xf]
        %v5576 = vld [vmem:[#allocation9 + $0x7c] sm:$0xf]
        %v5577 = vld [vmem:[#allocation9 + $0x80] sm:$0xf]
        %v5578 = vld [vmem:[#allocation9 + $0x84] sm:$0xf]
        %v5579 = vld [vmem:[#allocation9 + $0x88] sm:$0xf]
        %v5580 = vld [vmem:[#allocation9 + $0x8c] sm:$0xf]
        %v5581 = vld [vmem:[#allocation9 + $0x90] sm:$0xf]
        %v5582 = vld [vmem:[#allocation9 + $0x94] sm:$0xf]
        %v5583 = vld [vmem:[#allocation9 + $0x98] sm:$0xf]
        %v5584 = vld [vmem:[#allocation9 + $0x9c] sm:$0xf]
        %v5585 = vld [vmem:[#allocation9 + $0xa0] sm:$0xf]
        %v5586 = vld [vmem:[#allocation9 + $0xa4] sm:$0xf]
        %v5587 = vld [vmem:[#allocation9 + $0xa8] sm:$0xf]
        %v5588 = vld [vmem:[#allocation9 + $0xac] sm:$0xf]
        %v5589 = vld [vmem:[#allocation9 + $0xb0] sm:$0xf]
        %v5590 = vld [vmem:[#allocation9 + $0xb4] sm:$0xf]
        %v5591 = vld [vmem:[#allocation9 + $0xb8] sm:$0xf]
        %v5592 = vld [vmem:[#allocation9 + $0xbc] sm:$0xf]
        %v5641 = vunpack.c.l.b16 %v5545
        %v5642 = vunpack.c.l.b16 %v5546
        %v5643 = vunpack.c.l.b16 %v5547
        %v5644 = vunpack.c.l.b16 %v5548
        %v5645 = vunpack.c.l.b16 %v5549
        %v5646 = vunpack.c.l.b16 %v5550
        %v5647 = vunpack.c.l.b16 %v5551
        %v5648 = vunpack.c.l.b16 %v5552
        %v5649 = vunpack.c.l.b16 %v5553
        %v5650 = vunpack.c.l.b16 %v5554
        %v5651 = vunpack.c.l.b16 %v5555
        %v5652 = vunpack.c.l.b16 %v5556
        %v5653 = vunpack.c.l.b16 %v5557
        %v5654 = vunpack.c.l.b16 %v5558
        %v5655 = vunpack.c.l.b16 %v5559
        %v5656 = vunpack.c.l.b16 %v5560
        %v5657 = vunpack.c.l.b16 %v5561
        %v5658 = vunpack.c.l.b16 %v5562
        %v5659 = vunpack.c.l.b16 %v5563
        %v5660 = vunpack.c.l.b16 %v5564
        %v5661 = vunpack.c.l.b16 %v5565
        %v5662 = vunpack.c.l.b16 %v5566
        %v5663 = vunpack.c.l.b16 %v5567
        %v5664 = vunpack.c.l.b16 %v5568
        %v5665 = vunpack.c.l.b16 %v5569
        %v5666 = vunpack.c.l.b16 %v5570
        %v5667 = vunpack.c.l.b16 %v5571
        %v5668 = vunpack.c.l.b16 %v5572
        %v5669 = vunpack.c.l.b16 %v5573
        %v5670 = vunpack.c.l.b16 %v5574
        %v5671 = vunpack.c.l.b16 %v5575
        %v5672 = vunpack.c.l.b16 %v5576
        %v5673 = vunpack.c.l.b16 %v5577
        %v5674 = vunpack.c.l.b16 %v5578
        %v5675 = vunpack.c.l.b16 %v5579
        %v5676 = vunpack.c.l.b16 %v5580
        %v5677 = vunpack.c.l.b16 %v5581
        %v5678 = vunpack.c.l.b16 %v5582
        %v5679 = vunpack.c.l.b16 %v5583
        %v5680 = vunpack.c.l.b16 %v5584
        %v5681 = vunpack.c.l.b16 %v5585
        %v5682 = vunpack.c.l.b16 %v5586
        %v5683 = vunpack.c.l.b16 %v5587
        %v5684 = vunpack.c.l.b16 %v5588
        %v5685 = vunpack.c.l.b16 %v5589
        %v5686 = vunpack.c.l.b16 %v5590
        %v5687 = vunpack.c.l.b16 %v5591
        %v5688 = vunpack.c.l.b16 %v5592
        %v5689 = vpack.c.b16 %v5642, %v5641
        %v5690 = vpack.c.b16 %v5644, %v5643
        %v5691 = vpack.c.b16 %v5646, %v5645
        %v5692 = vpack.c.b16 %v5648, %v5647
        %v5693 = vpack.c.b16 %v5650, %v5649
        %v5694 = vpack.c.b16 %v5652, %v5651
        %v5695 = vpack.c.b16 %v5654, %v5653
        %v5696 = vpack.c.b16 %v5656, %v5655
        %v5697 = vpack.c.b16 %v5658, %v5657
        %v5698 = vpack.c.b16 %v5660, %v5659
        %v5699 = vpack.c.b16 %v5662, %v5661
        %v5700 = vpack.c.b16 %v5664, %v5663
        %v5701 = vpack.c.b16 %v5666, %v5665
        %v5702 = vpack.c.b16 %v5668, %v5667
        %v5703 = vpack.c.b16 %v5670, %v5669
        %v5704 = vpack.c.b16 %v5672, %v5671
        %v5705 = vpack.c.b16 %v5674, %v5673
        %v5706 = vpack.c.b16 %v5676, %v5675
        %v5707 = vpack.c.b16 %v5678, %v5677
        %v5708 = vpack.c.b16 %v5680, %v5679
        %v5709 = vpack.c.b16 %v5682, %v5681
        %v5710 = vpack.c.b16 %v5684, %v5683
        %v5711 = vpack.c.b16 %v5686, %v5685
        %v5712 = vpack.c.b16 %v5688, %v5687
        %5737 = vmatprep.subr.bf16.mxu0 0
        %5738 = vmatpush1.bf16.msra.mxu0 %v5696
        %5739 = vmatprep.subr.bf16.mxu0 0
        %5740 = vmatpush1.bf16.msra.mxu0 %v5695
        %5741 = vmatprep.subr.bf16.mxu0 0
        %5742 = vmatpush1.bf16.msra.mxu0 %v5694
        %5743 = vmatprep.subr.bf16.mxu0 0
        %5744 = vmatpush1.bf16.msra.mxu0 %v5693
        %5745 = vmatprep.subr.bf16.mxu0 0
        %5746 = vmatpush1.bf16.msra.mxu0 %v5692
        %5747 = vmatprep.subr.bf16.mxu0 0
        %5748 = vmatpush1.bf16.msra.mxu0 %v5691
        %5749 = vmatprep.subr.bf16.mxu0 0
        %5750 = vmatpush1.bf16.msra.mxu0 %v5690
        %5751 = vmatprep.subr.bf16.mxu0 0
        %5752 = vmatpush1.bf16.msra.mxu0 %v5689
        %5753 = vmatprep.subr.bf16.mxu0 0
        %5754 = vmatpush2.bf16.msra.mxu0 %v5704
        %5755 = vmatprep.subr.bf16.mxu0 0
        %5756 = vmatpush2.bf16.msra.mxu0 %v5703
        %5757 = vmatprep.subr.bf16.mxu0 0
        %5758 = vmatpush2.bf16.msra.mxu0 %v5702
        %5759 = vmatprep.subr.bf16.mxu0 0
        %5760 = vmatpush2.bf16.msra.mxu0 %v5701
        %5761 = vmatprep.subr.bf16.mxu0 0
        %5762 = vmatpush2.bf16.msra.mxu0 %v5700
        %5763 = vmatprep.subr.bf16.mxu0 0
        %5764 = vmatpush2.bf16.msra.mxu0 %v5699
        %5765 = vmatprep.subr.bf16.mxu0 0
        %5766 = vmatpush2.bf16.msra.mxu0 %v5698
        %5767 = vmatprep.subr.bf16.mxu0 0
        %5768 = vmatpush2.bf16.msra.mxu0 %v5697
        %5769 = vmatprep.mubr.bf16.mxu0 %v5252
        %5770 = vmatmul.mubr.bf16.gmra.mxu0 %v5161
        %v5771 = vpop.f32.mrf.mxu0
        %v5772 = vadd.f32 0.0, %v5771
        %v5773 = vpop.f32.mrf.mxu0
        %v5774 = vpop.f32.mrf.mxu0
        %v5775 = vadd.f32 0.0, %v5774
        %v5776 = vpop.f32.mrf.mxu0
        %5777 = vmatprep.mubr.bf16.mxu0 %v5264
        %5778 = vmatmul.mubr.bf16.gmra.mxu0 %v5162
        %v5779 = vpop.f32.mrf.mxu0
        %v5780 = vadd.f32 0.0, %v5779
        %v5781 = vpop.f32.mrf.mxu0
        %v5782 = vpop.f32.mrf.mxu0
        %v5783 = vadd.f32 0.0, %v5782
        %v5784 = vpop.f32.mrf.mxu0
        %5785 = vmatprep.mubr.bf16.mxu0 %v5276
        %5786 = vmatmul.mubr.bf16.gmra.mxu0 %v5163
        %v5787 = vpop.f32.mrf.mxu0
        %v5788 = vadd.f32 0.0, %v5787
        %v5789 = vpop.f32.mrf.mxu0
        %v5790 = vpop.f32.mrf.mxu0
        %v5791 = vadd.f32 0.0, %v5790
        %v5792 = vpop.f32.mrf.mxu0
        %5793 = vmatprep.mubr.bf16.mxu0 %v5288
        %5794 = vmatmul.mubr.bf16.gmra.mxu0 %v5164
        %v5795 = vpop.f32.mrf.mxu0
        %v5796 = vadd.f32 0.0, %v5795
        %v5797 = vpop.f32.mrf.mxu0
        %v5798 = vpop.f32.mrf.mxu0
        %v5799 = vadd.f32 0.0, %v5798
        %v5800 = vpop.f32.mrf.mxu0
        %5801 = vmatprep.mubr.bf16.mxu0 %v5300
        %5802 = vmatmul.mubr.bf16.gmra.mxu0 %v5165
        %v5803 = vpop.f32.mrf.mxu0
        %v5804 = vadd.f32 0.0, %v5803
        %v5805 = vpop.f32.mrf.mxu0
        %v5806 = vpop.f32.mrf.mxu0
        %v5807 = vadd.f32 0.0, %v5806
        %v5808 = vpop.f32.mrf.mxu0
        %5809 = vmatprep.mubr.bf16.mxu0 %v5312
        %5810 = vmatmul.mubr.bf16.gmra.mxu0 %v5166
        %v5811 = vpop.f32.mrf.mxu0
        %v5812 = vadd.f32 0.0, %v5811
        %v5813 = vpop.f32.mrf.mxu0
        %v5814 = vpop.f32.mrf.mxu0
        %v5815 = vadd.f32 0.0, %v5814
        %v5816 = vpop.f32.mrf.mxu0
        %5817 = vmatprep.mubr.bf16.mxu0 %v5324
        %5818 = vmatmul.mubr.bf16.gmra.mxu0 %v5167
        %v5819 = vpop.f32.mrf.mxu0
        %v5820 = vadd.f32 0.0, %v5819
        %v5821 = vpop.f32.mrf.mxu0
        %v5822 = vpop.f32.mrf.mxu0
        %v5823 = vadd.f32 0.0, %v5822
        %v5824 = vpop.f32.mrf.mxu0
        %5825 = vmatprep.mubr.bf16.mxu0 %v5336
        %5826 = vmatmul.mubr.bf16.gmra.mxu0 %v5168
        %v5827 = vpop.f32.mrf.mxu0
        %v5828 = vadd.f32 0.0, %v5827
        %v5829 = vpop.f32.mrf.mxu0
        %v5830 = vpop.f32.mrf.mxu0
        %v5831 = vadd.f32 0.0, %v5830
        %v5832 = vpop.f32.mrf.mxu0
        %5833 = vmatprep.mubr.bf16.mxu0 %v5348
        %5834 = vmatmul.mubr.bf16.gmra.mxu0 %v5169
        %v5835 = vpop.f32.mrf.mxu0
        %v5836 = vadd.f32 0.0, %v5835
        %v5837 = vpop.f32.mrf.mxu0
        %v5838 = vpop.f32.mrf.mxu0
        %v5839 = vadd.f32 0.0, %v5838
        %v5840 = vpop.f32.mrf.mxu0
        %5841 = vmatprep.mubr.bf16.mxu0 %v5360
        %5842 = vmatmul.mubr.bf16.gmra.mxu0 %v5170
        %v5843 = vpop.f32.mrf.mxu0
        %v5844 = vadd.f32 0.0, %v5843
        %v5845 = vpop.f32.mrf.mxu0
        %v5846 = vpop.f32.mrf.mxu0
        %v5847 = vadd.f32 0.0, %v5846
        %v5848 = vpop.f32.mrf.mxu0
        %5849 = vmatprep.mubr.bf16.mxu0 %v5372
        %5850 = vmatmul.mubr.bf16.gmra.mxu0 %v5171
        %v5851 = vpop.f32.mrf.mxu0
        %v5852 = vadd.f32 0.0, %v5851
        %v5853 = vpop.f32.mrf.mxu0
        %v5854 = vpop.f32.mrf.mxu0
        %v5855 = vadd.f32 0.0, %v5854
        %v5856 = vpop.f32.mrf.mxu0
        %5857 = vmatprep.mubr.bf16.mxu0 %v5384
        %5858 = vmatmul.mubr.bf16.gmra.mxu0 %v5172
        %v5859 = vpop.f32.mrf.mxu0
        %v5860 = vadd.f32 0.0, %v5859
        %v5861 = vpop.f32.mrf.mxu0
        %v5862 = vpop.f32.mrf.mxu0
        %v5863 = vadd.f32 0.0, %v5862
        %v5864 = vpop.f32.mrf.mxu0
        %5865 = vmatprep.mubr.bf16.mxu0 %v5396
        %5866 = vmatmul.mubr.bf16.gmra.mxu0 %v5173
        %v5867 = vpop.f32.mrf.mxu0
        %v5868 = vadd.f32 0.0, %v5867
        %v5869 = vpop.f32.mrf.mxu0
        %v5870 = vpop.f32.mrf.mxu0
        %v5871 = vadd.f32 0.0, %v5870
        %v5872 = vpop.f32.mrf.mxu0
        %5873 = vmatprep.mubr.bf16.mxu0 %v5408
        %5874 = vmatmul.mubr.bf16.gmra.mxu0 %v5174
        %v5875 = vpop.f32.mrf.mxu0
        %v5876 = vadd.f32 0.0, %v5875
        %v5877 = vpop.f32.mrf.mxu0
        %v5878 = vpop.f32.mrf.mxu0
        %v5879 = vadd.f32 0.0, %v5878
        %v5880 = vpop.f32.mrf.mxu0
        %5881 = vmatprep.mubr.bf16.mxu0 %v5420
        %5882 = vmatmul.mubr.bf16.gmra.mxu0 %v5175
        %v5883 = vpop.f32.mrf.mxu0
        %v5884 = vadd.f32 0.0, %v5883
        %v5885 = vpop.f32.mrf.mxu0
        %v5886 = vpop.f32.mrf.mxu0
        %v5887 = vadd.f32 0.0, %v5886
        %v5888 = vpop.f32.mrf.mxu0
        %5889 = vmatprep.mubr.bf16.mxu0 %v5432
        %5890 = vmatmul.mubr.bf16.gmra.mxu0 %v5176
        %v5891 = vpop.f32.mrf.mxu0
        %v5892 = vadd.f32 0.0, %v5891
        %v5893 = vpop.f32.mrf.mxu0
        %v5894 = vpop.f32.mrf.mxu0
        %v5895 = vadd.f32 0.0, %v5894
        %v5896 = vpop.f32.mrf.mxu0
        %5897 = vdwg.mxu0
        %5898 = vmatprep.subr.bf16.mxu0 0
        %5899 = vmatpush1.bf16.msra.mxu0 %v5712
        %5900 = vmatprep.subr.bf16.mxu0 0
        %5901 = vmatpush1.bf16.msra.mxu0 %v5711
        %5902 = vmatprep.subr.bf16.mxu0 0
        %5903 = vmatpush1.bf16.msra.mxu0 %v5710
        %5904 = vmatprep.subr.bf16.mxu0 0
        %5905 = vmatpush1.bf16.msra.mxu0 %v5709
        %5906 = vmatprep.subr.bf16.mxu0 0
        %5907 = vmatpush1.bf16.msra.mxu0 %v5708
        %5908 = vmatprep.subr.bf16.mxu0 0
        %5909 = vmatpush1.bf16.msra.mxu0 %v5707
        %5910 = vmatprep.subr.bf16.mxu0 0
        %5911 = vmatpush1.bf16.msra.mxu0 %v5706
        %5912 = vmatprep.subr.bf16.mxu0 0
        %5913 = vmatpush1.bf16.msra.mxu0 %v5705
        %5914 = vmatprep.subr.bf16.mxu0 0
        %5915 = vmatpush2.bf16.msra.mxu0 0
        %5916 = vmatprep.subr.bf16.mxu0 0
        %5917 = vmatpush2.bf16.msra.mxu0 0
        %5918 = vmatprep.subr.bf16.mxu0 0
        %5919 = vmatpush2.bf16.msra.mxu0 0
        %5920 = vmatprep.subr.bf16.mxu0 0
        %5921 = vmatpush2.bf16.msra.mxu0 0
        %5922 = vmatprep.subr.bf16.mxu0 0
        %5923 = vmatpush2.bf16.msra.mxu0 0
        %5924 = vmatprep.subr.bf16.mxu0 0
        %5925 = vmatpush2.bf16.msra.mxu0 0
        %5926 = vmatprep.subr.bf16.mxu0 0
        %5927 = vmatpush2.bf16.msra.mxu0 0
        %5928 = vmatprep.subr.bf16.mxu0 0
        %5929 = vmatpush2.bf16.msra.mxu0 0
        %5930 = vmatprep.mubr.bf16.mxu0 0
        %5931 = vmatmul.mubr.bf16.gmra.mxu0 %v5451
        %v5932 = vpop.f32.mrf.mxu0
        %v5933 = vadd.f32 %v5772, %v5932
        %v5934 = vpop.f32.mrf.mxu0
        %v5935 = vpop.f32.mrf.mxu0
        %v5936 = vadd.f32 %v5775, %v5935
        %v5937 = vpop.f32.mrf.mxu0
        %5938 = vmatprep.mubr.bf16.mxu0 0
        %5939 = vmatmul.mubr.bf16.gmra.mxu0 %v5454
        %v5940 = vpop.f32.mrf.mxu0
        %v5941 = vadd.f32 %v5780, %v5940
        %v5942 = vpop.f32.mrf.mxu0
        %v5943 = vpop.f32.mrf.mxu0
        %v5944 = vadd.f32 %v5783, %v5943
        %v5945 = vpop.f32.mrf.mxu0
        %5946 = vmatprep.mubr.bf16.mxu0 0
        %5947 = vmatmul.mubr.bf16.gmra.mxu0 %v5457
        %v5948 = vpop.f32.mrf.mxu0
        %v5949 = vadd.f32 %v5788, %v5948
        %v5950 = vpop.f32.mrf.mxu0
        %v5951 = vpop.f32.mrf.mxu0
        %v5952 = vadd.f32 %v5791, %v5951
        %v5953 = vpop.f32.mrf.mxu0
        %5954 = vmatprep.mubr.bf16.mxu0 0
        %5955 = vmatmul.mubr.bf16.gmra.mxu0 %v5460
        %v5956 = vpop.f32.mrf.mxu0
        %v5957 = vadd.f32 %v5796, %v5956
        %v5958 = vpop.f32.mrf.mxu0
        %v5959 = vpop.f32.mrf.mxu0
        %v5960 = vadd.f32 %v5799, %v5959
        %v5961 = vpop.f32.mrf.mxu0
        %5962 = vmatprep.mubr.bf16.mxu0 0
        %5963 = vmatmul.mubr.bf16.gmra.mxu0 %v5463
        %v5964 = vpop.f32.mrf.mxu0
        %v5965 = vadd.f32 %v5804, %v5964
        %v5966 = vpop.f32.mrf.mxu0
        %v5967 = vpop.f32.mrf.mxu0
        %v5968 = vadd.f32 %v5807, %v5967
        %v5969 = vpop.f32.mrf.mxu0
        %5970 = vmatprep.mubr.bf16.mxu0 0
        %5971 = vmatmul.mubr.bf16.gmra.mxu0 %v5466
        %v5972 = vpop.f32.mrf.mxu0
        %v5973 = vadd.f32 %v5812, %v5972
        %v5974 = vpop.f32.mrf.mxu0
        %v5975 = vpop.f32.mrf.mxu0
        %v5976 = vadd.f32 %v5815, %v5975
        %v5977 = vpop.f32.mrf.mxu0
        %5978 = vmatprep.mubr.bf16.mxu0 0
        %5979 = vmatmul.mubr.bf16.gmra.mxu0 %v5469
        %v5980 = vpop.f32.mrf.mxu0
        %v5981 = vadd.f32 %v5820, %v5980
        %v5982 = vpop.f32.mrf.mxu0
        %v5983 = vpop.f32.mrf.mxu0
        %v5984 = vadd.f32 %v5823, %v5983
        %v5985 = vpop.f32.mrf.mxu0
        %5986 = vmatprep.mubr.bf16.mxu0 0
        %5987 = vmatmul.mubr.bf16.gmra.mxu0 %v5472
        %v5988 = vpop.f32.mrf.mxu0
        %v5989 = vadd.f32 %v5828, %v5988
        %v5990 = vpop.f32.mrf.mxu0
        %v5991 = vpop.f32.mrf.mxu0
        %v5992 = vadd.f32 %v5831, %v5991
        %v5993 = vpop.f32.mrf.mxu0
        %5994 = vmatprep.mubr.bf16.mxu0 0
        %5995 = vmatmul.mubr.bf16.gmra.mxu0 %v5475
        %v5996 = vpop.f32.mrf.mxu0
        %v5997 = vadd.f32 %v5836, %v5996
        %v5998 = vpop.f32.mrf.mxu0
        %v5999 = vpop.f32.mrf.mxu0
        %v6000 = vadd.f32 %v5839, %v5999
        %v6001 = vpop.f32.mrf.mxu0
        %6002 = vmatprep.mubr.bf16.mxu0 0
        %6003 = vmatmul.mubr.bf16.gmra.mxu0 %v5478
        %v6004 = vpop.f32.mrf.mxu0
        %v6005 = vadd.f32 %v5844, %v6004
        %v6006 = vpop.f32.mrf.mxu0
        %v6007 = vpop.f32.mrf.mxu0
        %v6008 = vadd.f32 %v5847, %v6007
        %v6009 = vpop.f32.mrf.mxu0
        %6010 = vmatprep.mubr.bf16.mxu0 0
        %6011 = vmatmul.mubr.bf16.gmra.mxu0 %v5481
        %v6012 = vpop.f32.mrf.mxu0
        %v6013 = vadd.f32 %v5852, %v6012
        %v6014 = vpop.f32.mrf.mxu0
        %v6015 = vpop.f32.mrf.mxu0
        %v6016 = vadd.f32 %v5855, %v6015
        %v6017 = vpop.f32.mrf.mxu0
        %6018 = vmatprep.mubr.bf16.mxu0 0
        %6019 = vmatmul.mubr.bf16.gmra.mxu0 %v5484
        %v6020 = vpop.f32.mrf.mxu0
        %v6021 = vadd.f32 %v5860, %v6020
        %v6022 = vpop.f32.mrf.mxu0
        %v6023 = vpop.f32.mrf.mxu0
        %v6024 = vadd.f32 %v5863, %v6023
        %v6025 = vpop.f32.mrf.mxu0
        %6026 = vmatprep.mubr.bf16.mxu0 0
        %6027 = vmatmul.mubr.bf16.gmra.mxu0 %v5487
        %v6028 = vpop.f32.mrf.mxu0
        %v6029 = vadd.f32 %v5868, %v6028
        %v6030 = vpop.f32.mrf.mxu0
        %v6031 = vpop.f32.mrf.mxu0
        %v6032 = vadd.f32 %v5871, %v6031
        %v6033 = vpop.f32.mrf.mxu0
        %6034 = vmatprep.mubr.bf16.mxu0 0
        %6035 = vmatmul.mubr.bf16.gmra.mxu0 %v5490
        %v6036 = vpop.f32.mrf.mxu0
        %v6037 = vadd.f32 %v5876, %v6036
        %v6038 = vpop.f32.mrf.mxu0
        %v6039 = vpop.f32.mrf.mxu0
        %v6040 = vadd.f32 %v5879, %v6039
        %v6041 = vpop.f32.mrf.mxu0
        %6042 = vmatprep.mubr.bf16.mxu0 0
        %6043 = vmatmul.mubr.bf16.gmra.mxu0 %v5493
        %v6044 = vpop.f32.mrf.mxu0
        %v6045 = vadd.f32 %v5884, %v6044
        %v6046 = vpop.f32.mrf.mxu0
        %v6047 = vpop.f32.mrf.mxu0
        %v6048 = vadd.f32 %v5887, %v6047
        %v6049 = vpop.f32.mrf.mxu0
        %6050 = vmatprep.mubr.bf16.mxu0 0
        %6051 = vmatmul.mubr.bf16.gmra.mxu0 %v5496
        %v6052 = vpop.f32.mrf.mxu0
        %v6053 = vadd.f32 %v5892, %v6052
        %v6054 = vpop.f32.mrf.mxu0
        %v6055 = vpop.f32.mrf.mxu0
        %v6056 = vadd.f32 %v5895, %v6055
        %v6057 = vpop.f32.mrf.mxu0
        %6058 = vdwg.mxu0
        %v6059 = vadd.f32 %v5513, %v5933
        %v6060 = vadd.f32 %v5514, %v5936
        %v6061 = vadd.f32 %v5515, %v5941
        %v6062 = vadd.f32 %v5516, %v5944
        %v6063 = vadd.f32 %v5517, %v5949
        %v6064 = vadd.f32 %v5518, %v5952
        %v6065 = vadd.f32 %v5519, %v5957
        %v6066 = vadd.f32 %v5520, %v5960
        %v6067 = vadd.f32 %v5521, %v5965
        %v6068 = vadd.f32 %v5522, %v5968
        %v6069 = vadd.f32 %v5523, %v5973
        %v6070 = vadd.f32 %v5524, %v5976
        %v6071 = vadd.f32 %v5525, %v5981
        %v6072 = vadd.f32 %v5526, %v5984
        %v6073 = vadd.f32 %v5527, %v5989
        %v6074 = vadd.f32 %v5528, %v5992
        %v6075 = vadd.f32 %v5529, %v5997
        %v6076 = vadd.f32 %v5530, %v6000
        %v6077 = vadd.f32 %v5531, %v6005
        %v6078 = vadd.f32 %v5532, %v6008
        %v6079 = vadd.f32 %v5533, %v6013
        %v6080 = vadd.f32 %v5534, %v6016
        %v6081 = vadd.f32 %v5535, %v6021
        %v6082 = vadd.f32 %v5536, %v6024
        %v6083 = vadd.f32 %v5537, %v6029
        %v6084 = vadd.f32 %v5538, %v6032
        %v6085 = vadd.f32 %v5539, %v6037
        %v6086 = vadd.f32 %v5540, %v6040
        %v6087 = vadd.f32 %v5541, %v6045
        %v6088 = vadd.f32 %v5542, %v6048
        %v6089 = vadd.f32 %v5543, %v6053
        %v6090 = vadd.f32 %v5544, %v6056
        %6091 = vst [vmem:[#allocation2] sm:$0xff] %v6059
        %6092 = vst [vmem:[#allocation2 + $0x8] sm:$0xff] %v6060
        %6093 = vst [vmem:[#allocation2 + $0x10] sm:$0xff] %v6061
        %6094 = vst [vmem:[#allocation2 + $0x18] sm:$0xff] %v6062
        %6095 = vst [vmem:[#allocation2 + $0x20] sm:$0xff] %v6063
        %6096 = vst [vmem:[#allocation2 + $0x28] sm:$0xff] %v6064
        %6097 = vst [vmem:[#allocation2 + $0x30] sm:$0xff] %v6065
        %6098 = vst [vmem:[#allocation2 + $0x38] sm:$0xff] %v6066
        %6099 = vst [vmem:[#allocation2 + $0x40] sm:$0xff] %v6067
        %6100 = vst [vmem:[#allocation2 + $0x48] sm:$0xff] %v6068
        %6101 = vst [vmem:[#allocation2 + $0x50] sm:$0xff] %v6069
        %6102 = vst [vmem:[#allocation2 + $0x58] sm:$0xff] %v6070
        %6103 = vst [vmem:[#allocation2 + $0x60] sm:$0xff] %v6071
        %6104 = vst [vmem:[#allocation2 + $0x68] sm:$0xff] %v6072
        %6105 = vst [vmem:[#allocation2 + $0x70] sm:$0xff] %v6073
        %6106 = vst [vmem:[#allocation2 + $0x78] sm:$0xff] %v6074
        %6107 = vst [vmem:[#allocation2 + $0x80] sm:$0xff] %v6075
        %6108 = vst [vmem:[#allocation2 + $0x88] sm:$0xff] %v6076
        %6109 = vst [vmem:[#allocation2 + $0x90] sm:$0xff] %v6077
        %6110 = vst [vmem:[#allocation2 + $0x98] sm:$0xff] %v6078
        %6111 = vst [vmem:[#allocation2 + $0xa0] sm:$0xff] %v6079
        %6112 = vst [vmem:[#allocation2 + $0xa8] sm:$0xff] %v6080
        %6113 = vst [vmem:[#allocation2 + $0xb0] sm:$0xff] %v6081
        %6114 = vst [vmem:[#allocation2 + $0xb8] sm:$0xff] %v6082
        %6115 = vst [vmem:[#allocation2 + $0xc0] sm:$0xff] %v6083
        %6116 = vst [vmem:[#allocation2 + $0xc8] sm:$0xff] %v6084
        %6117 = vst [vmem:[#allocation2 + $0xd0] sm:$0xff] %v6085
        %6118 = vst [vmem:[#allocation2 + $0xd8] sm:$0xff] %v6086
        %6119 = vst [vmem:[#allocation2 + $0xe0] sm:$0xff] %v6087
        %6120 = vst [vmem:[#allocation2 + $0xe8] sm:$0xff] %v6088
        %6121 = vst [vmem:[#allocation2 + $0xf0] sm:$0xff] %v6089
        %6122 = vst [vmem:[#allocation2 + $0xf8] sm:$0xff] %v6090
        %v6123 = vld [vmem:[%s3589] sm:$0xf]
        %v6124 = vld [vmem:[%s3589 + $0x4] sm:$0xf]
        %v6125 = vld [vmem:[%s3589 + $0x8] sm:$0xf]
        %v6126 = vld [vmem:[%s3589 + $0xc] sm:$0xf]
        %v6127 = vld [vmem:[%s3589 + $0x10] sm:$0xf]
        %v6128 = vld [vmem:[%s3589 + $0x14] sm:$0xf]
        %v6129 = vld [vmem:[%s3589 + $0x18] sm:$0xf]
        %v6130 = vld [vmem:[%s3589 + $0x1c] sm:$0xf]
        %v6131 = vld [vmem:[%s3589 + $0x20] sm:$0xf]
        %v6132 = vld [vmem:[%s3589 + $0x24] sm:$0xf]
        %v6133 = vld [vmem:[%s3589 + $0x28] sm:$0xf]
        %v6134 = vld [vmem:[%s3589 + $0x2c] sm:$0xf]
        %v6135 = vld [vmem:[%s3589 + $0x30] sm:$0xf]
        %v6136 = vld [vmem:[%s3589 + $0x34] sm:$0xf]
        %v6137 = vld [vmem:[%s3589 + $0x38] sm:$0xf]
        %v6138 = vld [vmem:[%s3589 + $0x3c] sm:$0xf]
        %v6139 = vld [vmem:[%s3589 + $0x40] sm:$0xf]
        %v6140 = vld [vmem:[%s3589 + $0x44] sm:$0xf]
        %v6141 = vld [vmem:[%s3589 + $0x48] sm:$0xf]
        %v6142 = vld [vmem:[%s3589 + $0x4c] sm:$0xf]
        %v6143 = vld [vmem:[%s3589 + $0x50] sm:$0xf]
        %v6144 = vld [vmem:[%s3589 + $0x54] sm:$0xf]
        %v6145 = vld [vmem:[%s3589 + $0x58] sm:$0xf]
        %v6146 = vld [vmem:[%s3589 + $0x5c] sm:$0xf]
        %v6147 = vld [vmem:[%s3589 + $0x60] sm:$0xf]
        %v6148 = vld [vmem:[%s3589 + $0x64] sm:$0xf]
        %v6149 = vld [vmem:[%s3589 + $0x68] sm:$0xf]
        %v6150 = vld [vmem:[%s3589 + $0x6c] sm:$0xf]
        %v6151 = vld [vmem:[%s3589 + $0x70] sm:$0xf]
        %v6152 = vld [vmem:[%s3589 + $0x74] sm:$0xf]
        %v6153 = vld [vmem:[%s3589 + $0x78] sm:$0xf]
        %v6154 = vld [vmem:[%s3589 + $0x7c] sm:$0xf]
        %v6155 = vld [vmem:[%s3589 + $0x80] sm:$0xf]
        %v6156 = vld [vmem:[%s3589 + $0x84] sm:$0xf]
        %v6157 = vld [vmem:[%s3589 + $0x88] sm:$0xf]
        %v6158 = vld [vmem:[%s3589 + $0x8c] sm:$0xf]
        %v6159 = vld [vmem:[%s3589 + $0x90] sm:$0xf]
        %v6160 = vld [vmem:[%s3589 + $0x94] sm:$0xf]
        %v6161 = vld [vmem:[%s3589 + $0x98] sm:$0xf]
        %v6162 = vld [vmem:[%s3589 + $0x9c] sm:$0xf]
        %v6163 = vld [vmem:[%s3589 + $0xa0] sm:$0xf]
        %v6164 = vld [vmem:[%s3589 + $0xa4] sm:$0xf]
        %v6165 = vld [vmem:[%s3589 + $0xa8] sm:$0xf]
        %v6166 = vld [vmem:[%s3589 + $0xac] sm:$0xf]
        %v6167 = vld [vmem:[%s3589 + $0xb0] sm:$0xf]
        %v6168 = vld [vmem:[%s3589 + $0xb4] sm:$0xf]
        %v6169 = vld [vmem:[%s3589 + $0xb8] sm:$0xf]
        %v6170 = vld [vmem:[%s3589 + $0xbc] sm:$0xf]
        %v6203 = vunpack.c.l.b16 %v6123
        %v6204 = vunpack.c.l.b16 %v6124
        %v6205 = vunpack.c.l.b16 %v6126
        %v6206 = vunpack.c.l.b16 %v6127
        %v6207 = vunpack.c.l.b16 %v6129
        %v6208 = vunpack.c.l.b16 %v6130
        %v6209 = vunpack.c.l.b16 %v6132
        %v6210 = vunpack.c.l.b16 %v6133
        %v6211 = vunpack.c.l.b16 %v6135
        %v6212 = vunpack.c.l.b16 %v6136
        %v6213 = vunpack.c.l.b16 %v6138
        %v6214 = vunpack.c.l.b16 %v6139
        %v6215 = vunpack.c.l.b16 %v6141
        %v6216 = vunpack.c.l.b16 %v6142
        %v6217 = vunpack.c.l.b16 %v6144
        %v6218 = vunpack.c.l.b16 %v6145
        %v6219 = vunpack.c.l.b16 %v6147
        %v6220 = vunpack.c.l.b16 %v6148
        %v6221 = vunpack.c.l.b16 %v6150
        %v6222 = vunpack.c.l.b16 %v6151
        %v6223 = vunpack.c.l.b16 %v6153
        %v6224 = vunpack.c.l.b16 %v6154
        %v6225 = vunpack.c.l.b16 %v6156
        %v6226 = vunpack.c.l.b16 %v6157
        %v6227 = vunpack.c.l.b16 %v6159
        %v6228 = vunpack.c.l.b16 %v6160
        %v6229 = vunpack.c.l.b16 %v6162
        %v6230 = vunpack.c.l.b16 %v6163
        %v6231 = vunpack.c.l.b16 %v6165
        %v6232 = vunpack.c.l.b16 %v6166
        %v6233 = vunpack.c.l.b16 %v6168
        %v6234 = vunpack.c.l.b16 %v6169
        %v6235 = vpack.c.b16 %v6204, %v6203
        %v6236 = vpack.c.b16 %v6206, %v6205
        %v6237 = vpack.c.b16 %v6208, %v6207
        %v6238 = vpack.c.b16 %v6210, %v6209
        %v6239 = vpack.c.b16 %v6212, %v6211
        %v6240 = vpack.c.b16 %v6214, %v6213
        %v6241 = vpack.c.b16 %v6216, %v6215
        %v6242 = vpack.c.b16 %v6218, %v6217
        %v6243 = vpack.c.b16 %v6220, %v6219
        %v6244 = vpack.c.b16 %v6222, %v6221
        %v6245 = vpack.c.b16 %v6224, %v6223
        %v6246 = vpack.c.b16 %v6226, %v6225
        %v6247 = vpack.c.b16 %v6228, %v6227
        %v6248 = vpack.c.b16 %v6230, %v6229
        %v6249 = vpack.c.b16 %v6232, %v6231
        %v6250 = vpack.c.b16 %v6234, %v6233
        %v6283 = vunpack.c.l.b16 %v6125
        %v6284 = vunpack.c.l.b16 %v6128
        %v6285 = vunpack.c.l.b16 %v6131
        %v6286 = vunpack.c.l.b16 %v6134
        %v6287 = vunpack.c.l.b16 %v6137
        %v6288 = vunpack.c.l.b16 %v6140
        %v6289 = vunpack.c.l.b16 %v6143
        %v6290 = vunpack.c.l.b16 %v6146
        %v6291 = vunpack.c.l.b16 %v6149
        %v6292 = vunpack.c.l.b16 %v6152
        %v6293 = vunpack.c.l.b16 %v6155
        %v6294 = vunpack.c.l.b16 %v6158
        %v6295 = vunpack.c.l.b16 %v6161
        %v6296 = vunpack.c.l.b16 %v6164
        %v6297 = vunpack.c.l.b16 %v6167
        %v6298 = vunpack.c.l.b16 %v6170
        %v6299 = vpack.c.b16 %v6283, %v6283
        %v6300 = vpack.c.b16 %v6284, %v6284
        %v6301 = vpack.c.b16 %v6285, %v6285
        %v6302 = vpack.c.b16 %v6286, %v6286
        %v6303 = vpack.c.b16 %v6287, %v6287
        %v6304 = vpack.c.b16 %v6288, %v6288
        %v6305 = vpack.c.b16 %v6289, %v6289
        %v6306 = vpack.c.b16 %v6290, %v6290
        %v6307 = vpack.c.b16 %v6291, %v6291
        %v6308 = vpack.c.b16 %v6292, %v6292
        %v6309 = vpack.c.b16 %v6293, %v6293
        %v6310 = vpack.c.b16 %v6294, %v6294
        %v6311 = vpack.c.b16 %v6295, %v6295
        %v6312 = vpack.c.b16 %v6296, %v6296
        %v6313 = vpack.c.b16 %v6297, %v6297
        %v6314 = vpack.c.b16 %v6298, %v6298
        %v6316 = vshrl.u32 %v6235, 16
        %v6318 = vshll.u32 %v6235, 16
        %v6320 = vrot.slane %v6318, 1
        %v6321 = vor.u32 %v6316, %v6320
        %v6323 = vshll.u32 %v6299, 16
        %v6325 = vrot.slane %v6323, 1
        %v6326 = vsel %vm546, %v6321, %v6325
        %v6328 = vshrl.u32 %v6236, 16
        %v6330 = vshll.u32 %v6236, 16
        %v6332 = vrot.slane %v6330, 1
        %v6333 = vor.u32 %v6328, %v6332
        %v6335 = vshll.u32 %v6300, 16
        %v6337 = vrot.slane %v6335, 1
        %v6338 = vsel %vm546, %v6333, %v6337
        %v6340 = vshrl.u32 %v6237, 16
        %v6342 = vshll.u32 %v6237, 16
        %v6344 = vrot.slane %v6342, 1
        %v6345 = vor.u32 %v6340, %v6344
        %v6347 = vshll.u32 %v6301, 16
        %v6349 = vrot.slane %v6347, 1
        %v6350 = vsel %vm546, %v6345, %v6349
        %v6352 = vshrl.u32 %v6238, 16
        %v6354 = vshll.u32 %v6238, 16
        %v6356 = vrot.slane %v6354, 1
        %v6357 = vor.u32 %v6352, %v6356
        %v6359 = vshll.u32 %v6302, 16
        %v6361 = vrot.slane %v6359, 1
        %v6362 = vsel %vm546, %v6357, %v6361
        %v6364 = vshrl.u32 %v6239, 16
        %v6366 = vshll.u32 %v6239, 16
        %v6368 = vrot.slane %v6366, 1
        %v6369 = vor.u32 %v6364, %v6368
        %v6371 = vshll.u32 %v6303, 16
        %v6373 = vrot.slane %v6371, 1
        %v6374 = vsel %vm546, %v6369, %v6373
        %v6376 = vshrl.u32 %v6240, 16
        %v6378 = vshll.u32 %v6240, 16
        %v6380 = vrot.slane %v6378, 1
        %v6381 = vor.u32 %v6376, %v6380
        %v6383 = vshll.u32 %v6304, 16
        %v6385 = vrot.slane %v6383, 1
        %v6386 = vsel %vm546, %v6381, %v6385
        %v6388 = vshrl.u32 %v6241, 16
        %v6390 = vshll.u32 %v6241, 16
        %v6392 = vrot.slane %v6390, 1
        %v6393 = vor.u32 %v6388, %v6392
        %v6395 = vshll.u32 %v6305, 16
        %v6397 = vrot.slane %v6395, 1
        %v6398 = vsel %vm546, %v6393, %v6397
        %v6400 = vshrl.u32 %v6242, 16
        %v6402 = vshll.u32 %v6242, 16
        %v6404 = vrot.slane %v6402, 1
        %v6405 = vor.u32 %v6400, %v6404
        %v6407 = vshll.u32 %v6306, 16
        %v6409 = vrot.slane %v6407, 1
        %v6410 = vsel %vm546, %v6405, %v6409
        %v6412 = vshrl.u32 %v6243, 16
        %v6414 = vshll.u32 %v6243, 16
        %v6416 = vrot.slane %v6414, 1
        %v6417 = vor.u32 %v6412, %v6416
        %v6419 = vshll.u32 %v6307, 16
        %v6421 = vrot.slane %v6419, 1
        %v6422 = vsel %vm546, %v6417, %v6421
        %v6424 = vshrl.u32 %v6244, 16
        %v6426 = vshll.u32 %v6244, 16
        %v6428 = vrot.slane %v6426, 1
        %v6429 = vor.u32 %v6424, %v6428
        %v6431 = vshll.u32 %v6308, 16
        %v6433 = vrot.slane %v6431, 1
        %v6434 = vsel %vm546, %v6429, %v6433
        %v6436 = vshrl.u32 %v6245, 16
        %v6438 = vshll.u32 %v6245, 16
        %v6440 = vrot.slane %v6438, 1
        %v6441 = vor.u32 %v6436, %v6440
        %v6443 = vshll.u32 %v6309, 16
        %v6445 = vrot.slane %v6443, 1
        %v6446 = vsel %vm546, %v6441, %v6445
        %v6448 = vshrl.u32 %v6246, 16
        %v6450 = vshll.u32 %v6246, 16
        %v6452 = vrot.slane %v6450, 1
        %v6453 = vor.u32 %v6448, %v6452
        %v6455 = vshll.u32 %v6310, 16
        %v6457 = vrot.slane %v6455, 1
        %v6458 = vsel %vm546, %v6453, %v6457
        %v6460 = vshrl.u32 %v6247, 16
        %v6462 = vshll.u32 %v6247, 16
        %v6464 = vrot.slane %v6462, 1
        %v6465 = vor.u32 %v6460, %v6464
        %v6467 = vshll.u32 %v6311, 16
        %v6469 = vrot.slane %v6467, 1
        %v6470 = vsel %vm546, %v6465, %v6469
        %v6472 = vshrl.u32 %v6248, 16
        %v6474 = vshll.u32 %v6248, 16
        %v6476 = vrot.slane %v6474, 1
        %v6477 = vor.u32 %v6472, %v6476
        %v6479 = vshll.u32 %v6312, 16
        %v6481 = vrot.slane %v6479, 1
        %v6482 = vsel %vm546, %v6477, %v6481
        %v6484 = vshrl.u32 %v6249, 16
        %v6486 = vshll.u32 %v6249, 16
        %v6488 = vrot.slane %v6486, 1
        %v6489 = vor.u32 %v6484, %v6488
        %v6491 = vshll.u32 %v6313, 16
        %v6493 = vrot.slane %v6491, 1
        %v6494 = vsel %vm546, %v6489, %v6493
        %v6496 = vshrl.u32 %v6250, 16
        %v6498 = vshll.u32 %v6250, 16
        %v6500 = vrot.slane %v6498, 1
        %v6501 = vor.u32 %v6496, %v6500
        %v6503 = vshll.u32 %v6314, 16
        %v6505 = vrot.slane %v6503, 1
        %v6506 = vsel %vm546, %v6501, %v6505
        %v6523 = vrot.slane %v6235, 1
        %v6524 = vrot.slane %v6299, 1
        %v6525 = vsel %vm755, %v6523, %v6524
        %v6526 = vrot.slane %v6236, 1
        %v6527 = vrot.slane %v6300, 1
        %v6528 = vsel %vm755, %v6526, %v6527
        %v6529 = vrot.slane %v6237, 1
        %v6530 = vrot.slane %v6301, 1
        %v6531 = vsel %vm755, %v6529, %v6530
        %v6532 = vrot.slane %v6238, 1
        %v6533 = vrot.slane %v6302, 1
        %v6534 = vsel %vm755, %v6532, %v6533
        %v6535 = vrot.slane %v6239, 1
        %v6536 = vrot.slane %v6303, 1
        %v6537 = vsel %vm755, %v6535, %v6536
        %v6538 = vrot.slane %v6240, 1
        %v6539 = vrot.slane %v6304, 1
        %v6540 = vsel %vm755, %v6538, %v6539
        %v6541 = vrot.slane %v6241, 1
        %v6542 = vrot.slane %v6305, 1
        %v6543 = vsel %vm755, %v6541, %v6542
        %v6544 = vrot.slane %v6242, 1
        %v6545 = vrot.slane %v6306, 1
        %v6546 = vsel %vm755, %v6544, %v6545
        %v6547 = vrot.slane %v6243, 1
        %v6548 = vrot.slane %v6307, 1
        %v6549 = vsel %vm755, %v6547, %v6548
        %v6550 = vrot.slane %v6244, 1
        %v6551 = vrot.slane %v6308, 1
        %v6552 = vsel %vm755, %v6550, %v6551
        %v6553 = vrot.slane %v6245, 1
        %v6554 = vrot.slane %v6309, 1
        %v6555 = vsel %vm755, %v6553, %v6554
        %v6556 = vrot.slane %v6246, 1
        %v6557 = vrot.slane %v6310, 1
        %v6558 = vsel %vm755, %v6556, %v6557
        %v6559 = vrot.slane %v6247, 1
        %v6560 = vrot.slane %v6311, 1
        %v6561 = vsel %vm755, %v6559, %v6560
        %v6562 = vrot.slane %v6248, 1
        %v6563 = vrot.slane %v6312, 1
        %v6564 = vsel %vm755, %v6562, %v6563
        %v6565 = vrot.slane %v6249, 1
        %v6566 = vrot.slane %v6313, 1
        %v6567 = vsel %vm755, %v6565, %v6566
        %v6568 = vrot.slane %v6250, 1
        %v6569 = vrot.slane %v6314, 1
        %v6570 = vsel %vm755, %v6568, %v6569
        %v6587 = vld [vmem:[#allocation2] sm:$0xff]
        %v6588 = vld [vmem:[#allocation2 + $0x8] sm:$0xff]
        %v6589 = vld [vmem:[#allocation2 + $0x10] sm:$0xff]
        %v6590 = vld [vmem:[#allocation2 + $0x18] sm:$0xff]
        %v6591 = vld [vmem:[#allocation2 + $0x20] sm:$0xff]
        %v6592 = vld [vmem:[#allocation2 + $0x28] sm:$0xff]
        %v6593 = vld [vmem:[#allocation2 + $0x30] sm:$0xff]
        %v6594 = vld [vmem:[#allocation2 + $0x38] sm:$0xff]
        %v6595 = vld [vmem:[#allocation2 + $0x40] sm:$0xff]
        %v6596 = vld [vmem:[#allocation2 + $0x48] sm:$0xff]
        %v6597 = vld [vmem:[#allocation2 + $0x50] sm:$0xff]
        %v6598 = vld [vmem:[#allocation2 + $0x58] sm:$0xff]
        %v6599 = vld [vmem:[#allocation2 + $0x60] sm:$0xff]
        %v6600 = vld [vmem:[#allocation2 + $0x68] sm:$0xff]
        %v6601 = vld [vmem:[#allocation2 + $0x70] sm:$0xff]
        %v6602 = vld [vmem:[#allocation2 + $0x78] sm:$0xff]
        %v6603 = vld [vmem:[#allocation2 + $0x80] sm:$0xff]
        %v6604 = vld [vmem:[#allocation2 + $0x88] sm:$0xff]
        %v6605 = vld [vmem:[#allocation2 + $0x90] sm:$0xff]
        %v6606 = vld [vmem:[#allocation2 + $0x98] sm:$0xff]
        %v6607 = vld [vmem:[#allocation2 + $0xa0] sm:$0xff]
        %v6608 = vld [vmem:[#allocation2 + $0xa8] sm:$0xff]
        %v6609 = vld [vmem:[#allocation2 + $0xb0] sm:$0xff]
        %v6610 = vld [vmem:[#allocation2 + $0xb8] sm:$0xff]
        %v6611 = vld [vmem:[#allocation2 + $0xc0] sm:$0xff]
        %v6612 = vld [vmem:[#allocation2 + $0xc8] sm:$0xff]
        %v6613 = vld [vmem:[#allocation2 + $0xd0] sm:$0xff]
        %v6614 = vld [vmem:[#allocation2 + $0xd8] sm:$0xff]
        %v6615 = vld [vmem:[#allocation2 + $0xe0] sm:$0xff]
        %v6616 = vld [vmem:[#allocation2 + $0xe8] sm:$0xff]
        %v6617 = vld [vmem:[#allocation2 + $0xf0] sm:$0xff]
        %v6618 = vld [vmem:[#allocation2 + $0xf8] sm:$0xff]
        %s6619 = scalar_lea.vmem [#allocation9], 192
        %v6620 = vld [vmem:[%s6619] sm:$0xf]
        %v6621 = vld [vmem:[%s6619 + $0x4] sm:$0xf]
        %v6622 = vld [vmem:[%s6619 + $0x8] sm:$0xf]
        %v6623 = vld [vmem:[%s6619 + $0xc] sm:$0xf]
        %v6624 = vld [vmem:[%s6619 + $0x10] sm:$0xf]
        %v6625 = vld [vmem:[%s6619 + $0x14] sm:$0xf]
        %v6626 = vld [vmem:[%s6619 + $0x18] sm:$0xf]
        %v6627 = vld [vmem:[%s6619 + $0x1c] sm:$0xf]
        %v6628 = vld [vmem:[%s6619 + $0x20] sm:$0xf]
        %v6629 = vld [vmem:[%s6619 + $0x24] sm:$0xf]
        %v6630 = vld [vmem:[%s6619 + $0x28] sm:$0xf]
        %v6631 = vld [vmem:[%s6619 + $0x2c] sm:$0xf]
        %v6632 = vld [vmem:[%s6619 + $0x30] sm:$0xf]
        %v6633 = vld [vmem:[%s6619 + $0x34] sm:$0xf]
        %v6634 = vld [vmem:[%s6619 + $0x38] sm:$0xf]
        %v6635 = vld [vmem:[%s6619 + $0x3c] sm:$0xf]
        %v6636 = vld [vmem:[%s6619 + $0x40] sm:$0xf]
        %v6637 = vld [vmem:[%s6619 + $0x44] sm:$0xf]
        %v6638 = vld [vmem:[%s6619 + $0x48] sm:$0xf]
        %v6639 = vld [vmem:[%s6619 + $0x4c] sm:$0xf]
        %v6640 = vld [vmem:[%s6619 + $0x50] sm:$0xf]
        %v6641 = vld [vmem:[%s6619 + $0x54] sm:$0xf]
        %v6642 = vld [vmem:[%s6619 + $0x58] sm:$0xf]
        %v6643 = vld [vmem:[%s6619 + $0x5c] sm:$0xf]
        %v6644 = vld [vmem:[%s6619 + $0x60] sm:$0xf]
        %v6645 = vld [vmem:[%s6619 + $0x64] sm:$0xf]
        %v6646 = vld [vmem:[%s6619 + $0x68] sm:$0xf]
        %v6647 = vld [vmem:[%s6619 + $0x6c] sm:$0xf]
        %v6648 = vld [vmem:[%s6619 + $0x70] sm:$0xf]
        %v6649 = vld [vmem:[%s6619 + $0x74] sm:$0xf]
        %v6650 = vld [vmem:[%s6619 + $0x78] sm:$0xf]
        %v6651 = vld [vmem:[%s6619 + $0x7c] sm:$0xf]
        %v6652 = vld [vmem:[%s6619 + $0x80] sm:$0xf]
        %v6653 = vld [vmem:[%s6619 + $0x84] sm:$0xf]
        %v6654 = vld [vmem:[%s6619 + $0x88] sm:$0xf]
        %v6655 = vld [vmem:[%s6619 + $0x8c] sm:$0xf]
        %v6656 = vld [vmem:[%s6619 + $0x90] sm:$0xf]
        %v6657 = vld [vmem:[%s6619 + $0x94] sm:$0xf]
        %v6658 = vld [vmem:[%s6619 + $0x98] sm:$0xf]
        %v6659 = vld [vmem:[%s6619 + $0x9c] sm:$0xf]
        %v6660 = vld [vmem:[%s6619 + $0xa0] sm:$0xf]
        %v6661 = vld [vmem:[%s6619 + $0xa4] sm:$0xf]
        %v6662 = vld [vmem:[%s6619 + $0xa8] sm:$0xf]
        %v6663 = vld [vmem:[%s6619 + $0xac] sm:$0xf]
        %v6664 = vld [vmem:[%s6619 + $0xb0] sm:$0xf]
        %v6665 = vld [vmem:[%s6619 + $0xb4] sm:$0xf]
        %v6666 = vld [vmem:[%s6619 + $0xb8] sm:$0xf]
        %v6667 = vld [vmem:[%s6619 + $0xbc] sm:$0xf]
        %v6716 = vunpack.c.l.b16 %v6620
        %v6717 = vunpack.c.l.b16 %v6621
        %v6718 = vunpack.c.l.b16 %v6622
        %v6719 = vunpack.c.l.b16 %v6623
        %v6720 = vunpack.c.l.b16 %v6624
        %v6721 = vunpack.c.l.b16 %v6625
        %v6722 = vunpack.c.l.b16 %v6626
        %v6723 = vunpack.c.l.b16 %v6627
        %v6724 = vunpack.c.l.b16 %v6628
        %v6725 = vunpack.c.l.b16 %v6629
        %v6726 = vunpack.c.l.b16 %v6630
        %v6727 = vunpack.c.l.b16 %v6631
        %v6728 = vunpack.c.l.b16 %v6632
        %v6729 = vunpack.c.l.b16 %v6633
        %v6730 = vunpack.c.l.b16 %v6634
        %v6731 = vunpack.c.l.b16 %v6635
        %v6732 = vunpack.c.l.b16 %v6636
        %v6733 = vunpack.c.l.b16 %v6637
        %v6734 = vunpack.c.l.b16 %v6638
        %v6735 = vunpack.c.l.b16 %v6639
        %v6736 = vunpack.c.l.b16 %v6640
        %v6737 = vunpack.c.l.b16 %v6641
        %v6738 = vunpack.c.l.b16 %v6642
        %v6739 = vunpack.c.l.b16 %v6643
        %v6740 = vunpack.c.l.b16 %v6644
        %v6741 = vunpack.c.l.b16 %v6645
        %v6742 = vunpack.c.l.b16 %v6646
        %v6743 = vunpack.c.l.b16 %v6647
        %v6744 = vunpack.c.l.b16 %v6648
        %v6745 = vunpack.c.l.b16 %v6649
        %v6746 = vunpack.c.l.b16 %v6650
        %v6747 = vunpack.c.l.b16 %v6651
        %v6748 = vunpack.c.l.b16 %v6652
        %v6749 = vunpack.c.l.b16 %v6653
        %v6750 = vunpack.c.l.b16 %v6654
        %v6751 = vunpack.c.l.b16 %v6655
        %v6752 = vunpack.c.l.b16 %v6656
        %v6753 = vunpack.c.l.b16 %v6657
        %v6754 = vunpack.c.l.b16 %v6658
        %v6755 = vunpack.c.l.b16 %v6659
        %v6756 = vunpack.c.l.b16 %v6660
        %v6757 = vunpack.c.l.b16 %v6661
        %v6758 = vunpack.c.l.b16 %v6662
        %v6759 = vunpack.c.l.b16 %v6663
        %v6760 = vunpack.c.l.b16 %v6664
        %v6761 = vunpack.c.l.b16 %v6665
        %v6762 = vunpack.c.l.b16 %v6666
        %v6763 = vunpack.c.l.b16 %v6667
        %v6764 = vpack.c.b16 %v6717, %v6716
        %v6765 = vpack.c.b16 %v6719, %v6718
        %v6766 = vpack.c.b16 %v6721, %v6720
        %v6767 = vpack.c.b16 %v6723, %v6722
        %v6768 = vpack.c.b16 %v6725, %v6724
        %v6769 = vpack.c.b16 %v6727, %v6726
        %v6770 = vpack.c.b16 %v6729, %v6728
        %v6771 = vpack.c.b16 %v6731, %v6730
        %v6772 = vpack.c.b16 %v6733, %v6732
        %v6773 = vpack.c.b16 %v6735, %v6734
        %v6774 = vpack.c.b16 %v6737, %v6736
        %v6775 = vpack.c.b16 %v6739, %v6738
        %v6776 = vpack.c.b16 %v6741, %v6740
        %v6777 = vpack.c.b16 %v6743, %v6742
        %v6778 = vpack.c.b16 %v6745, %v6744
        %v6779 = vpack.c.b16 %v6747, %v6746
        %v6780 = vpack.c.b16 %v6749, %v6748
        %v6781 = vpack.c.b16 %v6751, %v6750
        %v6782 = vpack.c.b16 %v6753, %v6752
        %v6783 = vpack.c.b16 %v6755, %v6754
        %v6784 = vpack.c.b16 %v6757, %v6756
        %v6785 = vpack.c.b16 %v6759, %v6758
        %v6786 = vpack.c.b16 %v6761, %v6760
        %v6787 = vpack.c.b16 %v6763, %v6762
        %6812 = vmatprep.subr.bf16.mxu0 0
        %6813 = vmatpush1.bf16.msra.mxu0 %v6771
        %6814 = vmatprep.subr.bf16.mxu0 0
        %6815 = vmatpush1.bf16.msra.mxu0 %v6770
        %6816 = vmatprep.subr.bf16.mxu0 0
        %6817 = vmatpush1.bf16.msra.mxu0 %v6769
        %6818 = vmatprep.subr.bf16.mxu0 0
        %6819 = vmatpush1.bf16.msra.mxu0 %v6768
        %6820 = vmatprep.subr.bf16.mxu0 0
        %6821 = vmatpush1.bf16.msra.mxu0 %v6767
        %6822 = vmatprep.subr.bf16.mxu0 0
        %6823 = vmatpush1.bf16.msra.mxu0 %v6766
        %6824 = vmatprep.subr.bf16.mxu0 0
        %6825 = vmatpush1.bf16.msra.mxu0 %v6765
        %6826 = vmatprep.subr.bf16.mxu0 0
        %6827 = vmatpush1.bf16.msra.mxu0 %v6764
        %6828 = vmatprep.subr.bf16.mxu0 0
        %6829 = vmatpush2.bf16.msra.mxu0 %v6779
        %6830 = vmatprep.subr.bf16.mxu0 0
        %6831 = vmatpush2.bf16.msra.mxu0 %v6778
        %6832 = vmatprep.subr.bf16.mxu0 0
        %6833 = vmatpush2.bf16.msra.mxu0 %v6777
        %6834 = vmatprep.subr.bf16.mxu0 0
        %6835 = vmatpush2.bf16.msra.mxu0 %v6776
        %6836 = vmatprep.subr.bf16.mxu0 0
        %6837 = vmatpush2.bf16.msra.mxu0 %v6775
        %6838 = vmatprep.subr.bf16.mxu0 0
        %6839 = vmatpush2.bf16.msra.mxu0 %v6774
        %6840 = vmatprep.subr.bf16.mxu0 0
        %6841 = vmatpush2.bf16.msra.mxu0 %v6773
        %6842 = vmatprep.subr.bf16.mxu0 0
        %6843 = vmatpush2.bf16.msra.mxu0 %v6772
        %6844 = vmatprep.mubr.bf16.mxu0 %v6326
        %6845 = vmatmul.mubr.bf16.gmra.mxu0 %v6235
        %v6846 = vpop.f32.mrf.mxu0
        %v6847 = vadd.f32 0.0, %v6846
        %v6848 = vpop.f32.mrf.mxu0
        %v6849 = vpop.f32.mrf.mxu0
        %v6850 = vadd.f32 0.0, %v6849
        %v6851 = vpop.f32.mrf.mxu0
        %6852 = vmatprep.mubr.bf16.mxu0 %v6338
        %6853 = vmatmul.mubr.bf16.gmra.mxu0 %v6236
        %v6854 = vpop.f32.mrf.mxu0
        %v6855 = vadd.f32 0.0, %v6854
        %v6856 = vpop.f32.mrf.mxu0
        %v6857 = vpop.f32.mrf.mxu0
        %v6858 = vadd.f32 0.0, %v6857
        %v6859 = vpop.f32.mrf.mxu0
        %6860 = vmatprep.mubr.bf16.mxu0 %v6350
        %6861 = vmatmul.mubr.bf16.gmra.mxu0 %v6237
        %v6862 = vpop.f32.mrf.mxu0
        %v6863 = vadd.f32 0.0, %v6862
        %v6864 = vpop.f32.mrf.mxu0
        %v6865 = vpop.f32.mrf.mxu0
        %v6866 = vadd.f32 0.0, %v6865
        %v6867 = vpop.f32.mrf.mxu0
        %6868 = vmatprep.mubr.bf16.mxu0 %v6362
        %6869 = vmatmul.mubr.bf16.gmra.mxu0 %v6238
        %v6870 = vpop.f32.mrf.mxu0
        %v6871 = vadd.f32 0.0, %v6870
        %v6872 = vpop.f32.mrf.mxu0
        %v6873 = vpop.f32.mrf.mxu0
        %v6874 = vadd.f32 0.0, %v6873
        %v6875 = vpop.f32.mrf.mxu0
        %6876 = vmatprep.mubr.bf16.mxu0 %v6374
        %6877 = vmatmul.mubr.bf16.gmra.mxu0 %v6239
        %v6878 = vpop.f32.mrf.mxu0
        %v6879 = vadd.f32 0.0, %v6878
        %v6880 = vpop.f32.mrf.mxu0
        %v6881 = vpop.f32.mrf.mxu0
        %v6882 = vadd.f32 0.0, %v6881
        %v6883 = vpop.f32.mrf.mxu0
        %6884 = vmatprep.mubr.bf16.mxu0 %v6386
        %6885 = vmatmul.mubr.bf16.gmra.mxu0 %v6240
        %v6886 = vpop.f32.mrf.mxu0
        %v6887 = vadd.f32 0.0, %v6886
        %v6888 = vpop.f32.mrf.mxu0
        %v6889 = vpop.f32.mrf.mxu0
        %v6890 = vadd.f32 0.0, %v6889
        %v6891 = vpop.f32.mrf.mxu0
        %6892 = vmatprep.mubr.bf16.mxu0 %v6398
        %6893 = vmatmul.mubr.bf16.gmra.mxu0 %v6241
        %v6894 = vpop.f32.mrf.mxu0
        %v6895 = vadd.f32 0.0, %v6894
        %v6896 = vpop.f32.mrf.mxu0
        %v6897 = vpop.f32.mrf.mxu0
        %v6898 = vadd.f32 0.0, %v6897
        %v6899 = vpop.f32.mrf.mxu0
        %6900 = vmatprep.mubr.bf16.mxu0 %v6410
        %6901 = vmatmul.mubr.bf16.gmra.mxu0 %v6242
        %v6902 = vpop.f32.mrf.mxu0
        %v6903 = vadd.f32 0.0, %v6902
        %v6904 = vpop.f32.mrf.mxu0
        %v6905 = vpop.f32.mrf.mxu0
        %v6906 = vadd.f32 0.0, %v6905
        %v6907 = vpop.f32.mrf.mxu0
        %6908 = vmatprep.mubr.bf16.mxu0 %v6422
        %6909 = vmatmul.mubr.bf16.gmra.mxu0 %v6243
        %v6910 = vpop.f32.mrf.mxu0
        %v6911 = vadd.f32 0.0, %v6910
        %v6912 = vpop.f32.mrf.mxu0
        %v6913 = vpop.f32.mrf.mxu0
        %v6914 = vadd.f32 0.0, %v6913
        %v6915 = vpop.f32.mrf.mxu0
        %6916 = vmatprep.mubr.bf16.mxu0 %v6434
        %6917 = vmatmul.mubr.bf16.gmra.mxu0 %v6244
        %v6918 = vpop.f32.mrf.mxu0
        %v6919 = vadd.f32 0.0, %v6918
        %v6920 = vpop.f32.mrf.mxu0
        %v6921 = vpop.f32.mrf.mxu0
        %v6922 = vadd.f32 0.0, %v6921
        %v6923 = vpop.f32.mrf.mxu0
        %6924 = vmatprep.mubr.bf16.mxu0 %v6446
        %6925 = vmatmul.mubr.bf16.gmra.mxu0 %v6245
        %v6926 = vpop.f32.mrf.mxu0
        %v6927 = vadd.f32 0.0, %v6926
        %v6928 = vpop.f32.mrf.mxu0
        %v6929 = vpop.f32.mrf.mxu0
        %v6930 = vadd.f32 0.0, %v6929
        %v6931 = vpop.f32.mrf.mxu0
        %6932 = vmatprep.mubr.bf16.mxu0 %v6458
        %6933 = vmatmul.mubr.bf16.gmra.mxu0 %v6246
        %v6934 = vpop.f32.mrf.mxu0
        %v6935 = vadd.f32 0.0, %v6934
        %v6936 = vpop.f32.mrf.mxu0
        %v6937 = vpop.f32.mrf.mxu0
        %v6938 = vadd.f32 0.0, %v6937
        %v6939 = vpop.f32.mrf.mxu0
        %6940 = vmatprep.mubr.bf16.mxu0 %v6470
        %6941 = vmatmul.mubr.bf16.gmra.mxu0 %v6247
        %v6942 = vpop.f32.mrf.mxu0
        %v6943 = vadd.f32 0.0, %v6942
        %v6944 = vpop.f32.mrf.mxu0
        %v6945 = vpop.f32.mrf.mxu0
        %v6946 = vadd.f32 0.0, %v6945
        %v6947 = vpop.f32.mrf.mxu0
        %6948 = vmatprep.mubr.bf16.mxu0 %v6482
        %6949 = vmatmul.mubr.bf16.gmra.mxu0 %v6248
        %v6950 = vpop.f32.mrf.mxu0
        %v6951 = vadd.f32 0.0, %v6950
        %v6952 = vpop.f32.mrf.mxu0
        %v6953 = vpop.f32.mrf.mxu0
        %v6954 = vadd.f32 0.0, %v6953
        %v6955 = vpop.f32.mrf.mxu0
        %6956 = vmatprep.mubr.bf16.mxu0 %v6494
        %6957 = vmatmul.mubr.bf16.gmra.mxu0 %v6249
        %v6958 = vpop.f32.mrf.mxu0
        %v6959 = vadd.f32 0.0, %v6958
        %v6960 = vpop.f32.mrf.mxu0
        %v6961 = vpop.f32.mrf.mxu0
        %v6962 = vadd.f32 0.0, %v6961
        %v6963 = vpop.f32.mrf.mxu0
        %6964 = vmatprep.mubr.bf16.mxu0 %v6506
        %6965 = vmatmul.mubr.bf16.gmra.mxu0 %v6250
        %v6966 = vpop.f32.mrf.mxu0
        %v6967 = vadd.f32 0.0, %v6966
        %v6968 = vpop.f32.mrf.mxu0
        %v6969 = vpop.f32.mrf.mxu0
        %v6970 = vadd.f32 0.0, %v6969
        %v6971 = vpop.f32.mrf.mxu0
        %6972 = vdwg.mxu0
        %6973 = vmatprep.subr.bf16.mxu0 0
        %6974 = vmatpush1.bf16.msra.mxu0 %v6787
        %6975 = vmatprep.subr.bf16.mxu0 0
        %6976 = vmatpush1.bf16.msra.mxu0 %v6786
        %6977 = vmatprep.subr.bf16.mxu0 0
        %6978 = vmatpush1.bf16.msra.mxu0 %v6785
        %6979 = vmatprep.subr.bf16.mxu0 0
        %6980 = vmatpush1.bf16.msra.mxu0 %v6784
        %6981 = vmatprep.subr.bf16.mxu0 0
        %6982 = vmatpush1.bf16.msra.mxu0 %v6783
        %6983 = vmatprep.subr.bf16.mxu0 0
        %6984 = vmatpush1.bf16.msra.mxu0 %v6782
        %6985 = vmatprep.subr.bf16.mxu0 0
        %6986 = vmatpush1.bf16.msra.mxu0 %v6781
        %6987 = vmatprep.subr.bf16.mxu0 0
        %6988 = vmatpush1.bf16.msra.mxu0 %v6780
        %6989 = vmatprep.subr.bf16.mxu0 0
        %6990 = vmatpush2.bf16.msra.mxu0 0
        %6991 = vmatprep.subr.bf16.mxu0 0
        %6992 = vmatpush2.bf16.msra.mxu0 0
        %6993 = vmatprep.subr.bf16.mxu0 0
        %6994 = vmatpush2.bf16.msra.mxu0 0
        %6995 = vmatprep.subr.bf16.mxu0 0
        %6996 = vmatpush2.bf16.msra.mxu0 0
        %6997 = vmatprep.subr.bf16.mxu0 0
        %6998 = vmatpush2.bf16.msra.mxu0 0
        %6999 = vmatprep.subr.bf16.mxu0 0
        %7000 = vmatpush2.bf16.msra.mxu0 0
        %7001 = vmatprep.subr.bf16.mxu0 0
        %7002 = vmatpush2.bf16.msra.mxu0 0
        %7003 = vmatprep.subr.bf16.mxu0 0
        %7004 = vmatpush2.bf16.msra.mxu0 0
        %7005 = vmatprep.mubr.bf16.mxu0 0
        %7006 = vmatmul.mubr.bf16.gmra.mxu0 %v6525
        %v7007 = vpop.f32.mrf.mxu0
        %v7008 = vadd.f32 %v6847, %v7007
        %v7009 = vpop.f32.mrf.mxu0
        %v7010 = vpop.f32.mrf.mxu0
        %v7011 = vadd.f32 %v6850, %v7010
        %v7012 = vpop.f32.mrf.mxu0
        %7013 = vmatprep.mubr.bf16.mxu0 0
        %7014 = vmatmul.mubr.bf16.gmra.mxu0 %v6528
        %v7015 = vpop.f32.mrf.mxu0
        %v7016 = vadd.f32 %v6855, %v7015
        %v7017 = vpop.f32.mrf.mxu0
        %v7018 = vpop.f32.mrf.mxu0
        %v7019 = vadd.f32 %v6858, %v7018
        %v7020 = vpop.f32.mrf.mxu0
        %7021 = vmatprep.mubr.bf16.mxu0 0
        %7022 = vmatmul.mubr.bf16.gmra.mxu0 %v6531
        %v7023 = vpop.f32.mrf.mxu0
        %v7024 = vadd.f32 %v6863, %v7023
        %v7025 = vpop.f32.mrf.mxu0
        %v7026 = vpop.f32.mrf.mxu0
        %v7027 = vadd.f32 %v6866, %v7026
        %v7028 = vpop.f32.mrf.mxu0
        %7029 = vmatprep.mubr.bf16.mxu0 0
        %7030 = vmatmul.mubr.bf16.gmra.mxu0 %v6534
        %v7031 = vpop.f32.mrf.mxu0
        %v7032 = vadd.f32 %v6871, %v7031
        %v7033 = vpop.f32.mrf.mxu0
        %v7034 = vpop.f32.mrf.mxu0
        %v7035 = vadd.f32 %v6874, %v7034
        %v7036 = vpop.f32.mrf.mxu0
        %7037 = vmatprep.mubr.bf16.mxu0 0
        %7038 = vmatmul.mubr.bf16.gmra.mxu0 %v6537
        %v7039 = vpop.f32.mrf.mxu0
        %v7040 = vadd.f32 %v6879, %v7039
        %v7041 = vpop.f32.mrf.mxu0
        %v7042 = vpop.f32.mrf.mxu0
        %v7043 = vadd.f32 %v6882, %v7042
        %v7044 = vpop.f32.mrf.mxu0
        %7045 = vmatprep.mubr.bf16.mxu0 0
        %7046 = vmatmul.mubr.bf16.gmra.mxu0 %v6540
        %v7047 = vpop.f32.mrf.mxu0
        %v7048 = vadd.f32 %v6887, %v7047
        %v7049 = vpop.f32.mrf.mxu0
        %v7050 = vpop.f32.mrf.mxu0
        %v7051 = vadd.f32 %v6890, %v7050
        %v7052 = vpop.f32.mrf.mxu0
        %7053 = vmatprep.mubr.bf16.mxu0 0
        %7054 = vmatmul.mubr.bf16.gmra.mxu0 %v6543
        %v7055 = vpop.f32.mrf.mxu0
        %v7056 = vadd.f32 %v6895, %v7055
        %v7057 = vpop.f32.mrf.mxu0
        %v7058 = vpop.f32.mrf.mxu0
        %v7059 = vadd.f32 %v6898, %v7058
        %v7060 = vpop.f32.mrf.mxu0
        %7061 = vmatprep.mubr.bf16.mxu0 0
        %7062 = vmatmul.mubr.bf16.gmra.mxu0 %v6546
        %v7063 = vpop.f32.mrf.mxu0
        %v7064 = vadd.f32 %v6903, %v7063
        %v7065 = vpop.f32.mrf.mxu0
        %v7066 = vpop.f32.mrf.mxu0
        %v7067 = vadd.f32 %v6906, %v7066
        %v7068 = vpop.f32.mrf.mxu0
        %7069 = vmatprep.mubr.bf16.mxu0 0
        %7070 = vmatmul.mubr.bf16.gmra.mxu0 %v6549
        %v7071 = vpop.f32.mrf.mxu0
        %v7072 = vadd.f32 %v6911, %v7071
        %v7073 = vpop.f32.mrf.mxu0
        %v7074 = vpop.f32.mrf.mxu0
        %v7075 = vadd.f32 %v6914, %v7074
        %v7076 = vpop.f32.mrf.mxu0
        %7077 = vmatprep.mubr.bf16.mxu0 0
        %7078 = vmatmul.mubr.bf16.gmra.mxu0 %v6552
        %v7079 = vpop.f32.mrf.mxu0
        %v7080 = vadd.f32 %v6919, %v7079
        %v7081 = vpop.f32.mrf.mxu0
        %v7082 = vpop.f32.mrf.mxu0
        %v7083 = vadd.f32 %v6922, %v7082
        %v7084 = vpop.f32.mrf.mxu0
        %7085 = vmatprep.mubr.bf16.mxu0 0
        %7086 = vmatmul.mubr.bf16.gmra.mxu0 %v6555
        %v7087 = vpop.f32.mrf.mxu0
        %v7088 = vadd.f32 %v6927, %v7087
        %v7089 = vpop.f32.mrf.mxu0
        %v7090 = vpop.f32.mrf.mxu0
        %v7091 = vadd.f32 %v6930, %v7090
        %v7092 = vpop.f32.mrf.mxu0
        %7093 = vmatprep.mubr.bf16.mxu0 0
        %7094 = vmatmul.mubr.bf16.gmra.mxu0 %v6558
        %v7095 = vpop.f32.mrf.mxu0
        %v7096 = vadd.f32 %v6935, %v7095
        %v7097 = vpop.f32.mrf.mxu0
        %v7098 = vpop.f32.mrf.mxu0
        %v7099 = vadd.f32 %v6938, %v7098
        %v7100 = vpop.f32.mrf.mxu0
        %7101 = vmatprep.mubr.bf16.mxu0 0
        %7102 = vmatmul.mubr.bf16.gmra.mxu0 %v6561
        %v7103 = vpop.f32.mrf.mxu0
        %v7104 = vadd.f32 %v6943, %v7103
        %v7105 = vpop.f32.mrf.mxu0
        %v7106 = vpop.f32.mrf.mxu0
        %v7107 = vadd.f32 %v6946, %v7106
        %v7108 = vpop.f32.mrf.mxu0
        %7109 = vmatprep.mubr.bf16.mxu0 0
        %7110 = vmatmul.mubr.bf16.gmra.mxu0 %v6564
        %v7111 = vpop.f32.mrf.mxu0
        %v7112 = vadd.f32 %v6951, %v7111
        %v7113 = vpop.f32.mrf.mxu0
        %v7114 = vpop.f32.mrf.mxu0
        %v7115 = vadd.f32 %v6954, %v7114
        %v7116 = vpop.f32.mrf.mxu0
        %7117 = vmatprep.mubr.bf16.mxu0 0
        %7118 = vmatmul.mubr.bf16.gmra.mxu0 %v6567
        %v7119 = vpop.f32.mrf.mxu0
        %v7120 = vadd.f32 %v6959, %v7119
        %v7121 = vpop.f32.mrf.mxu0
        %v7122 = vpop.f32.mrf.mxu0
        %v7123 = vadd.f32 %v6962, %v7122
        %v7124 = vpop.f32.mrf.mxu0
        %7125 = vmatprep.mubr.bf16.mxu0 0
        %7126 = vmatmul.mubr.bf16.gmra.mxu0 %v6570
        %v7127 = vpop.f32.mrf.mxu0
        %v7128 = vadd.f32 %v6967, %v7127
        %v7129 = vpop.f32.mrf.mxu0
        %v7130 = vpop.f32.mrf.mxu0
        %v7131 = vadd.f32 %v6970, %v7130
        %v7132 = vpop.f32.mrf.mxu0
        %7133 = vdwg.mxu0
        %v7134 = vadd.f32 %v6587, %v7008
        %v7135 = vadd.f32 %v6588, %v7011
        %v7136 = vadd.f32 %v6589, %v7016
        %v7137 = vadd.f32 %v6590, %v7019
        %v7138 = vadd.f32 %v6591, %v7024
        %v7139 = vadd.f32 %v6592, %v7027
        %v7140 = vadd.f32 %v6593, %v7032
        %v7141 = vadd.f32 %v6594, %v7035
        %v7142 = vadd.f32 %v6595, %v7040
        %v7143 = vadd.f32 %v6596, %v7043
        %v7144 = vadd.f32 %v6597, %v7048
        %v7145 = vadd.f32 %v6598, %v7051
        %v7146 = vadd.f32 %v6599, %v7056
        %v7147 = vadd.f32 %v6600, %v7059
        %v7148 = vadd.f32 %v6601, %v7064
        %v7149 = vadd.f32 %v6602, %v7067
        %v7150 = vadd.f32 %v6603, %v7072
        %v7151 = vadd.f32 %v6604, %v7075
        %v7152 = vadd.f32 %v6605, %v7080
        %v7153 = vadd.f32 %v6606, %v7083
        %v7154 = vadd.f32 %v6607, %v7088
        %v7155 = vadd.f32 %v6608, %v7091
        %v7156 = vadd.f32 %v6609, %v7096
        %v7157 = vadd.f32 %v6610, %v7099
        %v7158 = vadd.f32 %v6611, %v7104
        %v7159 = vadd.f32 %v6612, %v7107
        %v7160 = vadd.f32 %v6613, %v7112
        %v7161 = vadd.f32 %v6614, %v7115
        %v7162 = vadd.f32 %v6615, %v7120
        %v7163 = vadd.f32 %v6616, %v7123
        %v7164 = vadd.f32 %v6617, %v7128
        %v7165 = vadd.f32 %v6618, %v7131
        %7166 = vst [vmem:[#allocation2] sm:$0xff] %v7134
        %7167 = vst [vmem:[#allocation2 + $0x8] sm:$0xff] %v7135
        %7168 = vst [vmem:[#allocation2 + $0x10] sm:$0xff] %v7136
        %7169 = vst [vmem:[#allocation2 + $0x18] sm:$0xff] %v7137
        %7170 = vst [vmem:[#allocation2 + $0x20] sm:$0xff] %v7138
        %7171 = vst [vmem:[#allocation2 + $0x28] sm:$0xff] %v7139
        %7172 = vst [vmem:[#allocation2 + $0x30] sm:$0xff] %v7140
        %7173 = vst [vmem:[#allocation2 + $0x38] sm:$0xff] %v7141
        %7174 = vst [vmem:[#allocation2 + $0x40] sm:$0xff] %v7142
        %7175 = vst [vmem:[#allocation2 + $0x48] sm:$0xff] %v7143
        %7176 = vst [vmem:[#allocation2 + $0x50] sm:$0xff] %v7144
        %7177 = vst [vmem:[#allocation2 + $0x58] sm:$0xff] %v7145
        %7178 = vst [vmem:[#allocation2 + $0x60] sm:$0xff] %v7146
        %7179 = vst [vmem:[#allocation2 + $0x68] sm:$0xff] %v7147
        %7180 = vst [vmem:[#allocation2 + $0x70] sm:$0xff] %v7148
        %7181 = vst [vmem:[#allocation2 + $0x78] sm:$0xff] %v7149
        %7182 = vst [vmem:[#allocation2 + $0x80] sm:$0xff] %v7150
        %7183 = vst [vmem:[#allocation2 + $0x88] sm:$0xff] %v7151
        %7184 = vst [vmem:[#allocation2 + $0x90] sm:$0xff] %v7152
        %7185 = vst [vmem:[#allocation2 + $0x98] sm:$0xff] %v7153
        %7186 = vst [vmem:[#allocation2 + $0xa0] sm:$0xff] %v7154
        %7187 = vst [vmem:[#allocation2 + $0xa8] sm:$0xff] %v7155
        %7188 = vst [vmem:[#allocation2 + $0xb0] sm:$0xff] %v7156
        %7189 = vst [vmem:[#allocation2 + $0xb8] sm:$0xff] %v7157
        %7190 = vst [vmem:[#allocation2 + $0xc0] sm:$0xff] %v7158
        %7191 = vst [vmem:[#allocation2 + $0xc8] sm:$0xff] %v7159
        %7192 = vst [vmem:[#allocation2 + $0xd0] sm:$0xff] %v7160
        %7193 = vst [vmem:[#allocation2 + $0xd8] sm:$0xff] %v7161
        %7194 = vst [vmem:[#allocation2 + $0xe0] sm:$0xff] %v7162
        %7195 = vst [vmem:[#allocation2 + $0xe8] sm:$0xff] %v7163
        %7196 = vst [vmem:[#allocation2 + $0xf0] sm:$0xff] %v7164
        %7197 = vst [vmem:[#allocation2 + $0xf8] sm:$0xff] %v7165
        %s7198 = scalar_lea.vmem [#allocation3], 24
        %v7199 = vld [vmem:[%s7198] sm:$0xf]
        %v7200 = vld [vmem:[%s7198 + $0x4] sm:$0xf]
        %v7201 = vld [vmem:[%s7198 + $0x8] sm:$0xf]
        %v7202 = vld [vmem:[%s7198 + $0xc] sm:$0xf]
        %v7203 = vld [vmem:[%s7198 + $0x10] sm:$0xf]
        %v7204 = vld [vmem:[%s7198 + $0x14] sm:$0xf]
        %v7205 = vld [vmem:[%s7198 + $0x18] sm:$0xf]
        %v7206 = vld [vmem:[%s7198 + $0x1c] sm:$0xf]
        %v7207 = vld [vmem:[%s7198 + $0x20] sm:$0xf]
        %v7208 = vld [vmem:[%s7198 + $0x24] sm:$0xf]
        %v7209 = vld [vmem:[%s7198 + $0x28] sm:$0xf]
        %v7210 = vld [vmem:[%s7198 + $0x2c] sm:$0xf]
        %v7211 = vld [vmem:[%s7198 + $0x30] sm:$0xf]
        %v7212 = vld [vmem:[%s7198 + $0x34] sm:$0xf]
        %v7213 = vld [vmem:[%s7198 + $0x38] sm:$0xf]
        %v7214 = vld [vmem:[%s7198 + $0x3c] sm:$0xf]
        %v7215 = vld [vmem:[%s7198 + $0x40] sm:$0xf]
        %v7216 = vld [vmem:[%s7198 + $0x44] sm:$0xf]
        %v7217 = vld [vmem:[%s7198 + $0x48] sm:$0xf]
        %v7218 = vld [vmem:[%s7198 + $0x4c] sm:$0xf]
        %v7219 = vld [vmem:[%s7198 + $0x50] sm:$0xf]
        %v7220 = vld [vmem:[%s7198 + $0x54] sm:$0xf]
        %v7221 = vld [vmem:[%s7198 + $0x58] sm:$0xf]
        %v7222 = vld [vmem:[%s7198 + $0x5c] sm:$0xf]
        %v7223 = vld [vmem:[%s7198 + $0x60] sm:$0xf]
        %v7224 = vld [vmem:[%s7198 + $0x64] sm:$0xf]
        %v7225 = vld [vmem:[%s7198 + $0x68] sm:$0xf]
        %v7226 = vld [vmem:[%s7198 + $0x6c] sm:$0xf]
        %v7227 = vld [vmem:[%s7198 + $0x70] sm:$0xf]
        %v7228 = vld [vmem:[%s7198 + $0x74] sm:$0xf]
        %v7229 = vld [vmem:[%s7198 + $0x78] sm:$0xf]
        %v7230 = vld [vmem:[%s7198 + $0x7c] sm:$0xf]
        %v7231 = vld [vmem:[%s7198 + $0x80] sm:$0xf]
        %v7232 = vld [vmem:[%s7198 + $0x84] sm:$0xf]
        %v7233 = vld [vmem:[%s7198 + $0x88] sm:$0xf]
        %v7234 = vld [vmem:[%s7198 + $0x8c] sm:$0xf]
        %v7235 = vld [vmem:[%s7198 + $0x90] sm:$0xf]
        %v7236 = vld [vmem:[%s7198 + $0x94] sm:$0xf]
        %v7237 = vld [vmem:[%s7198 + $0x98] sm:$0xf]
        %v7238 = vld [vmem:[%s7198 + $0x9c] sm:$0xf]
        %v7239 = vld [vmem:[%s7198 + $0xa0] sm:$0xf]
        %v7240 = vld [vmem:[%s7198 + $0xa4] sm:$0xf]
        %v7241 = vld [vmem:[%s7198 + $0xa8] sm:$0xf]
        %v7242 = vld [vmem:[%s7198 + $0xac] sm:$0xf]
        %v7243 = vld [vmem:[%s7198 + $0xb0] sm:$0xf]
        %v7244 = vld [vmem:[%s7198 + $0xb4] sm:$0xf]
        %v7245 = vld [vmem:[%s7198 + $0xb8] sm:$0xf]
        %v7246 = vld [vmem:[%s7198 + $0xbc] sm:$0xf]
        %v7279 = vunpack.c.l.b16 %v7199
        %v7280 = vunpack.c.l.b16 %v7200
        %v7281 = vunpack.c.l.b16 %v7202
        %v7282 = vunpack.c.l.b16 %v7203
        %v7283 = vunpack.c.l.b16 %v7205
        %v7284 = vunpack.c.l.b16 %v7206
        %v7285 = vunpack.c.l.b16 %v7208
        %v7286 = vunpack.c.l.b16 %v7209
        %v7287 = vunpack.c.l.b16 %v7211
        %v7288 = vunpack.c.l.b16 %v7212
        %v7289 = vunpack.c.l.b16 %v7214
        %v7290 = vunpack.c.l.b16 %v7215
        %v7291 = vunpack.c.l.b16 %v7217
        %v7292 = vunpack.c.l.b16 %v7218
        %v7293 = vunpack.c.l.b16 %v7220
        %v7294 = vunpack.c.l.b16 %v7221
        %v7295 = vunpack.c.l.b16 %v7223
        %v7296 = vunpack.c.l.b16 %v7224
        %v7297 = vunpack.c.l.b16 %v7226
        %v7298 = vunpack.c.l.b16 %v7227
        %v7299 = vunpack.c.l.b16 %v7229
        %v7300 = vunpack.c.l.b16 %v7230
        %v7301 = vunpack.c.l.b16 %v7232
        %v7302 = vunpack.c.l.b16 %v7233
        %v7303 = vunpack.c.l.b16 %v7235
        %v7304 = vunpack.c.l.b16 %v7236
        %v7305 = vunpack.c.l.b16 %v7238
        %v7306 = vunpack.c.l.b16 %v7239
        %v7307 = vunpack.c.l.b16 %v7241
        %v7308 = vunpack.c.l.b16 %v7242
        %v7309 = vunpack.c.l.b16 %v7244
        %v7310 = vunpack.c.l.b16 %v7245
        %v7311 = vpack.c.b16 %v7280, %v7279
        %v7312 = vpack.c.b16 %v7282, %v7281
        %v7313 = vpack.c.b16 %v7284, %v7283
        %v7314 = vpack.c.b16 %v7286, %v7285
        %v7315 = vpack.c.b16 %v7288, %v7287
        %v7316 = vpack.c.b16 %v7290, %v7289
        %v7317 = vpack.c.b16 %v7292, %v7291
        %v7318 = vpack.c.b16 %v7294, %v7293
        %v7319 = vpack.c.b16 %v7296, %v7295
        %v7320 = vpack.c.b16 %v7298, %v7297
        %v7321 = vpack.c.b16 %v7300, %v7299
        %v7322 = vpack.c.b16 %v7302, %v7301
        %v7323 = vpack.c.b16 %v7304, %v7303
        %v7324 = vpack.c.b16 %v7306, %v7305
        %v7325 = vpack.c.b16 %v7308, %v7307
        %v7326 = vpack.c.b16 %v7310, %v7309
        %v7359 = vunpack.c.l.b16 %v7201
        %v7360 = vunpack.c.l.b16 %v7204
        %v7361 = vunpack.c.l.b16 %v7207
        %v7362 = vunpack.c.l.b16 %v7210
        %v7363 = vunpack.c.l.b16 %v7213
        %v7364 = vunpack.c.l.b16 %v7216
        %v7365 = vunpack.c.l.b16 %v7219
        %v7366 = vunpack.c.l.b16 %v7222
        %v7367 = vunpack.c.l.b16 %v7225
        %v7368 = vunpack.c.l.b16 %v7228
        %v7369 = vunpack.c.l.b16 %v7231
        %v7370 = vunpack.c.l.b16 %v7234
        %v7371 = vunpack.c.l.b16 %v7237
        %v7372 = vunpack.c.l.b16 %v7240
        %v7373 = vunpack.c.l.b16 %v7243
        %v7374 = vunpack.c.l.b16 %v7246
        %v7375 = vpack.c.b16 %v7359, %v7359
        %v7376 = vpack.c.b16 %v7360, %v7360
        %v7377 = vpack.c.b16 %v7361, %v7361
        %v7378 = vpack.c.b16 %v7362, %v7362
        %v7379 = vpack.c.b16 %v7363, %v7363
        %v7380 = vpack.c.b16 %v7364, %v7364
        %v7381 = vpack.c.b16 %v7365, %v7365
        %v7382 = vpack.c.b16 %v7366, %v7366
        %v7383 = vpack.c.b16 %v7367, %v7367
        %v7384 = vpack.c.b16 %v7368, %v7368
        %v7385 = vpack.c.b16 %v7369, %v7369
        %v7386 = vpack.c.b16 %v7370, %v7370
        %v7387 = vpack.c.b16 %v7371, %v7371
        %v7388 = vpack.c.b16 %v7372, %v7372
        %v7389 = vpack.c.b16 %v7373, %v7373
        %v7390 = vpack.c.b16 %v7374, %v7374
        %v7392 = vshrl.u32 %v7311, 16
        %v7394 = vshll.u32 %v7311, 16
        %v7396 = vrot.slane %v7394, 1
        %v7397 = vor.u32 %v7392, %v7396
        %v7399 = vshll.u32 %v7375, 16
        %v7401 = vrot.slane %v7399, 1
        %v7402 = vsel %vm546, %v7397, %v7401
        %v7404 = vshrl.u32 %v7312, 16
        %v7406 = vshll.u32 %v7312, 16
        %v7408 = vrot.slane %v7406, 1
        %v7409 = vor.u32 %v7404, %v7408
        %v7411 = vshll.u32 %v7376, 16
        %v7413 = vrot.slane %v7411, 1
        %v7414 = vsel %vm546, %v7409, %v7413
        %v7416 = vshrl.u32 %v7313, 16
        %v7418 = vshll.u32 %v7313, 16
        %v7420 = vrot.slane %v7418, 1
        %v7421 = vor.u32 %v7416, %v7420
        %v7423 = vshll.u32 %v7377, 16
        %v7425 = vrot.slane %v7423, 1
        %v7426 = vsel %vm546, %v7421, %v7425
        %v7428 = vshrl.u32 %v7314, 16
        %v7430 = vshll.u32 %v7314, 16
        %v7432 = vrot.slane %v7430, 1
        %v7433 = vor.u32 %v7428, %v7432
        %v7435 = vshll.u32 %v7378, 16
        %v7437 = vrot.slane %v7435, 1
        %v7438 = vsel %vm546, %v7433, %v7437
        %v7440 = vshrl.u32 %v7315, 16
        %v7442 = vshll.u32 %v7315, 16
        %v7444 = vrot.slane %v7442, 1
        %v7445 = vor.u32 %v7440, %v7444
        %v7447 = vshll.u32 %v7379, 16
        %v7449 = vrot.slane %v7447, 1
        %v7450 = vsel %vm546, %v7445, %v7449
        %v7452 = vshrl.u32 %v7316, 16
        %v7454 = vshll.u32 %v7316, 16
        %v7456 = vrot.slane %v7454, 1
        %v7457 = vor.u32 %v7452, %v7456
        %v7459 = vshll.u32 %v7380, 16
        %v7461 = vrot.slane %v7459, 1
        %v7462 = vsel %vm546, %v7457, %v7461
        %v7464 = vshrl.u32 %v7317, 16
        %v7466 = vshll.u32 %v7317, 16
        %v7468 = vrot.slane %v7466, 1
        %v7469 = vor.u32 %v7464, %v7468
        %v7471 = vshll.u32 %v7381, 16
        %v7473 = vrot.slane %v7471, 1
        %v7474 = vsel %vm546, %v7469, %v7473
        %v7476 = vshrl.u32 %v7318, 16
        %v7478 = vshll.u32 %v7318, 16
        %v7480 = vrot.slane %v7478, 1
        %v7481 = vor.u32 %v7476, %v7480
        %v7483 = vshll.u32 %v7382, 16
        %v7485 = vrot.slane %v7483, 1
        %v7486 = vsel %vm546, %v7481, %v7485
        %v7488 = vshrl.u32 %v7319, 16
        %v7490 = vshll.u32 %v7319, 16
        %v7492 = vrot.slane %v7490, 1
        %v7493 = vor.u32 %v7488, %v7492
        %v7495 = vshll.u32 %v7383, 16
        %v7497 = vrot.slane %v7495, 1
        %v7498 = vsel %vm546, %v7493, %v7497
        %v7500 = vshrl.u32 %v7320, 16
        %v7502 = vshll.u32 %v7320, 16
        %v7504 = vrot.slane %v7502, 1
        %v7505 = vor.u32 %v7500, %v7504
        %v7507 = vshll.u32 %v7384, 16
        %v7509 = vrot.slane %v7507, 1
        %v7510 = vsel %vm546, %v7505, %v7509
        %v7512 = vshrl.u32 %v7321, 16
        %v7514 = vshll.u32 %v7321, 16
        %v7516 = vrot.slane %v7514, 1
        %v7517 = vor.u32 %v7512, %v7516
        %v7519 = vshll.u32 %v7385, 16
        %v7521 = vrot.slane %v7519, 1
        %v7522 = vsel %vm546, %v7517, %v7521
        %v7524 = vshrl.u32 %v7322, 16
        %v7526 = vshll.u32 %v7322, 16
        %v7528 = vrot.slane %v7526, 1
        %v7529 = vor.u32 %v7524, %v7528
        %v7531 = vshll.u32 %v7386, 16
        %v7533 = vrot.slane %v7531, 1
        %v7534 = vsel %vm546, %v7529, %v7533
        %v7536 = vshrl.u32 %v7323, 16
        %v7538 = vshll.u32 %v7323, 16
        %v7540 = vrot.slane %v7538, 1
        %v7541 = vor.u32 %v7536, %v7540
        %v7543 = vshll.u32 %v7387, 16
        %v7545 = vrot.slane %v7543, 1
        %v7546 = vsel %vm546, %v7541, %v7545
        %v7548 = vshrl.u32 %v7324, 16
        %v7550 = vshll.u32 %v7324, 16
        %v7552 = vrot.slane %v7550, 1
        %v7553 = vor.u32 %v7548, %v7552
        %v7555 = vshll.u32 %v7388, 16
        %v7557 = vrot.slane %v7555, 1
        %v7558 = vsel %vm546, %v7553, %v7557
        %v7560 = vshrl.u32 %v7325, 16
        %v7562 = vshll.u32 %v7325, 16
        %v7564 = vrot.slane %v7562, 1
        %v7565 = vor.u32 %v7560, %v7564
        %v7567 = vshll.u32 %v7389, 16
        %v7569 = vrot.slane %v7567, 1
        %v7570 = vsel %vm546, %v7565, %v7569
        %v7572 = vshrl.u32 %v7326, 16
        %v7574 = vshll.u32 %v7326, 16
        %v7576 = vrot.slane %v7574, 1
        %v7577 = vor.u32 %v7572, %v7576
        %v7579 = vshll.u32 %v7390, 16
        %v7581 = vrot.slane %v7579, 1
        %v7582 = vsel %vm546, %v7577, %v7581
        %v7599 = vrot.slane %v7311, 1
        %v7600 = vrot.slane %v7375, 1
        %v7601 = vsel %vm755, %v7599, %v7600
        %v7602 = vrot.slane %v7312, 1
        %v7603 = vrot.slane %v7376, 1
        %v7604 = vsel %vm755, %v7602, %v7603
        %v7605 = vrot.slane %v7313, 1
        %v7606 = vrot.slane %v7377, 1
        %v7607 = vsel %vm755, %v7605, %v7606
        %v7608 = vrot.slane %v7314, 1
        %v7609 = vrot.slane %v7378, 1
        %v7610 = vsel %vm755, %v7608, %v7609
        %v7611 = vrot.slane %v7315, 1
        %v7612 = vrot.slane %v7379, 1
        %v7613 = vsel %vm755, %v7611, %v7612
        %v7614 = vrot.slane %v7316, 1
        %v7615 = vrot.slane %v7380, 1
        %v7616 = vsel %vm755, %v7614, %v7615
        %v7617 = vrot.slane %v7317, 1
        %v7618 = vrot.slane %v7381, 1
        %v7619 = vsel %vm755, %v7617, %v7618
        %v7620 = vrot.slane %v7318, 1
        %v7621 = vrot.slane %v7382, 1
        %v7622 = vsel %vm755, %v7620, %v7621
        %v7623 = vrot.slane %v7319, 1
        %v7624 = vrot.slane %v7383, 1
        %v7625 = vsel %vm755, %v7623, %v7624
        %v7626 = vrot.slane %v7320, 1
        %v7627 = vrot.slane %v7384, 1
        %v7628 = vsel %vm755, %v7626, %v7627
        %v7629 = vrot.slane %v7321, 1
        %v7630 = vrot.slane %v7385, 1
        %v7631 = vsel %vm755, %v7629, %v7630
        %v7632 = vrot.slane %v7322, 1
        %v7633 = vrot.slane %v7386, 1
        %v7634 = vsel %vm755, %v7632, %v7633
        %v7635 = vrot.slane %v7323, 1
        %v7636 = vrot.slane %v7387, 1
        %v7637 = vsel %vm755, %v7635, %v7636
        %v7638 = vrot.slane %v7324, 1
        %v7639 = vrot.slane %v7388, 1
        %v7640 = vsel %vm755, %v7638, %v7639
        %v7641 = vrot.slane %v7325, 1
        %v7642 = vrot.slane %v7389, 1
        %v7643 = vsel %vm755, %v7641, %v7642
        %v7644 = vrot.slane %v7326, 1
        %v7645 = vrot.slane %v7390, 1
        %v7646 = vsel %vm755, %v7644, %v7645
        %v7663 = vld [vmem:[#allocation2] sm:$0xff]
        %v7664 = vld [vmem:[#allocation2 + $0x8] sm:$0xff]
        %v7665 = vld [vmem:[#allocation2 + $0x10] sm:$0xff]
        %v7666 = vld [vmem:[#allocation2 + $0x18] sm:$0xff]
        %v7667 = vld [vmem:[#allocation2 + $0x20] sm:$0xff]
        %v7668 = vld [vmem:[#allocation2 + $0x28] sm:$0xff]
        %v7669 = vld [vmem:[#allocation2 + $0x30] sm:$0xff]
        %v7670 = vld [vmem:[#allocation2 + $0x38] sm:$0xff]
        %v7671 = vld [vmem:[#allocation2 + $0x40] sm:$0xff]
        %v7672 = vld [vmem:[#allocation2 + $0x48] sm:$0xff]
        %v7673 = vld [vmem:[#allocation2 + $0x50] sm:$0xff]
        %v7674 = vld [vmem:[#allocation2 + $0x58] sm:$0xff]
        %v7675 = vld [vmem:[#allocation2 + $0x60] sm:$0xff]
        %v7676 = vld [vmem:[#allocation2 + $0x68] sm:$0xff]
        %v7677 = vld [vmem:[#allocation2 + $0x70] sm:$0xff]
        %v7678 = vld [vmem:[#allocation2 + $0x78] sm:$0xff]
        %v7679 = vld [vmem:[#allocation2 + $0x80] sm:$0xff]
        %v7680 = vld [vmem:[#allocation2 + $0x88] sm:$0xff]
        %v7681 = vld [vmem:[#allocation2 + $0x90] sm:$0xff]
        %v7682 = vld [vmem:[#allocation2 + $0x98] sm:$0xff]
        %v7683 = vld [vmem:[#allocation2 + $0xa0] sm:$0xff]
        %v7684 = vld [vmem:[#allocation2 + $0xa8] sm:$0xff]
        %v7685 = vld [vmem:[#allocation2 + $0xb0] sm:$0xff]
        %v7686 = vld [vmem:[#allocation2 + $0xb8] sm:$0xff]
        %v7687 = vld [vmem:[#allocation2 + $0xc0] sm:$0xff]
        %v7688 = vld [vmem:[#allocation2 + $0xc8] sm:$0xff]
        %v7689 = vld [vmem:[#allocation2 + $0xd0] sm:$0xff]
        %v7690 = vld [vmem:[#allocation2 + $0xd8] sm:$0xff]
        %v7691 = vld [vmem:[#allocation2 + $0xe0] sm:$0xff]
        %v7692 = vld [vmem:[#allocation2 + $0xe8] sm:$0xff]
        %v7693 = vld [vmem:[#allocation2 + $0xf0] sm:$0xff]
        %v7694 = vld [vmem:[#allocation2 + $0xf8] sm:$0xff]
        %s7695 = scalar_lea.vmem [#allocation9], 384
        %v7696 = vld [vmem:[%s7695] sm:$0xf]
        %v7697 = vld [vmem:[%s7695 + $0x4] sm:$0xf]
        %v7698 = vld [vmem:[%s7695 + $0x8] sm:$0xf]
        %v7699 = vld [vmem:[%s7695 + $0xc] sm:$0xf]
        %v7700 = vld [vmem:[%s7695 + $0x10] sm:$0xf]
        %v7701 = vld [vmem:[%s7695 + $0x14] sm:$0xf]
        %v7702 = vld [vmem:[%s7695 + $0x18] sm:$0xf]
        %v7703 = vld [vmem:[%s7695 + $0x1c] sm:$0xf]
        %v7704 = vld [vmem:[%s7695 + $0x20] sm:$0xf]
        %v7705 = vld [vmem:[%s7695 + $0x24] sm:$0xf]
        %v7706 = vld [vmem:[%s7695 + $0x28] sm:$0xf]
        %v7707 = vld [vmem:[%s7695 + $0x2c] sm:$0xf]
        %v7708 = vld [vmem:[%s7695 + $0x30] sm:$0xf]
        %v7709 = vld [vmem:[%s7695 + $0x34] sm:$0xf]
        %v7710 = vld [vmem:[%s7695 + $0x38] sm:$0xf]
        %v7711 = vld [vmem:[%s7695 + $0x3c] sm:$0xf]
        %v7712 = vld [vmem:[%s7695 + $0x40] sm:$0xf]
        %v7713 = vld [vmem:[%s7695 + $0x44] sm:$0xf]
        %v7714 = vld [vmem:[%s7695 + $0x48] sm:$0xf]
        %v7715 = vld [vmem:[%s7695 + $0x4c] sm:$0xf]
        %v7716 = vld [vmem:[%s7695 + $0x50] sm:$0xf]
        %v7717 = vld [vmem:[%s7695 + $0x54] sm:$0xf]
        %v7718 = vld [vmem:[%s7695 + $0x58] sm:$0xf]
        %v7719 = vld [vmem:[%s7695 + $0x5c] sm:$0xf]
        %v7720 = vld [vmem:[%s7695 + $0x60] sm:$0xf]
        %v7721 = vld [vmem:[%s7695 + $0x64] sm:$0xf]
        %v7722 = vld [vmem:[%s7695 + $0x68] sm:$0xf]
        %v7723 = vld [vmem:[%s7695 + $0x6c] sm:$0xf]
        %v7724 = vld [vmem:[%s7695 + $0x70] sm:$0xf]
        %v7725 = vld [vmem:[%s7695 + $0x74] sm:$0xf]
        %v7726 = vld [vmem:[%s7695 + $0x78] sm:$0xf]
        %v7727 = vld [vmem:[%s7695 + $0x7c] sm:$0xf]
        %v7728 = vld [vmem:[%s7695 + $0x80] sm:$0xf]
        %v7729 = vld [vmem:[%s7695 + $0x84] sm:$0xf]
        %v7730 = vld [vmem:[%s7695 + $0x88] sm:$0xf]
        %v7731 = vld [vmem:[%s7695 + $0x8c] sm:$0xf]
        %v7732 = vld [vmem:[%s7695 + $0x90] sm:$0xf]
        %v7733 = vld [vmem:[%s7695 + $0x94] sm:$0xf]
        %v7734 = vld [vmem:[%s7695 + $0x98] sm:$0xf]
        %v7735 = vld [vmem:[%s7695 + $0x9c] sm:$0xf]
        %v7736 = vld [vmem:[%s7695 + $0xa0] sm:$0xf]
        %v7737 = vld [vmem:[%s7695 + $0xa4] sm:$0xf]
        %v7738 = vld [vmem:[%s7695 + $0xa8] sm:$0xf]
        %v7739 = vld [vmem:[%s7695 + $0xac] sm:$0xf]
        %v7740 = vld [vmem:[%s7695 + $0xb0] sm:$0xf]
        %v7741 = vld [vmem:[%s7695 + $0xb4] sm:$0xf]
        %v7742 = vld [vmem:[%s7695 + $0xb8] sm:$0xf]
        %v7743 = vld [vmem:[%s7695 + $0xbc] sm:$0xf]
        %v7792 = vunpack.c.l.b16 %v7696
        %v7793 = vunpack.c.l.b16 %v7697
        %v7794 = vunpack.c.l.b16 %v7698
        %v7795 = vunpack.c.l.b16 %v7699
        %v7796 = vunpack.c.l.b16 %v7700
        %v7797 = vunpack.c.l.b16 %v7701
        %v7798 = vunpack.c.l.b16 %v7702
        %v7799 = vunpack.c.l.b16 %v7703
        %v7800 = vunpack.c.l.b16 %v7704
        %v7801 = vunpack.c.l.b16 %v7705
        %v7802 = vunpack.c.l.b16 %v7706
        %v7803 = vunpack.c.l.b16 %v7707
        %v7804 = vunpack.c.l.b16 %v7708
        %v7805 = vunpack.c.l.b16 %v7709
        %v7806 = vunpack.c.l.b16 %v7710
        %v7807 = vunpack.c.l.b16 %v7711
        %v7808 = vunpack.c.l.b16 %v7712
        %v7809 = vunpack.c.l.b16 %v7713
        %v7810 = vunpack.c.l.b16 %v7714
        %v7811 = vunpack.c.l.b16 %v7715
        %v7812 = vunpack.c.l.b16 %v7716
        %v7813 = vunpack.c.l.b16 %v7717
        %v7814 = vunpack.c.l.b16 %v7718
        %v7815 = vunpack.c.l.b16 %v7719
        %v7816 = vunpack.c.l.b16 %v7720
        %v7817 = vunpack.c.l.b16 %v7721
        %v7818 = vunpack.c.l.b16 %v7722
        %v7819 = vunpack.c.l.b16 %v7723
        %v7820 = vunpack.c.l.b16 %v7724
        %v7821 = vunpack.c.l.b16 %v7725
        %v7822 = vunpack.c.l.b16 %v7726
        %v7823 = vunpack.c.l.b16 %v7727
        %v7824 = vunpack.c.l.b16 %v7728
        %v7825 = vunpack.c.l.b16 %v7729
        %v7826 = vunpack.c.l.b16 %v7730
        %v7827 = vunpack.c.l.b16 %v7731
        %v7828 = vunpack.c.l.b16 %v7732
        %v7829 = vunpack.c.l.b16 %v7733
        %v7830 = vunpack.c.l.b16 %v7734
        %v7831 = vunpack.c.l.b16 %v7735
        %v7832 = vunpack.c.l.b16 %v7736
        %v7833 = vunpack.c.l.b16 %v7737
        %v7834 = vunpack.c.l.b16 %v7738
        %v7835 = vunpack.c.l.b16 %v7739
        %v7836 = vunpack.c.l.b16 %v7740
        %v7837 = vunpack.c.l.b16 %v7741
        %v7838 = vunpack.c.l.b16 %v7742
        %v7839 = vunpack.c.l.b16 %v7743
        %v7840 = vpack.c.b16 %v7793, %v7792
        %v7841 = vpack.c.b16 %v7795, %v7794
        %v7842 = vpack.c.b16 %v7797, %v7796
        %v7843 = vpack.c.b16 %v7799, %v7798
        %v7844 = vpack.c.b16 %v7801, %v7800
        %v7845 = vpack.c.b16 %v7803, %v7802
        %v7846 = vpack.c.b16 %v7805, %v7804
        %v7847 = vpack.c.b16 %v7807, %v7806
        %v7848 = vpack.c.b16 %v7809, %v7808
        %v7849 = vpack.c.b16 %v7811, %v7810
        %v7850 = vpack.c.b16 %v7813, %v7812
        %v7851 = vpack.c.b16 %v7815, %v7814
        %v7852 = vpack.c.b16 %v7817, %v7816
        %v7853 = vpack.c.b16 %v7819, %v7818
        %v7854 = vpack.c.b16 %v7821, %v7820
        %v7855 = vpack.c.b16 %v7823, %v7822
        %v7856 = vpack.c.b16 %v7825, %v7824
        %v7857 = vpack.c.b16 %v7827, %v7826
        %v7858 = vpack.c.b16 %v7829, %v7828
        %v7859 = vpack.c.b16 %v7831, %v7830
        %v7860 = vpack.c.b16 %v7833, %v7832
        %v7861 = vpack.c.b16 %v7835, %v7834
        %v7862 = vpack.c.b16 %v7837, %v7836
        %v7863 = vpack.c.b16 %v7839, %v7838
        %7888 = vmatprep.subr.bf16.mxu0 0
        %7889 = vmatpush1.bf16.msra.mxu0 %v7847
        %7890 = vmatprep.subr.bf16.mxu0 0
        %7891 = vmatpush1.bf16.msra.mxu0 %v7846
        %7892 = vmatprep.subr.bf16.mxu0 0
        %7893 = vmatpush1.bf16.msra.mxu0 %v7845
        %7894 = vmatprep.subr.bf16.mxu0 0
        %7895 = vmatpush1.bf16.msra.mxu0 %v7844
        %7896 = vmatprep.subr.bf16.mxu0 0
        %7897 = vmatpush1.bf16.msra.mxu0 %v7843
        %7898 = vmatprep.subr.bf16.mxu0 0
        %7899 = vmatpush1.bf16.msra.mxu0 %v7842
        %7900 = vmatprep.subr.bf16.mxu0 0
        %7901 = vmatpush1.bf16.msra.mxu0 %v7841
        %7902 = vmatprep.subr.bf16.mxu0 0
        %7903 = vmatpush1.bf16.msra.mxu0 %v7840
        %7904 = vmatprep.subr.bf16.mxu0 0
        %7905 = vmatpush2.bf16.msra.mxu0 %v7855
        %7906 = vmatprep.subr.bf16.mxu0 0
        %7907 = vmatpush2.bf16.msra.mxu0 %v7854
        %7908 = vmatprep.subr.bf16.mxu0 0
        %7909 = vmatpush2.bf16.msra.mxu0 %v7853
        %7910 = vmatprep.subr.bf16.mxu0 0
        %7911 = vmatpush2.bf16.msra.mxu0 %v7852
        %7912 = vmatprep.subr.bf16.mxu0 0
        %7913 = vmatpush2.bf16.msra.mxu0 %v7851
        %7914 = vmatprep.subr.bf16.mxu0 0
        %7915 = vmatpush2.bf16.msra.mxu0 %v7850
        %7916 = vmatprep.subr.bf16.mxu0 0
        %7917 = vmatpush2.bf16.msra.mxu0 %v7849
        %7918 = vmatprep.subr.bf16.mxu0 0
        %7919 = vmatpush2.bf16.msra.mxu0 %v7848
        %7920 = vmatprep.mubr.bf16.mxu0 %v7402
        %7921 = vmatmul.mubr.bf16.gmra.mxu0 %v7311
        %v7922 = vpop.f32.mrf.mxu0
        %v7923 = vadd.f32 0.0, %v7922
        %v7924 = vpop.f32.mrf.mxu0
        %v7925 = vpop.f32.mrf.mxu0
        %v7926 = vadd.f32 0.0, %v7925
        %v7927 = vpop.f32.mrf.mxu0
        %7928 = vmatprep.mubr.bf16.mxu0 %v7414
        %7929 = vmatmul.mubr.bf16.gmra.mxu0 %v7312
        %v7930 = vpop.f32.mrf.mxu0
        %v7931 = vadd.f32 0.0, %v7930
        %v7932 = vpop.f32.mrf.mxu0
        %v7933 = vpop.f32.mrf.mxu0
        %v7934 = vadd.f32 0.0, %v7933
        %v7935 = vpop.f32.mrf.mxu0
        %7936 = vmatprep.mubr.bf16.mxu0 %v7426
        %7937 = vmatmul.mubr.bf16.gmra.mxu0 %v7313
        %v7938 = vpop.f32.mrf.mxu0
        %v7939 = vadd.f32 0.0, %v7938
        %v7940 = vpop.f32.mrf.mxu0
        %v7941 = vpop.f32.mrf.mxu0
        %v7942 = vadd.f32 0.0, %v7941
        %v7943 = vpop.f32.mrf.mxu0
        %7944 = vmatprep.mubr.bf16.mxu0 %v7438
        %7945 = vmatmul.mubr.bf16.gmra.mxu0 %v7314
        %v7946 = vpop.f32.mrf.mxu0
        %v7947 = vadd.f32 0.0, %v7946
        %v7948 = vpop.f32.mrf.mxu0
        %v7949 = vpop.f32.mrf.mxu0
        %v7950 = vadd.f32 0.0, %v7949
        %v7951 = vpop.f32.mrf.mxu0
        %7952 = vmatprep.mubr.bf16.mxu0 %v7450
        %7953 = vmatmul.mubr.bf16.gmra.mxu0 %v7315
        %v7954 = vpop.f32.mrf.mxu0
        %v7955 = vadd.f32 0.0, %v7954
        %v7956 = vpop.f32.mrf.mxu0
        %v7957 = vpop.f32.mrf.mxu0
        %v7958 = vadd.f32 0.0, %v7957
        %v7959 = vpop.f32.mrf.mxu0
        %7960 = vmatprep.mubr.bf16.mxu0 %v7462
        %7961 = vmatmul.mubr.bf16.gmra.mxu0 %v7316
        %v7962 = vpop.f32.mrf.mxu0
        %v7963 = vadd.f32 0.0, %v7962
        %v7964 = vpop.f32.mrf.mxu0
        %v7965 = vpop.f32.mrf.mxu0
        %v7966 = vadd.f32 0.0, %v7965
        %v7967 = vpop.f32.mrf.mxu0
        %7968 = vmatprep.mubr.bf16.mxu0 %v7474
        %7969 = vmatmul.mubr.bf16.gmra.mxu0 %v7317
        %v7970 = vpop.f32.mrf.mxu0
        %v7971 = vadd.f32 0.0, %v7970
        %v7972 = vpop.f32.mrf.mxu0
        %v7973 = vpop.f32.mrf.mxu0
        %v7974 = vadd.f32 0.0, %v7973
        %v7975 = vpop.f32.mrf.mxu0
        %7976 = vmatprep.mubr.bf16.mxu0 %v7486
        %7977 = vmatmul.mubr.bf16.gmra.mxu0 %v7318
        %v7978 = vpop.f32.mrf.mxu0
        %v7979 = vadd.f32 0.0, %v7978
        %v7980 = vpop.f32.mrf.mxu0
        %v7981 = vpop.f32.mrf.mxu0
        %v7982 = vadd.f32 0.0, %v7981
        %v7983 = vpop.f32.mrf.mxu0
        %7984 = vmatprep.mubr.bf16.mxu0 %v7498
        %7985 = vmatmul.mubr.bf16.gmra.mxu0 %v7319
        %v7986 = vpop.f32.mrf.mxu0
        %v7987 = vadd.f32 0.0, %v7986
        %v7988 = vpop.f32.mrf.mxu0
        %v7989 = vpop.f32.mrf.mxu0
        %v7990 = vadd.f32 0.0, %v7989
        %v7991 = vpop.f32.mrf.mxu0
        %7992 = vmatprep.mubr.bf16.mxu0 %v7510
        %7993 = vmatmul.mubr.bf16.gmra.mxu0 %v7320
        %v7994 = vpop.f32.mrf.mxu0
        %v7995 = vadd.f32 0.0, %v7994
        %v7996 = vpop.f32.mrf.mxu0
        %v7997 = vpop.f32.mrf.mxu0
        %v7998 = vadd.f32 0.0, %v7997
        %v7999 = vpop.f32.mrf.mxu0
        %8000 = vmatprep.mubr.bf16.mxu0 %v7522
        %8001 = vmatmul.mubr.bf16.gmra.mxu0 %v7321
        %v8002 = vpop.f32.mrf.mxu0
        %v8003 = vadd.f32 0.0, %v8002
        %v8004 = vpop.f32.mrf.mxu0
        %v8005 = vpop.f32.mrf.mxu0
        %v8006 = vadd.f32 0.0, %v8005
        %v8007 = vpop.f32.mrf.mxu0
        %8008 = vmatprep.mubr.bf16.mxu0 %v7534
        %8009 = vmatmul.mubr.bf16.gmra.mxu0 %v7322
        %v8010 = vpop.f32.mrf.mxu0
        %v8011 = vadd.f32 0.0, %v8010
        %v8012 = vpop.f32.mrf.mxu0
        %v8013 = vpop.f32.mrf.mxu0
        %v8014 = vadd.f32 0.0, %v8013
        %v8015 = vpop.f32.mrf.mxu0
        %8016 = vmatprep.mubr.bf16.mxu0 %v7546
        %8017 = vmatmul.mubr.bf16.gmra.mxu0 %v7323
        %v8018 = vpop.f32.mrf.mxu0
        %v8019 = vadd.f32 0.0, %v8018
        %v8020 = vpop.f32.mrf.mxu0
        %v8021 = vpop.f32.mrf.mxu0
        %v8022 = vadd.f32 0.0, %v8021
        %v8023 = vpop.f32.mrf.mxu0
        %8024 = vmatprep.mubr.bf16.mxu0 %v7558
        %8025 = vmatmul.mubr.bf16.gmra.mxu0 %v7324
        %v8026 = vpop.f32.mrf.mxu0
        %v8027 = vadd.f32 0.0, %v8026
        %v8028 = vpop.f32.mrf.mxu0
        %v8029 = vpop.f32.mrf.mxu0
        %v8030 = vadd.f32 0.0, %v8029
        %v8031 = vpop.f32.mrf.mxu0
        %8032 = vmatprep.mubr.bf16.mxu0 %v7570
        %8033 = vmatmul.mubr.bf16.gmra.mxu0 %v7325
        %v8034 = vpop.f32.mrf.mxu0
        %v8035 = vadd.f32 0.0, %v8034
        %v8036 = vpop.f32.mrf.mxu0
        %v8037 = vpop.f32.mrf.mxu0
        %v8038 = vadd.f32 0.0, %v8037
        %v8039 = vpop.f32.mrf.mxu0
        %8040 = vmatprep.mubr.bf16.mxu0 %v7582
        %8041 = vmatmul.mubr.bf16.gmra.mxu0 %v7326
        %v8042 = vpop.f32.mrf.mxu0
        %v8043 = vadd.f32 0.0, %v8042
        %v8044 = vpop.f32.mrf.mxu0
        %v8045 = vpop.f32.mrf.mxu0
        %v8046 = vadd.f32 0.0, %v8045
        %v8047 = vpop.f32.mrf.mxu0
        %8048 = vdwg.mxu0
        %8049 = vmatprep.subr.bf16.mxu0 0
        %8050 = vmatpush1.bf16.msra.mxu0 %v7863
        %8051 = vmatprep.subr.bf16.mxu0 0
        %8052 = vmatpush1.bf16.msra.mxu0 %v7862
        %8053 = vmatprep.subr.bf16.mxu0 0
        %8054 = vmatpush1.bf16.msra.mxu0 %v7861
        %8055 = vmatprep.subr.bf16.mxu0 0
        %8056 = vmatpush1.bf16.msra.mxu0 %v7860
        %8057 = vmatprep.subr.bf16.mxu0 0
        %8058 = vmatpush1.bf16.msra.mxu0 %v7859
        %8059 = vmatprep.subr.bf16.mxu0 0
        %8060 = vmatpush1.bf16.msra.mxu0 %v7858
        %8061 = vmatprep.subr.bf16.mxu0 0
        %8062 = vmatpush1.bf16.msra.mxu0 %v7857
        %8063 = vmatprep.subr.bf16.mxu0 0
        %8064 = vmatpush1.bf16.msra.mxu0 %v7856
        %8065 = vmatprep.subr.bf16.mxu0 0
        %8066 = vmatpush2.bf16.msra.mxu0 0
        %8067 = vmatprep.subr.bf16.mxu0 0
        %8068 = vmatpush2.bf16.msra.mxu0 0
        %8069 = vmatprep.subr.bf16.mxu0 0
        %8070 = vmatpush2.bf16.msra.mxu0 0
        %8071 = vmatprep.subr.bf16.mxu0 0
        %8072 = vmatpush2.bf16.msra.mxu0 0
        %8073 = vmatprep.subr.bf16.mxu0 0
        %8074 = vmatpush2.bf16.msra.mxu0 0
        %8075 = vmatprep.subr.bf16.mxu0 0
        %8076 = vmatpush2.bf16.msra.mxu0 0
        %8077 = vmatprep.subr.bf16.mxu0 0
        %8078 = vmatpush2.bf16.msra.mxu0 0
        %8079 = vmatprep.subr.bf16.mxu0 0
        %8080 = vmatpush2.bf16.msra.mxu0 0
        %8081 = vmatprep.mubr.bf16.mxu0 0
        %8082 = vmatmul.mubr.bf16.gmra.mxu0 %v7601
        %v8083 = vpop.f32.mrf.mxu0
        %v8084 = vadd.f32 %v7923, %v8083
        %v8085 = vpop.f32.mrf.mxu0
        %v8086 = vpop.f32.mrf.mxu0
        %v8087 = vadd.f32 %v7926, %v8086
        %v8088 = vpop.f32.mrf.mxu0
        %8089 = vmatprep.mubr.bf16.mxu0 0
        %8090 = vmatmul.mubr.bf16.gmra.mxu0 %v7604
        %v8091 = vpop.f32.mrf.mxu0
        %v8092 = vadd.f32 %v7931, %v8091
        %v8093 = vpop.f32.mrf.mxu0
        %v8094 = vpop.f32.mrf.mxu0
        %v8095 = vadd.f32 %v7934, %v8094
        %v8096 = vpop.f32.mrf.mxu0
        %8097 = vmatprep.mubr.bf16.mxu0 0
        %8098 = vmatmul.mubr.bf16.gmra.mxu0 %v7607
        %v8099 = vpop.f32.mrf.mxu0
        %v8100 = vadd.f32 %v7939, %v8099
        %v8101 = vpop.f32.mrf.mxu0
        %v8102 = vpop.f32.mrf.mxu0
        %v8103 = vadd.f32 %v7942, %v8102
        %v8104 = vpop.f32.mrf.mxu0
        %8105 = vmatprep.mubr.bf16.mxu0 0
        %8106 = vmatmul.mubr.bf16.gmra.mxu0 %v7610
        %v8107 = vpop.f32.mrf.mxu0
        %v8108 = vadd.f32 %v7947, %v8107
        %v8109 = vpop.f32.mrf.mxu0
        %v8110 = vpop.f32.mrf.mxu0
        %v8111 = vadd.f32 %v7950, %v8110
        %v8112 = vpop.f32.mrf.mxu0
        %8113 = vmatprep.mubr.bf16.mxu0 0
        %8114 = vmatmul.mubr.bf16.gmra.mxu0 %v7613
        %v8115 = vpop.f32.mrf.mxu0
        %v8116 = vadd.f32 %v7955, %v8115
        %v8117 = vpop.f32.mrf.mxu0
        %v8118 = vpop.f32.mrf.mxu0
        %v8119 = vadd.f32 %v7958, %v8118
        %v8120 = vpop.f32.mrf.mxu0
        %8121 = vmatprep.mubr.bf16.mxu0 0
        %8122 = vmatmul.mubr.bf16.gmra.mxu0 %v7616
        %v8123 = vpop.f32.mrf.mxu0
        %v8124 = vadd.f32 %v7963, %v8123
        %v8125 = vpop.f32.mrf.mxu0
        %v8126 = vpop.f32.mrf.mxu0
        %v8127 = vadd.f32 %v7966, %v8126
        %v8128 = vpop.f32.mrf.mxu0
        %8129 = vmatprep.mubr.bf16.mxu0 0
        %8130 = vmatmul.mubr.bf16.gmra.mxu0 %v7619
        %v8131 = vpop.f32.mrf.mxu0
        %v8132 = vadd.f32 %v7971, %v8131
        %v8133 = vpop.f32.mrf.mxu0
        %v8134 = vpop.f32.mrf.mxu0
        %v8135 = vadd.f32 %v7974, %v8134
        %v8136 = vpop.f32.mrf.mxu0
        %8137 = vmatprep.mubr.bf16.mxu0 0
        %8138 = vmatmul.mubr.bf16.gmra.mxu0 %v7622
        %v8139 = vpop.f32.mrf.mxu0
        %v8140 = vadd.f32 %v7979, %v8139
        %v8141 = vpop.f32.mrf.mxu0
        %v8142 = vpop.f32.mrf.mxu0
        %v8143 = vadd.f32 %v7982, %v8142
        %v8144 = vpop.f32.mrf.mxu0
        %8145 = vmatprep.mubr.bf16.mxu0 0
        %8146 = vmatmul.mubr.bf16.gmra.mxu0 %v7625
        %v8147 = vpop.f32.mrf.mxu0
        %v8148 = vadd.f32 %v7987, %v8147
        %v8149 = vpop.f32.mrf.mxu0
        %v8150 = vpop.f32.mrf.mxu0
        %v8151 = vadd.f32 %v7990, %v8150
        %v8152 = vpop.f32.mrf.mxu0
        %8153 = vmatprep.mubr.bf16.mxu0 0
        %8154 = vmatmul.mubr.bf16.gmra.mxu0 %v7628
        %v8155 = vpop.f32.mrf.mxu0
        %v8156 = vadd.f32 %v7995, %v8155
        %v8157 = vpop.f32.mrf.mxu0
        %v8158 = vpop.f32.mrf.mxu0
        %v8159 = vadd.f32 %v7998, %v8158
        %v8160 = vpop.f32.mrf.mxu0
        %8161 = vmatprep.mubr.bf16.mxu0 0
        %8162 = vmatmul.mubr.bf16.gmra.mxu0 %v7631
        %v8163 = vpop.f32.mrf.mxu0
        %v8164 = vadd.f32 %v8003, %v8163
        %v8165 = vpop.f32.mrf.mxu0
        %v8166 = vpop.f32.mrf.mxu0
        %v8167 = vadd.f32 %v8006, %v8166
        %v8168 = vpop.f32.mrf.mxu0
        %8169 = vmatprep.mubr.bf16.mxu0 0
        %8170 = vmatmul.mubr.bf16.gmra.mxu0 %v7634
        %v8171 = vpop.f32.mrf.mxu0
        %v8172 = vadd.f32 %v8011, %v8171
        %v8173 = vpop.f32.mrf.mxu0
        %v8174 = vpop.f32.mrf.mxu0
        %v8175 = vadd.f32 %v8014, %v8174
        %v8176 = vpop.f32.mrf.mxu0
        %8177 = vmatprep.mubr.bf16.mxu0 0
        %8178 = vmatmul.mubr.bf16.gmra.mxu0 %v7637
        %v8179 = vpop.f32.mrf.mxu0
        %v8180 = vadd.f32 %v8019, %v8179
        %v8181 = vpop.f32.mrf.mxu0
        %v8182 = vpop.f32.mrf.mxu0
        %v8183 = vadd.f32 %v8022, %v8182
        %v8184 = vpop.f32.mrf.mxu0
        %8185 = vmatprep.mubr.bf16.mxu0 0
        %8186 = vmatmul.mubr.bf16.gmra.mxu0 %v7640
        %v8187 = vpop.f32.mrf.mxu0
        %v8188 = vadd.f32 %v8027, %v8187
        %v8189 = vpop.f32.mrf.mxu0
        %v8190 = vpop.f32.mrf.mxu0
        %v8191 = vadd.f32 %v8030, %v8190
        %v8192 = vpop.f32.mrf.mxu0
        %8193 = vmatprep.mubr.bf16.mxu0 0
        %8194 = vmatmul.mubr.bf16.gmra.mxu0 %v7643
        %v8195 = vpop.f32.mrf.mxu0
        %v8196 = vadd.f32 %v8035, %v8195
        %v8197 = vpop.f32.mrf.mxu0
        %v8198 = vpop.f32.mrf.mxu0
        %v8199 = vadd.f32 %v8038, %v8198
        %v8200 = vpop.f32.mrf.mxu0
        %8201 = vmatprep.mubr.bf16.mxu0 0
        %8202 = vmatmul.mubr.bf16.gmra.mxu0 %v7646
        %v8203 = vpop.f32.mrf.mxu0
        %v8204 = vadd.f32 %v8043, %v8203
        %v8205 = vpop.f32.mrf.mxu0
        %v8206 = vpop.f32.mrf.mxu0
        %v8207 = vadd.f32 %v8046, %v8206
        %v8208 = vpop.f32.mrf.mxu0
        %8209 = vdwg.mxu0
        %v8210 = vadd.f32 %v7663, %v8084
        %v8211 = vadd.f32 %v7664, %v8087
        %v8212 = vadd.f32 %v7665, %v8092
        %v8213 = vadd.f32 %v7666, %v8095
        %v8214 = vadd.f32 %v7667, %v8100
        %v8215 = vadd.f32 %v7668, %v8103
        %v8216 = vadd.f32 %v7669, %v8108
        %v8217 = vadd.f32 %v7670, %v8111
        %v8218 = vadd.f32 %v7671, %v8116
        %v8219 = vadd.f32 %v7672, %v8119
        %v8220 = vadd.f32 %v7673, %v8124
        %v8221 = vadd.f32 %v7674, %v8127
        %v8222 = vadd.f32 %v7675, %v8132
        %v8223 = vadd.f32 %v7676, %v8135
        %v8224 = vadd.f32 %v7677, %v8140
        %v8225 = vadd.f32 %v7678, %v8143
        %v8226 = vadd.f32 %v7679, %v8148
        %v8227 = vadd.f32 %v7680, %v8151
        %v8228 = vadd.f32 %v7681, %v8156
        %v8229 = vadd.f32 %v7682, %v8159
        %v8230 = vadd.f32 %v7683, %v8164
        %v8231 = vadd.f32 %v7684, %v8167
        %v8232 = vadd.f32 %v7685, %v8172
        %v8233 = vadd.f32 %v7686, %v8175
        %v8234 = vadd.f32 %v7687, %v8180
        %v8235 = vadd.f32 %v7688, %v8183
        %v8236 = vadd.f32 %v7689, %v8188
        %v8237 = vadd.f32 %v7690, %v8191
        %v8238 = vadd.f32 %v7691, %v8196
        %v8239 = vadd.f32 %v7692, %v8199
        %v8240 = vadd.f32 %v7693, %v8204
        %v8241 = vadd.f32 %v7694, %v8207
        %8242 = vst [vmem:[#allocation2] sm:$0xff] %v8210
        %8243 = vst [vmem:[#allocation2 + $0x8] sm:$0xff] %v8211
        %8244 = vst [vmem:[#allocation2 + $0x10] sm:$0xff] %v8212
        %8245 = vst [vmem:[#allocation2 + $0x18] sm:$0xff] %v8213
        %8246 = vst [vmem:[#allocation2 + $0x20] sm:$0xff] %v8214
        %8247 = vst [vmem:[#allocation2 + $0x28] sm:$0xff] %v8215
        %8248 = vst [vmem:[#allocation2 + $0x30] sm:$0xff] %v8216
        %8249 = vst [vmem:[#allocation2 + $0x38] sm:$0xff] %v8217
        %8250 = vst [vmem:[#allocation2 + $0x40] sm:$0xff] %v8218
        %8251 = vst [vmem:[#allocation2 + $0x48] sm:$0xff] %v8219
        %8252 = vst [vmem:[#allocation2 + $0x50] sm:$0xff] %v8220
        %8253 = vst [vmem:[#allocation2 + $0x58] sm:$0xff] %v8221
        %8254 = vst [vmem:[#allocation2 + $0x60] sm:$0xff] %v8222
        %8255 = vst [vmem:[#allocation2 + $0x68] sm:$0xff] %v8223
        %8256 = vst [vmem:[#allocation2 + $0x70] sm:$0xff] %v8224
        %8257 = vst [vmem:[#allocation2 + $0x78] sm:$0xff] %v8225
        %8258 = vst [vmem:[#allocation2 + $0x80] sm:$0xff] %v8226
        %8259 = vst [vmem:[#allocation2 + $0x88] sm:$0xff] %v8227
        %8260 = vst [vmem:[#allocation2 + $0x90] sm:$0xff] %v8228
        %8261 = vst [vmem:[#allocation2 + $0x98] sm:$0xff] %v8229
        %8262 = vst [vmem:[#allocation2 + $0xa0] sm:$0xff] %v8230
        %8263 = vst [vmem:[#allocation2 + $0xa8] sm:$0xff] %v8231
        %8264 = vst [vmem:[#allocation2 + $0xb0] sm:$0xff] %v8232
        %8265 = vst [vmem:[#allocation2 + $0xb8] sm:$0xff] %v8233
        %8266 = vst [vmem:[#allocation2 + $0xc0] sm:$0xff] %v8234
        %8267 = vst [vmem:[#allocation2 + $0xc8] sm:$0xff] %v8235
        %8268 = vst [vmem:[#allocation2 + $0xd0] sm:$0xff] %v8236
        %8269 = vst [vmem:[#allocation2 + $0xd8] sm:$0xff] %v8237
        %8270 = vst [vmem:[#allocation2 + $0xe0] sm:$0xff] %v8238
        %8271 = vst [vmem:[#allocation2 + $0xe8] sm:$0xff] %v8239
        %8272 = vst [vmem:[#allocation2 + $0xf0] sm:$0xff] %v8240
        %8273 = vst [vmem:[#allocation2 + $0xf8] sm:$0xff] %v8241
        %v8274 = vld [vmem:[#allocation2] sm:$0xff]
        %v8275 = vld [vmem:[#allocation2 + $0x8] sm:$0xff]
        %v8276 = vld [vmem:[#allocation2 + $0x10] sm:$0xff]
        %v8277 = vld [vmem:[#allocation2 + $0x18] sm:$0xff]
        %v8278 = vld [vmem:[#allocation2 + $0x20] sm:$0xff]
        %v8279 = vld [vmem:[#allocation2 + $0x28] sm:$0xff]
        %v8280 = vld [vmem:[#allocation2 + $0x30] sm:$0xff]
        %v8281 = vld [vmem:[#allocation2 + $0x38] sm:$0xff]
        %v8282 = vld [vmem:[#allocation2 + $0x40] sm:$0xff]
        %v8283 = vld [vmem:[#allocation2 + $0x48] sm:$0xff]
        %v8284 = vld [vmem:[#allocation2 + $0x50] sm:$0xff]
        %v8285 = vld [vmem:[#allocation2 + $0x58] sm:$0xff]
        %v8286 = vld [vmem:[#allocation2 + $0x60] sm:$0xff]
        %v8287 = vld [vmem:[#allocation2 + $0x68] sm:$0xff]
        %v8288 = vld [vmem:[#allocation2 + $0x70] sm:$0xff]
        %v8289 = vld [vmem:[#allocation2 + $0x78] sm:$0xff]
        %v8290 = vld [vmem:[#allocation2 + $0x80] sm:$0xff]
        %v8291 = vld [vmem:[#allocation2 + $0x88] sm:$0xff]
        %v8292 = vld [vmem:[#allocation2 + $0x90] sm:$0xff]
        %v8293 = vld [vmem:[#allocation2 + $0x98] sm:$0xff]
        %v8294 = vld [vmem:[#allocation2 + $0xa0] sm:$0xff]
        %v8295 = vld [vmem:[#allocation2 + $0xa8] sm:$0xff]
        %v8296 = vld [vmem:[#allocation2 + $0xb0] sm:$0xff]
        %v8297 = vld [vmem:[#allocation2 + $0xb8] sm:$0xff]
        %v8298 = vld [vmem:[#allocation2 + $0xc0] sm:$0xff]
        %v8299 = vld [vmem:[#allocation2 + $0xc8] sm:$0xff]
        %v8300 = vld [vmem:[#allocation2 + $0xd0] sm:$0xff]
        %v8301 = vld [vmem:[#allocation2 + $0xd8] sm:$0xff]
        %v8302 = vld [vmem:[#allocation2 + $0xe0] sm:$0xff]
        %v8303 = vld [vmem:[#allocation2 + $0xe8] sm:$0xff]
        %v8304 = vld [vmem:[#allocation2 + $0xf0] sm:$0xff]
        %v8305 = vld [vmem:[#allocation2 + $0xf8] sm:$0xff]
        %v8306 = vmax.f32 %v8274, 0.0
        %v8307 = vmax.f32 %v8275, 0.0
        %v8308 = vmax.f32 %v8276, 0.0
        %v8309 = vmax.f32 %v8277, 0.0
        %v8310 = vmax.f32 %v8278, 0.0
        %v8311 = vmax.f32 %v8279, 0.0
        %v8312 = vmax.f32 %v8280, 0.0
        %v8313 = vmax.f32 %v8281, 0.0
        %v8314 = vmax.f32 %v8282, 0.0
        %v8315 = vmax.f32 %v8283, 0.0
        %v8316 = vmax.f32 %v8284, 0.0
        %v8317 = vmax.f32 %v8285, 0.0
        %v8318 = vmax.f32 %v8286, 0.0
        %v8319 = vmax.f32 %v8287, 0.0
        %v8320 = vmax.f32 %v8288, 0.0
        %v8321 = vmax.f32 %v8289, 0.0
        %v8322 = vmax.f32 %v8290, 0.0
        %v8323 = vmax.f32 %v8291, 0.0
        %v8324 = vmax.f32 %v8292, 0.0
        %v8325 = vmax.f32 %v8293, 0.0
        %v8326 = vmax.f32 %v8294, 0.0
        %v8327 = vmax.f32 %v8295, 0.0
        %v8328 = vmax.f32 %v8296, 0.0
        %v8329 = vmax.f32 %v8297, 0.0
        %v8330 = vmax.f32 %v8298, 0.0
        %v8331 = vmax.f32 %v8299, 0.0
        %v8332 = vmax.f32 %v8300, 0.0
        %v8333 = vmax.f32 %v8301, 0.0
        %v8334 = vmax.f32 %v8302, 0.0
        %v8335 = vmax.f32 %v8303, 0.0
        %v8336 = vmax.f32 %v8304, 0.0
        %v8337 = vmax.f32 %v8305, 0.0
        %v8338 = vpack.c.bf16 %v8307, %v8306
        %v8339 = vpack.c.bf16 %v8309, %v8308
        %v8340 = vpack.c.bf16 %v8311, %v8310
        %v8341 = vpack.c.bf16 %v8313, %v8312
        %v8342 = vpack.c.bf16 %v8315, %v8314
        %v8343 = vpack.c.bf16 %v8317, %v8316
        %v8344 = vpack.c.bf16 %v8319, %v8318
        %v8345 = vpack.c.bf16 %v8321, %v8320
        %v8346 = vpack.c.bf16 %v8323, %v8322
        %v8347 = vpack.c.bf16 %v8325, %v8324
        %v8348 = vpack.c.bf16 %v8327, %v8326
        %v8349 = vpack.c.bf16 %v8329, %v8328
        %v8350 = vpack.c.bf16 %v8331, %v8330
        %v8351 = vpack.c.bf16 %v8333, %v8332
        %v8352 = vpack.c.bf16 %v8335, %v8334
        %v8353 = vpack.c.bf16 %v8337, %v8336
        %v8370 = vunpack.c.l.b16 %v8338
        %v8371 = vunpack.c.h.b16 %v8338
        %v8372 = vunpack.c.l.b16 %v8339
        %v8373 = vunpack.c.h.b16 %v8339
        %v8374 = vunpack.c.l.b16 %v8340
        %v8375 = vunpack.c.h.b16 %v8340
        %v8376 = vunpack.c.l.b16 %v8341
        %v8377 = vunpack.c.h.b16 %v8341
        %v8378 = vunpack.c.l.b16 %v8342
        %v8379 = vunpack.c.h.b16 %v8342
        %v8380 = vunpack.c.l.b16 %v8343
        %v8381 = vunpack.c.h.b16 %v8343
        %v8382 = vunpack.c.l.b16 %v8344
        %v8383 = vunpack.c.h.b16 %v8344
        %v8384 = vunpack.c.l.b16 %v8345
        %v8385 = vunpack.c.h.b16 %v8345
        %v8386 = vunpack.c.l.b16 %v8346
        %v8387 = vunpack.c.h.b16 %v8346
        %v8388 = vunpack.c.l.b16 %v8347
        %v8389 = vunpack.c.h.b16 %v8347
        %v8390 = vunpack.c.l.b16 %v8348
        %v8391 = vunpack.c.h.b16 %v8348
        %v8392 = vunpack.c.l.b16 %v8349
        %v8393 = vunpack.c.h.b16 %v8349
        %v8394 = vunpack.c.l.b16 %v8350
        %v8395 = vunpack.c.h.b16 %v8350
        %v8396 = vunpack.c.l.b16 %v8351
        %v8397 = vunpack.c.h.b16 %v8351
        %v8398 = vunpack.c.l.b16 %v8352
        %v8399 = vunpack.c.h.b16 %v8352
        %v8400 = vunpack.c.l.b16 %v8353
        %v8401 = vunpack.c.h.b16 %v8353
        %v8402 = vpack.c.b16 %v8370, %v8370
        %v8403 = vpack.c.b16 %v8371, %v8371
        %v8404 = vpack.c.b16 %v8372, %v8372
        %v8405 = vpack.c.b16 %v8373, %v8373
        %v8406 = vpack.c.b16 %v8374, %v8374
        %v8407 = vpack.c.b16 %v8375, %v8375
        %v8408 = vpack.c.b16 %v8376, %v8376
        %v8409 = vpack.c.b16 %v8377, %v8377
        %v8410 = vpack.c.b16 %v8378, %v8378
        %v8411 = vpack.c.b16 %v8379, %v8379
        %v8412 = vpack.c.b16 %v8380, %v8380
        %v8413 = vpack.c.b16 %v8381, %v8381
        %v8414 = vpack.c.b16 %v8382, %v8382
        %v8415 = vpack.c.b16 %v8383, %v8383
        %v8416 = vpack.c.b16 %v8384, %v8384
        %v8417 = vpack.c.b16 %v8385, %v8385
        %v8418 = vpack.c.b16 %v8386, %v8386
        %v8419 = vpack.c.b16 %v8387, %v8387
        %v8420 = vpack.c.b16 %v8388, %v8388
        %v8421 = vpack.c.b16 %v8389, %v8389
        %v8422 = vpack.c.b16 %v8390, %v8390
        %v8423 = vpack.c.b16 %v8391, %v8391
        %v8424 = vpack.c.b16 %v8392, %v8392
        %v8425 = vpack.c.b16 %v8393, %v8393
        %v8426 = vpack.c.b16 %v8394, %v8394
        %v8427 = vpack.c.b16 %v8395, %v8395
        %v8428 = vpack.c.b16 %v8396, %v8396
        %v8429 = vpack.c.b16 %v8397, %v8397
        %v8430 = vpack.c.b16 %v8398, %v8398
        %v8431 = vpack.c.b16 %v8399, %v8399
        %v8432 = vpack.c.b16 %v8400, %v8400
        %v8433 = vpack.c.b16 %v8401, %v8401
        %8466 = vst [vmem:[%s313] sm:$0xf] %v8402
        %8467 = vst [vmem:[%s313 + $0x4] sm:$0xf] %v8403
        %8468 = vst [vmem:[%s313 + $0x8] sm:$0xf] %v8404
        %8469 = vst [vmem:[%s313 + $0xc] sm:$0xf] %v8405
        %8470 = vst [vmem:[%s313 + $0x10] sm:$0xf] %v8406
        %8471 = vst [vmem:[%s313 + $0x14] sm:$0xf] %v8407
        %8472 = vst [vmem:[%s313 + $0x18] sm:$0xf] %v8408
        %8473 = vst [vmem:[%s313 + $0x1c] sm:$0xf] %v8409
        %8474 = vst [vmem:[%s313 + $0x20] sm:$0xf] %v8410
        %8475 = vst [vmem:[%s313 + $0x24] sm:$0xf] %v8411
        %8476 = vst [vmem:[%s313 + $0x28] sm:$0xf] %v8412
        %8477 = vst [vmem:[%s313 + $0x2c] sm:$0xf] %v8413
        %8478 = vst [vmem:[%s313 + $0x30] sm:$0xf] %v8414
        %8479 = vst [vmem:[%s313 + $0x34] sm:$0xf] %v8415
        %8480 = vst [vmem:[%s313 + $0x38] sm:$0xf] %v8416
        %8481 = vst [vmem:[%s313 + $0x3c] sm:$0xf] %v8417
        %8482 = vst [vmem:[%s313 + $0x40] sm:$0xf] %v8418
        %8483 = vst [vmem:[%s313 + $0x44] sm:$0xf] %v8419
        %8484 = vst [vmem:[%s313 + $0x48] sm:$0xf] %v8420
        %8485 = vst [vmem:[%s313 + $0x4c] sm:$0xf] %v8421
        %8486 = vst [vmem:[%s313 + $0x50] sm:$0xf] %v8422
        %8487 = vst [vmem:[%s313 + $0x54] sm:$0xf] %v8423
        %8488 = vst [vmem:[%s313 + $0x58] sm:$0xf] %v8424
        %8489 = vst [vmem:[%s313 + $0x5c] sm:$0xf] %v8425
        %8490 = vst [vmem:[%s313 + $0x60] sm:$0xf] %v8426
        %8491 = vst [vmem:[%s313 + $0x64] sm:$0xf] %v8427
        %8492 = vst [vmem:[%s313 + $0x68] sm:$0xf] %v8428
        %8493 = vst [vmem:[%s313 + $0x6c] sm:$0xf] %v8429
        %8494 = vst [vmem:[%s313 + $0x70] sm:$0xf] %v8430
        %8495 = vst [vmem:[%s313 + $0x74] sm:$0xf] %v8431
        %8496 = vst [vmem:[%s313 + $0x78] sm:$0xf] %v8432
        %8497 = vst [vmem:[%s313 + $0x7c] sm:$0xf] %v8433
        %s8498 = sand.u32 %s164, 1
        %s8499 = scalar_lea.sflag [#allocation6], %s8498
        %s8500 = sand.u32 %s164, 1
        %s8501 = smul.addr %s8500, 128
        %s8502 = scalar_lea.vmem [#allocation12], %s8501
        // Predicated region
        $region61: #{tpu_custom_call.1} parent=43 // pred_check
          %p8503 = pneg %p174
        $region62: #{tpu_custom_call.1} parent=43 // pred_check_branch
          %8505 = sbr.rel (%p8503) target = $region64
        $region63: #{tpu_custom_call.1} parent=43 // pred_region
          %s8507 = ssub.s32 2048, 2048
          %8508 = vsyncadd %s8499, %s8507
          %s8509 = smul.addr %s25, 32
          %s8510 = smul.addr %s8509, 64
          %s8511 = scalar_lea.hbm %s6, %s8510
          %s8512 = sshll.u32 %s8502, 4
          %s8513 = int_to_ptr.vmem [resolvable:$true] %s8512
          %8518 = dma.vmem_to_hbm [thread:$0]  %s8513, 2048, %s8511, %s8499, 64, 64, 4
        $region64: #{tpu_custom_call.1} parent=43 // pred_fallthru
          _
      $region44: #{tpu_custom_call.1} parent=5 // pred_fallthru
        _
      %p8519 = scmp.le.s32.totalorder 2, %s20
      // Predicated region
      $region65: #{tpu_custom_call.1} parent=5 // pred_check
        %p8520 = pneg %p8519
      $region66: #{tpu_custom_call.1} parent=5 // pred_check_branch
        %8522 = sbr.rel (%p8520) target = $region68
      $region67: #{tpu_custom_call.1} parent=5 // pred_region
        %s8523 = ssub.s32 %s20, 2
        // Predicated region
        $region69: #{tpu_custom_call.1} parent=67 // pred_check
          %p8524 = pneg %p180
        $region70: #{tpu_custom_call.1} parent=67 // pred_check_branch
          %8526 = sbr.rel (%p8524) target = $region72
        $region71: #{tpu_custom_call.1} parent=67 // pred_region
          %s8527 = sand.u32 %s165, 1
          %s8528 = scalar_lea.sflag [#allocation6], %s8527
          %s8529 = sand.u32 %s165, 1
          %s8530 = smul.addr %s8529, 128
          %s8531 = scalar_lea.vmem [#allocation12], %s8530
          %8532 = dma.done %s8528, 2048
        $region72: #{tpu_custom_call.1} parent=67 // pred_fallthru
          _
      $region68: #{tpu_custom_call.1} parent=5 // pred_fallthru
        _
    $region6: #{tpu_custom_call.1} parent=1 // loop_footer
      %s24 = sadd.s32 1, %s20
    $region7: #{tpu_custom_call.1} parent=1 // loop_footer_branch
      %19 = sbr.rel target = $region3
    $region8: #{tpu_custom_call.1} parent=1 // loop_exit
      _
    %8533 = vsyncpa [#allocation5], 1
    %s8534 = scalar_lea.sflag [#allocation5], 1
    %8535 = vsyncpa %s8534, 1
    %8536 = vsyncpa [#allocation8], 1
    %8537 = vsyncpa [#allocation11], 1
    %8538 = vsyncpa [#allocation6], 1
    %s8539 = scalar_lea.sflag [#allocation6], 1
    %8540 = vsyncpa %s8539, 1

</llo_original>
